<compile_context>
chip_gen: v7x
topology: tpu7x:2x2x1
jax: 0.10.0
libtpu: 0.0.40
codegen_flags: <defaults>
</compile_context>

<pallas_src>
import math
import jax
import jax.numpy as jnp
from jax import lax
from jax.experimental import pallas as pl
from jax.experimental.pallas import tpu as pltpu

# ----------------------------- configuration --------------------------------
DIM = 32                 # node feature dim
EDIM = 16                # edge feature dim
HEADS = 4
GHD = 8                  # graph-attention dim_head
SK = 8                   # IPA scalar key dim
SV = 8                   # IPA scalar value dim
PK = 4                   # IPA point key dim
PV = 4                   # IPA point value dim
B = 2                    # batch
S = 8                    # sequence length (number of nodes)

INNER = GHD * HEADS                       # 32
IPA_HEAD_FEAT = SV + 3 * PV + PV + EDIM   # 40 features per IPA head
NEG = float(-jnp.finfo(jnp.float32).max)
LN_EPS = 1e-5
LEAKY_SLOPE = 0.01
IPA_EPS = 1e-8

# column offsets inside the packed IPA projection weight (D, 240)
OFF_QS = 0
OFF_KS = OFF_QS + HEADS * SK              # 32
OFF_VS = OFF_KS + HEADS * SK              # 64
OFF_QP = OFF_VS + HEADS * SV              # 96
OFF_KP = OFF_QP + 3 * HEADS * PK          # 144
OFF_VP = OFF_KP + 3 * HEADS * PK          # 192
W_IPA_COLS = OFF_VP + 3 * HEADS * PV      # 240


# ------------------------------ in-kernel helpers ----------------------------
def _ln(x, gamma, beta):
    mu = jnp.mean(x, axis=-1, keepdims=True)
    var = jnp.mean((x - mu) ** 2, axis=-1, keepdims=True)
    return (x - mu) * lax.rsqrt(var + LN_EPS) * gamma + beta


def _mm(a, b):
    return jnp.dot(a, b, preferred_element_type=jnp.float32)


def _qkt(a, b):  # a @ b.T without a transpose op
    return lax.dot_general(a, b, (((1,), (1,)), ((), ())),
                           preferred_element_type=jnp.float32)


def _softmax_rows(logits):
    logits = logits - jnp.max(logits, axis=-1, keepdims=True)
    e = jnp.exp(logits)
    return e * pl.reciprocal(jnp.sum(e, axis=-1, keepdims=True), approx=True)


def _sqdist(q, k):
    d = q[:, None, :] - k[None, :, :]          # (S, S, d)
    return jnp.sum(d * d, axis=-1)             # (S, S)


# ------------------------------- fused kernel --------------------------------
def fused_kernel(nodes_ref, edges_ref, extm_ref, intm_ref, mdense_ref,
                 rot_ref, trans_ref,
                 ang_ref, anb_ref, wqkv_ref, bqkv_ref, wo_ref, bo_ref,
                 wipa_ref, coef_ref, wpb_ref, bpb_ref, rep_ref, sum_ref,
                 wipao_ref, bipao_ref,
                 ffg_ref, ffb_ref, ffw_ref, ffbias_ref,
                 tew1_ref, teb1_ref, tew2_ref, teb2_ref,
                 nodes_out_ref, edges_out_ref):
    x = nodes_ref[0]                          # (S, DIM)
    edges_dense = edges_ref[0]                # (S, S*EDIM) lane-dense view
    xn = _ln(x, ang_ref[0], anb_ref[0])       # attn_norm(nodes)

    # -------------------- graph Attention (external mask) --------------------
    ext_ok = extm_ref[0] > 0.5                # (S, S) bool, hoisted
    qkv = _mm(xn, wqkv_ref[...]) + bqkv_ref[0]          # (S, 3*INNER); scale folded into q
    attn_out = jnp.zeros((S, DIM), jnp.float32)
    for h in range(HEADS):
        qh = qkv[:, h * GHD:(h + 1) * GHD]
        kh = qkv[:, INNER + h * GHD:INNER + (h + 1) * GHD]
        vh = qkv[:, 2 * INNER + h * GHD:2 * INNER + (h + 1) * GHD]
        sim = jnp.where(ext_ok, _qkt(qh, kh), NEG)
        p = _softmax_rows(sim)
        # accumulate straight into the output projection (no head concat)
        attn_out = attn_out + _mm(_mm(p, vh), wo_ref[h * GHD:(h + 1) * GHD, :])
    attn_out = attn_out + bo_ref[0]

    # --------------- InvariantPointAttention (internal mask) -----------------
    rot = rot_ref[0]                          # (S, 9), rot[:, 3*c + r] = R[:, c, r]
    tr = trans_ref[0]                         # (S, 3)
    proj = _mm(xn, wipa_ref[...])             # (S, 240) packed q_s|k_s|v_s|points

    q_s = proj[:, OFF_QS:OFF_QS + HEADS * SK]
    k_s = proj[:, OFF_KS:OFF_KS + HEADS * SK]
    v_s = proj[:, OFF_VS:OFF_VS + HEADS * SV]

    def to_global(px, py, pz):
        out = []
        for r in range(3):
            out.append(px * rot[:, r:r + 1] + py * rot[:, 3 + r:4 + r]
                       + pz * rot[:, 6 + r:7 + r] + tr[:, r:r + 1])
        return out

    hpk = HEADS * PK
    hpv = HEADS * PV
    qgx, qgy, qgz = to_global(proj[:, OFF_QP:OFF_QP + hpk],
                              proj[:, OFF_QP + hpk:OFF_QP + 2 * hpk],
                              proj[:, OFF_QP + 2 * hpk:OFF_QP + 3 * hpk])
    kgx, kgy, kgz = to_global(proj[:, OFF_KP:OFF_KP + hpk],
                              proj[:, OFF_KP + hpk:OFF_KP + 2 * hpk],
                              proj[:, OFF_KP + 2 * hpk:OFF_KP + 3 * hpk])
    vgx, vgy, vgz = to_global(proj[:, OFF_VP:OFF_VP + hpv],
                              proj[:, OFF_VP + hpv:OFF_VP + 2 * hpv],
                              proj[:, OFF_VP + 2 * hpv:OFF_VP + 3 * hpv])

    # pairwise bias for all heads via block weight: pb_all[i, h*S + j]
    pb_all = _mm(edges_dense, wpb_ref[...])   # (S, HEADS*S)
    coef = coef_ref[...]                      # (1, HEADS) = -0.5*point_scale*softplus(pw)
    bpb = bpb_ref[...]                        # (1, HEADS) scaled pair-bias bias
    int_ok = intm_ref[0] > 0.5

    ipa_out = jnp.zeros((S, DIM), jnp.float32)
    for h in range(HEADS):
        sl_s = slice(h * SK, (h + 1) * SK)
        sl_p = slice(h * PK, (h + 1) * PK)
        sl_pv = slice(h * PV, (h + 1) * PV)

        lg = _qkt(q_s[:, sl_s], k_s[:, sl_s])                 # scalar logits (scale folded)
        dist = (_sqdist(qgx[:, sl_p], kgx[:, sl_p])
                + _sqdist(qgy[:, sl_p], kgy[:, sl_p])
                + _sqdist(qgz[:, sl_p], kgz[:, sl_p]))
        lg = lg + coef[0:1, h:h + 1] * dist                   # point logits
        lg = lg + pb_all[:, h * S:(h + 1) * S] + bpb[0:1, h:h + 1]  # pairwise logits
        attn_h = _softmax_rows(jnp.where(int_ok, lg, NEG))

        rs = _mm(attn_h, v_s[:, h * SV:(h + 1) * SV])         # (S, SV)
        gx = _mm(attn_h, vgx[:, sl_pv]) - tr[:, 0:1]
        gy = _mm(attn_h, vgy[:, sl_pv]) - tr[:, 1:2]
        gz = _mm(attn_h, vgz[:, sl_pv]) - tr[:, 2:3]
        # back to local frame (multiply by R^T)
        lx = gx * rot[:, 0:1] + gy * rot[:, 1:2] + gz * rot[:, 2:3]
        ly = gx * rot[:, 3:4] + gy * rot[:, 4:5] + gz * rot[:, 5:6]
        lz = gx * rot[:, 6:7] + gy * rot[:, 7:8] + gz * rot[:, 8:9]
        nrm = jnp.sqrt(lx * lx + ly * ly + lz * lz + IPA_EPS)
        # res_pairwise via constant REP/SUM matmuls (keeps everything 2-D/lane-dense)
        rp = _mm(_mm(attn_h, rep_ref[...]) * edges_dense, sum_ref[...])   # (S, EDIM)

        feats = jnp.concatenate([rs, lx, ly, lz, nrm, rp], axis=-1)       # (S, 40)
        ipa_out = ipa_out + _mm(
            feats, wipao_ref[h * IPA_HEAD_FEAT:(h + 1) * IPA_HEAD_FEAT, :])
    ipa_out = ipa_out + bipao_ref[0]

    # --------------------- residual + ff_norm + ff + residual ----------------
    y = x + ipa_out + attn_out
    yn = _ln(y, ffg_ref[0], ffb_ref[0])
    new_nodes = _mm(yn, ffw_ref[...]) + ffbias_ref[0] + yn
    nodes_out_ref[0] = new_nodes

    # --------------- to_edge MLP (strength reduced) + edge update ------------
    a = _mm(new_nodes, tew1_ref[...])                                      # (S, DIM)
    # a_row[0, j*D+d] = A[j, d];  a_tile[i, j*D+d] = A[i, d]
    a_row = jnp.concatenate([a[j:j + 1, :] for j in range(S)], axis=-1)    # (1, S*DIM)
    a_tile = jnp.concatenate([a] * S, axis=-1)                             # (S, S*DIM)
    hpre = a_row - a_tile + teb1_ref[...]                # diff[i,j] = nodes[j]-nodes[i]
    hact = jnp.where(hpre > 0, hpre, LEAKY_SLOPE * hpre)                   # LeakyReLU
    ext = _mm(hact, tew2_ref[...]) + teb2_ref[...]       # (S, S*EDIM) lane-dense
    # reference applies `edges += mask * external_edges` TWICE (conv path is dead code)
    edges_out_ref[0] = edges_dense + 2.0 * mdense_ref[0] * ext


# ------------------------------ parameter init -------------------------------
def init_params(key):
    keys = iter(jax.random.split(key, 32))

    def lin(fan_in, fan_out):
        s = fan_in ** (-0.5)
        return jax.random.uniform(next(keys), (fan_in, fan_out), jnp.float32, -s, s)

    def bias(fan_in, fan_out):
        s = fan_in ** (-0.5)
        return jax.random.uniform(next(keys), (1, fan_out), jnp.float32, -s, s)

    p = {}
    p['attn_norm_g'] = jnp.ones((1, DIM), jnp.float32)
    p['attn_norm_b'] = jnp.zeros((1, DIM), jnp.float32)
    p['wq'] = lin(DIM, INNER);       p['bq'] = bias(DIM, INNER)
    p['wkv'] = lin(DIM, 2 * INNER);  p['bkv'] = bias(DIM, 2 * INNER)
    p['wo'] = lin(INNER, DIM);       p['bo'] = bias(INNER, DIM)
    p['ff_norm_g'] = jnp.ones((1, DIM), jnp.float32)
    p['ff_norm_b'] = jnp.zeros((1, DIM), jnp.float32)
    p['ff_w'] = lin(DIM, DIM);       p['ff_b'] = bias(DIM, DIM)
    p['te_w1'] = lin(DIM, DIM);      p['te_b1'] = bias(DIM, DIM)
    p['te_w2'] = lin(DIM, EDIM);     p['te_b2'] = bias(DIM, EDIM)
    # IPA (no bias on scalar/point projections, matching the reference impl)
    p['ipa_wq_s'] = lin(DIM, SK * HEADS)
    p['ipa_wk_s'] = lin(DIM, SK * HEADS)
    p['ipa_wv_s'] = lin(DIM, SV * HEADS)
    p['ipa_wq_p'] = lin(DIM, PK * HEADS * 3)
    p['ipa_wk_p'] = lin(DIM, PK * HEADS * 3)
    p['ipa_wv_p'] = lin(DIM, PV * HEADS * 3)
    p['ipa_point_weights'] = jnp.full((HEADS,), math.log(math.e - 1.0), jnp.float32)
    p['ipa_w_pb'] = lin(EDIM, HEADS)
    p['ipa_b_pb'] = bias(EDIM, HEADS)
    ipa_out_in = HEADS * IPA_HEAD_FEAT
    p['ipa_wo'] = lin(ipa_out_in, DIM)     # rows: per head [scalar|px|py|pz|norm|pair]
    p['ipa_bo'] = bias(ipa_out_in, DIM)
    return p


def prepare_params(p):
    """Pack / pre-scale weights once (outside jit) into the kernel's layout."""
    f32 = jnp.float32
    graph_scale = GHD ** (-0.5)
    scalar_scale = (3 * SK) ** (-0.5)
    point_scale = ((3 * PK) * (9.0 / 2.0)) ** (-0.5)
    pairwise_scale = 3.0 ** (-0.5)

    def regroup(w):  # (D, H*PK*3) -> (D, 3*H*PK), grouped [x | y | z]
        return w.reshape(DIM, HEADS, -1, 3).transpose(0, 3, 1, 2).reshape(DIM, -1)

    d = {}
    d['attn_norm_g'] = p['attn_norm_g']
    d['attn_norm_b'] = p['attn_norm_b']
    d['wqkv'] = jnp.concatenate([p['wq'] * graph_scale, p['wkv']], axis=1)
    d['bqkv'] = jnp.concatenate([p['bq'] * graph_scale, p['bkv']], axis=1)
    d['wo'] = p['wo'];  d['bo'] = p['bo']

    d['w_ipa'] = jnp.concatenate(
        [p['ipa_wq_s'] * scalar_scale, p['ipa_wk_s'], p['ipa_wv_s'],
         regroup(p['ipa_wq_p']), regroup(p['ipa_wk_p']), regroup(p['ipa_wv_p'])],
        axis=1)                                                       # (D, 240)
    d['ipa_coef'] = (-0.5 * point_scale
                     * jax.nn.softplus(p['ipa_point_weights'])).reshape(1, HEADS)
    # pair-bias block weight: (S*E, H*S); [j*E+e, h*S+j] = w_pb[e,h]*pairwise_scale
    d['wpb_big'] = jnp.einsum('eh,jk->jehk', p['ipa_w_pb'] * pairwise_scale,
                              jnp.eye(S, dtype=f32)).reshape(S * EDIM, HEADS * S)
    d['bpb'] = p['ipa_b_pb'] * pairwise_scale                          # (1, H)
    d['rep'] = jnp.kron(jnp.eye(S, dtype=f32), jnp.ones((1, EDIM), f32))   # (S, S*E)
    d['sum'] = jnp.kron(jnp.ones((S, 1), f32), jnp.eye(EDIM, dtype=f32))   # (S*E, E)
    d['ipa_wo'] = p['ipa_wo'];  d['ipa_bo'] = p['ipa_bo']

    d['ff_norm_g'] = p['ff_norm_g'];  d['ff_norm_b'] = p['ff_norm_b']
    d['ff_w'] = p['ff_w'];            d['ff_b'] = p['ff_b']

    d['te_w1'] = p['te_w1']
    d['te_b1_t'] = jnp.tile(p['te_b1'], (1, S))                        # (1, S*D)
    d['te_w2_big'] = jnp.kron(jnp.eye(S, dtype=f32), p['te_w2'])       # (S*D, S*E)
    d['te_b2_t'] = jnp.tile(p['te_b2'], (1, S))                        # (1, S*E)
    return d


# ------------------------------- forward pass --------------------------------
def _rep_spec(shape):       # full-array weight, replicated across the batch grid
    zeros = (0,) * len(shape)
    return pl.BlockSpec(shape, lambda b, _z=zeros: _z)


def _batch_spec(shape):     # per-batch block; shape[0] == 1
    tail = (0,) * (len(shape) - 1)
    return pl.BlockSpec(shape, lambda b, _t=tail: (b,) + _t)


_WEIGHT_NAMES = ['attn_norm_g', 'attn_norm_b', 'wqkv', 'bqkv', 'wo', 'bo',
                 'w_ipa', 'ipa_coef', 'wpb_big', 'bpb', 'rep', 'sum',
                 'ipa_wo', 'ipa_bo', 'ff_norm_g', 'ff_norm_b', 'ff_w', 'ff_b',
                 'te_w1', 'te_b1_t', 'te_w2_big', 'te_b2_t']


def cross_encoder_block(prep, nodes, edges, translations, rotations,
                        internal_edge_mask, external_edge_mask):
    extm = external_edge_mask.astype(jnp.float32)
    intm = internal_edge_mask.astype(jnp.float32)
    edges_dense = edges.reshape(B, S, S * EDIM)             # lane-dense edge view
    mdense = jnp.repeat(extm, EDIM, axis=-1)                # (B, S, S*E) update mask
    rot9 = rotations.reshape(B, S, 9)

    tensor_inputs = [nodes, edges_dense, extm, intm, mdense, rot9, translations]
    weights = [prep[k] for k in _WEIGHT_NAMES]

    in_specs = ([_batch_spec((1,) + t.shape[1:]) for t in tensor_inputs]
                + [_rep_spec(w.shape) for w in weights])
    out_specs = (_batch_spec((1, S, DIM)), _batch_spec((1, S, S * EDIM)))
    out_shape = (jax.ShapeDtypeStruct((B, S, DIM), jnp.float32),
                 jax.ShapeDtypeStruct((B, S, S * EDIM), jnp.float32))

    new_nodes, new_edges_dense = pl.pallas_call(
        fused_kernel, grid=(B,), in_specs=in_specs, out_specs=out_specs,
        out_shape=out_shape,
        compiler_params=pltpu.CompilerParams(
            dimension_semantics=("parallel",)),      # one batch per TC on v7x
    )(*tensor_inputs, *weights)
    return new_nodes, new_edges_dense.reshape(B, S, S, EDIM)


# ----------------------------------- main ------------------------------------
if __name__ == "__main__":
    key = jax.random.PRNGKey(0)
    kp, kn, ke, kt, kr, km1, km2 = jax.random.split(key, 7)

    params = init_params(kp)
    prep = prepare_params(params)        # one-time weight packing, outside jit

    nodes = jax.random.normal(kn, (B, S, DIM), jnp.float32)
    edges = jax.random.normal(ke, (B, S, S, EDIM), jnp.float32)
    translations = jax.random.normal(kt, (B, S, 3), jnp.float32)

    ang = jax.random.uniform(kr, (B, S), jnp.float32, 0.0, 2.0 * math.pi)
    c, s_ = jnp.cos(ang), jnp.sin(ang)
    z, o = jnp.zeros_like(c), jnp.ones_like(c)
    rotations = jnp.stack([jnp.stack([c, -s_, z], -1),
                           jnp.stack([s_, c, z], -1),
                           jnp.stack([z, z, o], -1)], -2)      # (B, S, 3, 3)

    internal_edge_mask = jax.random.bernoulli(km1, 0.7, (B, S, S))
    external_edge_mask = jax.random.bernoulli(km2, 0.5, (B, S, S))

    fwd = jax.jit(cross_encoder_block)
    out_nodes, out_edges = fwd(prep, nodes, edges, translations, rotations,
                               internal_edge_mask, external_edge_mask)
    jax.block_until_ready((out_nodes, out_edges))

    assert out_nodes.shape == (B, S, DIM)
    assert out_edges.shape == (B, S, S, EDIM)
    assert bool(jnp.all(jnp.isfinite(out_nodes)))
    assert bool(jnp.all(jnp.isfinite(out_edges)))
    print("KERNEL_OK")
</pallas_src>

<mosaic_0001>
module attributes {stable_mosaic.version = 11 : i64} {
  func.func @fused_kernel(%arg0: i32, %arg1: memref<1x8x32xf32, #tpu.memory_space<vmem>>, %arg2: memref<1x8x128xf32, #tpu.memory_space<vmem>>, %arg3: memref<1x8x8xf32, #tpu.memory_space<vmem>>, %arg4: memref<1x8x8xf32, #tpu.memory_space<vmem>>, %arg5: memref<1x8x128xf32, #tpu.memory_space<vmem>>, %arg6: memref<1x8x9xf32, #tpu.memory_space<vmem>>, %arg7: memref<1x8x3xf32, #tpu.memory_space<vmem>>, %arg8: memref<1x32xf32, #tpu.memory_space<vmem>>, %arg9: memref<1x32xf32, #tpu.memory_space<vmem>>, %arg10: memref<32x96xf32, #tpu.memory_space<vmem>>, %arg11: memref<1x96xf32, #tpu.memory_space<vmem>>, %arg12: memref<32x32xf32, #tpu.memory_space<vmem>>, %arg13: memref<1x32xf32, #tpu.memory_space<vmem>>, %arg14: memref<32x240xf32, #tpu.memory_space<vmem>>, %arg15: memref<1x4xf32, #tpu.memory_space<vmem>>, %arg16: memref<128x32xf32, #tpu.memory_space<vmem>>, %arg17: memref<1x4xf32, #tpu.memory_space<vmem>>, %arg18: memref<8x128xf32, #tpu.memory_space<vmem>>, %arg19: memref<128x16xf32, #tpu.memory_space<vmem>>, %arg20: memref<160x32xf32, #tpu.memory_space<vmem>>, %arg21: memref<1x32xf32, #tpu.memory_space<vmem>>, %arg22: memref<1x32xf32, #tpu.memory_space<vmem>>, %arg23: memref<1x32xf32, #tpu.memory_space<vmem>>, %arg24: memref<32x32xf32, #tpu.memory_space<vmem>>, %arg25: memref<1x32xf32, #tpu.memory_space<vmem>>, %arg26: memref<32x32xf32, #tpu.memory_space<vmem>>, %arg27: memref<1x256xf32, #tpu.memory_space<vmem>>, %arg28: memref<256x128xf32, #tpu.memory_space<vmem>>, %arg29: memref<1x128xf32, #tpu.memory_space<vmem>>, %arg30: memref<1x8x32xf32, #tpu.memory_space<vmem>>, %arg31: memref<1x8x128xf32, #tpu.memory_space<vmem>>) attributes {dimension_semantics = [#tpu.dimension_semantics<parallel>], iteration_bounds = array<i64: 2>, scalar_prefetch = 0 : i64, scratch_operands = 0 : i64, tpu.core_type = #tpu.core_type<tc>, window_params = [{transform_indices = @transform_0, window_bounds = array<i64: 1, 8, 32>}, {transform_indices = @transform_1, window_bounds = array<i64: 1, 8, 128>}, {transform_indices = @transform_2, window_bounds = array<i64: 1, 8, 8>}, {transform_indices = @transform_3, window_bounds = array<i64: 1, 8, 8>}, {transform_indices = @transform_4, window_bounds = array<i64: 1, 8, 128>}, {transform_indices = @transform_5, window_bounds = array<i64: 1, 8, 9>}, {transform_indices = @transform_6, window_bounds = array<i64: 1, 8, 3>}, {pipeline_mode = #tpu.pipeline_mode<synchronous>, transform_indices = @transform_7, window_bounds = array<i64: 1, 32>}, {pipeline_mode = #tpu.pipeline_mode<synchronous>, transform_indices = @transform_8, window_bounds = array<i64: 1, 32>}, {pipeline_mode = #tpu.pipeline_mode<synchronous>, transform_indices = @transform_9, window_bounds = array<i64: 32, 96>}, {pipeline_mode = #tpu.pipeline_mode<synchronous>, transform_indices = @transform_10, window_bounds = array<i64: 1, 96>}, {pipeline_mode = #tpu.pipeline_mode<synchronous>, transform_indices = @transform_11, window_bounds = array<i64: 32, 32>}, {pipeline_mode = #tpu.pipeline_mode<synchronous>, transform_indices = @transform_12, window_bounds = array<i64: 1, 32>}, {pipeline_mode = #tpu.pipeline_mode<synchronous>, transform_indices = @transform_13, window_bounds = array<i64: 32, 240>}, {pipeline_mode = #tpu.pipeline_mode<synchronous>, transform_indices = @transform_14, window_bounds = array<i64: 1, 4>}, {pipeline_mode = #tpu.pipeline_mode<synchronous>, transform_indices = @transform_15, window_bounds = array<i64: 128, 32>}, {pipeline_mode = #tpu.pipeline_mode<synchronous>, transform_indices = @transform_16, window_bounds = array<i64: 1, 4>}, {pipeline_mode = #tpu.pipeline_mode<synchronous>, transform_indices = @transform_17, window_bounds = array<i64: 8, 128>}, {pipeline_mode = #tpu.pipeline_mode<synchronous>, transform_indices = @transform_18, window_bounds = array<i64: 128, 16>}, {pipeline_mode = #tpu.pipeline_mode<synchronous>, transform_indices = @transform_19, window_bounds = array<i64: 160, 32>}, {pipeline_mode = #tpu.pipeline_mode<synchronous>, transform_indices = @transform_20, window_bounds = array<i64: 1, 32>}, {pipeline_mode = #tpu.pipeline_mode<synchronous>, transform_indices = @transform_21, window_bounds = array<i64: 1, 32>}, {pipeline_mode = #tpu.pipeline_mode<synchronous>, transform_indices = @transform_22, window_bounds = array<i64: 1, 32>}, {pipeline_mode = #tpu.pipeline_mode<synchronous>, transform_indices = @transform_23, window_bounds = array<i64: 32, 32>}, {pipeline_mode = #tpu.pipeline_mode<synchronous>, transform_indices = @transform_24, window_bounds = array<i64: 1, 32>}, {pipeline_mode = #tpu.pipeline_mode<synchronous>, transform_indices = @transform_25, window_bounds = array<i64: 32, 32>}, {pipeline_mode = #tpu.pipeline_mode<synchronous>, transform_indices = @transform_26, window_bounds = array<i64: 1, 256>}, {pipeline_mode = #tpu.pipeline_mode<synchronous>, transform_indices = @transform_27, window_bounds = array<i64: 256, 128>}, {pipeline_mode = #tpu.pipeline_mode<synchronous>, transform_indices = @transform_28, window_bounds = array<i64: 1, 128>}, {transform_indices = @transform_29, window_bounds = array<i64: 1, 8, 32>}, {transform_indices = @transform_30, window_bounds = array<i64: 1, 8, 128>}]} {
    %c0 = arith.constant 0 : index
    %c0_0 = arith.constant 0 : index
    %c0_1 = arith.constant 0 : index
    %0 = vector.load %arg1[%c0, %c0_0, %c0_1] : memref<1x8x32xf32, #tpu.memory_space<vmem>>, vector<1x8x32xf32>
    %1 = vector.shape_cast %0 : vector<1x8x32xf32> to vector<8x32xf32>
    %c0_2 = arith.constant 0 : index
    %c0_3 = arith.constant 0 : index
    %c0_4 = arith.constant 0 : index
    %2 = vector.load %arg2[%c0_2, %c0_3, %c0_4] : memref<1x8x128xf32, #tpu.memory_space<vmem>>, vector<1x8x128xf32>
    %3 = vector.shape_cast %2 : vector<1x8x128xf32> to vector<8x128xf32>
    %c0_5 = arith.constant 0 : index
    %c0_6 = arith.constant 0 : index
    %4 = vector.load %arg8[%c0_5, %c0_6] : memref<1x32xf32, #tpu.memory_space<vmem>>, vector<1x32xf32>
    %5 = vector.shape_cast %4 : vector<1x32xf32> to vector<32xf32>
    %c0_7 = arith.constant 0 : index
    %c0_8 = arith.constant 0 : index
    %6 = vector.load %arg9[%c0_7, %c0_8] : memref<1x32xf32, #tpu.memory_space<vmem>>, vector<1x32xf32>
    %7 = vector.shape_cast %6 : vector<1x32xf32> to vector<32xf32>
    %cst = arith.constant dense<0.000000e+00> : vector<8xf32>
    %8 = vector.multi_reduction <add>, %1, %cst [1] : vector<8x32xf32> to vector<8xf32>
    %9 = vector.shape_cast %8 : vector<8xf32> to vector<8x1xf32>
    %cst_9 = arith.constant 3.200000e+01 : f32
    %10 = vector.broadcast %cst_9 : f32 to vector<8x1xf32>
    %11 = arith.divf %9, %10 : vector<8x1xf32>
    %12 = vector.broadcast %11 : vector<8x1xf32> to vector<8x32xf32>
    %13 = arith.subf %1, %12 : vector<8x32xf32>
    %14 = arith.mulf %13, %13 : vector<8x32xf32>
    %cst_10 = arith.constant dense<0.000000e+00> : vector<8xf32>
    %15 = vector.multi_reduction <add>, %14, %cst_10 [1] : vector<8x32xf32> to vector<8xf32>
    %16 = vector.shape_cast %15 : vector<8xf32> to vector<8x1xf32>
    %cst_11 = arith.constant 3.200000e+01 : f32
    %17 = vector.broadcast %cst_11 : f32 to vector<8x1xf32>
    %18 = arith.divf %16, %17 : vector<8x1xf32>
    %19 = vector.broadcast %11 : vector<8x1xf32> to vector<8x32xf32>
    %20 = arith.subf %1, %19 : vector<8x32xf32>
    %cst_12 = arith.constant 9.99999974E-6 : f32
    %21 = vector.broadcast %cst_12 : f32 to vector<8x1xf32>
    %22 = arith.addf %18, %21 : vector<8x1xf32>
    %23 = math.rsqrt %22 : vector<8x1xf32>
    %24 = vector.broadcast %23 : vector<8x1xf32> to vector<8x32xf32>
    %25 = arith.mulf %20, %24 : vector<8x32xf32>
    %26 = vector.shape_cast %5 : vector<32xf32> to vector<1x32xf32>
    %27 = vector.broadcast %26 : vector<1x32xf32> to vector<8x32xf32>
    %28 = arith.mulf %25, %27 : vector<8x32xf32>
    %29 = vector.shape_cast %7 : vector<32xf32> to vector<1x32xf32>
    %30 = vector.broadcast %29 : vector<1x32xf32> to vector<8x32xf32>
    %31 = arith.addf %28, %30 : vector<8x32xf32>
    %c0_13 = arith.constant 0 : index
    %c0_14 = arith.constant 0 : index
    %c0_15 = arith.constant 0 : index
    %32 = vector.load %arg3[%c0_13, %c0_14, %c0_15] : memref<1x8x8xf32, #tpu.memory_space<vmem>>, vector<1x8x8xf32>
    %33 = vector.shape_cast %32 : vector<1x8x8xf32> to vector<8x8xf32>
    %cst_16 = arith.constant 5.000000e-01 : f32
    %34 = vector.broadcast %cst_16 : f32 to vector<8x8xf32>
    %35 = arith.cmpf ogt, %33, %34 : vector<8x8xf32>
    %c0_17 = arith.constant 0 : index
    %c0_18 = arith.constant 0 : index
    %36 = vector.load %arg10[%c0_17, %c0_18] : memref<32x96xf32, #tpu.memory_space<vmem>>, vector<32x96xf32>
    %cst_19 = arith.constant dense<0.000000e+00> : vector<8x96xf32>
    %37 = tpu.matmul %31, %36, %cst_19 {dimension_numbers = #tpu.dot_dimension_numbers<[1], [0], [0], [1], [0, 0, 1, 1], [], []>} : vector<8x32xf32>, vector<32x96xf32>, vector<8x96xf32> -> vector<8x96xf32>
    %c0_20 = arith.constant 0 : index
    %c0_21 = arith.constant 0 : index
    %38 = vector.load %arg11[%c0_20, %c0_21] : memref<1x96xf32, #tpu.memory_space<vmem>>, vector<1x96xf32>
    %39 = vector.shape_cast %38 : vector<1x96xf32> to vector<96xf32>
    %40 = vector.shape_cast %39 : vector<96xf32> to vector<1x96xf32>
    %41 = vector.broadcast %40 : vector<1x96xf32> to vector<8x96xf32>
    %42 = arith.addf %37, %41 : vector<8x96xf32>
    %cst_22 = arith.constant 0.000000e+00 : f32
    %43 = vector.broadcast %cst_22 : f32 to vector<8x32xf32>
    %44 = vector.extract_strided_slice %42 {offsets = [0, 0], sizes = [8, 8], strides = [1, 1]} : vector<8x96xf32> to vector<8x8xf32>
    %45 = vector.extract_strided_slice %42 {offsets = [0, 32], sizes = [8, 8], strides = [1, 1]} : vector<8x96xf32> to vector<8x8xf32>
    %46 = vector.extract_strided_slice %42 {offsets = [0, 64], sizes = [8, 8], strides = [1, 1]} : vector<8x96xf32> to vector<8x8xf32>
    %cst_23 = arith.constant dense<0.000000e+00> : vector<8x8xf32>
    %47 = tpu.matmul %44, %45, %cst_23 {dimension_numbers = #tpu.dot_dimension_numbers<[1], [1], [0], [0], [0, 0, 1, 0], [], []>} : vector<8x8xf32>, vector<8x8xf32>, vector<8x8xf32> -> vector<8x8xf32>
    %cst_24 = arith.constant -3.40282347E+38 : f32
    %48 = vector.broadcast %cst_24 : f32 to vector<8x8xf32>
    %49 = arith.select %35, %47, %48 : vector<8x8xi1>, vector<8x8xf32>
    %cst_25 = arith.constant dense<0xFF800000> : vector<8xf32>
    %50 = vector.multi_reduction <maximumf>, %49, %cst_25 [1] : vector<8x8xf32> to vector<8xf32>
    %51 = vector.shape_cast %50 : vector<8xf32> to vector<8x1xf32>
    %52 = vector.broadcast %51 : vector<8x1xf32> to vector<8x8xf32>
    %53 = arith.subf %49, %52 : vector<8x8xf32>
    %54 = math.exp %53 : vector<8x8xf32>
    %cst_26 = arith.constant dense<0.000000e+00> : vector<8xf32>
    %55 = vector.multi_reduction <add>, %54, %cst_26 [1] : vector<8x8xf32> to vector<8xf32>
    %56 = vector.shape_cast %55 : vector<8xf32> to vector<8x1xf32>
    %57 = tpu.reciprocal %56 {approx = true} : vector<8x1xf32> -> vector<8x1xf32>
    %58 = vector.broadcast %57 : vector<8x1xf32> to vector<8x8xf32>
    %59 = arith.mulf %54, %58 : vector<8x8xf32>
    %cst_27 = arith.constant dense<0.000000e+00> : vector<8x8xf32>
    %60 = tpu.matmul %59, %46, %cst_27 {dimension_numbers = #tpu.dot_dimension_numbers<[1], [0], [0], [1], [0, 0, 1, 1], [], []>} : vector<8x8xf32>, vector<8x8xf32>, vector<8x8xf32> -> vector<8x8xf32>
    %c0_28 = arith.constant 0 : index
    %c0_29 = arith.constant 0 : index
    %61 = vector.load %arg12[%c0_28, %c0_29] : memref<32x32xf32, #tpu.memory_space<vmem>>, vector<8x32xf32>
    %cst_30 = arith.constant dense<0.000000e+00> : vector<8x32xf32>
    %62 = tpu.matmul %60, %61, %cst_30 {dimension_numbers = #tpu.dot_dimension_numbers<[1], [0], [0], [1], [0, 0, 1, 1], [], []>} : vector<8x8xf32>, vector<8x32xf32>, vector<8x32xf32> -> vector<8x32xf32>
    %63 = arith.addf %43, %62 : vector<8x32xf32>
    %64 = vector.extract_strided_slice %42 {offsets = [0, 8], sizes = [8, 8], strides = [1, 1]} : vector<8x96xf32> to vector<8x8xf32>
    %65 = vector.extract_strided_slice %42 {offsets = [0, 40], sizes = [8, 8], strides = [1, 1]} : vector<8x96xf32> to vector<8x8xf32>
    %66 = vector.extract_strided_slice %42 {offsets = [0, 72], sizes = [8, 8], strides = [1, 1]} : vector<8x96xf32> to vector<8x8xf32>
    %cst_31 = arith.constant dense<0.000000e+00> : vector<8x8xf32>
    %67 = tpu.matmul %64, %65, %cst_31 {dimension_numbers = #tpu.dot_dimension_numbers<[1], [1], [0], [0], [0, 0, 1, 0], [], []>} : vector<8x8xf32>, vector<8x8xf32>, vector<8x8xf32> -> vector<8x8xf32>
    %cst_32 = arith.constant -3.40282347E+38 : f32
    %68 = vector.broadcast %cst_32 : f32 to vector<8x8xf32>
    %69 = arith.select %35, %67, %68 : vector<8x8xi1>, vector<8x8xf32>
    %cst_33 = arith.constant dense<0xFF800000> : vector<8xf32>
    %70 = vector.multi_reduction <maximumf>, %69, %cst_33 [1] : vector<8x8xf32> to vector<8xf32>
    %71 = vector.shape_cast %70 : vector<8xf32> to vector<8x1xf32>
    %72 = vector.broadcast %71 : vector<8x1xf32> to vector<8x8xf32>
    %73 = arith.subf %69, %72 : vector<8x8xf32>
    %74 = math.exp %73 : vector<8x8xf32>
    %cst_34 = arith.constant dense<0.000000e+00> : vector<8xf32>
    %75 = vector.multi_reduction <add>, %74, %cst_34 [1] : vector<8x8xf32> to vector<8xf32>
    %76 = vector.shape_cast %75 : vector<8xf32> to vector<8x1xf32>
    %77 = tpu.reciprocal %76 {approx = true} : vector<8x1xf32> -> vector<8x1xf32>
    %78 = vector.broadcast %77 : vector<8x1xf32> to vector<8x8xf32>
    %79 = arith.mulf %74, %78 : vector<8x8xf32>
    %cst_35 = arith.constant dense<0.000000e+00> : vector<8x8xf32>
    %80 = tpu.matmul %79, %66, %cst_35 {dimension_numbers = #tpu.dot_dimension_numbers<[1], [0], [0], [1], [0, 0, 1, 1], [], []>} : vector<8x8xf32>, vector<8x8xf32>, vector<8x8xf32> -> vector<8x8xf32>
    %c8 = arith.constant 8 : index
    %c0_36 = arith.constant 0 : index
    %81 = vector.load %arg12[%c8, %c0_36] : memref<32x32xf32, #tpu.memory_space<vmem>>, vector<8x32xf32>
    %cst_37 = arith.constant dense<0.000000e+00> : vector<8x32xf32>
    %82 = tpu.matmul %80, %81, %cst_37 {dimension_numbers = #tpu.dot_dimension_numbers<[1], [0], [0], [1], [0, 0, 1, 1], [], []>} : vector<8x8xf32>, vector<8x32xf32>, vector<8x32xf32> -> vector<8x32xf32>
    %83 = arith.addf %63, %82 : vector<8x32xf32>
    %84 = vector.extract_strided_slice %42 {offsets = [0, 16], sizes = [8, 8], strides = [1, 1]} : vector<8x96xf32> to vector<8x8xf32>
    %85 = vector.extract_strided_slice %42 {offsets = [0, 48], sizes = [8, 8], strides = [1, 1]} : vector<8x96xf32> to vector<8x8xf32>
    %86 = vector.extract_strided_slice %42 {offsets = [0, 80], sizes = [8, 8], strides = [1, 1]} : vector<8x96xf32> to vector<8x8xf32>
    %cst_38 = arith.constant dense<0.000000e+00> : vector<8x8xf32>
    %87 = tpu.matmul %84, %85, %cst_38 {dimension_numbers = #tpu.dot_dimension_numbers<[1], [1], [0], [0], [0, 0, 1, 0], [], []>} : vector<8x8xf32>, vector<8x8xf32>, vector<8x8xf32> -> vector<8x8xf32>
    %cst_39 = arith.constant -3.40282347E+38 : f32
    %88 = vector.broadcast %cst_39 : f32 to vector<8x8xf32>
    %89 = arith.select %35, %87, %88 : vector<8x8xi1>, vector<8x8xf32>
    %cst_40 = arith.constant dense<0xFF800000> : vector<8xf32>
    %90 = vector.multi_reduction <maximumf>, %89, %cst_40 [1] : vector<8x8xf32> to vector<8xf32>
    %91 = vector.shape_cast %90 : vector<8xf32> to vector<8x1xf32>
    %92 = vector.broadcast %91 : vector<8x1xf32> to vector<8x8xf32>
    %93 = arith.subf %89, %92 : vector<8x8xf32>
    %94 = math.exp %93 : vector<8x8xf32>
    %cst_41 = arith.constant dense<0.000000e+00> : vector<8xf32>
    %95 = vector.multi_reduction <add>, %94, %cst_41 [1] : vector<8x8xf32> to vector<8xf32>
    %96 = vector.shape_cast %95 : vector<8xf32> to vector<8x1xf32>
    %97 = tpu.reciprocal %96 {approx = true} : vector<8x1xf32> -> vector<8x1xf32>
    %98 = vector.broadcast %97 : vector<8x1xf32> to vector<8x8xf32>
    %99 = arith.mulf %94, %98 : vector<8x8xf32>
    %cst_42 = arith.constant dense<0.000000e+00> : vector<8x8xf32>
    %100 = tpu.matmul %99, %86, %cst_42 {dimension_numbers = #tpu.dot_dimension_numbers<[1], [0], [0], [1], [0, 0, 1, 1], [], []>} : vector<8x8xf32>, vector<8x8xf32>, vector<8x8xf32> -> vector<8x8xf32>
    %c16 = arith.constant 16 : index
    %c0_43 = arith.constant 0 : index
    %101 = vector.load %arg12[%c16, %c0_43] : memref<32x32xf32, #tpu.memory_space<vmem>>, vector<8x32xf32>
    %cst_44 = arith.constant dense<0.000000e+00> : vector<8x32xf32>
    %102 = tpu.matmul %100, %101, %cst_44 {dimension_numbers = #tpu.dot_dimension_numbers<[1], [0], [0], [1], [0, 0, 1, 1], [], []>} : vector<8x8xf32>, vector<8x32xf32>, vector<8x32xf32> -> vector<8x32xf32>
    %103 = arith.addf %83, %102 : vector<8x32xf32>
    %104 = vector.extract_strided_slice %42 {offsets = [0, 24], sizes = [8, 8], strides = [1, 1]} : vector<8x96xf32> to vector<8x8xf32>
    %105 = vector.extract_strided_slice %42 {offsets = [0, 56], sizes = [8, 8], strides = [1, 1]} : vector<8x96xf32> to vector<8x8xf32>
    %106 = vector.extract_strided_slice %42 {offsets = [0, 88], sizes = [8, 8], strides = [1, 1]} : vector<8x96xf32> to vector<8x8xf32>
    %cst_45 = arith.constant dense<0.000000e+00> : vector<8x8xf32>
    %107 = tpu.matmul %104, %105, %cst_45 {dimension_numbers = #tpu.dot_dimension_numbers<[1], [1], [0], [0], [0, 0, 1, 0], [], []>} : vector<8x8xf32>, vector<8x8xf32>, vector<8x8xf32> -> vector<8x8xf32>
    %cst_46 = arith.constant -3.40282347E+38 : f32
    %108 = vector.broadcast %cst_46 : f32 to vector<8x8xf32>
    %109 = arith.select %35, %107, %108 : vector<8x8xi1>, vector<8x8xf32>
    %cst_47 = arith.constant dense<0xFF800000> : vector<8xf32>
    %110 = vector.multi_reduction <maximumf>, %109, %cst_47 [1] : vector<8x8xf32> to vector<8xf32>
    %111 = vector.shape_cast %110 : vector<8xf32> to vector<8x1xf32>
    %112 = vector.broadcast %111 : vector<8x1xf32> to vector<8x8xf32>
    %113 = arith.subf %109, %112 : vector<8x8xf32>
    %114 = math.exp %113 : vector<8x8xf32>
    %cst_48 = arith.constant dense<0.000000e+00> : vector<8xf32>
    %115 = vector.multi_reduction <add>, %114, %cst_48 [1] : vector<8x8xf32> to vector<8xf32>
    %116 = vector.shape_cast %115 : vector<8xf32> to vector<8x1xf32>
    %117 = tpu.reciprocal %116 {approx = true} : vector<8x1xf32> -> vector<8x1xf32>
    %118 = vector.broadcast %117 : vector<8x1xf32> to vector<8x8xf32>
    %119 = arith.mulf %114, %118 : vector<8x8xf32>
    %cst_49 = arith.constant dense<0.000000e+00> : vector<8x8xf32>
    %120 = tpu.matmul %119, %106, %cst_49 {dimension_numbers = #tpu.dot_dimension_numbers<[1], [0], [0], [1], [0, 0, 1, 1], [], []>} : vector<8x8xf32>, vector<8x8xf32>, vector<8x8xf32> -> vector<8x8xf32>
    %c24 = arith.constant 24 : index
    %c0_50 = arith.constant 0 : index
    %121 = vector.load %arg12[%c24, %c0_50] : memref<32x32xf32, #tpu.memory_space<vmem>>, vector<8x32xf32>
    %cst_51 = arith.constant dense<0.000000e+00> : vector<8x32xf32>
    %122 = tpu.matmul %120, %121, %cst_51 {dimension_numbers = #tpu.dot_dimension_numbers<[1], [0], [0], [1], [0, 0, 1, 1], [], []>} : vector<8x8xf32>, vector<8x32xf32>, vector<8x32xf32> -> vector<8x32xf32>
    %123 = arith.addf %103, %122 : vector<8x32xf32>
    %c0_52 = arith.constant 0 : index
    %c0_53 = arith.constant 0 : index
    %124 = vector.load %arg13[%c0_52, %c0_53] : memref<1x32xf32, #tpu.memory_space<vmem>>, vector<1x32xf32>
    %125 = vector.shape_cast %124 : vector<1x32xf32> to vector<32xf32>
    %126 = vector.shape_cast %125 : vector<32xf32> to vector<1x32xf32>
    %127 = vector.broadcast %126 : vector<1x32xf32> to vector<8x32xf32>
    %128 = arith.addf %123, %127 : vector<8x32xf32>
    %c0_54 = arith.constant 0 : index
    %c0_55 = arith.constant 0 : index
    %c0_56 = arith.constant 0 : index
    %129 = vector.load %arg6[%c0_54, %c0_55, %c0_56] : memref<1x8x9xf32, #tpu.memory_space<vmem>>, vector<1x8x9xf32>
    %130 = vector.shape_cast %129 : vector<1x8x9xf32> to vector<8x9xf32>
    %c0_57 = arith.constant 0 : index
    %c0_58 = arith.constant 0 : index
    %c0_59 = arith.constant 0 : index
    %131 = vector.load %arg7[%c0_57, %c0_58, %c0_59] : memref<1x8x3xf32, #tpu.memory_space<vmem>>, vector<1x8x3xf32>
    %132 = vector.shape_cast %131 : vector<1x8x3xf32> to vector<8x3xf32>
    %c0_60 = arith.constant 0 : index
    %c0_61 = arith.constant 0 : index
    %133 = vector.load %arg14[%c0_60, %c0_61] : memref<32x240xf32, #tpu.memory_space<vmem>>, vector<32x240xf32>
    %cst_62 = arith.constant dense<0.000000e+00> : vector<8x240xf32>
    %134 = tpu.matmul %31, %133, %cst_62 {dimension_numbers = #tpu.dot_dimension_numbers<[1], [0], [0], [1], [0, 0, 1, 1], [], []>} : vector<8x32xf32>, vector<32x240xf32>, vector<8x240xf32> -> vector<8x240xf32>
    %135 = vector.extract_strided_slice %134 {offsets = [0, 0], sizes = [8, 32], strides = [1, 1]} : vector<8x240xf32> to vector<8x32xf32>
    %136 = vector.extract_strided_slice %134 {offsets = [0, 32], sizes = [8, 32], strides = [1, 1]} : vector<8x240xf32> to vector<8x32xf32>
    %137 = vector.extract_strided_slice %134 {offsets = [0, 64], sizes = [8, 32], strides = [1, 1]} : vector<8x240xf32> to vector<8x32xf32>
    %138 = vector.extract_strided_slice %134 {offsets = [0, 96], sizes = [8, 16], strides = [1, 1]} : vector<8x240xf32> to vector<8x16xf32>
    %139 = vector.extract_strided_slice %134 {offsets = [0, 112], sizes = [8, 16], strides = [1, 1]} : vector<8x240xf32> to vector<8x16xf32>
    %140 = vector.extract_strided_slice %134 {offsets = [0, 128], sizes = [8, 16], strides = [1, 1]} : vector<8x240xf32> to vector<8x16xf32>
    %141 = vector.extract_strided_slice %130 {offsets = [0, 0], sizes = [8, 1], strides = [1, 1]} : vector<8x9xf32> to vector<8x1xf32>
    %142 = vector.broadcast %141 : vector<8x1xf32> to vector<8x16xf32>
    %143 = arith.mulf %138, %142 : vector<8x16xf32>
    %144 = vector.extract_strided_slice %130 {offsets = [0, 3], sizes = [8, 1], strides = [1, 1]} : vector<8x9xf32> to vector<8x1xf32>
    %145 = vector.broadcast %144 : vector<8x1xf32> to vector<8x16xf32>
    %146 = arith.mulf %139, %145 : vector<8x16xf32>
    %147 = arith.addf %143, %146 : vector<8x16xf32>
    %148 = vector.extract_strided_slice %130 {offsets = [0, 6], sizes = [8, 1], strides = [1, 1]} : vector<8x9xf32> to vector<8x1xf32>
    %149 = vector.broadcast %148 : vector<8x1xf32> to vector<8x16xf32>
    %150 = arith.mulf %140, %149 : vector<8x16xf32>
    %151 = arith.addf %147, %150 : vector<8x16xf32>
    %152 = vector.extract_strided_slice %132 {offsets = [0, 0], sizes = [8, 1], strides = [1, 1]} : vector<8x3xf32> to vector<8x1xf32>
    %153 = vector.broadcast %152 : vector<8x1xf32> to vector<8x16xf32>
    %154 = arith.addf %151, %153 : vector<8x16xf32>
    %155 = vector.extract_strided_slice %130 {offsets = [0, 1], sizes = [8, 1], strides = [1, 1]} : vector<8x9xf32> to vector<8x1xf32>
    %156 = vector.broadcast %155 : vector<8x1xf32> to vector<8x16xf32>
    %157 = arith.mulf %138, %156 : vector<8x16xf32>
    %158 = vector.extract_strided_slice %130 {offsets = [0, 4], sizes = [8, 1], strides = [1, 1]} : vector<8x9xf32> to vector<8x1xf32>
    %159 = vector.broadcast %158 : vector<8x1xf32> to vector<8x16xf32>
    %160 = arith.mulf %139, %159 : vector<8x16xf32>
    %161 = arith.addf %157, %160 : vector<8x16xf32>
    %162 = vector.extract_strided_slice %130 {offsets = [0, 7], sizes = [8, 1], strides = [1, 1]} : vector<8x9xf32> to vector<8x1xf32>
    %163 = vector.broadcast %162 : vector<8x1xf32> to vector<8x16xf32>
    %164 = arith.mulf %140, %163 : vector<8x16xf32>
    %165 = arith.addf %161, %164 : vector<8x16xf32>
    %166 = vector.extract_strided_slice %132 {offsets = [0, 1], sizes = [8, 1], strides = [1, 1]} : vector<8x3xf32> to vector<8x1xf32>
    %167 = vector.broadcast %166 : vector<8x1xf32> to vector<8x16xf32>
    %168 = arith.addf %165, %167 : vector<8x16xf32>
    %169 = vector.extract_strided_slice %130 {offsets = [0, 2], sizes = [8, 1], strides = [1, 1]} : vector<8x9xf32> to vector<8x1xf32>
    %170 = vector.broadcast %169 : vector<8x1xf32> to vector<8x16xf32>
    %171 = arith.mulf %138, %170 : vector<8x16xf32>
    %172 = vector.extract_strided_slice %130 {offsets = [0, 5], sizes = [8, 1], strides = [1, 1]} : vector<8x9xf32> to vector<8x1xf32>
    %173 = vector.broadcast %172 : vector<8x1xf32> to vector<8x16xf32>
    %174 = arith.mulf %139, %173 : vector<8x16xf32>
    %175 = arith.addf %171, %174 : vector<8x16xf32>
    %176 = vector.extract_strided_slice %130 {offsets = [0, 8], sizes = [8, 1], strides = [1, 1]} : vector<8x9xf32> to vector<8x1xf32>
    %177 = vector.broadcast %176 : vector<8x1xf32> to vector<8x16xf32>
    %178 = arith.mulf %140, %177 : vector<8x16xf32>
    %179 = arith.addf %175, %178 : vector<8x16xf32>
    %180 = vector.extract_strided_slice %132 {offsets = [0, 2], sizes = [8, 1], strides = [1, 1]} : vector<8x3xf32> to vector<8x1xf32>
    %181 = vector.broadcast %180 : vector<8x1xf32> to vector<8x16xf32>
    %182 = arith.addf %179, %181 : vector<8x16xf32>
    %183 = vector.extract_strided_slice %134 {offsets = [0, 144], sizes = [8, 16], strides = [1, 1]} : vector<8x240xf32> to vector<8x16xf32>
    %184 = vector.extract_strided_slice %134 {offsets = [0, 160], sizes = [8, 16], strides = [1, 1]} : vector<8x240xf32> to vector<8x16xf32>
    %185 = vector.extract_strided_slice %134 {offsets = [0, 176], sizes = [8, 16], strides = [1, 1]} : vector<8x240xf32> to vector<8x16xf32>
    %186 = vector.extract_strided_slice %130 {offsets = [0, 0], sizes = [8, 1], strides = [1, 1]} : vector<8x9xf32> to vector<8x1xf32>
    %187 = vector.broadcast %186 : vector<8x1xf32> to vector<8x16xf32>
    %188 = arith.mulf %183, %187 : vector<8x16xf32>
    %189 = vector.extract_strided_slice %130 {offsets = [0, 3], sizes = [8, 1], strides = [1, 1]} : vector<8x9xf32> to vector<8x1xf32>
    %190 = vector.broadcast %189 : vector<8x1xf32> to vector<8x16xf32>
    %191 = arith.mulf %184, %190 : vector<8x16xf32>
    %192 = arith.addf %188, %191 : vector<8x16xf32>
    %193 = vector.extract_strided_slice %130 {offsets = [0, 6], sizes = [8, 1], strides = [1, 1]} : vector<8x9xf32> to vector<8x1xf32>
    %194 = vector.broadcast %193 : vector<8x1xf32> to vector<8x16xf32>
    %195 = arith.mulf %185, %194 : vector<8x16xf32>
    %196 = arith.addf %192, %195 : vector<8x16xf32>
    %197 = vector.extract_strided_slice %132 {offsets = [0, 0], sizes = [8, 1], strides = [1, 1]} : vector<8x3xf32> to vector<8x1xf32>
    %198 = vector.broadcast %197 : vector<8x1xf32> to vector<8x16xf32>
    %199 = arith.addf %196, %198 : vector<8x16xf32>
    %200 = vector.extract_strided_slice %130 {offsets = [0, 1], sizes = [8, 1], strides = [1, 1]} : vector<8x9xf32> to vector<8x1xf32>
    %201 = vector.broadcast %200 : vector<8x1xf32> to vector<8x16xf32>
    %202 = arith.mulf %183, %201 : vector<8x16xf32>
    %203 = vector.extract_strided_slice %130 {offsets = [0, 4], sizes = [8, 1], strides = [1, 1]} : vector<8x9xf32> to vector<8x1xf32>
    %204 = vector.broadcast %203 : vector<8x1xf32> to vector<8x16xf32>
    %205 = arith.mulf %184, %204 : vector<8x16xf32>
    %206 = arith.addf %202, %205 : vector<8x16xf32>
    %207 = vector.extract_strided_slice %130 {offsets = [0, 7], sizes = [8, 1], strides = [1, 1]} : vector<8x9xf32> to vector<8x1xf32>
    %208 = vector.broadcast %207 : vector<8x1xf32> to vector<8x16xf32>
    %209 = arith.mulf %185, %208 : vector<8x16xf32>
    %210 = arith.addf %206, %209 : vector<8x16xf32>
    %211 = vector.extract_strided_slice %132 {offsets = [0, 1], sizes = [8, 1], strides = [1, 1]} : vector<8x3xf32> to vector<8x1xf32>
    %212 = vector.broadcast %211 : vector<8x1xf32> to vector<8x16xf32>
    %213 = arith.addf %210, %212 : vector<8x16xf32>
    %214 = vector.extract_strided_slice %130 {offsets = [0, 2], sizes = [8, 1], strides = [1, 1]} : vector<8x9xf32> to vector<8x1xf32>
    %215 = vector.broadcast %214 : vector<8x1xf32> to vector<8x16xf32>
    %216 = arith.mulf %183, %215 : vector<8x16xf32>
    %217 = vector.extract_strided_slice %130 {offsets = [0, 5], sizes = [8, 1], strides = [1, 1]} : vector<8x9xf32> to vector<8x1xf32>
    %218 = vector.broadcast %217 : vector<8x1xf32> to vector<8x16xf32>
    %219 = arith.mulf %184, %218 : vector<8x16xf32>
    %220 = arith.addf %216, %219 : vector<8x16xf32>
    %221 = vector.extract_strided_slice %130 {offsets = [0, 8], sizes = [8, 1], strides = [1, 1]} : vector<8x9xf32> to vector<8x1xf32>
    %222 = vector.broadcast %221 : vector<8x1xf32> to vector<8x16xf32>
    %223 = arith.mulf %185, %222 : vector<8x16xf32>
    %224 = arith.addf %220, %223 : vector<8x16xf32>
    %225 = vector.extract_strided_slice %132 {offsets = [0, 2], sizes = [8, 1], strides = [1, 1]} : vector<8x3xf32> to vector<8x1xf32>
    %226 = vector.broadcast %225 : vector<8x1xf32> to vector<8x16xf32>
    %227 = arith.addf %224, %226 : vector<8x16xf32>
    %228 = vector.extract_strided_slice %134 {offsets = [0, 192], sizes = [8, 16], strides = [1, 1]} : vector<8x240xf32> to vector<8x16xf32>
    %229 = vector.extract_strided_slice %134 {offsets = [0, 208], sizes = [8, 16], strides = [1, 1]} : vector<8x240xf32> to vector<8x16xf32>
    %230 = vector.extract_strided_slice %134 {offsets = [0, 224], sizes = [8, 16], strides = [1, 1]} : vector<8x240xf32> to vector<8x16xf32>
    %231 = vector.extract_strided_slice %130 {offsets = [0, 0], sizes = [8, 1], strides = [1, 1]} : vector<8x9xf32> to vector<8x1xf32>
    %232 = vector.broadcast %231 : vector<8x1xf32> to vector<8x16xf32>
    %233 = arith.mulf %228, %232 : vector<8x16xf32>
    %234 = vector.extract_strided_slice %130 {offsets = [0, 3], sizes = [8, 1], strides = [1, 1]} : vector<8x9xf32> to vector<8x1xf32>
    %235 = vector.broadcast %234 : vector<8x1xf32> to vector<8x16xf32>
    %236 = arith.mulf %229, %235 : vector<8x16xf32>
    %237 = arith.addf %233, %236 : vector<8x16xf32>
    %238 = vector.extract_strided_slice %130 {offsets = [0, 6], sizes = [8, 1], strides = [1, 1]} : vector<8x9xf32> to vector<8x1xf32>
    %239 = vector.broadcast %238 : vector<8x1xf32> to vector<8x16xf32>
    %240 = arith.mulf %230, %239 : vector<8x16xf32>
    %241 = arith.addf %237, %240 : vector<8x16xf32>
    %242 = vector.extract_strided_slice %132 {offsets = [0, 0], sizes = [8, 1], strides = [1, 1]} : vector<8x3xf32> to vector<8x1xf32>
    %243 = vector.broadcast %242 : vector<8x1xf32> to vector<8x16xf32>
    %244 = arith.addf %241, %243 : vector<8x16xf32>
    %245 = vector.extract_strided_slice %130 {offsets = [0, 1], sizes = [8, 1], strides = [1, 1]} : vector<8x9xf32> to vector<8x1xf32>
    %246 = vector.broadcast %245 : vector<8x1xf32> to vector<8x16xf32>
    %247 = arith.mulf %228, %246 : vector<8x16xf32>
    %248 = vector.extract_strided_slice %130 {offsets = [0, 4], sizes = [8, 1], strides = [1, 1]} : vector<8x9xf32> to vector<8x1xf32>
    %249 = vector.broadcast %248 : vector<8x1xf32> to vector<8x16xf32>
    %250 = arith.mulf %229, %249 : vector<8x16xf32>
    %251 = arith.addf %247, %250 : vector<8x16xf32>
    %252 = vector.extract_strided_slice %130 {offsets = [0, 7], sizes = [8, 1], strides = [1, 1]} : vector<8x9xf32> to vector<8x1xf32>
    %253 = vector.broadcast %252 : vector<8x1xf32> to vector<8x16xf32>
    %254 = arith.mulf %230, %253 : vector<8x16xf32>
    %255 = arith.addf %251, %254 : vector<8x16xf32>
    %256 = vector.extract_strided_slice %132 {offsets = [0, 1], sizes = [8, 1], strides = [1, 1]} : vector<8x3xf32> to vector<8x1xf32>
    %257 = vector.broadcast %256 : vector<8x1xf32> to vector<8x16xf32>
    %258 = arith.addf %255, %257 : vector<8x16xf32>
    %259 = vector.extract_strided_slice %130 {offsets = [0, 2], sizes = [8, 1], strides = [1, 1]} : vector<8x9xf32> to vector<8x1xf32>
    %260 = vector.broadcast %259 : vector<8x1xf32> to vector<8x16xf32>
    %261 = arith.mulf %228, %260 : vector<8x16xf32>
    %262 = vector.extract_strided_slice %130 {offsets = [0, 5], sizes = [8, 1], strides = [1, 1]} : vector<8x9xf32> to vector<8x1xf32>
    %263 = vector.broadcast %262 : vector<8x1xf32> to vector<8x16xf32>
    %264 = arith.mulf %229, %263 : vector<8x16xf32>
    %265 = arith.addf %261, %264 : vector<8x16xf32>
    %266 = vector.extract_strided_slice %130 {offsets = [0, 8], sizes = [8, 1], strides = [1, 1]} : vector<8x9xf32> to vector<8x1xf32>
    %267 = vector.broadcast %266 : vector<8x1xf32> to vector<8x16xf32>
    %268 = arith.mulf %230, %267 : vector<8x16xf32>
    %269 = arith.addf %265, %268 : vector<8x16xf32>
    %270 = vector.extract_strided_slice %132 {offsets = [0, 2], sizes = [8, 1], strides = [1, 1]} : vector<8x3xf32> to vector<8x1xf32>
    %271 = vector.broadcast %270 : vector<8x1xf32> to vector<8x16xf32>
    %272 = arith.addf %269, %271 : vector<8x16xf32>
    %c0_63 = arith.constant 0 : index
    %c0_64 = arith.constant 0 : index
    %273 = vector.load %arg16[%c0_63, %c0_64] : memref<128x32xf32, #tpu.memory_space<vmem>>, vector<128x32xf32>
    %cst_65 = arith.constant dense<0.000000e+00> : vector<8x32xf32>
    %274 = tpu.matmul %3, %273, %cst_65 {dimension_numbers = #tpu.dot_dimension_numbers<[1], [0], [0], [1], [0, 0, 1, 1], [], []>} : vector<8x128xf32>, vector<128x32xf32>, vector<8x32xf32> -> vector<8x32xf32>
    %c0_66 = arith.constant 0 : index
    %c0_67 = arith.constant 0 : index
    %275 = vector.load %arg15[%c0_66, %c0_67] : memref<1x4xf32, #tpu.memory_space<vmem>>, vector<1x4xf32>
    %c0_68 = arith.constant 0 : index
    %c0_69 = arith.constant 0 : index
    %276 = vector.load %arg17[%c0_68, %c0_69] : memref<1x4xf32, #tpu.memory_space<vmem>>, vector<1x4xf32>
    %c0_70 = arith.constant 0 : index
    %c0_71 = arith.constant 0 : index
    %c0_72 = arith.constant 0 : index
    %277 = vector.load %arg4[%c0_70, %c0_71, %c0_72] : memref<1x8x8xf32, #tpu.memory_space<vmem>>, vector<1x8x8xf32>
    %278 = vector.shape_cast %277 : vector<1x8x8xf32> to vector<8x8xf32>
    %cst_73 = arith.constant 5.000000e-01 : f32
    %279 = vector.broadcast %cst_73 : f32 to vector<8x8xf32>
    %280 = arith.cmpf ogt, %278, %279 : vector<8x8xf32>
    %cst_74 = arith.constant 0.000000e+00 : f32
    %281 = vector.broadcast %cst_74 : f32 to vector<8x32xf32>
    %282 = vector.extract_strided_slice %135 {offsets = [0, 0], sizes = [8, 8], strides = [1, 1]} : vector<8x32xf32> to vector<8x8xf32>
    %283 = vector.extract_strided_slice %136 {offsets = [0, 0], sizes = [8, 8], strides = [1, 1]} : vector<8x32xf32> to vector<8x8xf32>
    %cst_75 = arith.constant dense<0.000000e+00> : vector<8x8xf32>
    %284 = tpu.matmul %282, %283, %cst_75 {dimension_numbers = #tpu.dot_dimension_numbers<[1], [1], [0], [0], [0, 0, 1, 0], [], []>} : vector<8x8xf32>, vector<8x8xf32>, vector<8x8xf32> -> vector<8x8xf32>
    %285 = vector.extract_strided_slice %154 {offsets = [0, 0], sizes = [8, 4], strides = [1, 1]} : vector<8x16xf32> to vector<8x4xf32>
    %286 = vector.extract_strided_slice %199 {offsets = [0, 0], sizes = [8, 4], strides = [1, 1]} : vector<8x16xf32> to vector<8x4xf32>
    %287 = vector.shape_cast %285 : vector<8x4xf32> to vector<8x1x4xf32>
    %288 = vector.shape_cast %286 : vector<8x4xf32> to vector<1x8x4xf32>
    %289 = vector.broadcast %287 : vector<8x1x4xf32> to vector<8x8x4xf32>
    %290 = vector.broadcast %288 : vector<1x8x4xf32> to vector<8x8x4xf32>
    %291 = arith.subf %289, %290 : vector<8x8x4xf32>
    %292 = arith.mulf %291, %291 : vector<8x8x4xf32>
    %cst_76 = arith.constant dense<0.000000e+00> : vector<8x8xf32>
    %293 = vector.multi_reduction <add>, %292, %cst_76 [2] : vector<8x8x4xf32> to vector<8x8xf32>
    %294 = vector.extract_strided_slice %168 {offsets = [0, 0], sizes = [8, 4], strides = [1, 1]} : vector<8x16xf32> to vector<8x4xf32>
    %295 = vector.extract_strided_slice %213 {offsets = [0, 0], sizes = [8, 4], strides = [1, 1]} : vector<8x16xf32> to vector<8x4xf32>
    %296 = vector.shape_cast %294 : vector<8x4xf32> to vector<8x1x4xf32>
    %297 = vector.shape_cast %295 : vector<8x4xf32> to vector<1x8x4xf32>
    %298 = vector.broadcast %296 : vector<8x1x4xf32> to vector<8x8x4xf32>
    %299 = vector.broadcast %297 : vector<1x8x4xf32> to vector<8x8x4xf32>
    %300 = arith.subf %298, %299 : vector<8x8x4xf32>
    %301 = arith.mulf %300, %300 : vector<8x8x4xf32>
    %cst_77 = arith.constant dense<0.000000e+00> : vector<8x8xf32>
    %302 = vector.multi_reduction <add>, %301, %cst_77 [2] : vector<8x8x4xf32> to vector<8x8xf32>
    %303 = arith.addf %293, %302 : vector<8x8xf32>
    %304 = vector.extract_strided_slice %182 {offsets = [0, 0], sizes = [8, 4], strides = [1, 1]} : vector<8x16xf32> to vector<8x4xf32>
    %305 = vector.extract_strided_slice %227 {offsets = [0, 0], sizes = [8, 4], strides = [1, 1]} : vector<8x16xf32> to vector<8x4xf32>
    %306 = vector.shape_cast %304 : vector<8x4xf32> to vector<8x1x4xf32>
    %307 = vector.shape_cast %305 : vector<8x4xf32> to vector<1x8x4xf32>
    %308 = vector.broadcast %306 : vector<8x1x4xf32> to vector<8x8x4xf32>
    %309 = vector.broadcast %307 : vector<1x8x4xf32> to vector<8x8x4xf32>
    %310 = arith.subf %308, %309 : vector<8x8x4xf32>
    %311 = arith.mulf %310, %310 : vector<8x8x4xf32>
    %cst_78 = arith.constant dense<0.000000e+00> : vector<8x8xf32>
    %312 = vector.multi_reduction <add>, %311, %cst_78 [2] : vector<8x8x4xf32> to vector<8x8xf32>
    %313 = arith.addf %303, %312 : vector<8x8xf32>
    %314 = vector.extract_strided_slice %275 {offsets = [0, 0], sizes = [1, 1], strides = [1, 1]} : vector<1x4xf32> to vector<1x1xf32>
    %315 = vector.broadcast %314 : vector<1x1xf32> to vector<8x8xf32>
    %316 = arith.mulf %315, %313 : vector<8x8xf32>
    %317 = arith.addf %284, %316 : vector<8x8xf32>
    %318 = vector.extract_strided_slice %274 {offsets = [0, 0], sizes = [8, 8], strides = [1, 1]} : vector<8x32xf32> to vector<8x8xf32>
    %319 = arith.addf %317, %318 : vector<8x8xf32>
    %320 = vector.extract_strided_slice %276 {offsets = [0, 0], sizes = [1, 1], strides = [1, 1]} : vector<1x4xf32> to vector<1x1xf32>
    %321 = vector.broadcast %320 : vector<1x1xf32> to vector<8x8xf32>
    %322 = arith.addf %319, %321 : vector<8x8xf32>
    %cst_79 = arith.constant -3.40282347E+38 : f32
    %323 = vector.broadcast %cst_79 : f32 to vector<8x8xf32>
    %324 = arith.select %280, %322, %323 : vector<8x8xi1>, vector<8x8xf32>
    %cst_80 = arith.constant dense<0xFF800000> : vector<8xf32>
    %325 = vector.multi_reduction <maximumf>, %324, %cst_80 [1] : vector<8x8xf32> to vector<8xf32>
    %326 = vector.shape_cast %325 : vector<8xf32> to vector<8x1xf32>
    %327 = vector.broadcast %326 : vector<8x1xf32> to vector<8x8xf32>
    %328 = arith.subf %324, %327 : vector<8x8xf32>
    %329 = math.exp %328 : vector<8x8xf32>
    %cst_81 = arith.constant dense<0.000000e+00> : vector<8xf32>
    %330 = vector.multi_reduction <add>, %329, %cst_81 [1] : vector<8x8xf32> to vector<8xf32>
    %331 = vector.shape_cast %330 : vector<8xf32> to vector<8x1xf32>
    %332 = tpu.reciprocal %331 {approx = true} : vector<8x1xf32> -> vector<8x1xf32>
    %333 = vector.broadcast %332 : vector<8x1xf32> to vector<8x8xf32>
    %334 = arith.mulf %329, %333 : vector<8x8xf32>
    %335 = vector.extract_strided_slice %137 {offsets = [0, 0], sizes = [8, 8], strides = [1, 1]} : vector<8x32xf32> to vector<8x8xf32>
    %cst_82 = arith.constant dense<0.000000e+00> : vector<8x8xf32>
    %336 = tpu.matmul %334, %335, %cst_82 {dimension_numbers = #tpu.dot_dimension_numbers<[1], [0], [0], [1], [0, 0, 1, 1], [], []>} : vector<8x8xf32>, vector<8x8xf32>, vector<8x8xf32> -> vector<8x8xf32>
    %337 = vector.extract_strided_slice %244 {offsets = [0, 0], sizes = [8, 4], strides = [1, 1]} : vector<8x16xf32> to vector<8x4xf32>
    %cst_83 = arith.constant dense<0.000000e+00> : vector<8x4xf32>
    %338 = tpu.matmul %334, %337, %cst_83 {dimension_numbers = #tpu.dot_dimension_numbers<[1], [0], [0], [1], [0, 0, 1, 1], [], []>} : vector<8x8xf32>, vector<8x4xf32>, vector<8x4xf32> -> vector<8x4xf32>
    %339 = vector.extract_strided_slice %132 {offsets = [0, 0], sizes = [8, 1], strides = [1, 1]} : vector<8x3xf32> to vector<8x1xf32>
    %340 = vector.broadcast %339 : vector<8x1xf32> to vector<8x4xf32>
    %341 = arith.subf %338, %340 : vector<8x4xf32>
    %342 = vector.extract_strided_slice %258 {offsets = [0, 0], sizes = [8, 4], strides = [1, 1]} : vector<8x16xf32> to vector<8x4xf32>
    %cst_84 = arith.constant dense<0.000000e+00> : vector<8x4xf32>
    %343 = tpu.matmul %334, %342, %cst_84 {dimension_numbers = #tpu.dot_dimension_numbers<[1], [0], [0], [1], [0, 0, 1, 1], [], []>} : vector<8x8xf32>, vector<8x4xf32>, vector<8x4xf32> -> vector<8x4xf32>
    %344 = vector.extract_strided_slice %132 {offsets = [0, 1], sizes = [8, 1], strides = [1, 1]} : vector<8x3xf32> to vector<8x1xf32>
    %345 = vector.broadcast %344 : vector<8x1xf32> to vector<8x4xf32>
    %346 = arith.subf %343, %345 : vector<8x4xf32>
    %347 = vector.extract_strided_slice %272 {offsets = [0, 0], sizes = [8, 4], strides = [1, 1]} : vector<8x16xf32> to vector<8x4xf32>
    %cst_85 = arith.constant dense<0.000000e+00> : vector<8x4xf32>
    %348 = tpu.matmul %334, %347, %cst_85 {dimension_numbers = #tpu.dot_dimension_numbers<[1], [0], [0], [1], [0, 0, 1, 1], [], []>} : vector<8x8xf32>, vector<8x4xf32>, vector<8x4xf32> -> vector<8x4xf32>
    %349 = vector.extract_strided_slice %132 {offsets = [0, 2], sizes = [8, 1], strides = [1, 1]} : vector<8x3xf32> to vector<8x1xf32>
    %350 = vector.broadcast %349 : vector<8x1xf32> to vector<8x4xf32>
    %351 = arith.subf %348, %350 : vector<8x4xf32>
    %352 = vector.extract_strided_slice %130 {offsets = [0, 0], sizes = [8, 1], strides = [1, 1]} : vector<8x9xf32> to vector<8x1xf32>
    %353 = vector.broadcast %352 : vector<8x1xf32> to vector<8x4xf32>
    %354 = arith.mulf %341, %353 : vector<8x4xf32>
    %355 = vector.extract_strided_slice %130 {offsets = [0, 1], sizes = [8, 1], strides = [1, 1]} : vector<8x9xf32> to vector<8x1xf32>
    %356 = vector.broadcast %355 : vector<8x1xf32> to vector<8x4xf32>
    %357 = arith.mulf %346, %356 : vector<8x4xf32>
    %358 = arith.addf %354, %357 : vector<8x4xf32>
    %359 = vector.extract_strided_slice %130 {offsets = [0, 2], sizes = [8, 1], strides = [1, 1]} : vector<8x9xf32> to vector<8x1xf32>
    %360 = vector.broadcast %359 : vector<8x1xf32> to vector<8x4xf32>
    %361 = arith.mulf %351, %360 : vector<8x4xf32>
    %362 = arith.addf %358, %361 : vector<8x4xf32>
    %363 = vector.extract_strided_slice %130 {offsets = [0, 3], sizes = [8, 1], strides = [1, 1]} : vector<8x9xf32> to vector<8x1xf32>
    %364 = vector.broadcast %363 : vector<8x1xf32> to vector<8x4xf32>
    %365 = arith.mulf %341, %364 : vector<8x4xf32>
    %366 = vector.extract_strided_slice %130 {offsets = [0, 4], sizes = [8, 1], strides = [1, 1]} : vector<8x9xf32> to vector<8x1xf32>
    %367 = vector.broadcast %366 : vector<8x1xf32> to vector<8x4xf32>
    %368 = arith.mulf %346, %367 : vector<8x4xf32>
    %369 = arith.addf %365, %368 : vector<8x4xf32>
    %370 = vector.extract_strided_slice %130 {offsets = [0, 5], sizes = [8, 1], strides = [1, 1]} : vector<8x9xf32> to vector<8x1xf32>
    %371 = vector.broadcast %370 : vector<8x1xf32> to vector<8x4xf32>
    %372 = arith.mulf %351, %371 : vector<8x4xf32>
    %373 = arith.addf %369, %372 : vector<8x4xf32>
    %374 = vector.extract_strided_slice %130 {offsets = [0, 6], sizes = [8, 1], strides = [1, 1]} : vector<8x9xf32> to vector<8x1xf32>
    %375 = vector.broadcast %374 : vector<8x1xf32> to vector<8x4xf32>
    %376 = arith.mulf %341, %375 : vector<8x4xf32>
    %377 = vector.extract_strided_slice %130 {offsets = [0, 7], sizes = [8, 1], strides = [1, 1]} : vector<8x9xf32> to vector<8x1xf32>
    %378 = vector.broadcast %377 : vector<8x1xf32> to vector<8x4xf32>
    %379 = arith.mulf %346, %378 : vector<8x4xf32>
    %380 = arith.addf %376, %379 : vector<8x4xf32>
    %381 = vector.extract_strided_slice %130 {offsets = [0, 8], sizes = [8, 1], strides = [1, 1]} : vector<8x9xf32> to vector<8x1xf32>
    %382 = vector.broadcast %381 : vector<8x1xf32> to vector<8x4xf32>
    %383 = arith.mulf %351, %382 : vector<8x4xf32>
    %384 = arith.addf %380, %383 : vector<8x4xf32>
    %385 = arith.mulf %362, %362 : vector<8x4xf32>
    %386 = arith.mulf %373, %373 : vector<8x4xf32>
    %387 = arith.addf %385, %386 : vector<8x4xf32>
    %388 = arith.mulf %384, %384 : vector<8x4xf32>
    %389 = arith.addf %387, %388 : vector<8x4xf32>
    %cst_86 = arith.constant 9.99999993E-9 : f32
    %390 = vector.broadcast %cst_86 : f32 to vector<8x4xf32>
    %391 = arith.addf %389, %390 : vector<8x4xf32>
    %392 = math.sqrt %391 : vector<8x4xf32>
    %c0_87 = arith.constant 0 : index
    %c0_88 = arith.constant 0 : index
    %393 = vector.load %arg18[%c0_87, %c0_88] : memref<8x128xf32, #tpu.memory_space<vmem>>, vector<8x128xf32>
    %cst_89 = arith.constant dense<0.000000e+00> : vector<8x128xf32>
    %394 = tpu.matmul %334, %393, %cst_89 {dimension_numbers = #tpu.dot_dimension_numbers<[1], [0], [0], [1], [0, 0, 1, 1], [], []>} : vector<8x8xf32>, vector<8x128xf32>, vector<8x128xf32> -> vector<8x128xf32>
    %395 = arith.mulf %394, %3 : vector<8x128xf32>
    %c0_90 = arith.constant 0 : index
    %c0_91 = arith.constant 0 : index
    %396 = vector.load %arg19[%c0_90, %c0_91] : memref<128x16xf32, #tpu.memory_space<vmem>>, vector<128x16xf32>
    %cst_92 = arith.constant dense<0.000000e+00> : vector<8x16xf32>
    %397 = tpu.matmul %395, %396, %cst_92 {dimension_numbers = #tpu.dot_dimension_numbers<[1], [0], [0], [1], [0, 0, 1, 1], [], []>} : vector<8x128xf32>, vector<128x16xf32>, vector<8x16xf32> -> vector<8x16xf32>
    %398 = tpu.concatenate %336, %362, %373, %384, %392, %397 in 1 : vector<8x8xf32>, vector<8x4xf32>, vector<8x4xf32>, vector<8x4xf32>, vector<8x4xf32>, vector<8x16xf32> -> vector<8x40xf32>
    %c0_93 = arith.constant 0 : index
    %c0_94 = arith.constant 0 : index
    %399 = vector.load %arg20[%c0_93, %c0_94] : memref<160x32xf32, #tpu.memory_space<vmem>>, vector<40x32xf32>
    %cst_95 = arith.constant dense<0.000000e+00> : vector<8x32xf32>
    %400 = tpu.matmul %398, %399, %cst_95 {dimension_numbers = #tpu.dot_dimension_numbers<[1], [0], [0], [1], [0, 0, 1, 1], [], []>} : vector<8x40xf32>, vector<40x32xf32>, vector<8x32xf32> -> vector<8x32xf32>
    %401 = arith.addf %281, %400 : vector<8x32xf32>
    %402 = vector.extract_strided_slice %135 {offsets = [0, 8], sizes = [8, 8], strides = [1, 1]} : vector<8x32xf32> to vector<8x8xf32>
    %403 = vector.extract_strided_slice %136 {offsets = [0, 8], sizes = [8, 8], strides = [1, 1]} : vector<8x32xf32> to vector<8x8xf32>
    %cst_96 = arith.constant dense<0.000000e+00> : vector<8x8xf32>
    %404 = tpu.matmul %402, %403, %cst_96 {dimension_numbers = #tpu.dot_dimension_numbers<[1], [1], [0], [0], [0, 0, 1, 0], [], []>} : vector<8x8xf32>, vector<8x8xf32>, vector<8x8xf32> -> vector<8x8xf32>
    %405 = vector.extract_strided_slice %154 {offsets = [0, 4], sizes = [8, 4], strides = [1, 1]} : vector<8x16xf32> to vector<8x4xf32>
    %406 = vector.extract_strided_slice %199 {offsets = [0, 4], sizes = [8, 4], strides = [1, 1]} : vector<8x16xf32> to vector<8x4xf32>
    %407 = vector.shape_cast %405 : vector<8x4xf32> to vector<8x1x4xf32>
    %408 = vector.shape_cast %406 : vector<8x4xf32> to vector<1x8x4xf32>
    %409 = vector.broadcast %407 : vector<8x1x4xf32> to vector<8x8x4xf32>
    %410 = vector.broadcast %408 : vector<1x8x4xf32> to vector<8x8x4xf32>
    %411 = arith.subf %409, %410 : vector<8x8x4xf32>
    %412 = arith.mulf %411, %411 : vector<8x8x4xf32>
    %cst_97 = arith.constant dense<0.000000e+00> : vector<8x8xf32>
    %413 = vector.multi_reduction <add>, %412, %cst_97 [2] : vector<8x8x4xf32> to vector<8x8xf32>
    %414 = vector.extract_strided_slice %168 {offsets = [0, 4], sizes = [8, 4], strides = [1, 1]} : vector<8x16xf32> to vector<8x4xf32>
    %415 = vector.extract_strided_slice %213 {offsets = [0, 4], sizes = [8, 4], strides = [1, 1]} : vector<8x16xf32> to vector<8x4xf32>
    %416 = vector.shape_cast %414 : vector<8x4xf32> to vector<8x1x4xf32>
    %417 = vector.shape_cast %415 : vector<8x4xf32> to vector<1x8x4xf32>
    %418 = vector.broadcast %416 : vector<8x1x4xf32> to vector<8x8x4xf32>
    %419 = vector.broadcast %417 : vector<1x8x4xf32> to vector<8x8x4xf32>
    %420 = arith.subf %418, %419 : vector<8x8x4xf32>
    %421 = arith.mulf %420, %420 : vector<8x8x4xf32>
    %cst_98 = arith.constant dense<0.000000e+00> : vector<8x8xf32>
    %422 = vector.multi_reduction <add>, %421, %cst_98 [2] : vector<8x8x4xf32> to vector<8x8xf32>
    %423 = arith.addf %413, %422 : vector<8x8xf32>
    %424 = vector.extract_strided_slice %182 {offsets = [0, 4], sizes = [8, 4], strides = [1, 1]} : vector<8x16xf32> to vector<8x4xf32>
    %425 = vector.extract_strided_slice %227 {offsets = [0, 4], sizes = [8, 4], strides = [1, 1]} : vector<8x16xf32> to vector<8x4xf32>
    %426 = vector.shape_cast %424 : vector<8x4xf32> to vector<8x1x4xf32>
    %427 = vector.shape_cast %425 : vector<8x4xf32> to vector<1x8x4xf32>
    %428 = vector.broadcast %426 : vector<8x1x4xf32> to vector<8x8x4xf32>
    %429 = vector.broadcast %427 : vector<1x8x4xf32> to vector<8x8x4xf32>
    %430 = arith.subf %428, %429 : vector<8x8x4xf32>
    %431 = arith.mulf %430, %430 : vector<8x8x4xf32>
    %cst_99 = arith.constant dense<0.000000e+00> : vector<8x8xf32>
    %432 = vector.multi_reduction <add>, %431, %cst_99 [2] : vector<8x8x4xf32> to vector<8x8xf32>
    %433 = arith.addf %423, %432 : vector<8x8xf32>
    %434 = vector.extract_strided_slice %275 {offsets = [0, 1], sizes = [1, 1], strides = [1, 1]} : vector<1x4xf32> to vector<1x1xf32>
    %435 = vector.broadcast %434 : vector<1x1xf32> to vector<8x8xf32>
    %436 = arith.mulf %435, %433 : vector<8x8xf32>
    %437 = arith.addf %404, %436 : vector<8x8xf32>
    %438 = vector.extract_strided_slice %274 {offsets = [0, 8], sizes = [8, 8], strides = [1, 1]} : vector<8x32xf32> to vector<8x8xf32>
    %439 = arith.addf %437, %438 : vector<8x8xf32>
    %440 = vector.extract_strided_slice %276 {offsets = [0, 1], sizes = [1, 1], strides = [1, 1]} : vector<1x4xf32> to vector<1x1xf32>
    %441 = vector.broadcast %440 : vector<1x1xf32> to vector<8x8xf32>
    %442 = arith.addf %439, %441 : vector<8x8xf32>
    %cst_100 = arith.constant -3.40282347E+38 : f32
    %443 = vector.broadcast %cst_100 : f32 to vector<8x8xf32>
    %444 = arith.select %280, %442, %443 : vector<8x8xi1>, vector<8x8xf32>
    %cst_101 = arith.constant dense<0xFF800000> : vector<8xf32>
    %445 = vector.multi_reduction <maximumf>, %444, %cst_101 [1] : vector<8x8xf32> to vector<8xf32>
    %446 = vector.shape_cast %445 : vector<8xf32> to vector<8x1xf32>
    %447 = vector.broadcast %446 : vector<8x1xf32> to vector<8x8xf32>
    %448 = arith.subf %444, %447 : vector<8x8xf32>
    %449 = math.exp %448 : vector<8x8xf32>
    %cst_102 = arith.constant dense<0.000000e+00> : vector<8xf32>
    %450 = vector.multi_reduction <add>, %449, %cst_102 [1] : vector<8x8xf32> to vector<8xf32>
    %451 = vector.shape_cast %450 : vector<8xf32> to vector<8x1xf32>
    %452 = tpu.reciprocal %451 {approx = true} : vector<8x1xf32> -> vector<8x1xf32>
    %453 = vector.broadcast %452 : vector<8x1xf32> to vector<8x8xf32>
    %454 = arith.mulf %449, %453 : vector<8x8xf32>
    %455 = vector.extract_strided_slice %137 {offsets = [0, 8], sizes = [8, 8], strides = [1, 1]} : vector<8x32xf32> to vector<8x8xf32>
    %cst_103 = arith.constant dense<0.000000e+00> : vector<8x8xf32>
    %456 = tpu.matmul %454, %455, %cst_103 {dimension_numbers = #tpu.dot_dimension_numbers<[1], [0], [0], [1], [0, 0, 1, 1], [], []>} : vector<8x8xf32>, vector<8x8xf32>, vector<8x8xf32> -> vector<8x8xf32>
    %457 = vector.extract_strided_slice %244 {offsets = [0, 4], sizes = [8, 4], strides = [1, 1]} : vector<8x16xf32> to vector<8x4xf32>
    %cst_104 = arith.constant dense<0.000000e+00> : vector<8x4xf32>
    %458 = tpu.matmul %454, %457, %cst_104 {dimension_numbers = #tpu.dot_dimension_numbers<[1], [0], [0], [1], [0, 0, 1, 1], [], []>} : vector<8x8xf32>, vector<8x4xf32>, vector<8x4xf32> -> vector<8x4xf32>
    %459 = vector.extract_strided_slice %132 {offsets = [0, 0], sizes = [8, 1], strides = [1, 1]} : vector<8x3xf32> to vector<8x1xf32>
    %460 = vector.broadcast %459 : vector<8x1xf32> to vector<8x4xf32>
    %461 = arith.subf %458, %460 : vector<8x4xf32>
    %462 = vector.extract_strided_slice %258 {offsets = [0, 4], sizes = [8, 4], strides = [1, 1]} : vector<8x16xf32> to vector<8x4xf32>
    %cst_105 = arith.constant dense<0.000000e+00> : vector<8x4xf32>
    %463 = tpu.matmul %454, %462, %cst_105 {dimension_numbers = #tpu.dot_dimension_numbers<[1], [0], [0], [1], [0, 0, 1, 1], [], []>} : vector<8x8xf32>, vector<8x4xf32>, vector<8x4xf32> -> vector<8x4xf32>
    %464 = vector.extract_strided_slice %132 {offsets = [0, 1], sizes = [8, 1], strides = [1, 1]} : vector<8x3xf32> to vector<8x1xf32>
    %465 = vector.broadcast %464 : vector<8x1xf32> to vector<8x4xf32>
    %466 = arith.subf %463, %465 : vector<8x4xf32>
    %467 = vector.extract_strided_slice %272 {offsets = [0, 4], sizes = [8, 4], strides = [1, 1]} : vector<8x16xf32> to vector<8x4xf32>
    %cst_106 = arith.constant dense<0.000000e+00> : vector<8x4xf32>
    %468 = tpu.matmul %454, %467, %cst_106 {dimension_numbers = #tpu.dot_dimension_numbers<[1], [0], [0], [1], [0, 0, 1, 1], [], []>} : vector<8x8xf32>, vector<8x4xf32>, vector<8x4xf32> -> vector<8x4xf32>
    %469 = vector.extract_strided_slice %132 {offsets = [0, 2], sizes = [8, 1], strides = [1, 1]} : vector<8x3xf32> to vector<8x1xf32>
    %470 = vector.broadcast %469 : vector<8x1xf32> to vector<8x4xf32>
    %471 = arith.subf %468, %470 : vector<8x4xf32>
    %472 = vector.extract_strided_slice %130 {offsets = [0, 0], sizes = [8, 1], strides = [1, 1]} : vector<8x9xf32> to vector<8x1xf32>
    %473 = vector.broadcast %472 : vector<8x1xf32> to vector<8x4xf32>
    %474 = arith.mulf %461, %473 : vector<8x4xf32>
    %475 = vector.extract_strided_slice %130 {offsets = [0, 1], sizes = [8, 1], strides = [1, 1]} : vector<8x9xf32> to vector<8x1xf32>
    %476 = vector.broadcast %475 : vector<8x1xf32> to vector<8x4xf32>
    %477 = arith.mulf %466, %476 : vector<8x4xf32>
    %478 = arith.addf %474, %477 : vector<8x4xf32>
    %479 = vector.extract_strided_slice %130 {offsets = [0, 2], sizes = [8, 1], strides = [1, 1]} : vector<8x9xf32> to vector<8x1xf32>
    %480 = vector.broadcast %479 : vector<8x1xf32> to vector<8x4xf32>
    %481 = arith.mulf %471, %480 : vector<8x4xf32>
    %482 = arith.addf %478, %481 : vector<8x4xf32>
    %483 = vector.extract_strided_slice %130 {offsets = [0, 3], sizes = [8, 1], strides = [1, 1]} : vector<8x9xf32> to vector<8x1xf32>
    %484 = vector.broadcast %483 : vector<8x1xf32> to vector<8x4xf32>
    %485 = arith.mulf %461, %484 : vector<8x4xf32>
    %486 = vector.extract_strided_slice %130 {offsets = [0, 4], sizes = [8, 1], strides = [1, 1]} : vector<8x9xf32> to vector<8x1xf32>
    %487 = vector.broadcast %486 : vector<8x1xf32> to vector<8x4xf32>
    %488 = arith.mulf %466, %487 : vector<8x4xf32>
    %489 = arith.addf %485, %488 : vector<8x4xf32>
    %490 = vector.extract_strided_slice %130 {offsets = [0, 5], sizes = [8, 1], strides = [1, 1]} : vector<8x9xf32> to vector<8x1xf32>
    %491 = vector.broadcast %490 : vector<8x1xf32> to vector<8x4xf32>
    %492 = arith.mulf %471, %491 : vector<8x4xf32>
    %493 = arith.addf %489, %492 : vector<8x4xf32>
    %494 = vector.extract_strided_slice %130 {offsets = [0, 6], sizes = [8, 1], strides = [1, 1]} : vector<8x9xf32> to vector<8x1xf32>
    %495 = vector.broadcast %494 : vector<8x1xf32> to vector<8x4xf32>
    %496 = arith.mulf %461, %495 : vector<8x4xf32>
    %497 = vector.extract_strided_slice %130 {offsets = [0, 7], sizes = [8, 1], strides = [1, 1]} : vector<8x9xf32> to vector<8x1xf32>
    %498 = vector.broadcast %497 : vector<8x1xf32> to vector<8x4xf32>
    %499 = arith.mulf %466, %498 : vector<8x4xf32>
    %500 = arith.addf %496, %499 : vector<8x4xf32>
    %501 = vector.extract_strided_slice %130 {offsets = [0, 8], sizes = [8, 1], strides = [1, 1]} : vector<8x9xf32> to vector<8x1xf32>
    %502 = vector.broadcast %501 : vector<8x1xf32> to vector<8x4xf32>
    %503 = arith.mulf %471, %502 : vector<8x4xf32>
    %504 = arith.addf %500, %503 : vector<8x4xf32>
    %505 = arith.mulf %482, %482 : vector<8x4xf32>
    %506 = arith.mulf %493, %493 : vector<8x4xf32>
    %507 = arith.addf %505, %506 : vector<8x4xf32>
    %508 = arith.mulf %504, %504 : vector<8x4xf32>
    %509 = arith.addf %507, %508 : vector<8x4xf32>
    %cst_107 = arith.constant 9.99999993E-9 : f32
    %510 = vector.broadcast %cst_107 : f32 to vector<8x4xf32>
    %511 = arith.addf %509, %510 : vector<8x4xf32>
    %512 = math.sqrt %511 : vector<8x4xf32>
    %c0_108 = arith.constant 0 : index
    %c0_109 = arith.constant 0 : index
    %513 = vector.load %arg18[%c0_108, %c0_109] : memref<8x128xf32, #tpu.memory_space<vmem>>, vector<8x128xf32>
    %cst_110 = arith.constant dense<0.000000e+00> : vector<8x128xf32>
    %514 = tpu.matmul %454, %513, %cst_110 {dimension_numbers = #tpu.dot_dimension_numbers<[1], [0], [0], [1], [0, 0, 1, 1], [], []>} : vector<8x8xf32>, vector<8x128xf32>, vector<8x128xf32> -> vector<8x128xf32>
    %515 = arith.mulf %514, %3 : vector<8x128xf32>
    %c0_111 = arith.constant 0 : index
    %c0_112 = arith.constant 0 : index
    %516 = vector.load %arg19[%c0_111, %c0_112] : memref<128x16xf32, #tpu.memory_space<vmem>>, vector<128x16xf32>
    %cst_113 = arith.constant dense<0.000000e+00> : vector<8x16xf32>
    %517 = tpu.matmul %515, %516, %cst_113 {dimension_numbers = #tpu.dot_dimension_numbers<[1], [0], [0], [1], [0, 0, 1, 1], [], []>} : vector<8x128xf32>, vector<128x16xf32>, vector<8x16xf32> -> vector<8x16xf32>
    %518 = tpu.concatenate %456, %482, %493, %504, %512, %517 in 1 : vector<8x8xf32>, vector<8x4xf32>, vector<8x4xf32>, vector<8x4xf32>, vector<8x4xf32>, vector<8x16xf32> -> vector<8x40xf32>
    %c40 = arith.constant 40 : index
    %c0_114 = arith.constant 0 : index
    %519 = vector.load %arg20[%c40, %c0_114] : memref<160x32xf32, #tpu.memory_space<vmem>>, vector<40x32xf32>
    %cst_115 = arith.constant dense<0.000000e+00> : vector<8x32xf32>
    %520 = tpu.matmul %518, %519, %cst_115 {dimension_numbers = #tpu.dot_dimension_numbers<[1], [0], [0], [1], [0, 0, 1, 1], [], []>} : vector<8x40xf32>, vector<40x32xf32>, vector<8x32xf32> -> vector<8x32xf32>
    %521 = arith.addf %401, %520 : vector<8x32xf32>
    %522 = vector.extract_strided_slice %135 {offsets = [0, 16], sizes = [8, 8], strides = [1, 1]} : vector<8x32xf32> to vector<8x8xf32>
    %523 = vector.extract_strided_slice %136 {offsets = [0, 16], sizes = [8, 8], strides = [1, 1]} : vector<8x32xf32> to vector<8x8xf32>
    %cst_116 = arith.constant dense<0.000000e+00> : vector<8x8xf32>
    %524 = tpu.matmul %522, %523, %cst_116 {dimension_numbers = #tpu.dot_dimension_numbers<[1], [1], [0], [0], [0, 0, 1, 0], [], []>} : vector<8x8xf32>, vector<8x8xf32>, vector<8x8xf32> -> vector<8x8xf32>
    %525 = vector.extract_strided_slice %154 {offsets = [0, 8], sizes = [8, 4], strides = [1, 1]} : vector<8x16xf32> to vector<8x4xf32>
    %526 = vector.extract_strided_slice %199 {offsets = [0, 8], sizes = [8, 4], strides = [1, 1]} : vector<8x16xf32> to vector<8x4xf32>
    %527 = vector.shape_cast %525 : vector<8x4xf32> to vector<8x1x4xf32>
    %528 = vector.shape_cast %526 : vector<8x4xf32> to vector<1x8x4xf32>
    %529 = vector.broadcast %527 : vector<8x1x4xf32> to vector<8x8x4xf32>
    %530 = vector.broadcast %528 : vector<1x8x4xf32> to vector<8x8x4xf32>
    %531 = arith.subf %529, %530 : vector<8x8x4xf32>
    %532 = arith.mulf %531, %531 : vector<8x8x4xf32>
    %cst_117 = arith.constant dense<0.000000e+00> : vector<8x8xf32>
    %533 = vector.multi_reduction <add>, %532, %cst_117 [2] : vector<8x8x4xf32> to vector<8x8xf32>
    %534 = vector.extract_strided_slice %168 {offsets = [0, 8], sizes = [8, 4], strides = [1, 1]} : vector<8x16xf32> to vector<8x4xf32>
    %535 = vector.extract_strided_slice %213 {offsets = [0, 8], sizes = [8, 4], strides = [1, 1]} : vector<8x16xf32> to vector<8x4xf32>
    %536 = vector.shape_cast %534 : vector<8x4xf32> to vector<8x1x4xf32>
    %537 = vector.shape_cast %535 : vector<8x4xf32> to vector<1x8x4xf32>
    %538 = vector.broadcast %536 : vector<8x1x4xf32> to vector<8x8x4xf32>
    %539 = vector.broadcast %537 : vector<1x8x4xf32> to vector<8x8x4xf32>
    %540 = arith.subf %538, %539 : vector<8x8x4xf32>
    %541 = arith.mulf %540, %540 : vector<8x8x4xf32>
    %cst_118 = arith.constant dense<0.000000e+00> : vector<8x8xf32>
    %542 = vector.multi_reduction <add>, %541, %cst_118 [2] : vector<8x8x4xf32> to vector<8x8xf32>
    %543 = arith.addf %533, %542 : vector<8x8xf32>
    %544 = vector.extract_strided_slice %182 {offsets = [0, 8], sizes = [8, 4], strides = [1, 1]} : vector<8x16xf32> to vector<8x4xf32>
    %545 = vector.extract_strided_slice %227 {offsets = [0, 8], sizes = [8, 4], strides = [1, 1]} : vector<8x16xf32> to vector<8x4xf32>
    %546 = vector.shape_cast %544 : vector<8x4xf32> to vector<8x1x4xf32>
    %547 = vector.shape_cast %545 : vector<8x4xf32> to vector<1x8x4xf32>
    %548 = vector.broadcast %546 : vector<8x1x4xf32> to vector<8x8x4xf32>
    %549 = vector.broadcast %547 : vector<1x8x4xf32> to vector<8x8x4xf32>
    %550 = arith.subf %548, %549 : vector<8x8x4xf32>
    %551 = arith.mulf %550, %550 : vector<8x8x4xf32>
    %cst_119 = arith.constant dense<0.000000e+00> : vector<8x8xf32>
    %552 = vector.multi_reduction <add>, %551, %cst_119 [2] : vector<8x8x4xf32> to vector<8x8xf32>
    %553 = arith.addf %543, %552 : vector<8x8xf32>
    %554 = vector.extract_strided_slice %275 {offsets = [0, 2], sizes = [1, 1], strides = [1, 1]} : vector<1x4xf32> to vector<1x1xf32>
    %555 = vector.broadcast %554 : vector<1x1xf32> to vector<8x8xf32>
    %556 = arith.mulf %555, %553 : vector<8x8xf32>
    %557 = arith.addf %524, %556 : vector<8x8xf32>
    %558 = vector.extract_strided_slice %274 {offsets = [0, 16], sizes = [8, 8], strides = [1, 1]} : vector<8x32xf32> to vector<8x8xf32>
    %559 = arith.addf %557, %558 : vector<8x8xf32>
    %560 = vector.extract_strided_slice %276 {offsets = [0, 2], sizes = [1, 1], strides = [1, 1]} : vector<1x4xf32> to vector<1x1xf32>
    %561 = vector.broadcast %560 : vector<1x1xf32> to vector<8x8xf32>
    %562 = arith.addf %559, %561 : vector<8x8xf32>
    %cst_120 = arith.constant -3.40282347E+38 : f32
    %563 = vector.broadcast %cst_120 : f32 to vector<8x8xf32>
    %564 = arith.select %280, %562, %563 : vector<8x8xi1>, vector<8x8xf32>
    %cst_121 = arith.constant dense<0xFF800000> : vector<8xf32>
    %565 = vector.multi_reduction <maximumf>, %564, %cst_121 [1] : vector<8x8xf32> to vector<8xf32>
    %566 = vector.shape_cast %565 : vector<8xf32> to vector<8x1xf32>
    %567 = vector.broadcast %566 : vector<8x1xf32> to vector<8x8xf32>
    %568 = arith.subf %564, %567 : vector<8x8xf32>
    %569 = math.exp %568 : vector<8x8xf32>
    %cst_122 = arith.constant dense<0.000000e+00> : vector<8xf32>
    %570 = vector.multi_reduction <add>, %569, %cst_122 [1] : vector<8x8xf32> to vector<8xf32>
    %571 = vector.shape_cast %570 : vector<8xf32> to vector<8x1xf32>
    %572 = tpu.reciprocal %571 {approx = true} : vector<8x1xf32> -> vector<8x1xf32>
    %573 = vector.broadcast %572 : vector<8x1xf32> to vector<8x8xf32>
    %574 = arith.mulf %569, %573 : vector<8x8xf32>
    %575 = vector.extract_strided_slice %137 {offsets = [0, 16], sizes = [8, 8], strides = [1, 1]} : vector<8x32xf32> to vector<8x8xf32>
    %cst_123 = arith.constant dense<0.000000e+00> : vector<8x8xf32>
    %576 = tpu.matmul %574, %575, %cst_123 {dimension_numbers = #tpu.dot_dimension_numbers<[1], [0], [0], [1], [0, 0, 1, 1], [], []>} : vector<8x8xf32>, vector<8x8xf32>, vector<8x8xf32> -> vector<8x8xf32>
    %577 = vector.extract_strided_slice %244 {offsets = [0, 8], sizes = [8, 4], strides = [1, 1]} : vector<8x16xf32> to vector<8x4xf32>
    %cst_124 = arith.constant dense<0.000000e+00> : vector<8x4xf32>
    %578 = tpu.matmul %574, %577, %cst_124 {dimension_numbers = #tpu.dot_dimension_numbers<[1], [0], [0], [1], [0, 0, 1, 1], [], []>} : vector<8x8xf32>, vector<8x4xf32>, vector<8x4xf32> -> vector<8x4xf32>
    %579 = vector.extract_strided_slice %132 {offsets = [0, 0], sizes = [8, 1], strides = [1, 1]} : vector<8x3xf32> to vector<8x1xf32>
    %580 = vector.broadcast %579 : vector<8x1xf32> to vector<8x4xf32>
    %581 = arith.subf %578, %580 : vector<8x4xf32>
    %582 = vector.extract_strided_slice %258 {offsets = [0, 8], sizes = [8, 4], strides = [1, 1]} : vector<8x16xf32> to vector<8x4xf32>
    %cst_125 = arith.constant dense<0.000000e+00> : vector<8x4xf32>
    %583 = tpu.matmul %574, %582, %cst_125 {dimension_numbers = #tpu.dot_dimension_numbers<[1], [0], [0], [1], [0, 0, 1, 1], [], []>} : vector<8x8xf32>, vector<8x4xf32>, vector<8x4xf32> -> vector<8x4xf32>
    %584 = vector.extract_strided_slice %132 {offsets = [0, 1], sizes = [8, 1], strides = [1, 1]} : vector<8x3xf32> to vector<8x1xf32>
    %585 = vector.broadcast %584 : vector<8x1xf32> to vector<8x4xf32>
    %586 = arith.subf %583, %585 : vector<8x4xf32>
    %587 = vector.extract_strided_slice %272 {offsets = [0, 8], sizes = [8, 4], strides = [1, 1]} : vector<8x16xf32> to vector<8x4xf32>
    %cst_126 = arith.constant dense<0.000000e+00> : vector<8x4xf32>
    %588 = tpu.matmul %574, %587, %cst_126 {dimension_numbers = #tpu.dot_dimension_numbers<[1], [0], [0], [1], [0, 0, 1, 1], [], []>} : vector<8x8xf32>, vector<8x4xf32>, vector<8x4xf32> -> vector<8x4xf32>
    %589 = vector.extract_strided_slice %132 {offsets = [0, 2], sizes = [8, 1], strides = [1, 1]} : vector<8x3xf32> to vector<8x1xf32>
    %590 = vector.broadcast %589 : vector<8x1xf32> to vector<8x4xf32>
    %591 = arith.subf %588, %590 : vector<8x4xf32>
    %592 = vector.extract_strided_slice %130 {offsets = [0, 0], sizes = [8, 1], strides = [1, 1]} : vector<8x9xf32> to vector<8x1xf32>
    %593 = vector.broadcast %592 : vector<8x1xf32> to vector<8x4xf32>
    %594 = arith.mulf %581, %593 : vector<8x4xf32>
    %595 = vector.extract_strided_slice %130 {offsets = [0, 1], sizes = [8, 1], strides = [1, 1]} : vector<8x9xf32> to vector<8x1xf32>
    %596 = vector.broadcast %595 : vector<8x1xf32> to vector<8x4xf32>
    %597 = arith.mulf %586, %596 : vector<8x4xf32>
    %598 = arith.addf %594, %597 : vector<8x4xf32>
    %599 = vector.extract_strided_slice %130 {offsets = [0, 2], sizes = [8, 1], strides = [1, 1]} : vector<8x9xf32> to vector<8x1xf32>
    %600 = vector.broadcast %599 : vector<8x1xf32> to vector<8x4xf32>
    %601 = arith.mulf %591, %600 : vector<8x4xf32>
    %602 = arith.addf %598, %601 : vector<8x4xf32>
    %603 = vector.extract_strided_slice %130 {offsets = [0, 3], sizes = [8, 1], strides = [1, 1]} : vector<8x9xf32> to vector<8x1xf32>
    %604 = vector.broadcast %603 : vector<8x1xf32> to vector<8x4xf32>
    %605 = arith.mulf %581, %604 : vector<8x4xf32>
    %606 = vector.extract_strided_slice %130 {offsets = [0, 4], sizes = [8, 1], strides = [1, 1]} : vector<8x9xf32> to vector<8x1xf32>
    %607 = vector.broadcast %606 : vector<8x1xf32> to vector<8x4xf32>
    %608 = arith.mulf %586, %607 : vector<8x4xf32>
    %609 = arith.addf %605, %608 : vector<8x4xf32>
    %610 = vector.extract_strided_slice %130 {offsets = [0, 5], sizes = [8, 1], strides = [1, 1]} : vector<8x9xf32> to vector<8x1xf32>
    %611 = vector.broadcast %610 : vector<8x1xf32> to vector<8x4xf32>
    %612 = arith.mulf %591, %611 : vector<8x4xf32>
    %613 = arith.addf %609, %612 : vector<8x4xf32>
    %614 = vector.extract_strided_slice %130 {offsets = [0, 6], sizes = [8, 1], strides = [1, 1]} : vector<8x9xf32> to vector<8x1xf32>
    %615 = vector.broadcast %614 : vector<8x1xf32> to vector<8x4xf32>
    %616 = arith.mulf %581, %615 : vector<8x4xf32>
    %617 = vector.extract_strided_slice %130 {offsets = [0, 7], sizes = [8, 1], strides = [1, 1]} : vector<8x9xf32> to vector<8x1xf32>
    %618 = vector.broadcast %617 : vector<8x1xf32> to vector<8x4xf32>
    %619 = arith.mulf %586, %618 : vector<8x4xf32>
    %620 = arith.addf %616, %619 : vector<8x4xf32>
    %621 = vector.extract_strided_slice %130 {offsets = [0, 8], sizes = [8, 1], strides = [1, 1]} : vector<8x9xf32> to vector<8x1xf32>
    %622 = vector.broadcast %621 : vector<8x1xf32> to vector<8x4xf32>
    %623 = arith.mulf %591, %622 : vector<8x4xf32>
    %624 = arith.addf %620, %623 : vector<8x4xf32>
    %625 = arith.mulf %602, %602 : vector<8x4xf32>
    %626 = arith.mulf %613, %613 : vector<8x4xf32>
    %627 = arith.addf %625, %626 : vector<8x4xf32>
    %628 = arith.mulf %624, %624 : vector<8x4xf32>
    %629 = arith.addf %627, %628 : vector<8x4xf32>
    %cst_127 = arith.constant 9.99999993E-9 : f32
    %630 = vector.broadcast %cst_127 : f32 to vector<8x4xf32>
    %631 = arith.addf %629, %630 : vector<8x4xf32>
    %632 = math.sqrt %631 : vector<8x4xf32>
    %c0_128 = arith.constant 0 : index
    %c0_129 = arith.constant 0 : index
    %633 = vector.load %arg18[%c0_128, %c0_129] : memref<8x128xf32, #tpu.memory_space<vmem>>, vector<8x128xf32>
    %cst_130 = arith.constant dense<0.000000e+00> : vector<8x128xf32>
    %634 = tpu.matmul %574, %633, %cst_130 {dimension_numbers = #tpu.dot_dimension_numbers<[1], [0], [0], [1], [0, 0, 1, 1], [], []>} : vector<8x8xf32>, vector<8x128xf32>, vector<8x128xf32> -> vector<8x128xf32>
    %635 = arith.mulf %634, %3 : vector<8x128xf32>
    %c0_131 = arith.constant 0 : index
    %c0_132 = arith.constant 0 : index
    %636 = vector.load %arg19[%c0_131, %c0_132] : memref<128x16xf32, #tpu.memory_space<vmem>>, vector<128x16xf32>
    %cst_133 = arith.constant dense<0.000000e+00> : vector<8x16xf32>
    %637 = tpu.matmul %635, %636, %cst_133 {dimension_numbers = #tpu.dot_dimension_numbers<[1], [0], [0], [1], [0, 0, 1, 1], [], []>} : vector<8x128xf32>, vector<128x16xf32>, vector<8x16xf32> -> vector<8x16xf32>
    %638 = tpu.concatenate %576, %602, %613, %624, %632, %637 in 1 : vector<8x8xf32>, vector<8x4xf32>, vector<8x4xf32>, vector<8x4xf32>, vector<8x4xf32>, vector<8x16xf32> -> vector<8x40xf32>
    %c80 = arith.constant 80 : index
    %c0_134 = arith.constant 0 : index
    %639 = vector.load %arg20[%c80, %c0_134] : memref<160x32xf32, #tpu.memory_space<vmem>>, vector<40x32xf32>
    %cst_135 = arith.constant dense<0.000000e+00> : vector<8x32xf32>
    %640 = tpu.matmul %638, %639, %cst_135 {dimension_numbers = #tpu.dot_dimension_numbers<[1], [0], [0], [1], [0, 0, 1, 1], [], []>} : vector<8x40xf32>, vector<40x32xf32>, vector<8x32xf32> -> vector<8x32xf32>
    %641 = arith.addf %521, %640 : vector<8x32xf32>
    %642 = vector.extract_strided_slice %135 {offsets = [0, 24], sizes = [8, 8], strides = [1, 1]} : vector<8x32xf32> to vector<8x8xf32>
    %643 = vector.extract_strided_slice %136 {offsets = [0, 24], sizes = [8, 8], strides = [1, 1]} : vector<8x32xf32> to vector<8x8xf32>
    %cst_136 = arith.constant dense<0.000000e+00> : vector<8x8xf32>
    %644 = tpu.matmul %642, %643, %cst_136 {dimension_numbers = #tpu.dot_dimension_numbers<[1], [1], [0], [0], [0, 0, 1, 0], [], []>} : vector<8x8xf32>, vector<8x8xf32>, vector<8x8xf32> -> vector<8x8xf32>
    %645 = vector.extract_strided_slice %154 {offsets = [0, 12], sizes = [8, 4], strides = [1, 1]} : vector<8x16xf32> to vector<8x4xf32>
    %646 = vector.extract_strided_slice %199 {offsets = [0, 12], sizes = [8, 4], strides = [1, 1]} : vector<8x16xf32> to vector<8x4xf32>
    %647 = vector.shape_cast %645 : vector<8x4xf32> to vector<8x1x4xf32>
    %648 = vector.shape_cast %646 : vector<8x4xf32> to vector<1x8x4xf32>
    %649 = vector.broadcast %647 : vector<8x1x4xf32> to vector<8x8x4xf32>
    %650 = vector.broadcast %648 : vector<1x8x4xf32> to vector<8x8x4xf32>
    %651 = arith.subf %649, %650 : vector<8x8x4xf32>
    %652 = arith.mulf %651, %651 : vector<8x8x4xf32>
    %cst_137 = arith.constant dense<0.000000e+00> : vector<8x8xf32>
    %653 = vector.multi_reduction <add>, %652, %cst_137 [2] : vector<8x8x4xf32> to vector<8x8xf32>
    %654 = vector.extract_strided_slice %168 {offsets = [0, 12], sizes = [8, 4], strides = [1, 1]} : vector<8x16xf32> to vector<8x4xf32>
    %655 = vector.extract_strided_slice %213 {offsets = [0, 12], sizes = [8, 4], strides = [1, 1]} : vector<8x16xf32> to vector<8x4xf32>
    %656 = vector.shape_cast %654 : vector<8x4xf32> to vector<8x1x4xf32>
    %657 = vector.shape_cast %655 : vector<8x4xf32> to vector<1x8x4xf32>
    %658 = vector.broadcast %656 : vector<8x1x4xf32> to vector<8x8x4xf32>
    %659 = vector.broadcast %657 : vector<1x8x4xf32> to vector<8x8x4xf32>
    %660 = arith.subf %658, %659 : vector<8x8x4xf32>
    %661 = arith.mulf %660, %660 : vector<8x8x4xf32>
    %cst_138 = arith.constant dense<0.000000e+00> : vector<8x8xf32>
    %662 = vector.multi_reduction <add>, %661, %cst_138 [2] : vector<8x8x4xf32> to vector<8x8xf32>
    %663 = arith.addf %653, %662 : vector<8x8xf32>
    %664 = vector.extract_strided_slice %182 {offsets = [0, 12], sizes = [8, 4], strides = [1, 1]} : vector<8x16xf32> to vector<8x4xf32>
    %665 = vector.extract_strided_slice %227 {offsets = [0, 12], sizes = [8, 4], strides = [1, 1]} : vector<8x16xf32> to vector<8x4xf32>
    %666 = vector.shape_cast %664 : vector<8x4xf32> to vector<8x1x4xf32>
    %667 = vector.shape_cast %665 : vector<8x4xf32> to vector<1x8x4xf32>
    %668 = vector.broadcast %666 : vector<8x1x4xf32> to vector<8x8x4xf32>
    %669 = vector.broadcast %667 : vector<1x8x4xf32> to vector<8x8x4xf32>
    %670 = arith.subf %668, %669 : vector<8x8x4xf32>
    %671 = arith.mulf %670, %670 : vector<8x8x4xf32>
    %cst_139 = arith.constant dense<0.000000e+00> : vector<8x8xf32>
    %672 = vector.multi_reduction <add>, %671, %cst_139 [2] : vector<8x8x4xf32> to vector<8x8xf32>
    %673 = arith.addf %663, %672 : vector<8x8xf32>
    %674 = vector.extract_strided_slice %275 {offsets = [0, 3], sizes = [1, 1], strides = [1, 1]} : vector<1x4xf32> to vector<1x1xf32>
    %675 = vector.broadcast %674 : vector<1x1xf32> to vector<8x8xf32>
    %676 = arith.mulf %675, %673 : vector<8x8xf32>
    %677 = arith.addf %644, %676 : vector<8x8xf32>
    %678 = vector.extract_strided_slice %274 {offsets = [0, 24], sizes = [8, 8], strides = [1, 1]} : vector<8x32xf32> to vector<8x8xf32>
    %679 = arith.addf %677, %678 : vector<8x8xf32>
    %680 = vector.extract_strided_slice %276 {offsets = [0, 3], sizes = [1, 1], strides = [1, 1]} : vector<1x4xf32> to vector<1x1xf32>
    %681 = vector.broadcast %680 : vector<1x1xf32> to vector<8x8xf32>
    %682 = arith.addf %679, %681 : vector<8x8xf32>
    %cst_140 = arith.constant -3.40282347E+38 : f32
    %683 = vector.broadcast %cst_140 : f32 to vector<8x8xf32>
    %684 = arith.select %280, %682, %683 : vector<8x8xi1>, vector<8x8xf32>
    %cst_141 = arith.constant dense<0xFF800000> : vector<8xf32>
    %685 = vector.multi_reduction <maximumf>, %684, %cst_141 [1] : vector<8x8xf32> to vector<8xf32>
    %686 = vector.shape_cast %685 : vector<8xf32> to vector<8x1xf32>
    %687 = vector.broadcast %686 : vector<8x1xf32> to vector<8x8xf32>
    %688 = arith.subf %684, %687 : vector<8x8xf32>
    %689 = math.exp %688 : vector<8x8xf32>
    %cst_142 = arith.constant dense<0.000000e+00> : vector<8xf32>
    %690 = vector.multi_reduction <add>, %689, %cst_142 [1] : vector<8x8xf32> to vector<8xf32>
    %691 = vector.shape_cast %690 : vector<8xf32> to vector<8x1xf32>
    %692 = tpu.reciprocal %691 {approx = true} : vector<8x1xf32> -> vector<8x1xf32>
    %693 = vector.broadcast %692 : vector<8x1xf32> to vector<8x8xf32>
    %694 = arith.mulf %689, %693 : vector<8x8xf32>
    %695 = vector.extract_strided_slice %137 {offsets = [0, 24], sizes = [8, 8], strides = [1, 1]} : vector<8x32xf32> to vector<8x8xf32>
    %cst_143 = arith.constant dense<0.000000e+00> : vector<8x8xf32>
    %696 = tpu.matmul %694, %695, %cst_143 {dimension_numbers = #tpu.dot_dimension_numbers<[1], [0], [0], [1], [0, 0, 1, 1], [], []>} : vector<8x8xf32>, vector<8x8xf32>, vector<8x8xf32> -> vector<8x8xf32>
    %697 = vector.extract_strided_slice %244 {offsets = [0, 12], sizes = [8, 4], strides = [1, 1]} : vector<8x16xf32> to vector<8x4xf32>
    %cst_144 = arith.constant dense<0.000000e+00> : vector<8x4xf32>
    %698 = tpu.matmul %694, %697, %cst_144 {dimension_numbers = #tpu.dot_dimension_numbers<[1], [0], [0], [1], [0, 0, 1, 1], [], []>} : vector<8x8xf32>, vector<8x4xf32>, vector<8x4xf32> -> vector<8x4xf32>
    %699 = vector.extract_strided_slice %132 {offsets = [0, 0], sizes = [8, 1], strides = [1, 1]} : vector<8x3xf32> to vector<8x1xf32>
    %700 = vector.broadcast %699 : vector<8x1xf32> to vector<8x4xf32>
    %701 = arith.subf %698, %700 : vector<8x4xf32>
    %702 = vector.extract_strided_slice %258 {offsets = [0, 12], sizes = [8, 4], strides = [1, 1]} : vector<8x16xf32> to vector<8x4xf32>
    %cst_145 = arith.constant dense<0.000000e+00> : vector<8x4xf32>
    %703 = tpu.matmul %694, %702, %cst_145 {dimension_numbers = #tpu.dot_dimension_numbers<[1], [0], [0], [1], [0, 0, 1, 1], [], []>} : vector<8x8xf32>, vector<8x4xf32>, vector<8x4xf32> -> vector<8x4xf32>
    %704 = vector.extract_strided_slice %132 {offsets = [0, 1], sizes = [8, 1], strides = [1, 1]} : vector<8x3xf32> to vector<8x1xf32>
    %705 = vector.broadcast %704 : vector<8x1xf32> to vector<8x4xf32>
    %706 = arith.subf %703, %705 : vector<8x4xf32>
    %707 = vector.extract_strided_slice %272 {offsets = [0, 12], sizes = [8, 4], strides = [1, 1]} : vector<8x16xf32> to vector<8x4xf32>
    %cst_146 = arith.constant dense<0.000000e+00> : vector<8x4xf32>
    %708 = tpu.matmul %694, %707, %cst_146 {dimension_numbers = #tpu.dot_dimension_numbers<[1], [0], [0], [1], [0, 0, 1, 1], [], []>} : vector<8x8xf32>, vector<8x4xf32>, vector<8x4xf32> -> vector<8x4xf32>
    %709 = vector.extract_strided_slice %132 {offsets = [0, 2], sizes = [8, 1], strides = [1, 1]} : vector<8x3xf32> to vector<8x1xf32>
    %710 = vector.broadcast %709 : vector<8x1xf32> to vector<8x4xf32>
    %711 = arith.subf %708, %710 : vector<8x4xf32>
    %712 = vector.extract_strided_slice %130 {offsets = [0, 0], sizes = [8, 1], strides = [1, 1]} : vector<8x9xf32> to vector<8x1xf32>
    %713 = vector.broadcast %712 : vector<8x1xf32> to vector<8x4xf32>
    %714 = arith.mulf %701, %713 : vector<8x4xf32>
    %715 = vector.extract_strided_slice %130 {offsets = [0, 1], sizes = [8, 1], strides = [1, 1]} : vector<8x9xf32> to vector<8x1xf32>
    %716 = vector.broadcast %715 : vector<8x1xf32> to vector<8x4xf32>
    %717 = arith.mulf %706, %716 : vector<8x4xf32>
    %718 = arith.addf %714, %717 : vector<8x4xf32>
    %719 = vector.extract_strided_slice %130 {offsets = [0, 2], sizes = [8, 1], strides = [1, 1]} : vector<8x9xf32> to vector<8x1xf32>
    %720 = vector.broadcast %719 : vector<8x1xf32> to vector<8x4xf32>
    %721 = arith.mulf %711, %720 : vector<8x4xf32>
    %722 = arith.addf %718, %721 : vector<8x4xf32>
    %723 = vector.extract_strided_slice %130 {offsets = [0, 3], sizes = [8, 1], strides = [1, 1]} : vector<8x9xf32> to vector<8x1xf32>
    %724 = vector.broadcast %723 : vector<8x1xf32> to vector<8x4xf32>
    %725 = arith.mulf %701, %724 : vector<8x4xf32>
    %726 = vector.extract_strided_slice %130 {offsets = [0, 4], sizes = [8, 1], strides = [1, 1]} : vector<8x9xf32> to vector<8x1xf32>
    %727 = vector.broadcast %726 : vector<8x1xf32> to vector<8x4xf32>
    %728 = arith.mulf %706, %727 : vector<8x4xf32>
    %729 = arith.addf %725, %728 : vector<8x4xf32>
    %730 = vector.extract_strided_slice %130 {offsets = [0, 5], sizes = [8, 1], strides = [1, 1]} : vector<8x9xf32> to vector<8x1xf32>
    %731 = vector.broadcast %730 : vector<8x1xf32> to vector<8x4xf32>
    %732 = arith.mulf %711, %731 : vector<8x4xf32>
    %733 = arith.addf %729, %732 : vector<8x4xf32>
    %734 = vector.extract_strided_slice %130 {offsets = [0, 6], sizes = [8, 1], strides = [1, 1]} : vector<8x9xf32> to vector<8x1xf32>
    %735 = vector.broadcast %734 : vector<8x1xf32> to vector<8x4xf32>
    %736 = arith.mulf %701, %735 : vector<8x4xf32>
    %737 = vector.extract_strided_slice %130 {offsets = [0, 7], sizes = [8, 1], strides = [1, 1]} : vector<8x9xf32> to vector<8x1xf32>
    %738 = vector.broadcast %737 : vector<8x1xf32> to vector<8x4xf32>
    %739 = arith.mulf %706, %738 : vector<8x4xf32>
    %740 = arith.addf %736, %739 : vector<8x4xf32>
    %741 = vector.extract_strided_slice %130 {offsets = [0, 8], sizes = [8, 1], strides = [1, 1]} : vector<8x9xf32> to vector<8x1xf32>
    %742 = vector.broadcast %741 : vector<8x1xf32> to vector<8x4xf32>
    %743 = arith.mulf %711, %742 : vector<8x4xf32>
    %744 = arith.addf %740, %743 : vector<8x4xf32>
    %745 = arith.mulf %722, %722 : vector<8x4xf32>
    %746 = arith.mulf %733, %733 : vector<8x4xf32>
    %747 = arith.addf %745, %746 : vector<8x4xf32>
    %748 = arith.mulf %744, %744 : vector<8x4xf32>
    %749 = arith.addf %747, %748 : vector<8x4xf32>
    %cst_147 = arith.constant 9.99999993E-9 : f32
    %750 = vector.broadcast %cst_147 : f32 to vector<8x4xf32>
    %751 = arith.addf %749, %750 : vector<8x4xf32>
    %752 = math.sqrt %751 : vector<8x4xf32>
    %c0_148 = arith.constant 0 : index
    %c0_149 = arith.constant 0 : index
    %753 = vector.load %arg18[%c0_148, %c0_149] : memref<8x128xf32, #tpu.memory_space<vmem>>, vector<8x128xf32>
    %cst_150 = arith.constant dense<0.000000e+00> : vector<8x128xf32>
    %754 = tpu.matmul %694, %753, %cst_150 {dimension_numbers = #tpu.dot_dimension_numbers<[1], [0], [0], [1], [0, 0, 1, 1], [], []>} : vector<8x8xf32>, vector<8x128xf32>, vector<8x128xf32> -> vector<8x128xf32>
    %755 = arith.mulf %754, %3 : vector<8x128xf32>
    %c0_151 = arith.constant 0 : index
    %c0_152 = arith.constant 0 : index
    %756 = vector.load %arg19[%c0_151, %c0_152] : memref<128x16xf32, #tpu.memory_space<vmem>>, vector<128x16xf32>
    %cst_153 = arith.constant dense<0.000000e+00> : vector<8x16xf32>
    %757 = tpu.matmul %755, %756, %cst_153 {dimension_numbers = #tpu.dot_dimension_numbers<[1], [0], [0], [1], [0, 0, 1, 1], [], []>} : vector<8x128xf32>, vector<128x16xf32>, vector<8x16xf32> -> vector<8x16xf32>
    %758 = tpu.concatenate %696, %722, %733, %744, %752, %757 in 1 : vector<8x8xf32>, vector<8x4xf32>, vector<8x4xf32>, vector<8x4xf32>, vector<8x4xf32>, vector<8x16xf32> -> vector<8x40xf32>
    %c120 = arith.constant 120 : index
    %c0_154 = arith.constant 0 : index
    %759 = vector.load %arg20[%c120, %c0_154] : memref<160x32xf32, #tpu.memory_space<vmem>>, vector<40x32xf32>
    %cst_155 = arith.constant dense<0.000000e+00> : vector<8x32xf32>
    %760 = tpu.matmul %758, %759, %cst_155 {dimension_numbers = #tpu.dot_dimension_numbers<[1], [0], [0], [1], [0, 0, 1, 1], [], []>} : vector<8x40xf32>, vector<40x32xf32>, vector<8x32xf32> -> vector<8x32xf32>
    %761 = arith.addf %641, %760 : vector<8x32xf32>
    %c0_156 = arith.constant 0 : index
    %c0_157 = arith.constant 0 : index
    %762 = vector.load %arg21[%c0_156, %c0_157] : memref<1x32xf32, #tpu.memory_space<vmem>>, vector<1x32xf32>
    %763 = vector.shape_cast %762 : vector<1x32xf32> to vector<32xf32>
    %764 = vector.shape_cast %763 : vector<32xf32> to vector<1x32xf32>
    %765 = vector.broadcast %764 : vector<1x32xf32> to vector<8x32xf32>
    %766 = arith.addf %761, %765 : vector<8x32xf32>
    %767 = arith.addf %1, %766 : vector<8x32xf32>
    %768 = arith.addf %767, %128 : vector<8x32xf32>
    %c0_158 = arith.constant 0 : index
    %c0_159 = arith.constant 0 : index
    %769 = vector.load %arg22[%c0_158, %c0_159] : memref<1x32xf32, #tpu.memory_space<vmem>>, vector<1x32xf32>
    %770 = vector.shape_cast %769 : vector<1x32xf32> to vector<32xf32>
    %c0_160 = arith.constant 0 : index
    %c0_161 = arith.constant 0 : index
    %771 = vector.load %arg23[%c0_160, %c0_161] : memref<1x32xf32, #tpu.memory_space<vmem>>, vector<1x32xf32>
    %772 = vector.shape_cast %771 : vector<1x32xf32> to vector<32xf32>
    %cst_162 = arith.constant dense<0.000000e+00> : vector<8xf32>
    %773 = vector.multi_reduction <add>, %768, %cst_162 [1] : vector<8x32xf32> to vector<8xf32>
    %774 = vector.shape_cast %773 : vector<8xf32> to vector<8x1xf32>
    %cst_163 = arith.constant 3.200000e+01 : f32
    %775 = vector.broadcast %cst_163 : f32 to vector<8x1xf32>
    %776 = arith.divf %774, %775 : vector<8x1xf32>
    %777 = vector.broadcast %776 : vector<8x1xf32> to vector<8x32xf32>
    %778 = arith.subf %768, %777 : vector<8x32xf32>
    %779 = arith.mulf %778, %778 : vector<8x32xf32>
    %cst_164 = arith.constant dense<0.000000e+00> : vector<8xf32>
    %780 = vector.multi_reduction <add>, %779, %cst_164 [1] : vector<8x32xf32> to vector<8xf32>
    %781 = vector.shape_cast %780 : vector<8xf32> to vector<8x1xf32>
    %cst_165 = arith.constant 3.200000e+01 : f32
    %782 = vector.broadcast %cst_165 : f32 to vector<8x1xf32>
    %783 = arith.divf %781, %782 : vector<8x1xf32>
    %784 = vector.broadcast %776 : vector<8x1xf32> to vector<8x32xf32>
    %785 = arith.subf %768, %784 : vector<8x32xf32>
    %cst_166 = arith.constant 9.99999974E-6 : f32
    %786 = vector.broadcast %cst_166 : f32 to vector<8x1xf32>
    %787 = arith.addf %783, %786 : vector<8x1xf32>
    %788 = math.rsqrt %787 : vector<8x1xf32>
    %789 = vector.broadcast %788 : vector<8x1xf32> to vector<8x32xf32>
    %790 = arith.mulf %785, %789 : vector<8x32xf32>
    %791 = vector.shape_cast %770 : vector<32xf32> to vector<1x32xf32>
    %792 = vector.broadcast %791 : vector<1x32xf32> to vector<8x32xf32>
    %793 = arith.mulf %790, %792 : vector<8x32xf32>
    %794 = vector.shape_cast %772 : vector<32xf32> to vector<1x32xf32>
    %795 = vector.broadcast %794 : vector<1x32xf32> to vector<8x32xf32>
    %796 = arith.addf %793, %795 : vector<8x32xf32>
    %c0_167 = arith.constant 0 : index
    %c0_168 = arith.constant 0 : index
    %797 = vector.load %arg24[%c0_167, %c0_168] : memref<32x32xf32, #tpu.memory_space<vmem>>, vector<32x32xf32>
    %cst_169 = arith.constant dense<0.000000e+00> : vector<8x32xf32>
    %798 = tpu.matmul %796, %797, %cst_169 {dimension_numbers = #tpu.dot_dimension_numbers<[1], [0], [0], [1], [0, 0, 1, 1], [], []>} : vector<8x32xf32>, vector<32x32xf32>, vector<8x32xf32> -> vector<8x32xf32>
    %c0_170 = arith.constant 0 : index
    %c0_171 = arith.constant 0 : index
    %799 = vector.load %arg25[%c0_170, %c0_171] : memref<1x32xf32, #tpu.memory_space<vmem>>, vector<1x32xf32>
    %800 = vector.shape_cast %799 : vector<1x32xf32> to vector<32xf32>
    %801 = vector.shape_cast %800 : vector<32xf32> to vector<1x32xf32>
    %802 = vector.broadcast %801 : vector<1x32xf32> to vector<8x32xf32>
    %803 = arith.addf %798, %802 : vector<8x32xf32>
    %804 = arith.addf %803, %796 : vector<8x32xf32>
    %c0_172 = arith.constant 0 : index
    %c0_173 = arith.constant 0 : index
    %c0_174 = arith.constant 0 : index
    %805 = vector.load %arg30[%c0_172, %c0_173, %c0_174] : memref<1x8x32xf32, #tpu.memory_space<vmem>>, vector<1x8x32xf32>
    %806 = vector.shape_cast %805 : vector<1x8x32xf32> to vector<8x32xf32>
    %807 = vector.shape_cast %804 : vector<8x32xf32> to vector<1x8x32xf32>
    tpu.vector_store %arg30[%c0_172, %c0_173, %c0_174], %807 {strides = array<i32>} : memref<1x8x32xf32, #tpu.memory_space<vmem>>, vector<1x8x32xf32>,
    %c0_175 = arith.constant 0 : index
    %c0_176 = arith.constant 0 : index
    %808 = vector.load %arg26[%c0_175, %c0_176] : memref<32x32xf32, #tpu.memory_space<vmem>>, vector<32x32xf32>
    %cst_177 = arith.constant dense<0.000000e+00> : vector<8x32xf32>
    %809 = tpu.matmul %804, %808, %cst_177 {dimension_numbers = #tpu.dot_dimension_numbers<[1], [0], [0], [1], [0, 0, 1, 1], [], []>} : vector<8x32xf32>, vector<32x32xf32>, vector<8x32xf32> -> vector<8x32xf32>
    %810 = vector.extract_strided_slice %809 {offsets = [0, 0], sizes = [1, 32], strides = [1, 1]} : vector<8x32xf32> to vector<1x32xf32>
    %811 = vector.extract_strided_slice %809 {offsets = [1, 0], sizes = [1, 32], strides = [1, 1]} : vector<8x32xf32> to vector<1x32xf32>
    %812 = vector.extract_strided_slice %809 {offsets = [2, 0], sizes = [1, 32], strides = [1, 1]} : vector<8x32xf32> to vector<1x32xf32>
    %813 = vector.extract_strided_slice %809 {offsets = [3, 0], sizes = [1, 32], strides = [1, 1]} : vector<8x32xf32> to vector<1x32xf32>
    %814 = vector.extract_strided_slice %809 {offsets = [4, 0], sizes = [1, 32], strides = [1, 1]} : vector<8x32xf32> to vector<1x32xf32>
    %815 = vector.extract_strided_slice %809 {offsets = [5, 0], sizes = [1, 32], strides = [1, 1]} : vector<8x32xf32> to vector<1x32xf32>
    %816 = vector.extract_strided_slice %809 {offsets = [6, 0], sizes = [1, 32], strides = [1, 1]} : vector<8x32xf32> to vector<1x32xf32>
    %817 = vector.extract_strided_slice %809 {offsets = [7, 0], sizes = [1, 32], strides = [1, 1]} : vector<8x32xf32> to vector<1x32xf32>
    %818 = tpu.concatenate %810, %811, %812, %813, %814, %815, %816, %817 in 1 : vector<1x32xf32>, vector<1x32xf32>, vector<1x32xf32>, vector<1x32xf32>, vector<1x32xf32>, vector<1x32xf32>, vector<1x32xf32>, vector<1x32xf32> -> vector<1x256xf32>
    %819 = tpu.concatenate %809, %809, %809, %809, %809, %809, %809, %809 in 1 : vector<8x32xf32>, vector<8x32xf32>, vector<8x32xf32>, vector<8x32xf32>, vector<8x32xf32>, vector<8x32xf32>, vector<8x32xf32>, vector<8x32xf32> -> vector<8x256xf32>
    %820 = vector.broadcast %818 : vector<1x256xf32> to vector<8x256xf32>
    %821 = arith.subf %820, %819 : vector<8x256xf32>
    %c0_178 = arith.constant 0 : index
    %c0_179 = arith.constant 0 : index
    %822 = vector.load %arg27[%c0_178, %c0_179] : memref<1x256xf32, #tpu.memory_space<vmem>>, vector<1x256xf32>
    %823 = vector.broadcast %822 : vector<1x256xf32> to vector<8x256xf32>
    %824 = arith.addf %821, %823 : vector<8x256xf32>
    %cst_180 = arith.constant 0.000000e+00 : f32
    %825 = vector.broadcast %cst_180 : f32 to vector<8x256xf32>
    %826 = arith.cmpf ogt, %824, %825 : vector<8x256xf32>
    %cst_181 = arith.constant 0.00999999977 : f32
    %827 = vector.broadcast %cst_181 : f32 to vector<8x256xf32>
    %828 = arith.mulf %827, %824 : vector<8x256xf32>
    %829 = arith.select %826, %824, %828 : vector<8x256xi1>, vector<8x256xf32>
    %c0_182 = arith.constant 0 : index
    %c0_183 = arith.constant 0 : index
    %830 = vector.load %arg28[%c0_182, %c0_183] : memref<256x128xf32, #tpu.memory_space<vmem>>, vector<256x128xf32>
    %cst_184 = arith.constant dense<0.000000e+00> : vector<8x128xf32>
    %831 = tpu.matmul %829, %830, %cst_184 {dimension_numbers = #tpu.dot_dimension_numbers<[1], [0], [0], [1], [0, 0, 1, 1], [], []>} : vector<8x256xf32>, vector<256x128xf32>, vector<8x128xf32> -> vector<8x128xf32>
    %c0_185 = arith.constant 0 : index
    %c0_186 = arith.constant 0 : index
    %832 = vector.load %arg29[%c0_185, %c0_186] : memref<1x128xf32, #tpu.memory_space<vmem>>, vector<1x128xf32>
    %833 = vector.broadcast %832 : vector<1x128xf32> to vector<8x128xf32>
    %834 = arith.addf %831, %833 : vector<8x128xf32>
    %c0_187 = arith.constant 0 : index
    %c0_188 = arith.constant 0 : index
    %c0_189 = arith.constant 0 : index
    %835 = vector.load %arg5[%c0_187, %c0_188, %c0_189] : memref<1x8x128xf32, #tpu.memory_space<vmem>>, vector<1x8x128xf32>
    %836 = vector.shape_cast %835 : vector<1x8x128xf32> to vector<8x128xf32>
    %cst_190 = arith.constant 2.000000e+00 : f32
    %837 = vector.broadcast %cst_190 : f32 to vector<8x128xf32>
    %838 = arith.mulf %837, %836 : vector<8x128xf32>
    %839 = arith.mulf %838, %834 : vector<8x128xf32>
    %840 = arith.addf %3, %839 : vector<8x128xf32>
    %c0_191 = arith.constant 0 : index
    %c0_192 = arith.constant 0 : index
    %c0_193 = arith.constant 0 : index
    %841 = vector.load %arg31[%c0_191, %c0_192, %c0_193] : memref<1x8x128xf32, #tpu.memory_space<vmem>>, vector<1x8x128xf32>
    %842 = vector.shape_cast %841 : vector<1x8x128xf32> to vector<8x128xf32>
    %843 = vector.shape_cast %840 : vector<8x128xf32> to vector<1x8x128xf32>
    tpu.vector_store %arg31[%c0_191, %c0_192, %c0_193], %843 {strides = array<i32>} : memref<1x8x128xf32, #tpu.memory_space<vmem>>, vector<1x8x128xf32>,
    return
  }
  func.func @transform_0(%arg0: i32) -> (i32, i32, i32) {
    %c0_i32 = arith.constant 0 : i32
    %c0_i32_0 = arith.constant 0 : i32
    %c0_i32_1 = arith.constant 0 : i32
    return %arg0, %c0_i32, %c0_i32_0 : i32, i32, i32
  }
  func.func @transform_1(%arg0: i32) -> (i32, i32, i32) {
    %c0_i32 = arith.constant 0 : i32
    %c0_i32_0 = arith.constant 0 : i32
    %c0_i32_1 = arith.constant 0 : i32
    return %arg0, %c0_i32, %c0_i32_0 : i32, i32, i32
  }
  func.func @transform_2(%arg0: i32) -> (i32, i32, i32) {
    %c0_i32 = arith.constant 0 : i32
    %c0_i32_0 = arith.constant 0 : i32
    %c0_i32_1 = arith.constant 0 : i32
    return %arg0, %c0_i32, %c0_i32_0 : i32, i32, i32
  }
  func.func @transform_3(%arg0: i32) -> (i32, i32, i32) {
    %c0_i32 = arith.constant 0 : i32
    %c0_i32_0 = arith.constant 0 : i32
    %c0_i32_1 = arith.constant 0 : i32
    return %arg0, %c0_i32, %c0_i32_0 : i32, i32, i32
  }
  func.func @transform_4(%arg0: i32) -> (i32, i32, i32) {
    %c0_i32 = arith.constant 0 : i32
    %c0_i32_0 = arith.constant 0 : i32
    %c0_i32_1 = arith.constant 0 : i32
    return %arg0, %c0_i32, %c0_i32_0 : i32, i32, i32
  }
  func.func @transform_5(%arg0: i32) -> (i32, i32, i32) {
    %c0_i32 = arith.constant 0 : i32
    %c0_i32_0 = arith.constant 0 : i32
    %c0_i32_1 = arith.constant 0 : i32
    return %arg0, %c0_i32, %c0_i32_0 : i32, i32, i32
  }
  func.func @transform_6(%arg0: i32) -> (i32, i32, i32) {
    %c0_i32 = arith.constant 0 : i32
    %c0_i32_0 = arith.constant 0 : i32
    %c0_i32_1 = arith.constant 0 : i32
    return %arg0, %c0_i32, %c0_i32_0 : i32, i32, i32
  }
  func.func @transform_7(%arg0: i32) -> (i32, i32) {
    %c0_i32 = arith.constant 0 : i32
    %c0_i32_0 = arith.constant 0 : i32
    %c0_i32_1 = arith.constant 0 : i32
    return %c0_i32, %c0_i32_0 : i32, i32
  }
  func.func @transform_8(%arg0: i32) -> (i32, i32) {
    %c0_i32 = arith.constant 0 : i32
    %c0_i32_0 = arith.constant 0 : i32
    %c0_i32_1 = arith.constant 0 : i32
    return %c0_i32, %c0_i32_0 : i32, i32
  }
  func.func @transform_9(%arg0: i32) -> (i32, i32) {
    %c0_i32 = arith.constant 0 : i32
    %c0_i32_0 = arith.constant 0 : i32
    %c0_i32_1 = arith.constant 0 : i32
    return %c0_i32, %c0_i32_0 : i32, i32
  }
  func.func @transform_10(%arg0: i32) -> (i32, i32) {
    %c0_i32 = arith.constant 0 : i32
    %c0_i32_0 = arith.constant 0 : i32
    %c0_i32_1 = arith.constant 0 : i32
    return %c0_i32, %c0_i32_0 : i32, i32
  }
  func.func @transform_11(%arg0: i32) -> (i32, i32) {
    %c0_i32 = arith.constant 0 : i32
    %c0_i32_0 = arith.constant 0 : i32
    %c0_i32_1 = arith.constant 0 : i32
    return %c0_i32, %c0_i32_0 : i32, i32
  }
  func.func @transform_12(%arg0: i32) -> (i32, i32) {
    %c0_i32 = arith.constant 0 : i32
    %c0_i32_0 = arith.constant 0 : i32
    %c0_i32_1 = arith.constant 0 : i32
    return %c0_i32, %c0_i32_0 : i32, i32
  }
  func.func @transform_13(%arg0: i32) -> (i32, i32) {
    %c0_i32 = arith.constant 0 : i32
    %c0_i32_0 = arith.constant 0 : i32
    %c0_i32_1 = arith.constant 0 : i32
    return %c0_i32, %c0_i32_0 : i32, i32
  }
  func.func @transform_14(%arg0: i32) -> (i32, i32) {
    %c0_i32 = arith.constant 0 : i32
    %c0_i32_0 = arith.constant 0 : i32
    %c0_i32_1 = arith.constant 0 : i32
    return %c0_i32, %c0_i32_0 : i32, i32
  }
  func.func @transform_15(%arg0: i32) -> (i32, i32) {
    %c0_i32 = arith.constant 0 : i32
    %c0_i32_0 = arith.constant 0 : i32
    %c0_i32_1 = arith.constant 0 : i32
    return %c0_i32, %c0_i32_0 : i32, i32
  }
  func.func @transform_16(%arg0: i32) -> (i32, i32) {
    %c0_i32 = arith.constant 0 : i32
    %c0_i32_0 = arith.constant 0 : i32
    %c0_i32_1 = arith.constant 0 : i32
    return %c0_i32, %c0_i32_0 : i32, i32
  }
  func.func @transform_17(%arg0: i32) -> (i32, i32) {
    %c0_i32 = arith.constant 0 : i32
    %c0_i32_0 = arith.constant 0 : i32
    %c0_i32_1 = arith.constant 0 : i32
    return %c0_i32, %c0_i32_0 : i32, i32
  }
  func.func @transform_18(%arg0: i32) -> (i32, i32) {
    %c0_i32 = arith.constant 0 : i32
    %c0_i32_0 = arith.constant 0 : i32
    %c0_i32_1 = arith.constant 0 : i32
    return %c0_i32, %c0_i32_0 : i32, i32
  }
  func.func @transform_19(%arg0: i32) -> (i32, i32) {
    %c0_i32 = arith.constant 0 : i32
    %c0_i32_0 = arith.constant 0 : i32
    %c0_i32_1 = arith.constant 0 : i32
    return %c0_i32, %c0_i32_0 : i32, i32
  }
  func.func @transform_20(%arg0: i32) -> (i32, i32) {
    %c0_i32 = arith.constant 0 : i32
    %c0_i32_0 = arith.constant 0 : i32
    %c0_i32_1 = arith.constant 0 : i32
    return %c0_i32, %c0_i32_0 : i32, i32
  }
  func.func @transform_21(%arg0: i32) -> (i32, i32) {
    %c0_i32 = arith.constant 0 : i32
    %c0_i32_0 = arith.constant 0 : i32
    %c0_i32_1 = arith.constant 0 : i32
    return %c0_i32, %c0_i32_0 : i32, i32
  }
  func.func @transform_22(%arg0: i32) -> (i32, i32) {
    %c0_i32 = arith.constant 0 : i32
    %c0_i32_0 = arith.constant 0 : i32
    %c0_i32_1 = arith.constant 0 : i32
    return %c0_i32, %c0_i32_0 : i32, i32
  }
  func.func @transform_23(%arg0: i32) -> (i32, i32) {
    %c0_i32 = arith.constant 0 : i32
    %c0_i32_0 = arith.constant 0 : i32
    %c0_i32_1 = arith.constant 0 : i32
    return %c0_i32, %c0_i32_0 : i32, i32
  }
  func.func @transform_24(%arg0: i32) -> (i32, i32) {
    %c0_i32 = arith.constant 0 : i32
    %c0_i32_0 = arith.constant 0 : i32
    %c0_i32_1 = arith.constant 0 : i32
    return %c0_i32, %c0_i32_0 : i32, i32
  }
  func.func @transform_25(%arg0: i32) -> (i32, i32) {
    %c0_i32 = arith.constant 0 : i32
    %c0_i32_0 = arith.constant 0 : i32
    %c0_i32_1 = arith.constant 0 : i32
    return %c0_i32, %c0_i32_0 : i32, i32
  }
  func.func @transform_26(%arg0: i32) -> (i32, i32) {
    %c0_i32 = arith.constant 0 : i32
    %c0_i32_0 = arith.constant 0 : i32
    %c0_i32_1 = arith.constant 0 : i32
    return %c0_i32, %c0_i32_0 : i32, i32
  }
  func.func @transform_27(%arg0: i32) -> (i32, i32) {
    %c0_i32 = arith.constant 0 : i32
    %c0_i32_0 = arith.constant 0 : i32
    %c0_i32_1 = arith.constant 0 : i32
    return %c0_i32, %c0_i32_0 : i32, i32
  }
  func.func @transform_28(%arg0: i32) -> (i32, i32) {
    %c0_i32 = arith.constant 0 : i32
    %c0_i32_0 = arith.constant 0 : i32
    %c0_i32_1 = arith.constant 0 : i32
    return %c0_i32, %c0_i32_0 : i32, i32
  }
  func.func @transform_29(%arg0: i32) -> (i32, i32, i32) {
    %c0_i32 = arith.constant 0 : i32
    %c0_i32_0 = arith.constant 0 : i32
    %c0_i32_1 = arith.constant 0 : i32
    return %arg0, %c0_i32, %c0_i32_0 : i32, i32, i32
  }
  func.func @transform_30(%arg0: i32) -> (i32, i32, i32) {
    %c0_i32 = arith.constant 0 : i32
    %c0_i32_0 = arith.constant 0 : i32
    %c0_i32_1 = arith.constant 0 : i32
    return %arg0, %c0_i32, %c0_i32_0 : i32, i32, i32
  }
}

</mosaic_0001>

<llo_original>
// kernel: cross_encoder_block.1
$region0: #{cross_encoder_block.1}
  #allocation0 [shape = 'u32[]', space=smem, size = 0x4, offset = 0x4, fixed_abs, tag = 'smem constant byte address 0x4 - core index']
  #allocation1 [shape = 'u32[144,128]{1,0:T(1,128)}', space=vmem, size = 0x12000, scoped, tag = 'internal scratch']
  %s0 = inlined_call_operand.smem [shape: u32[31], index: -1, kind: input, shape index: {}]
  %s1 = sld [smem:[%s0]]
  %s2 = scalar_lea.smem %s0, 1
  %s3 = sld [smem:[%s2]]
  %s4 = scalar_lea.smem %s0, 2
  %s5 = sld [smem:[%s4]]
  %s6 = scalar_lea.smem %s0, 3
  %s7 = sld [smem:[%s6]]
  %s8 = scalar_lea.smem %s0, 4
  %s9 = sld [smem:[%s8]]
  %s10 = scalar_lea.smem %s0, 5
  %s11 = sld [smem:[%s10]]
  %s12 = scalar_lea.smem %s0, 6
  %s13 = sld [smem:[%s12]]
  %s14 = scalar_lea.smem %s0, 7
  %s15 = sld [smem:[%s14]]
  %s16 = scalar_lea.smem %s0, 8
  %s17 = sld [smem:[%s16]]
  %s18 = scalar_lea.smem %s0, 9
  %s19 = sld [smem:[%s18]]
  %s20 = scalar_lea.smem %s0, 10
  %s21 = sld [smem:[%s20]]
  %s22 = scalar_lea.smem %s0, 11
  %s23 = sld [smem:[%s22]]
  %s24 = scalar_lea.smem %s0, 12
  %s25 = sld [smem:[%s24]]
  %s26 = scalar_lea.smem %s0, 13
  %s27 = sld [smem:[%s26]]
  %s28 = scalar_lea.smem %s0, 14
  %s29 = sld [smem:[%s28]]
  %s30 = scalar_lea.smem %s0, 15
  %s31 = sld [smem:[%s30]]
  %s32 = scalar_lea.smem %s0, 16
  %s33 = sld [smem:[%s32]]
  %s34 = scalar_lea.smem %s0, 17
  %s35 = sld [smem:[%s34]]
  %s36 = scalar_lea.smem %s0, 18
  %s37 = sld [smem:[%s36]]
  %s38 = scalar_lea.smem %s0, 19
  %s39 = sld [smem:[%s38]]
  %s40 = scalar_lea.smem %s0, 20
  %s41 = sld [smem:[%s40]]
  %s42 = scalar_lea.smem %s0, 21
  %s43 = sld [smem:[%s42]]
  %s44 = scalar_lea.smem %s0, 22
  %s45 = sld [smem:[%s44]]
  %s46 = scalar_lea.smem %s0, 23
  %s47 = sld [smem:[%s46]]
  %s48 = scalar_lea.smem %s0, 24
  %s49 = sld [smem:[%s48]]
  %s50 = scalar_lea.smem %s0, 25
  %s51 = sld [smem:[%s50]]
  %s52 = scalar_lea.smem %s0, 26
  %s53 = sld [smem:[%s52]]
  %s54 = scalar_lea.smem %s0, 27
  %s55 = sld [smem:[%s54]]
  %s56 = scalar_lea.smem %s0, 28
  %s57 = sld [smem:[%s56]]
  %s58 = scalar_lea.smem %s0, 29
  %s59 = sld [smem:[%s58]]
  %s60 = scalar_lea.smem %s0, 30
  %s61 = sld [smem:[%s60]]
  %62 = xla_tuple %s59, %s61
  %s63 = sld [smem:[#allocation0]]
  $region157: #{cross_encoder_block.1} parent=0
    _
  %s65 = ssub.s32 1, %s63
  %s66 = scalar_select 0, %s65, %s63
  $region1: #{cross_encoder_block.1} parent=0
    #allocation2 [shape = 'u8[8192]{0}', space=vmem, size = 0x2000, scoped, tag = 'output window, operand 0']
    #allocation3 [shape = 's32[2]{0}', space=sflag, size = 0x8, scoped, tag = 'scoped memory for cross_encoder_block.1']
    %67 = vsyncpa [#allocation3], 0
    %s68 = scalar_lea.sflag [#allocation3], 1
    %69 = vsyncpa %s68, 0
    loop: start=0, step=1, limit=4
    $region2: #{cross_encoder_block.1} parent=1 // loop_pre_header
      _
    $region3: #{cross_encoder_block.1} parent=1 // loop_header
      %s71 = sphi 0, %s75
      %p72 = scmp.ge.s32.totalorder %s71, 4
      %s81 = sphi 0, %s83
      %s84 = sphi 0, %s81
      %s85 = sphi 0, %s84
      %s101 = sphi 0, %s85
      %s107 = sphi 0, %s109
      %s110 = sphi 0, %s107
      %s111 = sphi 0, %s110
      %s127 = sphi 0, %s111
      %s133 = sphi 0, %s135
      %s136 = sphi 0, %s133
      %s137 = sphi 0, %s136
      %s153 = sphi 0, %s137
      %s159 = sphi 0, %s161
      %s162 = sphi 0, %s159
      %s163 = sphi 0, %s162
      %s179 = sphi 0, %s163
      %s185 = sphi 0, %s187
      %s188 = sphi 0, %s185
      %s189 = sphi 0, %s188
      %s205 = sphi 0, %s189
      %s211 = sphi 0, %s213
      %s214 = sphi 0, %s211
      %s215 = sphi 0, %s214
      %s231 = sphi 0, %s215
      %s237 = sphi 0, %s239
      %s240 = sphi 0, %s237
      %s241 = sphi 0, %s240
      %s257 = sphi 0, %s241
      %s261 = sphi 0, %s261
      %s263 = sphi 0, %s261
      %s264 = sphi 0, %s263
      %s278 = sphi 0, %s264
      %s282 = sphi 0, %s282
      %s284 = sphi 0, %s282
      %s285 = sphi 0, %s284
      %s299 = sphi 0, %s285
      %s303 = sphi 0, %s303
      %s305 = sphi 0, %s303
      %s306 = sphi 0, %s305
      %s320 = sphi 0, %s306
      %s324 = sphi 0, %s324
      %s326 = sphi 0, %s324
      %s327 = sphi 0, %s326
      %s341 = sphi 0, %s327
      %s345 = sphi 0, %s345
      %s347 = sphi 0, %s345
      %s348 = sphi 0, %s347
      %s362 = sphi 0, %s348
      %s366 = sphi 0, %s366
      %s368 = sphi 0, %s366
      %s369 = sphi 0, %s368
      %s383 = sphi 0, %s369
      %s387 = sphi 0, %s387
      %s389 = sphi 0, %s387
      %s390 = sphi 0, %s389
      %s404 = sphi 0, %s390
      %s408 = sphi 0, %s408
      %s410 = sphi 0, %s408
      %s411 = sphi 0, %s410
      %s425 = sphi 0, %s411
      %s429 = sphi 0, %s429
      %s431 = sphi 0, %s429
      %s432 = sphi 0, %s431
      %s446 = sphi 0, %s432
      %s450 = sphi 0, %s450
      %s452 = sphi 0, %s450
      %s453 = sphi 0, %s452
      %s467 = sphi 0, %s453
      %s471 = sphi 0, %s471
      %s473 = sphi 0, %s471
      %s474 = sphi 0, %s473
      %s488 = sphi 0, %s474
      %s492 = sphi 0, %s492
      %s494 = sphi 0, %s492
      %s495 = sphi 0, %s494
      %s509 = sphi 0, %s495
      %s513 = sphi 0, %s513
      %s515 = sphi 0, %s513
      %s516 = sphi 0, %s515
      %s530 = sphi 0, %s516
      %s534 = sphi 0, %s534
      %s536 = sphi 0, %s534
      %s537 = sphi 0, %s536
      %s551 = sphi 0, %s537
      %s555 = sphi 0, %s555
      %s557 = sphi 0, %s555
      %s558 = sphi 0, %s557
      %s572 = sphi 0, %s558
      %s576 = sphi 0, %s576
      %s578 = sphi 0, %s576
      %s579 = sphi 0, %s578
      %s593 = sphi 0, %s579
      %s597 = sphi 0, %s597
      %s599 = sphi 0, %s597
      %s600 = sphi 0, %s599
      %s614 = sphi 0, %s600
      %s618 = sphi 0, %s618
      %s620 = sphi 0, %s618
      %s621 = sphi 0, %s620
      %s635 = sphi 0, %s621
      %s639 = sphi 0, %s639
      %s641 = sphi 0, %s639
      %s642 = sphi 0, %s641
      %s656 = sphi 0, %s642
      %s660 = sphi 0, %s660
      %s662 = sphi 0, %s660
      %s663 = sphi 0, %s662
      %s677 = sphi 0, %s663
      %s681 = sphi 0, %s681
      %s683 = sphi 0, %s681
      %s684 = sphi 0, %s683
      %s698 = sphi 0, %s684
      %s702 = sphi 0, %s702
      %s704 = sphi 0, %s702
      %s705 = sphi 0, %s704
      %s719 = sphi 0, %s705
      %s725 = sphi 0, %s727
      %s728 = sphi 0, %s725
      %s729 = sphi 0, %s728
      %s745 = sphi 0, %s729
      %s751 = sphi 0, %s753
      %s754 = sphi 0, %s751
      %s755 = sphi 0, %s754
      %s771 = sphi 0, %s755
    $region4: #{cross_encoder_block.1} parent=1 // loop_header_branch
      %74 = sbr.rel (%p72) target = $region8
    $region5: #{cross_encoder_block.1} parent=1 // loop_body
      %s76 = ssub.s32 %s71, 1
      %s77 = ssub.s32 %s71, 2
      %s78 = sadd.s32 %s71, 1
      %s79 = ssub.s32 %s71, %s78
      %p80 = scmp.eq.s32.totalorder %s79, 0
      %s82 = sadd.s32 %s81, 1
      %s83 = scalar_select %p80, %s81, %s82
      %p86 = pneg %p80
      %p87 = scmp.eq.s32.totalorder %s71, 1
      %p88 = por %p86, %p87
      %p89 = scmp.ne.s32.totalorder %s81, %s84
      %p90 = scmp.eq.s32.totalorder %s71, 0
      %p91 = por %p89, %p90
      %p92 = scmp.ne.s32.totalorder %s81, %s84
      %p93 = scmp.eq.s32.totalorder %s76, 1
      %p94 = por %p92, %p93
      %p95 = scmp.ne.s32.totalorder %s84, %s85
      %p96 = scmp.eq.s32.totalorder %s76, 0
      %p97 = por %p95, %p96
      %p98 = scmp.ne.s32.totalorder %s84, %s85
      %p99 = scmp.eq.s32.totalorder %s77, 1
      %p100 = por %p98, %p99
      %p102 = scmp.ne.s32.totalorder %s85, %s101
      %p103 = scmp.eq.s32.totalorder %s77, 0
      %p104 = por %p102, %p103
      %s105 = ssub.s32 %s71, %s78
      %p106 = scmp.eq.s32.totalorder %s105, 0
      %s108 = sadd.s32 %s107, 1
      %s109 = scalar_select %p106, %s107, %s108
      %p112 = pneg %p106
      %p113 = scmp.eq.s32.totalorder %s71, 1
      %p114 = por %p112, %p113
      %p115 = scmp.ne.s32.totalorder %s107, %s110
      %p116 = scmp.eq.s32.totalorder %s71, 0
      %p117 = por %p115, %p116
      %p118 = scmp.ne.s32.totalorder %s107, %s110
      %p119 = scmp.eq.s32.totalorder %s76, 1
      %p120 = por %p118, %p119
      %p121 = scmp.ne.s32.totalorder %s110, %s111
      %p122 = scmp.eq.s32.totalorder %s76, 0
      %p123 = por %p121, %p122
      %p124 = scmp.ne.s32.totalorder %s110, %s111
      %p125 = scmp.eq.s32.totalorder %s77, 1
      %p126 = por %p124, %p125
      %p128 = scmp.ne.s32.totalorder %s111, %s127
      %p129 = scmp.eq.s32.totalorder %s77, 0
      %p130 = por %p128, %p129
      %s131 = ssub.s32 %s71, %s78
      %p132 = scmp.eq.s32.totalorder %s131, 0
      %s134 = sadd.s32 %s133, 1
      %s135 = scalar_select %p132, %s133, %s134
      %p138 = pneg %p132
      %p139 = scmp.eq.s32.totalorder %s71, 1
      %p140 = por %p138, %p139
      %p141 = scmp.ne.s32.totalorder %s133, %s136
      %p142 = scmp.eq.s32.totalorder %s71, 0
      %p143 = por %p141, %p142
      %p144 = scmp.ne.s32.totalorder %s133, %s136
      %p145 = scmp.eq.s32.totalorder %s76, 1
      %p146 = por %p144, %p145
      %p147 = scmp.ne.s32.totalorder %s136, %s137
      %p148 = scmp.eq.s32.totalorder %s76, 0
      %p149 = por %p147, %p148
      %p150 = scmp.ne.s32.totalorder %s136, %s137
      %p151 = scmp.eq.s32.totalorder %s77, 1
      %p152 = por %p150, %p151
      %p154 = scmp.ne.s32.totalorder %s137, %s153
      %p155 = scmp.eq.s32.totalorder %s77, 0
      %p156 = por %p154, %p155
      %s157 = ssub.s32 %s71, %s78
      %p158 = scmp.eq.s32.totalorder %s157, 0
      %s160 = sadd.s32 %s159, 1
      %s161 = scalar_select %p158, %s159, %s160
      %p164 = pneg %p158
      %p165 = scmp.eq.s32.totalorder %s71, 1
      %p166 = por %p164, %p165
      %p167 = scmp.ne.s32.totalorder %s159, %s162
      %p168 = scmp.eq.s32.totalorder %s71, 0
      %p169 = por %p167, %p168
      %p170 = scmp.ne.s32.totalorder %s159, %s162
      %p171 = scmp.eq.s32.totalorder %s76, 1
      %p172 = por %p170, %p171
      %p173 = scmp.ne.s32.totalorder %s162, %s163
      %p174 = scmp.eq.s32.totalorder %s76, 0
      %p175 = por %p173, %p174
      %p176 = scmp.ne.s32.totalorder %s162, %s163
      %p177 = scmp.eq.s32.totalorder %s77, 1
      %p178 = por %p176, %p177
      %p180 = scmp.ne.s32.totalorder %s163, %s179
      %p181 = scmp.eq.s32.totalorder %s77, 0
      %p182 = por %p180, %p181
      %s183 = ssub.s32 %s71, %s78
      %p184 = scmp.eq.s32.totalorder %s183, 0
      %s186 = sadd.s32 %s185, 1
      %s187 = scalar_select %p184, %s185, %s186
      %p190 = pneg %p184
      %p191 = scmp.eq.s32.totalorder %s71, 1
      %p192 = por %p190, %p191
      %p193 = scmp.ne.s32.totalorder %s185, %s188
      %p194 = scmp.eq.s32.totalorder %s71, 0
      %p195 = por %p193, %p194
      %p196 = scmp.ne.s32.totalorder %s185, %s188
      %p197 = scmp.eq.s32.totalorder %s76, 1
      %p198 = por %p196, %p197
      %p199 = scmp.ne.s32.totalorder %s188, %s189
      %p200 = scmp.eq.s32.totalorder %s76, 0
      %p201 = por %p199, %p200
      %p202 = scmp.ne.s32.totalorder %s188, %s189
      %p203 = scmp.eq.s32.totalorder %s77, 1
      %p204 = por %p202, %p203
      %p206 = scmp.ne.s32.totalorder %s189, %s205
      %p207 = scmp.eq.s32.totalorder %s77, 0
      %p208 = por %p206, %p207
      %s209 = ssub.s32 %s71, %s78
      %p210 = scmp.eq.s32.totalorder %s209, 0
      %s212 = sadd.s32 %s211, 1
      %s213 = scalar_select %p210, %s211, %s212
      %p216 = pneg %p210
      %p217 = scmp.eq.s32.totalorder %s71, 1
      %p218 = por %p216, %p217
      %p219 = scmp.ne.s32.totalorder %s211, %s214
      %p220 = scmp.eq.s32.totalorder %s71, 0
      %p221 = por %p219, %p220
      %p222 = scmp.ne.s32.totalorder %s211, %s214
      %p223 = scmp.eq.s32.totalorder %s76, 1
      %p224 = por %p222, %p223
      %p225 = scmp.ne.s32.totalorder %s214, %s215
      %p226 = scmp.eq.s32.totalorder %s76, 0
      %p227 = por %p225, %p226
      %p228 = scmp.ne.s32.totalorder %s214, %s215
      %p229 = scmp.eq.s32.totalorder %s77, 1
      %p230 = por %p228, %p229
      %p232 = scmp.ne.s32.totalorder %s215, %s231
      %p233 = scmp.eq.s32.totalorder %s77, 0
      %p234 = por %p232, %p233
      %s235 = ssub.s32 %s71, %s78
      %p236 = scmp.eq.s32.totalorder %s235, 0
      %s238 = sadd.s32 %s237, 1
      %s239 = scalar_select %p236, %s237, %s238
      %p242 = pneg %p236
      %p243 = scmp.eq.s32.totalorder %s71, 1
      %p244 = por %p242, %p243
      %p245 = scmp.ne.s32.totalorder %s237, %s240
      %p246 = scmp.eq.s32.totalorder %s71, 0
      %p247 = por %p245, %p246
      %p248 = scmp.ne.s32.totalorder %s237, %s240
      %p249 = scmp.eq.s32.totalorder %s76, 1
      %p250 = por %p248, %p249
      %p251 = scmp.ne.s32.totalorder %s240, %s241
      %p252 = scmp.eq.s32.totalorder %s76, 0
      %p253 = por %p251, %p252
      %p254 = scmp.ne.s32.totalorder %s240, %s241
      %p255 = scmp.eq.s32.totalorder %s77, 1
      %p256 = por %p254, %p255
      %p258 = scmp.ne.s32.totalorder %s241, %s257
      %p259 = scmp.eq.s32.totalorder %s77, 0
      %p260 = por %p258, %p259
      %s262 = sadd.s32 %s261, 1
      %p265 = scmp.eq.s32.totalorder %s71, 1
      %p266 = scmp.ne.s32.totalorder %s261, %s263
      %p267 = scmp.eq.s32.totalorder %s71, 0
      %p268 = por %p266, %p267
      %p269 = scmp.ne.s32.totalorder %s261, %s263
      %p270 = scmp.eq.s32.totalorder %s76, 1
      %p271 = por %p269, %p270
      %p272 = scmp.ne.s32.totalorder %s263, %s264
      %p273 = scmp.eq.s32.totalorder %s76, 0
      %p274 = por %p272, %p273
      %p275 = scmp.ne.s32.totalorder %s263, %s264
      %p276 = scmp.eq.s32.totalorder %s77, 1
      %p277 = por %p275, %p276
      %p279 = scmp.ne.s32.totalorder %s264, %s278
      %p280 = scmp.eq.s32.totalorder %s77, 0
      %p281 = por %p279, %p280
      %s283 = sadd.s32 %s282, 1
      %p286 = scmp.eq.s32.totalorder %s71, 1
      %p287 = scmp.ne.s32.totalorder %s282, %s284
      %p288 = scmp.eq.s32.totalorder %s71, 0
      %p289 = por %p287, %p288
      %p290 = scmp.ne.s32.totalorder %s282, %s284
      %p291 = scmp.eq.s32.totalorder %s76, 1
      %p292 = por %p290, %p291
      %p293 = scmp.ne.s32.totalorder %s284, %s285
      %p294 = scmp.eq.s32.totalorder %s76, 0
      %p295 = por %p293, %p294
      %p296 = scmp.ne.s32.totalorder %s284, %s285
      %p297 = scmp.eq.s32.totalorder %s77, 1
      %p298 = por %p296, %p297
      %p300 = scmp.ne.s32.totalorder %s285, %s299
      %p301 = scmp.eq.s32.totalorder %s77, 0
      %p302 = por %p300, %p301
      %s304 = sadd.s32 %s303, 1
      %p307 = scmp.eq.s32.totalorder %s71, 1
      %p308 = scmp.ne.s32.totalorder %s303, %s305
      %p309 = scmp.eq.s32.totalorder %s71, 0
      %p310 = por %p308, %p309
      %p311 = scmp.ne.s32.totalorder %s303, %s305
      %p312 = scmp.eq.s32.totalorder %s76, 1
      %p313 = por %p311, %p312
      %p314 = scmp.ne.s32.totalorder %s305, %s306
      %p315 = scmp.eq.s32.totalorder %s76, 0
      %p316 = por %p314, %p315
      %p317 = scmp.ne.s32.totalorder %s305, %s306
      %p318 = scmp.eq.s32.totalorder %s77, 1
      %p319 = por %p317, %p318
      %p321 = scmp.ne.s32.totalorder %s306, %s320
      %p322 = scmp.eq.s32.totalorder %s77, 0
      %p323 = por %p321, %p322
      %s325 = sadd.s32 %s324, 1
      %p328 = scmp.eq.s32.totalorder %s71, 1
      %p329 = scmp.ne.s32.totalorder %s324, %s326
      %p330 = scmp.eq.s32.totalorder %s71, 0
      %p331 = por %p329, %p330
      %p332 = scmp.ne.s32.totalorder %s324, %s326
      %p333 = scmp.eq.s32.totalorder %s76, 1
      %p334 = por %p332, %p333
      %p335 = scmp.ne.s32.totalorder %s326, %s327
      %p336 = scmp.eq.s32.totalorder %s76, 0
      %p337 = por %p335, %p336
      %p338 = scmp.ne.s32.totalorder %s326, %s327
      %p339 = scmp.eq.s32.totalorder %s77, 1
      %p340 = por %p338, %p339
      %p342 = scmp.ne.s32.totalorder %s327, %s341
      %p343 = scmp.eq.s32.totalorder %s77, 0
      %p344 = por %p342, %p343
      %s346 = sadd.s32 %s345, 1
      %p349 = scmp.eq.s32.totalorder %s71, 1
      %p350 = scmp.ne.s32.totalorder %s345, %s347
      %p351 = scmp.eq.s32.totalorder %s71, 0
      %p352 = por %p350, %p351
      %p353 = scmp.ne.s32.totalorder %s345, %s347
      %p354 = scmp.eq.s32.totalorder %s76, 1
      %p355 = por %p353, %p354
      %p356 = scmp.ne.s32.totalorder %s347, %s348
      %p357 = scmp.eq.s32.totalorder %s76, 0
      %p358 = por %p356, %p357
      %p359 = scmp.ne.s32.totalorder %s347, %s348
      %p360 = scmp.eq.s32.totalorder %s77, 1
      %p361 = por %p359, %p360
      %p363 = scmp.ne.s32.totalorder %s348, %s362
      %p364 = scmp.eq.s32.totalorder %s77, 0
      %p365 = por %p363, %p364
      %s367 = sadd.s32 %s366, 1
      %p370 = scmp.eq.s32.totalorder %s71, 1
      %p371 = scmp.ne.s32.totalorder %s366, %s368
      %p372 = scmp.eq.s32.totalorder %s71, 0
      %p373 = por %p371, %p372
      %p374 = scmp.ne.s32.totalorder %s366, %s368
      %p375 = scmp.eq.s32.totalorder %s76, 1
      %p376 = por %p374, %p375
      %p377 = scmp.ne.s32.totalorder %s368, %s369
      %p378 = scmp.eq.s32.totalorder %s76, 0
      %p379 = por %p377, %p378
      %p380 = scmp.ne.s32.totalorder %s368, %s369
      %p381 = scmp.eq.s32.totalorder %s77, 1
      %p382 = por %p380, %p381
      %p384 = scmp.ne.s32.totalorder %s369, %s383
      %p385 = scmp.eq.s32.totalorder %s77, 0
      %p386 = por %p384, %p385
      %s388 = sadd.s32 %s387, 1
      %p391 = scmp.eq.s32.totalorder %s71, 1
      %p392 = scmp.ne.s32.totalorder %s387, %s389
      %p393 = scmp.eq.s32.totalorder %s71, 0
      %p394 = por %p392, %p393
      %p395 = scmp.ne.s32.totalorder %s387, %s389
      %p396 = scmp.eq.s32.totalorder %s76, 1
      %p397 = por %p395, %p396
      %p398 = scmp.ne.s32.totalorder %s389, %s390
      %p399 = scmp.eq.s32.totalorder %s76, 0
      %p400 = por %p398, %p399
      %p401 = scmp.ne.s32.totalorder %s389, %s390
      %p402 = scmp.eq.s32.totalorder %s77, 1
      %p403 = por %p401, %p402
      %p405 = scmp.ne.s32.totalorder %s390, %s404
      %p406 = scmp.eq.s32.totalorder %s77, 0
      %p407 = por %p405, %p406
      %s409 = sadd.s32 %s408, 1
      %p412 = scmp.eq.s32.totalorder %s71, 1
      %p413 = scmp.ne.s32.totalorder %s408, %s410
      %p414 = scmp.eq.s32.totalorder %s71, 0
      %p415 = por %p413, %p414
      %p416 = scmp.ne.s32.totalorder %s408, %s410
      %p417 = scmp.eq.s32.totalorder %s76, 1
      %p418 = por %p416, %p417
      %p419 = scmp.ne.s32.totalorder %s410, %s411
      %p420 = scmp.eq.s32.totalorder %s76, 0
      %p421 = por %p419, %p420
      %p422 = scmp.ne.s32.totalorder %s410, %s411
      %p423 = scmp.eq.s32.totalorder %s77, 1
      %p424 = por %p422, %p423
      %p426 = scmp.ne.s32.totalorder %s411, %s425
      %p427 = scmp.eq.s32.totalorder %s77, 0
      %p428 = por %p426, %p427
      %s430 = sadd.s32 %s429, 1
      %p433 = scmp.eq.s32.totalorder %s71, 1
      %p434 = scmp.ne.s32.totalorder %s429, %s431
      %p435 = scmp.eq.s32.totalorder %s71, 0
      %p436 = por %p434, %p435
      %p437 = scmp.ne.s32.totalorder %s429, %s431
      %p438 = scmp.eq.s32.totalorder %s76, 1
      %p439 = por %p437, %p438
      %p440 = scmp.ne.s32.totalorder %s431, %s432
      %p441 = scmp.eq.s32.totalorder %s76, 0
      %p442 = por %p440, %p441
      %p443 = scmp.ne.s32.totalorder %s431, %s432
      %p444 = scmp.eq.s32.totalorder %s77, 1
      %p445 = por %p443, %p444
      %p447 = scmp.ne.s32.totalorder %s432, %s446
      %p448 = scmp.eq.s32.totalorder %s77, 0
      %p449 = por %p447, %p448
      %s451 = sadd.s32 %s450, 1
      %p454 = scmp.eq.s32.totalorder %s71, 1
      %p455 = scmp.ne.s32.totalorder %s450, %s452
      %p456 = scmp.eq.s32.totalorder %s71, 0
      %p457 = por %p455, %p456
      %p458 = scmp.ne.s32.totalorder %s450, %s452
      %p459 = scmp.eq.s32.totalorder %s76, 1
      %p460 = por %p458, %p459
      %p461 = scmp.ne.s32.totalorder %s452, %s453
      %p462 = scmp.eq.s32.totalorder %s76, 0
      %p463 = por %p461, %p462
      %p464 = scmp.ne.s32.totalorder %s452, %s453
      %p465 = scmp.eq.s32.totalorder %s77, 1
      %p466 = por %p464, %p465
      %p468 = scmp.ne.s32.totalorder %s453, %s467
      %p469 = scmp.eq.s32.totalorder %s77, 0
      %p470 = por %p468, %p469
      %s472 = sadd.s32 %s471, 1
      %p475 = scmp.eq.s32.totalorder %s71, 1
      %p476 = scmp.ne.s32.totalorder %s471, %s473
      %p477 = scmp.eq.s32.totalorder %s71, 0
      %p478 = por %p476, %p477
      %p479 = scmp.ne.s32.totalorder %s471, %s473
      %p480 = scmp.eq.s32.totalorder %s76, 1
      %p481 = por %p479, %p480
      %p482 = scmp.ne.s32.totalorder %s473, %s474
      %p483 = scmp.eq.s32.totalorder %s76, 0
      %p484 = por %p482, %p483
      %p485 = scmp.ne.s32.totalorder %s473, %s474
      %p486 = scmp.eq.s32.totalorder %s77, 1
      %p487 = por %p485, %p486
      %p489 = scmp.ne.s32.totalorder %s474, %s488
      %p490 = scmp.eq.s32.totalorder %s77, 0
      %p491 = por %p489, %p490
      %s493 = sadd.s32 %s492, 1
      %p496 = scmp.eq.s32.totalorder %s71, 1
      %p497 = scmp.ne.s32.totalorder %s492, %s494
      %p498 = scmp.eq.s32.totalorder %s71, 0
      %p499 = por %p497, %p498
      %p500 = scmp.ne.s32.totalorder %s492, %s494
      %p501 = scmp.eq.s32.totalorder %s76, 1
      %p502 = por %p500, %p501
      %p503 = scmp.ne.s32.totalorder %s494, %s495
      %p504 = scmp.eq.s32.totalorder %s76, 0
      %p505 = por %p503, %p504
      %p506 = scmp.ne.s32.totalorder %s494, %s495
      %p507 = scmp.eq.s32.totalorder %s77, 1
      %p508 = por %p506, %p507
      %p510 = scmp.ne.s32.totalorder %s495, %s509
      %p511 = scmp.eq.s32.totalorder %s77, 0
      %p512 = por %p510, %p511
      %s514 = sadd.s32 %s513, 1
      %p517 = scmp.eq.s32.totalorder %s71, 1
      %p518 = scmp.ne.s32.totalorder %s513, %s515
      %p519 = scmp.eq.s32.totalorder %s71, 0
      %p520 = por %p518, %p519
      %p521 = scmp.ne.s32.totalorder %s513, %s515
      %p522 = scmp.eq.s32.totalorder %s76, 1
      %p523 = por %p521, %p522
      %p524 = scmp.ne.s32.totalorder %s515, %s516
      %p525 = scmp.eq.s32.totalorder %s76, 0
      %p526 = por %p524, %p525
      %p527 = scmp.ne.s32.totalorder %s515, %s516
      %p528 = scmp.eq.s32.totalorder %s77, 1
      %p529 = por %p527, %p528
      %p531 = scmp.ne.s32.totalorder %s516, %s530
      %p532 = scmp.eq.s32.totalorder %s77, 0
      %p533 = por %p531, %p532
      %s535 = sadd.s32 %s534, 1
      %p538 = scmp.eq.s32.totalorder %s71, 1
      %p539 = scmp.ne.s32.totalorder %s534, %s536
      %p540 = scmp.eq.s32.totalorder %s71, 0
      %p541 = por %p539, %p540
      %p542 = scmp.ne.s32.totalorder %s534, %s536
      %p543 = scmp.eq.s32.totalorder %s76, 1
      %p544 = por %p542, %p543
      %p545 = scmp.ne.s32.totalorder %s536, %s537
      %p546 = scmp.eq.s32.totalorder %s76, 0
      %p547 = por %p545, %p546
      %p548 = scmp.ne.s32.totalorder %s536, %s537
      %p549 = scmp.eq.s32.totalorder %s77, 1
      %p550 = por %p548, %p549
      %p552 = scmp.ne.s32.totalorder %s537, %s551
      %p553 = scmp.eq.s32.totalorder %s77, 0
      %p554 = por %p552, %p553
      %s556 = sadd.s32 %s555, 1
      %p559 = scmp.eq.s32.totalorder %s71, 1
      %p560 = scmp.ne.s32.totalorder %s555, %s557
      %p561 = scmp.eq.s32.totalorder %s71, 0
      %p562 = por %p560, %p561
      %p563 = scmp.ne.s32.totalorder %s555, %s557
      %p564 = scmp.eq.s32.totalorder %s76, 1
      %p565 = por %p563, %p564
      %p566 = scmp.ne.s32.totalorder %s557, %s558
      %p567 = scmp.eq.s32.totalorder %s76, 0
      %p568 = por %p566, %p567
      %p569 = scmp.ne.s32.totalorder %s557, %s558
      %p570 = scmp.eq.s32.totalorder %s77, 1
      %p571 = por %p569, %p570
      %p573 = scmp.ne.s32.totalorder %s558, %s572
      %p574 = scmp.eq.s32.totalorder %s77, 0
      %p575 = por %p573, %p574
      %s577 = sadd.s32 %s576, 1
      %p580 = scmp.eq.s32.totalorder %s71, 1
      %p581 = scmp.ne.s32.totalorder %s576, %s578
      %p582 = scmp.eq.s32.totalorder %s71, 0
      %p583 = por %p581, %p582
      %p584 = scmp.ne.s32.totalorder %s576, %s578
      %p585 = scmp.eq.s32.totalorder %s76, 1
      %p586 = por %p584, %p585
      %p587 = scmp.ne.s32.totalorder %s578, %s579
      %p588 = scmp.eq.s32.totalorder %s76, 0
      %p589 = por %p587, %p588
      %p590 = scmp.ne.s32.totalorder %s578, %s579
      %p591 = scmp.eq.s32.totalorder %s77, 1
      %p592 = por %p590, %p591
      %p594 = scmp.ne.s32.totalorder %s579, %s593
      %p595 = scmp.eq.s32.totalorder %s77, 0
      %p596 = por %p594, %p595
      %s598 = sadd.s32 %s597, 1
      %p601 = scmp.eq.s32.totalorder %s71, 1
      %p602 = scmp.ne.s32.totalorder %s597, %s599
      %p603 = scmp.eq.s32.totalorder %s71, 0
      %p604 = por %p602, %p603
      %p605 = scmp.ne.s32.totalorder %s597, %s599
      %p606 = scmp.eq.s32.totalorder %s76, 1
      %p607 = por %p605, %p606
      %p608 = scmp.ne.s32.totalorder %s599, %s600
      %p609 = scmp.eq.s32.totalorder %s76, 0
      %p610 = por %p608, %p609
      %p611 = scmp.ne.s32.totalorder %s599, %s600
      %p612 = scmp.eq.s32.totalorder %s77, 1
      %p613 = por %p611, %p612
      %p615 = scmp.ne.s32.totalorder %s600, %s614
      %p616 = scmp.eq.s32.totalorder %s77, 0
      %p617 = por %p615, %p616
      %s619 = sadd.s32 %s618, 1
      %p622 = scmp.eq.s32.totalorder %s71, 1
      %p623 = scmp.ne.s32.totalorder %s618, %s620
      %p624 = scmp.eq.s32.totalorder %s71, 0
      %p625 = por %p623, %p624
      %p626 = scmp.ne.s32.totalorder %s618, %s620
      %p627 = scmp.eq.s32.totalorder %s76, 1
      %p628 = por %p626, %p627
      %p629 = scmp.ne.s32.totalorder %s620, %s621
      %p630 = scmp.eq.s32.totalorder %s76, 0
      %p631 = por %p629, %p630
      %p632 = scmp.ne.s32.totalorder %s620, %s621
      %p633 = scmp.eq.s32.totalorder %s77, 1
      %p634 = por %p632, %p633
      %p636 = scmp.ne.s32.totalorder %s621, %s635
      %p637 = scmp.eq.s32.totalorder %s77, 0
      %p638 = por %p636, %p637
      %s640 = sadd.s32 %s639, 1
      %p643 = scmp.eq.s32.totalorder %s71, 1
      %p644 = scmp.ne.s32.totalorder %s639, %s641
      %p645 = scmp.eq.s32.totalorder %s71, 0
      %p646 = por %p644, %p645
      %p647 = scmp.ne.s32.totalorder %s639, %s641
      %p648 = scmp.eq.s32.totalorder %s76, 1
      %p649 = por %p647, %p648
      %p650 = scmp.ne.s32.totalorder %s641, %s642
      %p651 = scmp.eq.s32.totalorder %s76, 0
      %p652 = por %p650, %p651
      %p653 = scmp.ne.s32.totalorder %s641, %s642
      %p654 = scmp.eq.s32.totalorder %s77, 1
      %p655 = por %p653, %p654
      %p657 = scmp.ne.s32.totalorder %s642, %s656
      %p658 = scmp.eq.s32.totalorder %s77, 0
      %p659 = por %p657, %p658
      %s661 = sadd.s32 %s660, 1
      %p664 = scmp.eq.s32.totalorder %s71, 1
      %p665 = scmp.ne.s32.totalorder %s660, %s662
      %p666 = scmp.eq.s32.totalorder %s71, 0
      %p667 = por %p665, %p666
      %p668 = scmp.ne.s32.totalorder %s660, %s662
      %p669 = scmp.eq.s32.totalorder %s76, 1
      %p670 = por %p668, %p669
      %p671 = scmp.ne.s32.totalorder %s662, %s663
      %p672 = scmp.eq.s32.totalorder %s76, 0
      %p673 = por %p671, %p672
      %p674 = scmp.ne.s32.totalorder %s662, %s663
      %p675 = scmp.eq.s32.totalorder %s77, 1
      %p676 = por %p674, %p675
      %p678 = scmp.ne.s32.totalorder %s663, %s677
      %p679 = scmp.eq.s32.totalorder %s77, 0
      %p680 = por %p678, %p679
      %s682 = sadd.s32 %s681, 1
      %p685 = scmp.eq.s32.totalorder %s71, 1
      %p686 = scmp.ne.s32.totalorder %s681, %s683
      %p687 = scmp.eq.s32.totalorder %s71, 0
      %p688 = por %p686, %p687
      %p689 = scmp.ne.s32.totalorder %s681, %s683
      %p690 = scmp.eq.s32.totalorder %s76, 1
      %p691 = por %p689, %p690
      %p692 = scmp.ne.s32.totalorder %s683, %s684
      %p693 = scmp.eq.s32.totalorder %s76, 0
      %p694 = por %p692, %p693
      %p695 = scmp.ne.s32.totalorder %s683, %s684
      %p696 = scmp.eq.s32.totalorder %s77, 1
      %p697 = por %p695, %p696
      %p699 = scmp.ne.s32.totalorder %s684, %s698
      %p700 = scmp.eq.s32.totalorder %s77, 0
      %p701 = por %p699, %p700
      %s703 = sadd.s32 %s702, 1
      %p706 = scmp.eq.s32.totalorder %s71, 1
      %p707 = scmp.ne.s32.totalorder %s702, %s704
      %p708 = scmp.eq.s32.totalorder %s71, 0
      %p709 = por %p707, %p708
      %p710 = scmp.ne.s32.totalorder %s702, %s704
      %p711 = scmp.eq.s32.totalorder %s76, 1
      %p712 = por %p710, %p711
      %p713 = scmp.ne.s32.totalorder %s704, %s705
      %p714 = scmp.eq.s32.totalorder %s76, 0
      %p715 = por %p713, %p714
      %p716 = scmp.ne.s32.totalorder %s704, %s705
      %p717 = scmp.eq.s32.totalorder %s77, 1
      %p718 = por %p716, %p717
      %p720 = scmp.ne.s32.totalorder %s705, %s719
      %p721 = scmp.eq.s32.totalorder %s77, 0
      %p722 = por %p720, %p721
      %s723 = ssub.s32 %s71, %s78
      %p724 = scmp.eq.s32.totalorder %s723, 0
      %s726 = sadd.s32 %s725, 1
      %s727 = scalar_select %p724, %s725, %s726
      %p730 = pneg %p724
      %p731 = scmp.eq.s32.totalorder %s71, 1
      %p732 = por %p730, %p731
      %p733 = scmp.ne.s32.totalorder %s725, %s728
      %p734 = scmp.eq.s32.totalorder %s71, 0
      %p735 = por %p733, %p734
      %p736 = scmp.ne.s32.totalorder %s725, %s728
      %p737 = scmp.eq.s32.totalorder %s76, 1
      %p738 = por %p736, %p737
      %p739 = scmp.ne.s32.totalorder %s728, %s729
      %p740 = scmp.eq.s32.totalorder %s76, 0
      %p741 = por %p739, %p740
      %p742 = scmp.ne.s32.totalorder %s728, %s729
      %p743 = scmp.eq.s32.totalorder %s77, 1
      %p744 = por %p742, %p743
      %p746 = scmp.ne.s32.totalorder %s729, %s745
      %p747 = scmp.eq.s32.totalorder %s77, 0
      %p748 = por %p746, %p747
      %s749 = ssub.s32 %s71, %s78
      %p750 = scmp.eq.s32.totalorder %s749, 0
      %s752 = sadd.s32 %s751, 1
      %s753 = scalar_select %p750, %s751, %s752
      %p756 = pneg %p750
      %p757 = scmp.eq.s32.totalorder %s71, 1
      %p758 = por %p756, %p757
      %p759 = scmp.ne.s32.totalorder %s751, %s754
      %p760 = scmp.eq.s32.totalorder %s71, 0
      %p761 = por %p759, %p760
      %p762 = scmp.ne.s32.totalorder %s751, %s754
      %p763 = scmp.eq.s32.totalorder %s76, 1
      %p764 = por %p762, %p763
      %p765 = scmp.ne.s32.totalorder %s754, %s755
      %p766 = scmp.eq.s32.totalorder %s76, 0
      %p767 = por %p765, %p766
      %p768 = scmp.ne.s32.totalorder %s754, %s755
      %p769 = scmp.eq.s32.totalorder %s77, 1
      %p770 = por %p768, %p769
      %p772 = scmp.ne.s32.totalorder %s755, %s771
      %p773 = scmp.eq.s32.totalorder %s77, 0
      %p774 = por %p772, %p773
      %p775 = scmp.le.s32.totalorder 1, %s71
      %p776 = scmp.lt.s32.totalorder %s71, 3
      %p777 = pnand %p775, %p776
      %p778 = pneg %p777
      // Predicated region
      $region9: #{cross_encoder_block.1} parent=5 // pred_check
        _
      $region10: #{cross_encoder_block.1} parent=5 // pred_check_branch
        %780 = sbr.rel (%p777) target = $region12
      $region11: #{cross_encoder_block.1} parent=5 // pred_region
        %s781 = ssub.s32 %s71, 1
        // Predicated region
        $region13: #{cross_encoder_block.1} parent=11 // pred_check
          %p782 = pneg %p274
        $region14: #{cross_encoder_block.1} parent=11 // pred_check_branch
          %784 = sbr.rel (%p782) target = $region16
        $region15: #{cross_encoder_block.1} parent=11 // pred_region
          _
        $region16: #{cross_encoder_block.1} parent=11 // pred_fallthru
          _
        // Predicated region
        $region17: #{cross_encoder_block.1} parent=11 // pred_check
          %p785 = pneg %p295
        $region18: #{cross_encoder_block.1} parent=11 // pred_check_branch
          %787 = sbr.rel (%p785) target = $region20
        $region19: #{cross_encoder_block.1} parent=11 // pred_region
          _
        $region20: #{cross_encoder_block.1} parent=11 // pred_fallthru
          _
        // Predicated region
        $region21: #{cross_encoder_block.1} parent=11 // pred_check
          %p788 = pneg %p316
        $region22: #{cross_encoder_block.1} parent=11 // pred_check_branch
          %790 = sbr.rel (%p788) target = $region24
        $region23: #{cross_encoder_block.1} parent=11 // pred_region
          _
        $region24: #{cross_encoder_block.1} parent=11 // pred_fallthru
          _
        // Predicated region
        $region25: #{cross_encoder_block.1} parent=11 // pred_check
          %p791 = pneg %p337
        $region26: #{cross_encoder_block.1} parent=11 // pred_check_branch
          %793 = sbr.rel (%p791) target = $region28
        $region27: #{cross_encoder_block.1} parent=11 // pred_region
          _
        $region28: #{cross_encoder_block.1} parent=11 // pred_fallthru
          _
        // Predicated region
        $region29: #{cross_encoder_block.1} parent=11 // pred_check
          %p794 = pneg %p358
        $region30: #{cross_encoder_block.1} parent=11 // pred_check_branch
          %796 = sbr.rel (%p794) target = $region32
        $region31: #{cross_encoder_block.1} parent=11 // pred_region
          _
        $region32: #{cross_encoder_block.1} parent=11 // pred_fallthru
          _
        // Predicated region
        $region33: #{cross_encoder_block.1} parent=11 // pred_check
          %p797 = pneg %p379
        $region34: #{cross_encoder_block.1} parent=11 // pred_check_branch
          %799 = sbr.rel (%p797) target = $region36
        $region35: #{cross_encoder_block.1} parent=11 // pred_region
          _
        $region36: #{cross_encoder_block.1} parent=11 // pred_fallthru
          _
        // Predicated region
        $region37: #{cross_encoder_block.1} parent=11 // pred_check
          %p800 = pneg %p400
        $region38: #{cross_encoder_block.1} parent=11 // pred_check_branch
          %802 = sbr.rel (%p800) target = $region40
        $region39: #{cross_encoder_block.1} parent=11 // pred_region
          _
        $region40: #{cross_encoder_block.1} parent=11 // pred_fallthru
          _
        // Predicated region
        $region41: #{cross_encoder_block.1} parent=11 // pred_check
          %p803 = pneg %p421
        $region42: #{cross_encoder_block.1} parent=11 // pred_check_branch
          %805 = sbr.rel (%p803) target = $region44
        $region43: #{cross_encoder_block.1} parent=11 // pred_region
          _
        $region44: #{cross_encoder_block.1} parent=11 // pred_fallthru
          _
        // Predicated region
        $region45: #{cross_encoder_block.1} parent=11 // pred_check
          %p806 = pneg %p442
        $region46: #{cross_encoder_block.1} parent=11 // pred_check_branch
          %808 = sbr.rel (%p806) target = $region48
        $region47: #{cross_encoder_block.1} parent=11 // pred_region
          _
        $region48: #{cross_encoder_block.1} parent=11 // pred_fallthru
          _
        // Predicated region
        $region49: #{cross_encoder_block.1} parent=11 // pred_check
          %p809 = pneg %p463
        $region50: #{cross_encoder_block.1} parent=11 // pred_check_branch
          %811 = sbr.rel (%p809) target = $region52
        $region51: #{cross_encoder_block.1} parent=11 // pred_region
          _
        $region52: #{cross_encoder_block.1} parent=11 // pred_fallthru
          _
        // Predicated region
        $region53: #{cross_encoder_block.1} parent=11 // pred_check
          %p812 = pneg %p484
        $region54: #{cross_encoder_block.1} parent=11 // pred_check_branch
          %814 = sbr.rel (%p812) target = $region56
        $region55: #{cross_encoder_block.1} parent=11 // pred_region
          _
        $region56: #{cross_encoder_block.1} parent=11 // pred_fallthru
          _
        // Predicated region
        $region57: #{cross_encoder_block.1} parent=11 // pred_check
          %p815 = pneg %p505
        $region58: #{cross_encoder_block.1} parent=11 // pred_check_branch
          %817 = sbr.rel (%p815) target = $region60
        $region59: #{cross_encoder_block.1} parent=11 // pred_region
          _
        $region60: #{cross_encoder_block.1} parent=11 // pred_fallthru
          _
        // Predicated region
        $region61: #{cross_encoder_block.1} parent=11 // pred_check
          %p818 = pneg %p526
        $region62: #{cross_encoder_block.1} parent=11 // pred_check_branch
          %820 = sbr.rel (%p818) target = $region64
        $region63: #{cross_encoder_block.1} parent=11 // pred_region
          _
        $region64: #{cross_encoder_block.1} parent=11 // pred_fallthru
          _
        // Predicated region
        $region65: #{cross_encoder_block.1} parent=11 // pred_check
          %p821 = pneg %p547
        $region66: #{cross_encoder_block.1} parent=11 // pred_check_branch
          %823 = sbr.rel (%p821) target = $region68
        $region67: #{cross_encoder_block.1} parent=11 // pred_region
          _
        $region68: #{cross_encoder_block.1} parent=11 // pred_fallthru
          _
        // Predicated region
        $region69: #{cross_encoder_block.1} parent=11 // pred_check
          %p824 = pneg %p568
        $region70: #{cross_encoder_block.1} parent=11 // pred_check_branch
          %826 = sbr.rel (%p824) target = $region72
        $region71: #{cross_encoder_block.1} parent=11 // pred_region
          _
        $region72: #{cross_encoder_block.1} parent=11 // pred_fallthru
          _
        // Predicated region
        $region73: #{cross_encoder_block.1} parent=11 // pred_check
          %p827 = pneg %p589
        $region74: #{cross_encoder_block.1} parent=11 // pred_check_branch
          %829 = sbr.rel (%p827) target = $region76
        $region75: #{cross_encoder_block.1} parent=11 // pred_region
          _
        $region76: #{cross_encoder_block.1} parent=11 // pred_fallthru
          _
        // Predicated region
        $region77: #{cross_encoder_block.1} parent=11 // pred_check
          %p830 = pneg %p610
        $region78: #{cross_encoder_block.1} parent=11 // pred_check_branch
          %832 = sbr.rel (%p830) target = $region80
        $region79: #{cross_encoder_block.1} parent=11 // pred_region
          _
        $region80: #{cross_encoder_block.1} parent=11 // pred_fallthru
          _
        // Predicated region
        $region81: #{cross_encoder_block.1} parent=11 // pred_check
          %p833 = pneg %p631
        $region82: #{cross_encoder_block.1} parent=11 // pred_check_branch
          %835 = sbr.rel (%p833) target = $region84
        $region83: #{cross_encoder_block.1} parent=11 // pred_region
          _
        $region84: #{cross_encoder_block.1} parent=11 // pred_fallthru
          _
        // Predicated region
        $region85: #{cross_encoder_block.1} parent=11 // pred_check
          %p836 = pneg %p652
        $region86: #{cross_encoder_block.1} parent=11 // pred_check_branch
          %838 = sbr.rel (%p836) target = $region88
        $region87: #{cross_encoder_block.1} parent=11 // pred_region
          _
        $region88: #{cross_encoder_block.1} parent=11 // pred_fallthru
          _
        // Predicated region
        $region89: #{cross_encoder_block.1} parent=11 // pred_check
          %p839 = pneg %p673
        $region90: #{cross_encoder_block.1} parent=11 // pred_check_branch
          %841 = sbr.rel (%p839) target = $region92
        $region91: #{cross_encoder_block.1} parent=11 // pred_region
          _
        $region92: #{cross_encoder_block.1} parent=11 // pred_fallthru
          _
        // Predicated region
        $region93: #{cross_encoder_block.1} parent=11 // pred_check
          %p842 = pneg %p694
        $region94: #{cross_encoder_block.1} parent=11 // pred_check_branch
          %844 = sbr.rel (%p842) target = $region96
        $region95: #{cross_encoder_block.1} parent=11 // pred_region
          _
        $region96: #{cross_encoder_block.1} parent=11 // pred_fallthru
          _
        // Predicated region
        $region97: #{cross_encoder_block.1} parent=11 // pred_check
          %p845 = pneg %p715
        $region98: #{cross_encoder_block.1} parent=11 // pred_check_branch
          %847 = sbr.rel (%p845) target = $region100
        $region99: #{cross_encoder_block.1} parent=11 // pred_region
          _
        $region100: #{cross_encoder_block.1} parent=11 // pred_fallthru
          _
      $region12: #{cross_encoder_block.1} parent=5 // pred_fallthru
        _
      %p848 = scmp.lt.s32.totalorder %s71, 2
      // Predicated region
      $region101: #{cross_encoder_block.1} parent=5 // pred_check
        %p849 = pneg %p848
      $region102: #{cross_encoder_block.1} parent=5 // pred_check_branch
        %851 = sbr.rel (%p849) target = $region104
      $region103: #{cross_encoder_block.1} parent=5 // pred_region
        // Predicated region
        $region105: #{cross_encoder_block.1} parent=103 // pred_check
          %p852 = pneg %p91
        $region106: #{cross_encoder_block.1} parent=103 // pred_check_branch
          %854 = sbr.rel (%p852) target = $region108
        $region107: #{cross_encoder_block.1} parent=103 // pred_region
          %p855 = scmp.lt.s32.totalorder %s71, 1
          %s856 = scalar_select %p855, %s71, 1
          %s857 = smul.addr %s856, 8
          %s858 = scalar_lea.vmem %s1, %s857
        $region108: #{cross_encoder_block.1} parent=103 // pred_fallthru
          _
        // Predicated region
        $region109: #{cross_encoder_block.1} parent=103 // pred_check
          %p859 = pneg %p117
        $region110: #{cross_encoder_block.1} parent=103 // pred_check_branch
          %861 = sbr.rel (%p859) target = $region112
        $region111: #{cross_encoder_block.1} parent=103 // pred_region
          %p862 = scmp.lt.s32.totalorder %s71, 1
          %s863 = scalar_select %p862, %s71, 1
          %s864 = smul.addr %s863, 8
          %s865 = scalar_lea.vmem %s3, %s864
        $region112: #{cross_encoder_block.1} parent=103 // pred_fallthru
          _
        // Predicated region
        $region113: #{cross_encoder_block.1} parent=103 // pred_check
          %p866 = pneg %p143
        $region114: #{cross_encoder_block.1} parent=103 // pred_check_branch
          %868 = sbr.rel (%p866) target = $region116
        $region115: #{cross_encoder_block.1} parent=103 // pred_region
          %p869 = scmp.lt.s32.totalorder %s71, 1
          %s870 = scalar_select %p869, %s71, 1
          %s871 = smul.addr %s870, 8
          %s872 = scalar_lea.vmem %s5, %s871
        $region116: #{cross_encoder_block.1} parent=103 // pred_fallthru
          _
        // Predicated region
        $region117: #{cross_encoder_block.1} parent=103 // pred_check
          %p873 = pneg %p169
        $region118: #{cross_encoder_block.1} parent=103 // pred_check_branch
          %875 = sbr.rel (%p873) target = $region120
        $region119: #{cross_encoder_block.1} parent=103 // pred_region
          %p876 = scmp.lt.s32.totalorder %s71, 1
          %s877 = scalar_select %p876, %s71, 1
          %s878 = smul.addr %s877, 8
          %s879 = scalar_lea.vmem %s7, %s878
        $region120: #{cross_encoder_block.1} parent=103 // pred_fallthru
          _
        // Predicated region
        $region121: #{cross_encoder_block.1} parent=103 // pred_check
          %p880 = pneg %p195
        $region122: #{cross_encoder_block.1} parent=103 // pred_check_branch
          %882 = sbr.rel (%p880) target = $region124
        $region123: #{cross_encoder_block.1} parent=103 // pred_region
          %p883 = scmp.lt.s32.totalorder %s71, 1
          %s884 = scalar_select %p883, %s71, 1
          %s885 = smul.addr %s884, 8
          %s886 = scalar_lea.vmem %s9, %s885
        $region124: #{cross_encoder_block.1} parent=103 // pred_fallthru
          _
        // Predicated region
        $region125: #{cross_encoder_block.1} parent=103 // pred_check
          %p887 = pneg %p221
        $region126: #{cross_encoder_block.1} parent=103 // pred_check_branch
          %889 = sbr.rel (%p887) target = $region128
        $region127: #{cross_encoder_block.1} parent=103 // pred_region
          %p890 = scmp.lt.s32.totalorder %s71, 1
          %s891 = scalar_select %p890, %s71, 1
          %s892 = smul.addr %s891, 8
          %s893 = scalar_lea.vmem %s11, %s892
        $region128: #{cross_encoder_block.1} parent=103 // pred_fallthru
          _
        // Predicated region
        $region129: #{cross_encoder_block.1} parent=103 // pred_check
          %p894 = pneg %p247
        $region130: #{cross_encoder_block.1} parent=103 // pred_check_branch
          %896 = sbr.rel (%p894) target = $region132
        $region131: #{cross_encoder_block.1} parent=103 // pred_region
          %p897 = scmp.lt.s32.totalorder %s71, 1
          %s898 = scalar_select %p897, %s71, 1
          %s899 = smul.addr %s898, 8
          %s900 = scalar_lea.vmem %s13, %s899
        $region132: #{cross_encoder_block.1} parent=103 // pred_fallthru
          _
      $region104: #{cross_encoder_block.1} parent=5 // pred_fallthru
        _
      %p901 = scmp.le.s32.totalorder 1, %s71
      %p902 = scmp.lt.s32.totalorder %s71, 3
      %p903 = pnand %p901, %p902
      %p904 = pneg %p903
      // Predicated region
      $region133: #{cross_encoder_block.1} parent=5 // pred_check
        _
      $region134: #{cross_encoder_block.1} parent=5 // pred_check_branch
        %906 = sbr.rel (%p903) target = $region136
      $region135: #{cross_encoder_block.1} parent=5 // pred_region
        %s907 = ssub.s32 %s71, 1
        %p908 = scmp.lt.s32.totalorder %s76, 1
        %s909 = scalar_select %p908, %s76, 1
        %s910 = smul.addr %s909, 8
        %s911 = scalar_lea.vmem %s1, %s910
        %p912 = pneg %p97
        %p913 = pneg %p94
        %p914 = scmp.lt.s32.totalorder %s76, 1
        %s915 = scalar_select %p914, %s76, 1
        %s916 = smul.addr %s915, 8
        %s917 = scalar_lea.vmem %s3, %s916
        %p918 = pneg %p123
        %p919 = pneg %p120
        %p920 = scmp.lt.s32.totalorder %s76, 1
        %s921 = scalar_select %p920, %s76, 1
        %s922 = smul.addr %s921, 8
        %s923 = scalar_lea.vmem %s5, %s922
        %p924 = pneg %p149
        %p925 = pneg %p146
        %p926 = scmp.lt.s32.totalorder %s76, 1
        %s927 = scalar_select %p926, %s76, 1
        %s928 = smul.addr %s927, 8
        %s929 = scalar_lea.vmem %s7, %s928
        %p930 = pneg %p175
        %p931 = pneg %p172
        %p932 = scmp.lt.s32.totalorder %s76, 1
        %s933 = scalar_select %p932, %s76, 1
        %s934 = smul.addr %s933, 8
        %s935 = scalar_lea.vmem %s9, %s934
        %p936 = pneg %p201
        %p937 = pneg %p198
        %p938 = scmp.lt.s32.totalorder %s76, 1
        %s939 = scalar_select %p938, %s76, 1
        %s940 = smul.addr %s939, 8
        %s941 = scalar_lea.vmem %s11, %s940
        %p942 = pneg %p227
        %p943 = pneg %p224
        %p944 = scmp.lt.s32.totalorder %s76, 1
        %s945 = scalar_select %p944, %s76, 1
        %s946 = smul.addr %s945, 8
        %s947 = scalar_lea.vmem %s13, %s946
        %p948 = pneg %p253
        %p949 = pneg %p250
        %p950 = pneg %p274
        %p951 = pneg %p271
        %p952 = pneg %p295
        %p953 = pneg %p292
        %p954 = pneg %p316
        %p955 = pneg %p313
        %p956 = pneg %p337
        %p957 = pneg %p334
        %p958 = pneg %p358
        %p959 = pneg %p355
        %p960 = pneg %p379
        %p961 = pneg %p376
        %p962 = pneg %p400
        %p963 = pneg %p397
        %p964 = pneg %p421
        %p965 = pneg %p418
        %p966 = pneg %p442
        %p967 = pneg %p439
        %p968 = pneg %p463
        %p969 = pneg %p460
        %p970 = pneg %p484
        %p971 = pneg %p481
        %p972 = pneg %p505
        %p973 = pneg %p502
        %p974 = pneg %p526
        %p975 = pneg %p523
        %p976 = pneg %p547
        %p977 = pneg %p544
        %p978 = pneg %p568
        %p979 = pneg %p565
        %p980 = pneg %p589
        %p981 = pneg %p586
        %p982 = pneg %p610
        %p983 = pneg %p607
        %p984 = pneg %p631
        %p985 = pneg %p628
        %p986 = pneg %p652
        %p987 = pneg %p649
        %p988 = pneg %p673
        %p989 = pneg %p670
        %p990 = pneg %p694
        %p991 = pneg %p691
        %p992 = pneg %p715
        %p993 = pneg %p712
        %p994 = pneg %p741
        %p995 = pneg %p738
        %s996 = sand.u32 %s728, 1
        %s997 = scalar_lea.sflag [#allocation3], %s996
        %s998 = sand.u32 %s728, 1
        %s999 = smul.addr %s998, 8
        %s1000 = scalar_lea.vmem [#allocation2], %s999
        %p1001 = pneg %p767
        %p1002 = pneg %p764
        %p1003 = scmp.lt.s32.totalorder %s76, 1
        %s1004 = scalar_select %p1003, %s76, 1
        %s1005 = smul.addr %s1004, 8
        %s1006 = scalar_lea.vmem %s61, %s1005
        %p1007 = scmp.lt.s32.totalorder %s76, 1
        %s1008 = scalar_select %p1007, %s76, 1
        %s1009 = smul.addr %s1008, 8
        %s1010 = scalar_lea.vmem %s1, %s1009
        %p1011 = scmp.lt.s32.totalorder %s76, 1
        %s1012 = scalar_select %p1011, %s76, 1
        %s1013 = smul.addr %s1012, 8
        %s1014 = scalar_lea.vmem %s3, %s1013
        %p1015 = scmp.lt.s32.totalorder %s76, 1
        %s1016 = scalar_select %p1015, %s76, 1
        %s1017 = smul.addr %s1016, 8
        %s1018 = scalar_lea.vmem %s5, %s1017
        %p1019 = scmp.lt.s32.totalorder %s76, 1
        %s1020 = scalar_select %p1019, %s76, 1
        %s1021 = smul.addr %s1020, 8
        %s1022 = scalar_lea.vmem %s7, %s1021
        %p1023 = scmp.lt.s32.totalorder %s76, 1
        %s1024 = scalar_select %p1023, %s76, 1
        %s1025 = smul.addr %s1024, 8
        %s1026 = scalar_lea.vmem %s9, %s1025
        %p1027 = scmp.lt.s32.totalorder %s76, 1
        %s1028 = scalar_select %p1027, %s76, 1
        %s1029 = smul.addr %s1028, 8
        %s1030 = scalar_lea.vmem %s11, %s1029
        %p1031 = scmp.lt.s32.totalorder %s76, 1
        %s1032 = scalar_select %p1031, %s76, 1
        %s1033 = smul.addr %s1032, 8
        %s1034 = scalar_lea.vmem %s13, %s1033
        %p1035 = scmp.lt.s32.totalorder %s76, 1
        %s1036 = scalar_select %p1035, %s76, 1
        %s1037 = smul.addr %s1036, 8
        %s1038 = scalar_lea.vmem %s61, %s1037
        %v1039 = vld [vmem:[%s1010] sm:$0xff]
        %v1040 = vld [vmem:[%s1014] sm:$0xff]
        %v1041 = vld [vmem:[%s15] sm:$0x1]
        %v1042 = vld [vmem:[%s17] sm:$0x1]
        %vm1043 = vcmask 261120
        %v1044 = vsel %vm1043, %v1039, 0.0
        %1045 = vadd.xlane.f32.xlu0 %v1044
        %v1046 = vpop.xlane.xlu0 %1045
        %v1047 = vrcp.pop 32.0
        %v1048 = vmul.f32 %v1046, %v1047
        %v1049 = vsub.f32 %v1039, %v1048
        %v1050 = vmul.f32 %v1049, %v1049
        %v1051 = vsel %vm1043, %v1050, 0.0
        %1052 = vadd.xlane.f32.xlu0 %v1051
        %v1053 = vpop.xlane.xlu0 %1052
        %v1054 = vmul.f32 %v1053, %v1047
        %v1055 = vadd.f32 %v1054, 1e-05
        %v1056 = vrsqrt.pop %v1055
        %v1057 = vmul.f32 %v1049, %v1056
        %v1059 = vlaneseq
        %v1060 = vshrl.u32 %v1059, 7
        %v1061 = vsub.s32 0, %v1060
        %v1062 = vrot.slane %v1041, %v1061
        %v1064 = vmul.f32 %v1057, %v1062
        %v1066 = vlaneseq
        %v1067 = vshrl.u32 %v1066, 7
        %v1068 = vsub.s32 0, %v1067
        %v1069 = vrot.slane %v1042, %v1068
        %v1071 = vadd.f32 %v1064, %v1069
        %v1072 = vld [vmem:[%s1018] sm:$0xff]
        %vm1073 = vcmp.gt.f32.partialorder %v1072, 0.5
        %v1074 = vld [vmem:[%s19] sm:$0xff]
        %v1075 = vld [vmem:[%s19 + $0x8] sm:$0xff]
        %v1076 = vld [vmem:[%s19 + $0x10] sm:$0xff]
        %v1077 = vld [vmem:[%s19 + $0x18] sm:$0xff]
        %v1078 = vld [vmem:[%s21] sm:$0x1]
        %v1080 = vlaneseq
        %v1081 = vshrl.u32 %v1080, 7
        %v1082 = vsub.s32 0, %v1081
        %v1083 = vrot.slane %v1078, %v1082
        %v1086 = vsel %vm1043, %v1071, 0
        %1088 = vmatprep.subr.mxu0 0.0
        %1089 = vmatpush1.msra.mxu0 %v1074
        %1090 = vmatprep.subr.mxu0 0.0
        %1091 = vmatpush1.msra.mxu0 %v1075
        %1092 = vmatprep.subr.mxu0 0.0
        %1093 = vmatpush1.msra.mxu0 %v1076
        %1094 = vmatprep.subr.mxu0 0.0
        %1095 = vmatpush1.msra.mxu0 %v1077
        %1096 = vmatprep.subr.mxu0 0.0
        %1097 = vmatpush1.msra.mxu0 0.0
        %1098 = vmatprep.subr.mxu0 0.0
        %1099 = vmatpush1.msra.mxu0 0.0
        %1100 = vmatprep.subr.mxu0 0.0
        %1101 = vmatpush1.msra.mxu0 0.0
        %1102 = vmatprep.subr.mxu0 0.0
        %1103 = vmatpush1.msra.mxu0 0.0
        %1104 = vmatprep.subr.mxu0 0.0
        %1105 = vmatpush1.msra.mxu0 0.0
        %1106 = vmatprep.subr.mxu0 0.0
        %1107 = vmatpush1.msra.mxu0 0.0
        %1108 = vmatprep.subr.mxu0 0.0
        %1109 = vmatpush1.msra.mxu0 0.0
        %1110 = vmatprep.subr.mxu0 0.0
        %1111 = vmatpush1.msra.mxu0 0.0
        %1112 = vmatprep.subr.mxu0 0.0
        %1113 = vmatpush1.msra.mxu0 0.0
        %1114 = vmatprep.subr.mxu0 0.0
        %1115 = vmatpush1.msra.mxu0 0.0
        %1116 = vmatprep.subr.mxu0 0.0
        %1117 = vmatpush1.msra.mxu0 0.0
        %1118 = vmatprep.subr.mxu0 0.0
        %1119 = vmatpush1.msra.mxu0 0.0
        %1120 = vmatprep.subr.mxu0 0.0
        %1121 = vmatpush1.msra.mxu0 0.0
        %1122 = vmatprep.subr.mxu0 0.0
        %1123 = vmatpush1.msra.mxu0 0.0
        %1124 = vmatprep.subr.mxu0 0.0
        %1125 = vmatpush1.msra.mxu0 0.0
        %1126 = vmatprep.subr.mxu0 0.0
        %1127 = vmatpush1.msra.mxu0 0.0
        %1128 = vmatprep.subr.mxu0 0.0
        %1129 = vmatpush1.msra.mxu0 0.0
        %1130 = vmatprep.subr.mxu0 0.0
        %1131 = vmatpush1.msra.mxu0 0.0
        %1132 = vmatprep.subr.mxu0 0.0
        %1133 = vmatpush1.msra.mxu0 0.0
        %1134 = vmatprep.subr.mxu0 0.0
        %1135 = vmatpush1.msra.mxu0 0.0
        %1136 = vmatprep.subr.mxu0 0.0
        %1137 = vmatpush1.msra.mxu0 0.0
        %1138 = vmatprep.subr.mxu0 0.0
        %1139 = vmatpush1.msra.mxu0 0.0
        %1140 = vmatprep.subr.mxu0 0.0
        %1141 = vmatpush1.msra.mxu0 0.0
        %1142 = vmatprep.subr.mxu0 0.0
        %1143 = vmatpush1.msra.mxu0 0.0
        %1144 = vmatprep.subr.mxu0 0.0
        %1145 = vmatpush1.msra.mxu0 0.0
        %1146 = vmatprep.subr.mxu0 0.0
        %1147 = vmatpush1.msra.mxu0 0.0
        %1148 = vmatprep.subr.mxu0 0.0
        %1149 = vmatpush1.msra.mxu0 0.0
        %1150 = vmatprep.subr.mxu0 0.0
        %1151 = vmatpush1.msra.mxu0 0.0
        %1152 = vmatprep.mubr.f32.mxu0 0.0
        %1153 = vmatmul.mubr.f32.gmra.mrb[0].mxu0 %v1086
        %v1154 = vpop.f32.mrb[0].mxu0
        %v1155 = vadd.f32 %v1083, %v1154
        %v1156 = vpop.f32.mrb[0].mxu0
        %1157 = vdwg.mxu0
        %1159 = vrot.lane.b32.xlu0 %v1155, 96
        %v1160 = vpop.permute.xlu0 %1159
        %vm1161 = vcmask 64512
        %v1162 = vsel %vm1161, %v1155, 0
        %v1164 = vsel %vm1161, %v1160, 0
        %1166 = vmatprep.subr.mxu0 0.0
        %1167 = vmatpush1.xpose.msra.mxu0 %v1164
        %1168 = vmatprep.subr.mxu0 0.0
        %1169 = vmatpush1.xpose.msra.mxu0 0.0
        %1170 = vmatprep.subr.mxu0 0.0
        %1171 = vmatpush1.xpose.msra.mxu0 0.0
        %1172 = vmatprep.subr.mxu0 0.0
        %1173 = vmatpush1.xpose.msra.mxu0 0.0
        %1174 = vmatprep.subr.mxu0 0.0
        %1175 = vmatpush1.xpose.msra.mxu0 0.0
        %1176 = vmatprep.subr.mxu0 0.0
        %1177 = vmatpush1.xpose.msra.mxu0 0.0
        %1178 = vmatprep.subr.mxu0 0.0
        %1179 = vmatpush1.xpose.msra.mxu0 0.0
        %1180 = vmatprep.subr.mxu0 0.0
        %1181 = vmatpush1.xpose.msra.mxu0 0.0
        %1182 = vmatprep.subr.mxu0 0.0
        %1183 = vmatpush1.xpose.msra.mxu0 0.0
        %1184 = vmatprep.subr.mxu0 0.0
        %1185 = vmatpush1.xpose.msra.mxu0 0.0
        %1186 = vmatprep.subr.mxu0 0.0
        %1187 = vmatpush1.xpose.msra.mxu0 0.0
        %1188 = vmatprep.subr.mxu0 0.0
        %1189 = vmatpush1.xpose.msra.mxu0 0.0
        %1190 = vmatprep.subr.mxu0 0.0
        %1191 = vmatpush1.xpose.msra.mxu0 0.0
        %1192 = vmatprep.subr.mxu0 0.0
        %1193 = vmatpush1.xpose.msra.mxu0 0.0
        %1194 = vmatprep.subr.mxu0 0.0
        %1195 = vmatpush1.xpose.msra.mxu0 0.0
        %1196 = vmatprep.subr.mxu0 0.0
        %1197 = vmatpush1.xpose.msra.mxu0 0.0
        %1198 = vmatprep.subr.mxu0 0.0
        %1199 = vmatpush1.xpose.msra.mxu0 0.0
        %1200 = vmatprep.subr.mxu0 0.0
        %1201 = vmatpush1.xpose.msra.mxu0 0.0
        %1202 = vmatprep.subr.mxu0 0.0
        %1203 = vmatpush1.xpose.msra.mxu0 0.0
        %1204 = vmatprep.subr.mxu0 0.0
        %1205 = vmatpush1.xpose.msra.mxu0 0.0
        %1206 = vmatprep.subr.mxu0 0.0
        %1207 = vmatpush1.xpose.msra.mxu0 0.0
        %1208 = vmatprep.subr.mxu0 0.0
        %1209 = vmatpush1.xpose.msra.mxu0 0.0
        %1210 = vmatprep.subr.mxu0 0.0
        %1211 = vmatpush1.xpose.msra.mxu0 0.0
        %1212 = vmatprep.subr.mxu0 0.0
        %1213 = vmatpush1.xpose.msra.mxu0 0.0
        %1214 = vmatprep.subr.mxu0 0.0
        %1215 = vmatpush1.xpose.msra.mxu0 0.0
        %1216 = vmatprep.subr.mxu0 0.0
        %1217 = vmatpush1.xpose.msra.mxu0 0.0
        %1218 = vmatprep.subr.mxu0 0.0
        %1219 = vmatpush1.xpose.msra.mxu0 0.0
        %1220 = vmatprep.subr.mxu0 0.0
        %1221 = vmatpush1.xpose.msra.mxu0 0.0
        %1222 = vmatprep.subr.mxu0 0.0
        %1223 = vmatpush1.xpose.msra.mxu0 0.0
        %1224 = vmatprep.subr.mxu0 0.0
        %1225 = vmatpush1.xpose.msra.mxu0 0.0
        %1226 = vmatprep.subr.mxu0 0.0
        %1227 = vmatpush1.xpose.msra.mxu0 0.0
        %1228 = vmatprep.subr.mxu0 0.0
        %1229 = vmatpush1.xpose.msra.mxu0 0.0
        %1230 = vmatprep.mubr.f32.mxu0 0.0
        %1231 = vmatmul.mubr.f32.gmra.mrb[0].mxu0 %v1162
        %v1232 = vpop.f32.mrb[0].mxu0
        %v1233 = vadd.f32 0.0, %v1232
        %v1234 = vpop.f32.mrb[0].mxu0
        %1235 = vdwg.mxu0
        %v1236 = vsel %vm1073, %v1233, -3.4028235e+38
        %v1237 = vsel %vm1161, %v1236, -inf
        %1238 = vmax.xlane.f32.xlu0 %v1237
        %v1239 = vpop.xlane.xlu0 %1238
        %v1240 = vsub.f32 %v1236, %v1239
        %v1241 = vmul.f32 %v1240, 1.442695
        %v1242 = vpow.pop %v1241
        %v1243 = vsel %vm1161, %v1242, 0.0
        %1244 = vadd.xlane.f32.xlu0 %v1243
        %v1245 = vpop.xlane.xlu0 %1244
        %v1246 = vrcp.pop %v1245
        %v1247 = vmul.f32 %v1242, %v1246
        %1248 = vrot.lane.b32.xlu0 %v1155, 64
        %v1249 = vpop.permute.xlu0 %1248
        %v1252 = vsel %vm1161, %v1247, 0
        %1254 = vmatprep.subr.mxu0 0.0
        %1255 = vmatpush1.msra.mxu0 %v1249
        %1256 = vmatprep.subr.mxu0 0.0
        %1257 = vmatpush1.msra.mxu0 0.0
        %1258 = vmatprep.subr.mxu0 0.0
        %1259 = vmatpush1.msra.mxu0 0.0
        %1260 = vmatprep.subr.mxu0 0.0
        %1261 = vmatpush1.msra.mxu0 0.0
        %1262 = vmatprep.subr.mxu0 0.0
        %1263 = vmatpush1.msra.mxu0 0.0
        %1264 = vmatprep.subr.mxu0 0.0
        %1265 = vmatpush1.msra.mxu0 0.0
        %1266 = vmatprep.subr.mxu0 0.0
        %1267 = vmatpush1.msra.mxu0 0.0
        %1268 = vmatprep.subr.mxu0 0.0
        %1269 = vmatpush1.msra.mxu0 0.0
        %1270 = vmatprep.subr.mxu0 0.0
        %1271 = vmatpush1.msra.mxu0 0.0
        %1272 = vmatprep.subr.mxu0 0.0
        %1273 = vmatpush1.msra.mxu0 0.0
        %1274 = vmatprep.subr.mxu0 0.0
        %1275 = vmatpush1.msra.mxu0 0.0
        %1276 = vmatprep.subr.mxu0 0.0
        %1277 = vmatpush1.msra.mxu0 0.0
        %1278 = vmatprep.subr.mxu0 0.0
        %1279 = vmatpush1.msra.mxu0 0.0
        %1280 = vmatprep.subr.mxu0 0.0
        %1281 = vmatpush1.msra.mxu0 0.0
        %1282 = vmatprep.subr.mxu0 0.0
        %1283 = vmatpush1.msra.mxu0 0.0
        %1284 = vmatprep.subr.mxu0 0.0
        %1285 = vmatpush1.msra.mxu0 0.0
        %1286 = vmatprep.subr.mxu0 0.0
        %1287 = vmatpush1.msra.mxu0 0.0
        %1288 = vmatprep.subr.mxu0 0.0
        %1289 = vmatpush1.msra.mxu0 0.0
        %1290 = vmatprep.subr.mxu0 0.0
        %1291 = vmatpush1.msra.mxu0 0.0
        %1292 = vmatprep.subr.mxu0 0.0
        %1293 = vmatpush1.msra.mxu0 0.0
        %1294 = vmatprep.subr.mxu0 0.0
        %1295 = vmatpush1.msra.mxu0 0.0
        %1296 = vmatprep.subr.mxu0 0.0
        %1297 = vmatpush1.msra.mxu0 0.0
        %1298 = vmatprep.subr.mxu0 0.0
        %1299 = vmatpush1.msra.mxu0 0.0
        %1300 = vmatprep.subr.mxu0 0.0
        %1301 = vmatpush1.msra.mxu0 0.0
        %1302 = vmatprep.subr.mxu0 0.0
        %1303 = vmatpush1.msra.mxu0 0.0
        %1304 = vmatprep.subr.mxu0 0.0
        %1305 = vmatpush1.msra.mxu0 0.0
        %1306 = vmatprep.subr.mxu0 0.0
        %1307 = vmatpush1.msra.mxu0 0.0
        %1308 = vmatprep.subr.mxu0 0.0
        %1309 = vmatpush1.msra.mxu0 0.0
        %1310 = vmatprep.subr.mxu0 0.0
        %1311 = vmatpush1.msra.mxu0 0.0
        %1312 = vmatprep.subr.mxu0 0.0
        %1313 = vmatpush1.msra.mxu0 0.0
        %1314 = vmatprep.subr.mxu0 0.0
        %1315 = vmatpush1.msra.mxu0 0.0
        %1316 = vmatprep.subr.mxu0 0.0
        %1317 = vmatpush1.msra.mxu0 0.0
        %1318 = vmatprep.mubr.f32.mxu0 0.0
        %1319 = vmatmul.mubr.f32.gmra.mrb[0].mxu0 %v1252
        %v1320 = vpop.f32.mrb[0].mxu0
        %v1321 = vadd.f32 0.0, %v1320
        %v1322 = vpop.f32.mrb[0].mxu0
        %1323 = vdwg.mxu0
        %v1324 = vld [vmem:[%s23] sm:$0xff]
        %1325 = vrot.lane.b32.xlu0 %v1155, 120
        %v1326 = vpop.permute.xlu0 %1325
        %1327 = vrot.lane.b32.xlu0 %v1155, 88
        %v1328 = vpop.permute.xlu0 %1327
        %v1329 = vsel %vm1161, %v1326, 0
        %v1331 = vsel %vm1161, %v1328, 0
        %1333 = vmatprep.subr.mxu0 0.0
        %1334 = vmatpush1.xpose.msra.mxu0 %v1331
        %1335 = vmatprep.subr.mxu0 0.0
        %1336 = vmatpush1.xpose.msra.mxu0 0.0
        %1337 = vmatprep.subr.mxu0 0.0
        %1338 = vmatpush1.xpose.msra.mxu0 0.0
        %1339 = vmatprep.subr.mxu0 0.0
        %1340 = vmatpush1.xpose.msra.mxu0 0.0
        %1341 = vmatprep.subr.mxu0 0.0
        %1342 = vmatpush1.xpose.msra.mxu0 0.0
        %1343 = vmatprep.subr.mxu0 0.0
        %1344 = vmatpush1.xpose.msra.mxu0 0.0
        %1345 = vmatprep.subr.mxu0 0.0
        %1346 = vmatpush1.xpose.msra.mxu0 0.0
        %1347 = vmatprep.subr.mxu0 0.0
        %1348 = vmatpush1.xpose.msra.mxu0 0.0
        %1349 = vmatprep.subr.mxu0 0.0
        %1350 = vmatpush1.xpose.msra.mxu0 0.0
        %1351 = vmatprep.subr.mxu0 0.0
        %1352 = vmatpush1.xpose.msra.mxu0 0.0
        %1353 = vmatprep.subr.mxu0 0.0
        %1354 = vmatpush1.xpose.msra.mxu0 0.0
        %1355 = vmatprep.subr.mxu0 0.0
        %1356 = vmatpush1.xpose.msra.mxu0 0.0
        %1357 = vmatprep.subr.mxu0 0.0
        %1358 = vmatpush1.xpose.msra.mxu0 0.0
        %1359 = vmatprep.subr.mxu0 0.0
        %1360 = vmatpush1.xpose.msra.mxu0 0.0
        %1361 = vmatprep.subr.mxu0 0.0
        %1362 = vmatpush1.xpose.msra.mxu0 0.0
        %1363 = vmatprep.subr.mxu0 0.0
        %1364 = vmatpush1.xpose.msra.mxu0 0.0
        %1365 = vmatprep.subr.mxu0 0.0
        %1366 = vmatpush1.xpose.msra.mxu0 0.0
        %1367 = vmatprep.subr.mxu0 0.0
        %1368 = vmatpush1.xpose.msra.mxu0 0.0
        %1369 = vmatprep.subr.mxu0 0.0
        %1370 = vmatpush1.xpose.msra.mxu0 0.0
        %1371 = vmatprep.subr.mxu0 0.0
        %1372 = vmatpush1.xpose.msra.mxu0 0.0
        %1373 = vmatprep.subr.mxu0 0.0
        %1374 = vmatpush1.xpose.msra.mxu0 0.0
        %1375 = vmatprep.subr.mxu0 0.0
        %1376 = vmatpush1.xpose.msra.mxu0 0.0
        %1377 = vmatprep.subr.mxu0 0.0
        %1378 = vmatpush1.xpose.msra.mxu0 0.0
        %1379 = vmatprep.subr.mxu0 0.0
        %1380 = vmatpush1.xpose.msra.mxu0 0.0
        %1381 = vmatprep.subr.mxu0 0.0
        %1382 = vmatpush1.xpose.msra.mxu0 0.0
        %1383 = vmatprep.subr.mxu0 0.0
        %1384 = vmatpush1.xpose.msra.mxu0 0.0
        %1385 = vmatprep.subr.mxu0 0.0
        %1386 = vmatpush1.xpose.msra.mxu0 0.0
        %1387 = vmatprep.subr.mxu0 0.0
        %1388 = vmatpush1.xpose.msra.mxu0 0.0
        %1389 = vmatprep.subr.mxu0 0.0
        %1390 = vmatpush1.xpose.msra.mxu0 0.0
        %1391 = vmatprep.subr.mxu0 0.0
        %1392 = vmatpush1.xpose.msra.mxu0 0.0
        %1393 = vmatprep.subr.mxu0 0.0
        %1394 = vmatpush1.xpose.msra.mxu0 0.0
        %1395 = vmatprep.subr.mxu0 0.0
        %1396 = vmatpush1.xpose.msra.mxu0 0.0
        %1397 = vmatprep.mubr.f32.mxu0 0.0
        %1398 = vmatmul.mubr.f32.gmra.mrb[0].mxu0 %v1329
        %v1399 = vpop.f32.mrb[0].mxu0
        %v1400 = vadd.f32 0.0, %v1399
        %v1401 = vpop.f32.mrb[0].mxu0
        %1402 = vdwg.mxu0
        %v1403 = vsel %vm1073, %v1400, -3.4028235e+38
        %v1404 = vsel %vm1161, %v1403, -inf
        %1405 = vmax.xlane.f32.xlu0 %v1404
        %v1406 = vpop.xlane.xlu0 %1405
        %v1407 = vsub.f32 %v1403, %v1406
        %v1408 = vmul.f32 %v1407, 1.442695
        %v1409 = vpow.pop %v1408
        %v1410 = vsel %vm1161, %v1409, 0.0
        %1411 = vadd.xlane.f32.xlu0 %v1410
        %v1412 = vpop.xlane.xlu0 %1411
        %v1413 = vrcp.pop %v1412
        %v1414 = vmul.f32 %v1409, %v1413
        %1415 = vrot.lane.b32.xlu0 %v1155, 56
        %v1416 = vpop.permute.xlu0 %1415
        %v1419 = vsel %vm1161, %v1414, 0
        %1421 = vmatprep.subr.mxu0 0.0
        %1422 = vmatpush1.msra.mxu0 %v1416
        %1423 = vmatprep.subr.mxu0 0.0
        %1424 = vmatpush1.msra.mxu0 0.0
        %1425 = vmatprep.subr.mxu0 0.0
        %1426 = vmatpush1.msra.mxu0 0.0
        %1427 = vmatprep.subr.mxu0 0.0
        %1428 = vmatpush1.msra.mxu0 0.0
        %1429 = vmatprep.subr.mxu0 0.0
        %1430 = vmatpush1.msra.mxu0 0.0
        %1431 = vmatprep.subr.mxu0 0.0
        %1432 = vmatpush1.msra.mxu0 0.0
        %1433 = vmatprep.subr.mxu0 0.0
        %1434 = vmatpush1.msra.mxu0 0.0
        %1435 = vmatprep.subr.mxu0 0.0
        %1436 = vmatpush1.msra.mxu0 0.0
        %1437 = vmatprep.subr.mxu0 0.0
        %1438 = vmatpush1.msra.mxu0 0.0
        %1439 = vmatprep.subr.mxu0 0.0
        %1440 = vmatpush1.msra.mxu0 0.0
        %1441 = vmatprep.subr.mxu0 0.0
        %1442 = vmatpush1.msra.mxu0 0.0
        %1443 = vmatprep.subr.mxu0 0.0
        %1444 = vmatpush1.msra.mxu0 0.0
        %1445 = vmatprep.subr.mxu0 0.0
        %1446 = vmatpush1.msra.mxu0 0.0
        %1447 = vmatprep.subr.mxu0 0.0
        %1448 = vmatpush1.msra.mxu0 0.0
        %1449 = vmatprep.subr.mxu0 0.0
        %1450 = vmatpush1.msra.mxu0 0.0
        %1451 = vmatprep.subr.mxu0 0.0
        %1452 = vmatpush1.msra.mxu0 0.0
        %1453 = vmatprep.subr.mxu0 0.0
        %1454 = vmatpush1.msra.mxu0 0.0
        %1455 = vmatprep.subr.mxu0 0.0
        %1456 = vmatpush1.msra.mxu0 0.0
        %1457 = vmatprep.subr.mxu0 0.0
        %1458 = vmatpush1.msra.mxu0 0.0
        %1459 = vmatprep.subr.mxu0 0.0
        %1460 = vmatpush1.msra.mxu0 0.0
        %1461 = vmatprep.subr.mxu0 0.0
        %1462 = vmatpush1.msra.mxu0 0.0
        %1463 = vmatprep.subr.mxu0 0.0
        %1464 = vmatpush1.msra.mxu0 0.0
        %1465 = vmatprep.subr.mxu0 0.0
        %1466 = vmatpush1.msra.mxu0 0.0
        %1467 = vmatprep.subr.mxu0 0.0
        %1468 = vmatpush1.msra.mxu0 0.0
        %1469 = vmatprep.subr.mxu0 0.0
        %1470 = vmatpush1.msra.mxu0 0.0
        %1471 = vmatprep.subr.mxu0 0.0
        %1472 = vmatpush1.msra.mxu0 0.0
        %1473 = vmatprep.subr.mxu0 0.0
        %1474 = vmatpush1.msra.mxu0 0.0
        %1475 = vmatprep.subr.mxu0 0.0
        %1476 = vmatpush1.msra.mxu0 0.0
        %1477 = vmatprep.subr.mxu0 0.0
        %1478 = vmatpush1.msra.mxu0 0.0
        %1479 = vmatprep.subr.mxu0 0.0
        %1480 = vmatpush1.msra.mxu0 0.0
        %1481 = vmatprep.subr.mxu0 0.0
        %1482 = vmatpush1.msra.mxu0 0.0
        %1483 = vmatprep.subr.mxu0 0.0
        %1484 = vmatpush1.msra.mxu0 0.0
        %1485 = vmatprep.mubr.f32.mxu0 0.0
        %1486 = vmatmul.mubr.f32.gmra.mrb[0].mxu0 %v1419
        %v1487 = vpop.f32.mrb[0].mxu0
        %v1488 = vadd.f32 0.0, %v1487
        %v1489 = vpop.f32.mrb[0].mxu0
        %1490 = vdwg.mxu0
        %v1491 = vld [vmem:[%s23 + $0x8] sm:$0xff]
        %v1493 = vsel %vm1161, %v1488, 0
        %1495 = vmatprep.subr.mxu0 0.0
        %1496 = vmatpush1.msra.mxu0 %v1491
        %1497 = vmatprep.subr.mxu0 0.0
        %1498 = vmatpush1.msra.mxu0 0.0
        %1499 = vmatprep.subr.mxu0 0.0
        %1500 = vmatpush1.msra.mxu0 0.0
        %1501 = vmatprep.subr.mxu0 0.0
        %1502 = vmatpush1.msra.mxu0 0.0
        %1503 = vmatprep.subr.mxu0 0.0
        %1504 = vmatpush1.msra.mxu0 0.0
        %1505 = vmatprep.subr.mxu0 0.0
        %1506 = vmatpush1.msra.mxu0 0.0
        %1507 = vmatprep.subr.mxu0 0.0
        %1508 = vmatpush1.msra.mxu0 0.0
        %1509 = vmatprep.subr.mxu0 0.0
        %1510 = vmatpush1.msra.mxu0 0.0
        %1511 = vmatprep.subr.mxu0 0.0
        %1512 = vmatpush1.msra.mxu0 0.0
        %1513 = vmatprep.subr.mxu0 0.0
        %1514 = vmatpush1.msra.mxu0 0.0
        %1515 = vmatprep.subr.mxu0 0.0
        %1516 = vmatpush1.msra.mxu0 0.0
        %1517 = vmatprep.subr.mxu0 0.0
        %1518 = vmatpush1.msra.mxu0 0.0
        %1519 = vmatprep.subr.mxu0 0.0
        %1520 = vmatpush1.msra.mxu0 0.0
        %1521 = vmatprep.subr.mxu0 0.0
        %1522 = vmatpush1.msra.mxu0 0.0
        %1523 = vmatprep.subr.mxu0 0.0
        %1524 = vmatpush1.msra.mxu0 0.0
        %1525 = vmatprep.subr.mxu0 0.0
        %1526 = vmatpush1.msra.mxu0 0.0
        %1527 = vmatprep.subr.mxu0 0.0
        %1528 = vmatpush1.msra.mxu0 0.0
        %1529 = vmatprep.subr.mxu0 0.0
        %1530 = vmatpush1.msra.mxu0 0.0
        %1531 = vmatprep.subr.mxu0 0.0
        %1532 = vmatpush1.msra.mxu0 0.0
        %1533 = vmatprep.subr.mxu0 0.0
        %1534 = vmatpush1.msra.mxu0 0.0
        %1535 = vmatprep.subr.mxu0 0.0
        %1536 = vmatpush1.msra.mxu0 0.0
        %1537 = vmatprep.subr.mxu0 0.0
        %1538 = vmatpush1.msra.mxu0 0.0
        %1539 = vmatprep.subr.mxu0 0.0
        %1540 = vmatpush1.msra.mxu0 0.0
        %1541 = vmatprep.subr.mxu0 0.0
        %1542 = vmatpush1.msra.mxu0 0.0
        %1543 = vmatprep.subr.mxu0 0.0
        %1544 = vmatpush1.msra.mxu0 0.0
        %1545 = vmatprep.subr.mxu0 0.0
        %1546 = vmatpush1.msra.mxu0 0.0
        %1547 = vmatprep.subr.mxu0 0.0
        %1548 = vmatpush1.msra.mxu0 0.0
        %1549 = vmatprep.subr.mxu0 0.0
        %1550 = vmatpush1.msra.mxu0 0.0
        %1551 = vmatprep.subr.mxu0 0.0
        %1552 = vmatpush1.msra.mxu0 0.0
        %1553 = vmatprep.subr.mxu0 0.0
        %1554 = vmatpush1.msra.mxu0 0.0
        %1555 = vmatprep.subr.mxu0 0.0
        %1556 = vmatpush1.msra.mxu0 0.0
        %1557 = vmatprep.subr.mxu0 0.0
        %1558 = vmatpush1.msra.mxu0 0.0
        %1559 = vmatprep.mubr.f32.mxu0 0.0
        %1560 = vmatmul.mubr.f32.gmra.mrb[0].mxu0 %v1493
        %v1561 = vpop.f32.mrb[0].mxu0
        %v1562 = vadd.f32 0.0, %v1561
        %v1563 = vpop.f32.mrb[0].mxu0
        %1564 = vdwg.mxu0
        %v1566 = vsel %vm1161, %v1321, 0
        %1568 = vmatprep.subr.mxu0 0.0
        %1569 = vmatpush1.msra.mxu0 %v1324
        %1570 = vmatprep.subr.mxu0 0.0
        %1571 = vmatpush1.msra.mxu0 0.0
        %1572 = vmatprep.subr.mxu0 0.0
        %1573 = vmatpush1.msra.mxu0 0.0
        %1574 = vmatprep.subr.mxu0 0.0
        %1575 = vmatpush1.msra.mxu0 0.0
        %1576 = vmatprep.subr.mxu0 0.0
        %1577 = vmatpush1.msra.mxu0 0.0
        %1578 = vmatprep.subr.mxu0 0.0
        %1579 = vmatpush1.msra.mxu0 0.0
        %1580 = vmatprep.subr.mxu0 0.0
        %1581 = vmatpush1.msra.mxu0 0.0
        %1582 = vmatprep.subr.mxu0 0.0
        %1583 = vmatpush1.msra.mxu0 0.0
        %1584 = vmatprep.subr.mxu0 0.0
        %1585 = vmatpush1.msra.mxu0 0.0
        %1586 = vmatprep.subr.mxu0 0.0
        %1587 = vmatpush1.msra.mxu0 0.0
        %1588 = vmatprep.subr.mxu0 0.0
        %1589 = vmatpush1.msra.mxu0 0.0
        %1590 = vmatprep.subr.mxu0 0.0
        %1591 = vmatpush1.msra.mxu0 0.0
        %1592 = vmatprep.subr.mxu0 0.0
        %1593 = vmatpush1.msra.mxu0 0.0
        %1594 = vmatprep.subr.mxu0 0.0
        %1595 = vmatpush1.msra.mxu0 0.0
        %1596 = vmatprep.subr.mxu0 0.0
        %1597 = vmatpush1.msra.mxu0 0.0
        %1598 = vmatprep.subr.mxu0 0.0
        %1599 = vmatpush1.msra.mxu0 0.0
        %1600 = vmatprep.subr.mxu0 0.0
        %1601 = vmatpush1.msra.mxu0 0.0
        %1602 = vmatprep.subr.mxu0 0.0
        %1603 = vmatpush1.msra.mxu0 0.0
        %1604 = vmatprep.subr.mxu0 0.0
        %1605 = vmatpush1.msra.mxu0 0.0
        %1606 = vmatprep.subr.mxu0 0.0
        %1607 = vmatpush1.msra.mxu0 0.0
        %1608 = vmatprep.subr.mxu0 0.0
        %1609 = vmatpush1.msra.mxu0 0.0
        %1610 = vmatprep.subr.mxu0 0.0
        %1611 = vmatpush1.msra.mxu0 0.0
        %1612 = vmatprep.subr.mxu0 0.0
        %1613 = vmatpush1.msra.mxu0 0.0
        %1614 = vmatprep.subr.mxu0 0.0
        %1615 = vmatpush1.msra.mxu0 0.0
        %1616 = vmatprep.subr.mxu0 0.0
        %1617 = vmatpush1.msra.mxu0 0.0
        %1618 = vmatprep.subr.mxu0 0.0
        %1619 = vmatpush1.msra.mxu0 0.0
        %1620 = vmatprep.subr.mxu0 0.0
        %1621 = vmatpush1.msra.mxu0 0.0
        %1622 = vmatprep.subr.mxu0 0.0
        %1623 = vmatpush1.msra.mxu0 0.0
        %1624 = vmatprep.subr.mxu0 0.0
        %1625 = vmatpush1.msra.mxu0 0.0
        %1626 = vmatprep.subr.mxu0 0.0
        %1627 = vmatpush1.msra.mxu0 0.0
        %1628 = vmatprep.subr.mxu0 0.0
        %1629 = vmatpush1.msra.mxu0 0.0
        %1630 = vmatprep.subr.mxu0 0.0
        %1631 = vmatpush1.msra.mxu0 0.0
        %1632 = vmatprep.mubr.f32.mxu0 0.0
        %1633 = vmatmul.mubr.f32.gmra.mrb[0].mxu0 %v1566
        %v1634 = vpop.f32.mrb[0].mxu0
        %v1635 = vadd.f32 %v1562, %v1634
        %v1636 = vpop.f32.mrb[0].mxu0
        %1637 = vdwg.mxu0
        %1638 = vrot.lane.b32.xlu0 %v1155, 112
        %v1639 = vpop.permute.xlu0 %1638
        %1640 = vrot.lane.b32.xlu0 %v1155, 80
        %v1641 = vpop.permute.xlu0 %1640
        %v1642 = vsel %vm1161, %v1639, 0
        %v1644 = vsel %vm1161, %v1641, 0
        %1646 = vmatprep.subr.mxu0 0.0
        %1647 = vmatpush1.xpose.msra.mxu0 %v1644
        %1648 = vmatprep.subr.mxu0 0.0
        %1649 = vmatpush1.xpose.msra.mxu0 0.0
        %1650 = vmatprep.subr.mxu0 0.0
        %1651 = vmatpush1.xpose.msra.mxu0 0.0
        %1652 = vmatprep.subr.mxu0 0.0
        %1653 = vmatpush1.xpose.msra.mxu0 0.0
        %1654 = vmatprep.subr.mxu0 0.0
        %1655 = vmatpush1.xpose.msra.mxu0 0.0
        %1656 = vmatprep.subr.mxu0 0.0
        %1657 = vmatpush1.xpose.msra.mxu0 0.0
        %1658 = vmatprep.subr.mxu0 0.0
        %1659 = vmatpush1.xpose.msra.mxu0 0.0
        %1660 = vmatprep.subr.mxu0 0.0
        %1661 = vmatpush1.xpose.msra.mxu0 0.0
        %1662 = vmatprep.subr.mxu0 0.0
        %1663 = vmatpush1.xpose.msra.mxu0 0.0
        %1664 = vmatprep.subr.mxu0 0.0
        %1665 = vmatpush1.xpose.msra.mxu0 0.0
        %1666 = vmatprep.subr.mxu0 0.0
        %1667 = vmatpush1.xpose.msra.mxu0 0.0
        %1668 = vmatprep.subr.mxu0 0.0
        %1669 = vmatpush1.xpose.msra.mxu0 0.0
        %1670 = vmatprep.subr.mxu0 0.0
        %1671 = vmatpush1.xpose.msra.mxu0 0.0
        %1672 = vmatprep.subr.mxu0 0.0
        %1673 = vmatpush1.xpose.msra.mxu0 0.0
        %1674 = vmatprep.subr.mxu0 0.0
        %1675 = vmatpush1.xpose.msra.mxu0 0.0
        %1676 = vmatprep.subr.mxu0 0.0
        %1677 = vmatpush1.xpose.msra.mxu0 0.0
        %1678 = vmatprep.subr.mxu0 0.0
        %1679 = vmatpush1.xpose.msra.mxu0 0.0
        %1680 = vmatprep.subr.mxu0 0.0
        %1681 = vmatpush1.xpose.msra.mxu0 0.0
        %1682 = vmatprep.subr.mxu0 0.0
        %1683 = vmatpush1.xpose.msra.mxu0 0.0
        %1684 = vmatprep.subr.mxu0 0.0
        %1685 = vmatpush1.xpose.msra.mxu0 0.0
        %1686 = vmatprep.subr.mxu0 0.0
        %1687 = vmatpush1.xpose.msra.mxu0 0.0
        %1688 = vmatprep.subr.mxu0 0.0
        %1689 = vmatpush1.xpose.msra.mxu0 0.0
        %1690 = vmatprep.subr.mxu0 0.0
        %1691 = vmatpush1.xpose.msra.mxu0 0.0
        %1692 = vmatprep.subr.mxu0 0.0
        %1693 = vmatpush1.xpose.msra.mxu0 0.0
        %1694 = vmatprep.subr.mxu0 0.0
        %1695 = vmatpush1.xpose.msra.mxu0 0.0
        %1696 = vmatprep.subr.mxu0 0.0
        %1697 = vmatpush1.xpose.msra.mxu0 0.0
        %1698 = vmatprep.subr.mxu0 0.0
        %1699 = vmatpush1.xpose.msra.mxu0 0.0
        %1700 = vmatprep.subr.mxu0 0.0
        %1701 = vmatpush1.xpose.msra.mxu0 0.0
        %1702 = vmatprep.subr.mxu0 0.0
        %1703 = vmatpush1.xpose.msra.mxu0 0.0
        %1704 = vmatprep.subr.mxu0 0.0
        %1705 = vmatpush1.xpose.msra.mxu0 0.0
        %1706 = vmatprep.subr.mxu0 0.0
        %1707 = vmatpush1.xpose.msra.mxu0 0.0
        %1708 = vmatprep.subr.mxu0 0.0
        %1709 = vmatpush1.xpose.msra.mxu0 0.0
        %1710 = vmatprep.mubr.f32.mxu0 0.0
        %1711 = vmatmul.mubr.f32.gmra.mrb[0].mxu0 %v1642
        %v1712 = vpop.f32.mrb[0].mxu0
        %v1713 = vadd.f32 0.0, %v1712
        %v1714 = vpop.f32.mrb[0].mxu0
        %1715 = vdwg.mxu0
        %v1716 = vsel %vm1073, %v1713, -3.4028235e+38
        %v1717 = vsel %vm1161, %v1716, -inf
        %1718 = vmax.xlane.f32.xlu0 %v1717
        %v1719 = vpop.xlane.xlu0 %1718
        %v1720 = vsub.f32 %v1716, %v1719
        %v1721 = vmul.f32 %v1720, 1.442695
        %v1722 = vpow.pop %v1721
        %v1723 = vsel %vm1161, %v1722, 0.0
        %1724 = vadd.xlane.f32.xlu0 %v1723
        %v1725 = vpop.xlane.xlu0 %1724
        %v1726 = vrcp.pop %v1725
        %v1727 = vmul.f32 %v1722, %v1726
        %1728 = vrot.lane.b32.xlu0 %v1155, 48
        %v1729 = vpop.permute.xlu0 %1728
        %v1732 = vsel %vm1161, %v1727, 0
        %1734 = vmatprep.subr.mxu0 0.0
        %1735 = vmatpush1.msra.mxu0 %v1729
        %1736 = vmatprep.subr.mxu0 0.0
        %1737 = vmatpush1.msra.mxu0 0.0
        %1738 = vmatprep.subr.mxu0 0.0
        %1739 = vmatpush1.msra.mxu0 0.0
        %1740 = vmatprep.subr.mxu0 0.0
        %1741 = vmatpush1.msra.mxu0 0.0
        %1742 = vmatprep.subr.mxu0 0.0
        %1743 = vmatpush1.msra.mxu0 0.0
        %1744 = vmatprep.subr.mxu0 0.0
        %1745 = vmatpush1.msra.mxu0 0.0
        %1746 = vmatprep.subr.mxu0 0.0
        %1747 = vmatpush1.msra.mxu0 0.0
        %1748 = vmatprep.subr.mxu0 0.0
        %1749 = vmatpush1.msra.mxu0 0.0
        %1750 = vmatprep.subr.mxu0 0.0
        %1751 = vmatpush1.msra.mxu0 0.0
        %1752 = vmatprep.subr.mxu0 0.0
        %1753 = vmatpush1.msra.mxu0 0.0
        %1754 = vmatprep.subr.mxu0 0.0
        %1755 = vmatpush1.msra.mxu0 0.0
        %1756 = vmatprep.subr.mxu0 0.0
        %1757 = vmatpush1.msra.mxu0 0.0
        %1758 = vmatprep.subr.mxu0 0.0
        %1759 = vmatpush1.msra.mxu0 0.0
        %1760 = vmatprep.subr.mxu0 0.0
        %1761 = vmatpush1.msra.mxu0 0.0
        %1762 = vmatprep.subr.mxu0 0.0
        %1763 = vmatpush1.msra.mxu0 0.0
        %1764 = vmatprep.subr.mxu0 0.0
        %1765 = vmatpush1.msra.mxu0 0.0
        %1766 = vmatprep.subr.mxu0 0.0
        %1767 = vmatpush1.msra.mxu0 0.0
        %1768 = vmatprep.subr.mxu0 0.0
        %1769 = vmatpush1.msra.mxu0 0.0
        %1770 = vmatprep.subr.mxu0 0.0
        %1771 = vmatpush1.msra.mxu0 0.0
        %1772 = vmatprep.subr.mxu0 0.0
        %1773 = vmatpush1.msra.mxu0 0.0
        %1774 = vmatprep.subr.mxu0 0.0
        %1775 = vmatpush1.msra.mxu0 0.0
        %1776 = vmatprep.subr.mxu0 0.0
        %1777 = vmatpush1.msra.mxu0 0.0
        %1778 = vmatprep.subr.mxu0 0.0
        %1779 = vmatpush1.msra.mxu0 0.0
        %1780 = vmatprep.subr.mxu0 0.0
        %1781 = vmatpush1.msra.mxu0 0.0
        %1782 = vmatprep.subr.mxu0 0.0
        %1783 = vmatpush1.msra.mxu0 0.0
        %1784 = vmatprep.subr.mxu0 0.0
        %1785 = vmatpush1.msra.mxu0 0.0
        %1786 = vmatprep.subr.mxu0 0.0
        %1787 = vmatpush1.msra.mxu0 0.0
        %1788 = vmatprep.subr.mxu0 0.0
        %1789 = vmatpush1.msra.mxu0 0.0
        %1790 = vmatprep.subr.mxu0 0.0
        %1791 = vmatpush1.msra.mxu0 0.0
        %1792 = vmatprep.subr.mxu0 0.0
        %1793 = vmatpush1.msra.mxu0 0.0
        %1794 = vmatprep.subr.mxu0 0.0
        %1795 = vmatpush1.msra.mxu0 0.0
        %1796 = vmatprep.subr.mxu0 0.0
        %1797 = vmatpush1.msra.mxu0 0.0
        %1798 = vmatprep.mubr.f32.mxu0 0.0
        %1799 = vmatmul.mubr.f32.gmra.mrb[0].mxu0 %v1732
        %v1800 = vpop.f32.mrb[0].mxu0
        %v1801 = vadd.f32 0.0, %v1800
        %v1802 = vpop.f32.mrb[0].mxu0
        %1803 = vdwg.mxu0
        %v1804 = vld [vmem:[%s23 + $0x10] sm:$0xff]
        %v1806 = vsel %vm1161, %v1801, 0
        %1808 = vmatprep.subr.mxu0 0.0
        %1809 = vmatpush1.msra.mxu0 %v1804
        %1810 = vmatprep.subr.mxu0 0.0
        %1811 = vmatpush1.msra.mxu0 0.0
        %1812 = vmatprep.subr.mxu0 0.0
        %1813 = vmatpush1.msra.mxu0 0.0
        %1814 = vmatprep.subr.mxu0 0.0
        %1815 = vmatpush1.msra.mxu0 0.0
        %1816 = vmatprep.subr.mxu0 0.0
        %1817 = vmatpush1.msra.mxu0 0.0
        %1818 = vmatprep.subr.mxu0 0.0
        %1819 = vmatpush1.msra.mxu0 0.0
        %1820 = vmatprep.subr.mxu0 0.0
        %1821 = vmatpush1.msra.mxu0 0.0
        %1822 = vmatprep.subr.mxu0 0.0
        %1823 = vmatpush1.msra.mxu0 0.0
        %1824 = vmatprep.subr.mxu0 0.0
        %1825 = vmatpush1.msra.mxu0 0.0
        %1826 = vmatprep.subr.mxu0 0.0
        %1827 = vmatpush1.msra.mxu0 0.0
        %1828 = vmatprep.subr.mxu0 0.0
        %1829 = vmatpush1.msra.mxu0 0.0
        %1830 = vmatprep.subr.mxu0 0.0
        %1831 = vmatpush1.msra.mxu0 0.0
        %1832 = vmatprep.subr.mxu0 0.0
        %1833 = vmatpush1.msra.mxu0 0.0
        %1834 = vmatprep.subr.mxu0 0.0
        %1835 = vmatpush1.msra.mxu0 0.0
        %1836 = vmatprep.subr.mxu0 0.0
        %1837 = vmatpush1.msra.mxu0 0.0
        %1838 = vmatprep.subr.mxu0 0.0
        %1839 = vmatpush1.msra.mxu0 0.0
        %1840 = vmatprep.subr.mxu0 0.0
        %1841 = vmatpush1.msra.mxu0 0.0
        %1842 = vmatprep.subr.mxu0 0.0
        %1843 = vmatpush1.msra.mxu0 0.0
        %1844 = vmatprep.subr.mxu0 0.0
        %1845 = vmatpush1.msra.mxu0 0.0
        %1846 = vmatprep.subr.mxu0 0.0
        %1847 = vmatpush1.msra.mxu0 0.0
        %1848 = vmatprep.subr.mxu0 0.0
        %1849 = vmatpush1.msra.mxu0 0.0
        %1850 = vmatprep.subr.mxu0 0.0
        %1851 = vmatpush1.msra.mxu0 0.0
        %1852 = vmatprep.subr.mxu0 0.0
        %1853 = vmatpush1.msra.mxu0 0.0
        %1854 = vmatprep.subr.mxu0 0.0
        %1855 = vmatpush1.msra.mxu0 0.0
        %1856 = vmatprep.subr.mxu0 0.0
        %1857 = vmatpush1.msra.mxu0 0.0
        %1858 = vmatprep.subr.mxu0 0.0
        %1859 = vmatpush1.msra.mxu0 0.0
        %1860 = vmatprep.subr.mxu0 0.0
        %1861 = vmatpush1.msra.mxu0 0.0
        %1862 = vmatprep.subr.mxu0 0.0
        %1863 = vmatpush1.msra.mxu0 0.0
        %1864 = vmatprep.subr.mxu0 0.0
        %1865 = vmatpush1.msra.mxu0 0.0
        %1866 = vmatprep.subr.mxu0 0.0
        %1867 = vmatpush1.msra.mxu0 0.0
        %1868 = vmatprep.subr.mxu0 0.0
        %1869 = vmatpush1.msra.mxu0 0.0
        %1870 = vmatprep.subr.mxu0 0.0
        %1871 = vmatpush1.msra.mxu0 0.0
        %1872 = vmatprep.mubr.f32.mxu0 0.0
        %1873 = vmatmul.mubr.f32.gmra.mrb[0].mxu0 %v1806
        %v1874 = vpop.f32.mrb[0].mxu0
        %v1875 = vadd.f32 0.0, %v1874
        %v1876 = vpop.f32.mrb[0].mxu0
        %1877 = vdwg.mxu0
        %v1878 = vadd.f32 %v1635, %v1875
        %1879 = vrot.lane.b32.xlu0 %v1155, 104
        %v1880 = vpop.permute.xlu0 %1879
        %1881 = vrot.lane.b32.xlu0 %v1155, 72
        %v1882 = vpop.permute.xlu0 %1881
        %v1883 = vsel %vm1161, %v1880, 0
        %v1885 = vsel %vm1161, %v1882, 0
        %1887 = vmatprep.subr.mxu0 0.0
        %1888 = vmatpush1.xpose.msra.mxu0 %v1885
        %1889 = vmatprep.subr.mxu0 0.0
        %1890 = vmatpush1.xpose.msra.mxu0 0.0
        %1891 = vmatprep.subr.mxu0 0.0
        %1892 = vmatpush1.xpose.msra.mxu0 0.0
        %1893 = vmatprep.subr.mxu0 0.0
        %1894 = vmatpush1.xpose.msra.mxu0 0.0
        %1895 = vmatprep.subr.mxu0 0.0
        %1896 = vmatpush1.xpose.msra.mxu0 0.0
        %1897 = vmatprep.subr.mxu0 0.0
        %1898 = vmatpush1.xpose.msra.mxu0 0.0
        %1899 = vmatprep.subr.mxu0 0.0
        %1900 = vmatpush1.xpose.msra.mxu0 0.0
        %1901 = vmatprep.subr.mxu0 0.0
        %1902 = vmatpush1.xpose.msra.mxu0 0.0
        %1903 = vmatprep.subr.mxu0 0.0
        %1904 = vmatpush1.xpose.msra.mxu0 0.0
        %1905 = vmatprep.subr.mxu0 0.0
        %1906 = vmatpush1.xpose.msra.mxu0 0.0
        %1907 = vmatprep.subr.mxu0 0.0
        %1908 = vmatpush1.xpose.msra.mxu0 0.0
        %1909 = vmatprep.subr.mxu0 0.0
        %1910 = vmatpush1.xpose.msra.mxu0 0.0
        %1911 = vmatprep.subr.mxu0 0.0
        %1912 = vmatpush1.xpose.msra.mxu0 0.0
        %1913 = vmatprep.subr.mxu0 0.0
        %1914 = vmatpush1.xpose.msra.mxu0 0.0
        %1915 = vmatprep.subr.mxu0 0.0
        %1916 = vmatpush1.xpose.msra.mxu0 0.0
        %1917 = vmatprep.subr.mxu0 0.0
        %1918 = vmatpush1.xpose.msra.mxu0 0.0
        %1919 = vmatprep.subr.mxu0 0.0
        %1920 = vmatpush1.xpose.msra.mxu0 0.0
        %1921 = vmatprep.subr.mxu0 0.0
        %1922 = vmatpush1.xpose.msra.mxu0 0.0
        %1923 = vmatprep.subr.mxu0 0.0
        %1924 = vmatpush1.xpose.msra.mxu0 0.0
        %1925 = vmatprep.subr.mxu0 0.0
        %1926 = vmatpush1.xpose.msra.mxu0 0.0
        %1927 = vmatprep.subr.mxu0 0.0
        %1928 = vmatpush1.xpose.msra.mxu0 0.0
        %1929 = vmatprep.subr.mxu0 0.0
        %1930 = vmatpush1.xpose.msra.mxu0 0.0
        %1931 = vmatprep.subr.mxu0 0.0
        %1932 = vmatpush1.xpose.msra.mxu0 0.0
        %1933 = vmatprep.subr.mxu0 0.0
        %1934 = vmatpush1.xpose.msra.mxu0 0.0
        %1935 = vmatprep.subr.mxu0 0.0
        %1936 = vmatpush1.xpose.msra.mxu0 0.0
        %1937 = vmatprep.subr.mxu0 0.0
        %1938 = vmatpush1.xpose.msra.mxu0 0.0
        %1939 = vmatprep.subr.mxu0 0.0
        %1940 = vmatpush1.xpose.msra.mxu0 0.0
        %1941 = vmatprep.subr.mxu0 0.0
        %1942 = vmatpush1.xpose.msra.mxu0 0.0
        %1943 = vmatprep.subr.mxu0 0.0
        %1944 = vmatpush1.xpose.msra.mxu0 0.0
        %1945 = vmatprep.subr.mxu0 0.0
        %1946 = vmatpush1.xpose.msra.mxu0 0.0
        %1947 = vmatprep.subr.mxu0 0.0
        %1948 = vmatpush1.xpose.msra.mxu0 0.0
        %1949 = vmatprep.subr.mxu0 0.0
        %1950 = vmatpush1.xpose.msra.mxu0 0.0
        %1951 = vmatprep.mubr.f32.mxu0 0.0
        %1952 = vmatmul.mubr.f32.gmra.mrb[0].mxu0 %v1883
        %v1953 = vpop.f32.mrb[0].mxu0
        %v1954 = vadd.f32 0.0, %v1953
        %v1955 = vpop.f32.mrb[0].mxu0
        %1956 = vdwg.mxu0
        %v1957 = vsel %vm1073, %v1954, -3.4028235e+38
        %v1958 = vsel %vm1161, %v1957, -inf
        %1959 = vmax.xlane.f32.xlu0 %v1958
        %v1960 = vpop.xlane.xlu0 %1959
        %v1961 = vsub.f32 %v1957, %v1960
        %v1962 = vmul.f32 %v1961, 1.442695
        %v1963 = vpow.pop %v1962
        %v1964 = vsel %vm1161, %v1963, 0.0
        %1965 = vadd.xlane.f32.xlu0 %v1964
        %v1966 = vpop.xlane.xlu0 %1965
        %v1967 = vrcp.pop %v1966
        %v1968 = vmul.f32 %v1963, %v1967
        %1969 = vrot.lane.b32.xlu0 %v1155, 40
        %v1970 = vpop.permute.xlu0 %1969
        %v1973 = vsel %vm1161, %v1968, 0
        %1975 = vmatprep.subr.mxu0 0.0
        %1976 = vmatpush1.msra.mxu0 %v1970
        %1977 = vmatprep.subr.mxu0 0.0
        %1978 = vmatpush1.msra.mxu0 0.0
        %1979 = vmatprep.subr.mxu0 0.0
        %1980 = vmatpush1.msra.mxu0 0.0
        %1981 = vmatprep.subr.mxu0 0.0
        %1982 = vmatpush1.msra.mxu0 0.0
        %1983 = vmatprep.subr.mxu0 0.0
        %1984 = vmatpush1.msra.mxu0 0.0
        %1985 = vmatprep.subr.mxu0 0.0
        %1986 = vmatpush1.msra.mxu0 0.0
        %1987 = vmatprep.subr.mxu0 0.0
        %1988 = vmatpush1.msra.mxu0 0.0
        %1989 = vmatprep.subr.mxu0 0.0
        %1990 = vmatpush1.msra.mxu0 0.0
        %1991 = vmatprep.subr.mxu0 0.0
        %1992 = vmatpush1.msra.mxu0 0.0
        %1993 = vmatprep.subr.mxu0 0.0
        %1994 = vmatpush1.msra.mxu0 0.0
        %1995 = vmatprep.subr.mxu0 0.0
        %1996 = vmatpush1.msra.mxu0 0.0
        %1997 = vmatprep.subr.mxu0 0.0
        %1998 = vmatpush1.msra.mxu0 0.0
        %1999 = vmatprep.subr.mxu0 0.0
        %2000 = vmatpush1.msra.mxu0 0.0
        %2001 = vmatprep.subr.mxu0 0.0
        %2002 = vmatpush1.msra.mxu0 0.0
        %2003 = vmatprep.subr.mxu0 0.0
        %2004 = vmatpush1.msra.mxu0 0.0
        %2005 = vmatprep.subr.mxu0 0.0
        %2006 = vmatpush1.msra.mxu0 0.0
        %2007 = vmatprep.subr.mxu0 0.0
        %2008 = vmatpush1.msra.mxu0 0.0
        %2009 = vmatprep.subr.mxu0 0.0
        %2010 = vmatpush1.msra.mxu0 0.0
        %2011 = vmatprep.subr.mxu0 0.0
        %2012 = vmatpush1.msra.mxu0 0.0
        %2013 = vmatprep.subr.mxu0 0.0
        %2014 = vmatpush1.msra.mxu0 0.0
        %2015 = vmatprep.subr.mxu0 0.0
        %2016 = vmatpush1.msra.mxu0 0.0
        %2017 = vmatprep.subr.mxu0 0.0
        %2018 = vmatpush1.msra.mxu0 0.0
        %2019 = vmatprep.subr.mxu0 0.0
        %2020 = vmatpush1.msra.mxu0 0.0
        %2021 = vmatprep.subr.mxu0 0.0
        %2022 = vmatpush1.msra.mxu0 0.0
        %2023 = vmatprep.subr.mxu0 0.0
        %2024 = vmatpush1.msra.mxu0 0.0
        %2025 = vmatprep.subr.mxu0 0.0
        %2026 = vmatpush1.msra.mxu0 0.0
        %2027 = vmatprep.subr.mxu0 0.0
        %2028 = vmatpush1.msra.mxu0 0.0
        %2029 = vmatprep.subr.mxu0 0.0
        %2030 = vmatpush1.msra.mxu0 0.0
        %2031 = vmatprep.subr.mxu0 0.0
        %2032 = vmatpush1.msra.mxu0 0.0
        %2033 = vmatprep.subr.mxu0 0.0
        %2034 = vmatpush1.msra.mxu0 0.0
        %2035 = vmatprep.subr.mxu0 0.0
        %2036 = vmatpush1.msra.mxu0 0.0
        %2037 = vmatprep.subr.mxu0 0.0
        %2038 = vmatpush1.msra.mxu0 0.0
        %2039 = vmatprep.mubr.f32.mxu0 0.0
        %2040 = vmatmul.mubr.f32.gmra.mrb[0].mxu0 %v1973
        %v2041 = vpop.f32.mrb[0].mxu0
        %v2042 = vadd.f32 0.0, %v2041
        %v2043 = vpop.f32.mrb[0].mxu0
        %2044 = vdwg.mxu0
        %v2045 = vld [vmem:[%s23 + $0x18] sm:$0xff]
        %v2047 = vsel %vm1161, %v2042, 0
        %2049 = vmatprep.subr.mxu0 0.0
        %2050 = vmatpush1.msra.mxu0 %v2045
        %2051 = vmatprep.subr.mxu0 0.0
        %2052 = vmatpush1.msra.mxu0 0.0
        %2053 = vmatprep.subr.mxu0 0.0
        %2054 = vmatpush1.msra.mxu0 0.0
        %2055 = vmatprep.subr.mxu0 0.0
        %2056 = vmatpush1.msra.mxu0 0.0
        %2057 = vmatprep.subr.mxu0 0.0
        %2058 = vmatpush1.msra.mxu0 0.0
        %2059 = vmatprep.subr.mxu0 0.0
        %2060 = vmatpush1.msra.mxu0 0.0
        %2061 = vmatprep.subr.mxu0 0.0
        %2062 = vmatpush1.msra.mxu0 0.0
        %2063 = vmatprep.subr.mxu0 0.0
        %2064 = vmatpush1.msra.mxu0 0.0
        %2065 = vmatprep.subr.mxu0 0.0
        %2066 = vmatpush1.msra.mxu0 0.0
        %2067 = vmatprep.subr.mxu0 0.0
        %2068 = vmatpush1.msra.mxu0 0.0
        %2069 = vmatprep.subr.mxu0 0.0
        %2070 = vmatpush1.msra.mxu0 0.0
        %2071 = vmatprep.subr.mxu0 0.0
        %2072 = vmatpush1.msra.mxu0 0.0
        %2073 = vmatprep.subr.mxu0 0.0
        %2074 = vmatpush1.msra.mxu0 0.0
        %2075 = vmatprep.subr.mxu0 0.0
        %2076 = vmatpush1.msra.mxu0 0.0
        %2077 = vmatprep.subr.mxu0 0.0
        %2078 = vmatpush1.msra.mxu0 0.0
        %2079 = vmatprep.subr.mxu0 0.0
        %2080 = vmatpush1.msra.mxu0 0.0
        %2081 = vmatprep.subr.mxu0 0.0
        %2082 = vmatpush1.msra.mxu0 0.0
        %2083 = vmatprep.subr.mxu0 0.0
        %2084 = vmatpush1.msra.mxu0 0.0
        %2085 = vmatprep.subr.mxu0 0.0
        %2086 = vmatpush1.msra.mxu0 0.0
        %2087 = vmatprep.subr.mxu0 0.0
        %2088 = vmatpush1.msra.mxu0 0.0
        %2089 = vmatprep.subr.mxu0 0.0
        %2090 = vmatpush1.msra.mxu0 0.0
        %2091 = vmatprep.subr.mxu0 0.0
        %2092 = vmatpush1.msra.mxu0 0.0
        %2093 = vmatprep.subr.mxu0 0.0
        %2094 = vmatpush1.msra.mxu0 0.0
        %2095 = vmatprep.subr.mxu0 0.0
        %2096 = vmatpush1.msra.mxu0 0.0
        %2097 = vmatprep.subr.mxu0 0.0
        %2098 = vmatpush1.msra.mxu0 0.0
        %2099 = vmatprep.subr.mxu0 0.0
        %2100 = vmatpush1.msra.mxu0 0.0
        %2101 = vmatprep.subr.mxu0 0.0
        %2102 = vmatpush1.msra.mxu0 0.0
        %2103 = vmatprep.subr.mxu0 0.0
        %2104 = vmatpush1.msra.mxu0 0.0
        %2105 = vmatprep.subr.mxu0 0.0
        %2106 = vmatpush1.msra.mxu0 0.0
        %2107 = vmatprep.subr.mxu0 0.0
        %2108 = vmatpush1.msra.mxu0 0.0
        %2109 = vmatprep.subr.mxu0 0.0
        %2110 = vmatpush1.msra.mxu0 0.0
        %2111 = vmatprep.subr.mxu0 0.0
        %2112 = vmatpush1.msra.mxu0 0.0
        %2113 = vmatprep.mubr.f32.mxu0 0.0
        %2114 = vmatmul.mubr.f32.gmra.mrb[0].mxu0 %v2047
        %v2115 = vpop.f32.mrb[0].mxu0
        %v2116 = vadd.f32 0.0, %v2115
        %v2117 = vpop.f32.mrb[0].mxu0
        %2118 = vdwg.mxu0
        %v2119 = vadd.f32 %v1878, %v2116
        %v2120 = vld [vmem:[%s25] sm:$0x1]
        %v2122 = vlaneseq
        %v2123 = vshrl.u32 %v2122, 7
        %v2124 = vsub.s32 0, %v2123
        %v2125 = vrot.slane %v2120, %v2124
        %v2127 = vadd.f32 %v2119, %v2125
        %v2128 = vld [vmem:[%s1030] sm:$0xff]
        %v2129 = vld [vmem:[%s1034] sm:$0xff]
        %v2130 = vld [vmem:[%s27] sm:$0xff]
        %v2131 = vld [vmem:[%s27 + $0x8] sm:$0xff]
        %v2132 = vld [vmem:[%s27 + $0x10] sm:$0xff]
        %v2133 = vld [vmem:[%s27 + $0x18] sm:$0xff]
        %v2134 = vld [vmem:[%s27 + $0x20] sm:$0xff]
        %v2135 = vld [vmem:[%s27 + $0x28] sm:$0xff]
        %v2136 = vld [vmem:[%s27 + $0x30] sm:$0xff]
        %v2137 = vld [vmem:[%s27 + $0x38] sm:$0xff]
        %2138 = vmatprep.subr.mxu0 %v2131
        %2139 = vmatpush1.msra.mxu0 %v2130
        %2140 = vmatprep.subr.mxu0 %v2133
        %2141 = vmatpush1.msra.mxu0 %v2132
        %2142 = vmatprep.subr.mxu0 %v2135
        %2143 = vmatpush1.msra.mxu0 %v2134
        %2144 = vmatprep.subr.mxu0 %v2137
        %2145 = vmatpush1.msra.mxu0 %v2136
        %2146 = vmatprep.subr.mxu0 0.0
        %2147 = vmatpush1.msra.mxu0 0.0
        %2148 = vmatprep.subr.mxu0 0.0
        %2149 = vmatpush1.msra.mxu0 0.0
        %2150 = vmatprep.subr.mxu0 0.0
        %2151 = vmatpush1.msra.mxu0 0.0
        %2152 = vmatprep.subr.mxu0 0.0
        %2153 = vmatpush1.msra.mxu0 0.0
        %2154 = vmatprep.subr.mxu0 0.0
        %2155 = vmatpush1.msra.mxu0 0.0
        %2156 = vmatprep.subr.mxu0 0.0
        %2157 = vmatpush1.msra.mxu0 0.0
        %2158 = vmatprep.subr.mxu0 0.0
        %2159 = vmatpush1.msra.mxu0 0.0
        %2160 = vmatprep.subr.mxu0 0.0
        %2161 = vmatpush1.msra.mxu0 0.0
        %2162 = vmatprep.subr.mxu0 0.0
        %2163 = vmatpush1.msra.mxu0 0.0
        %2164 = vmatprep.subr.mxu0 0.0
        %2165 = vmatpush1.msra.mxu0 0.0
        %2166 = vmatprep.subr.mxu0 0.0
        %2167 = vmatpush1.msra.mxu0 0.0
        %2168 = vmatprep.subr.mxu0 0.0
        %2169 = vmatpush1.msra.mxu0 0.0
        %2170 = vmatprep.subr.mxu0 0.0
        %2171 = vmatpush1.msra.mxu0 0.0
        %2172 = vmatprep.subr.mxu0 0.0
        %2173 = vmatpush1.msra.mxu0 0.0
        %2174 = vmatprep.subr.mxu0 0.0
        %2175 = vmatpush1.msra.mxu0 0.0
        %2176 = vmatprep.subr.mxu0 0.0
        %2177 = vmatpush1.msra.mxu0 0.0
        %2178 = vmatprep.subr.mxu0 0.0
        %2179 = vmatpush1.msra.mxu0 0.0
        %2180 = vmatprep.subr.mxu0 0.0
        %2181 = vmatpush1.msra.mxu0 0.0
        %2182 = vmatprep.subr.mxu0 0.0
        %2183 = vmatpush1.msra.mxu0 0.0
        %2184 = vmatprep.subr.mxu0 0.0
        %2185 = vmatpush1.msra.mxu0 0.0
        %2186 = vmatprep.subr.mxu0 0.0
        %2187 = vmatpush1.msra.mxu0 0.0
        %2188 = vmatprep.subr.mxu0 0.0
        %2189 = vmatpush1.msra.mxu0 0.0
        %2190 = vmatprep.subr.mxu0 0.0
        %2191 = vmatpush1.msra.mxu0 0.0
        %2192 = vmatprep.subr.mxu0 0.0
        %2193 = vmatpush1.msra.mxu0 0.0
        %2194 = vmatprep.subr.mxu0 0.0
        %2195 = vmatpush1.msra.mxu0 0.0
        %2196 = vmatprep.subr.mxu0 0.0
        %2197 = vmatpush1.msra.mxu0 0.0
        %2198 = vmatprep.subr.mxu0 0.0
        %2199 = vmatpush1.msra.mxu0 0.0
        %2200 = vmatprep.subr.mxu0 0.0
        %2201 = vmatpush1.msra.mxu0 0.0
        %2202 = vmatprep.mubr.f32.mxu0 0.0
        %2203 = vmatmul.mubr.f32.gmra.mrb[0].mxu0 %v1086
        %v2204 = vpop.f32.mrb[0].mxu0
        %v2205 = vadd.f32 0.0, %v2204
        %v2206 = vpop.f32.mrb[0].mxu0
        %v2207 = vadd.f32 0.0, %v2206
        %2208 = vdwg.mxu0
        %2210 = vset.pattern.permute.xlu0 0
        %2211 = vperm.xlu0 %2210, %v2128
        %v2212 = vpop.permute.xlu0 %2211
        %v2214 = vmul.f32 %v2205, %v2212
        %2215 = vset.pattern.permute.xlu0 3
        %2216 = vperm.xlu0 %2215, %v2128
        %v2217 = vpop.permute.xlu0 %2216
        %v2219 = vmul.f32 %v2205, %v2217
        %2221 = vrot.lane.b32.xlu0 %v2219, 112
        %v2222 = vpop.permute.xlu0 %2221
        %v2224 = vadd.f32 %v2214, %v2222
        %2225 = vset.pattern.permute.xlu0 6
        %2226 = vperm.xlu0 %2225, %v2128
        %v2227 = vpop.permute.xlu0 %2226
        %v2229 = vmul.f32 %v2207, %v2227
        %2231 = vrot.lane.b32.xlu0 %v2229, 96
        %v2232 = vpop.permute.xlu0 %2231
        %v2234 = vadd.f32 %v2224, %v2232
        %2236 = vset.pattern.permute.xlu0 0
        %2237 = vperm.xlu0 %2236, %v2129
        %v2238 = vpop.permute.xlu0 %2237
        %v2240 = vadd.f32 %v2234, %v2238
        %2241 = vset.pattern.permute.xlu0 1
        %2242 = vperm.xlu0 %2241, %v2128
        %v2243 = vpop.permute.xlu0 %2242
        %v2245 = vmul.f32 %v2205, %v2243
        %2246 = vset.pattern.permute.xlu0 4
        %2247 = vperm.xlu0 %2246, %v2128
        %v2248 = vpop.permute.xlu0 %2247
        %v2250 = vmul.f32 %v2205, %v2248
        %2252 = vrot.lane.b32.xlu0 %v2250, 112
        %v2253 = vpop.permute.xlu0 %2252
        %v2255 = vadd.f32 %v2245, %v2253
        %2256 = vset.pattern.permute.xlu0 7
        %2257 = vperm.xlu0 %2256, %v2128
        %v2258 = vpop.permute.xlu0 %2257
        %v2260 = vmul.f32 %v2207, %v2258
        %2262 = vrot.lane.b32.xlu0 %v2260, 96
        %v2263 = vpop.permute.xlu0 %2262
        %v2265 = vadd.f32 %v2255, %v2263
        %2266 = vset.pattern.permute.xlu0 1
        %2267 = vperm.xlu0 %2266, %v2129
        %v2268 = vpop.permute.xlu0 %2267
        %v2270 = vadd.f32 %v2265, %v2268
        %2271 = vset.pattern.permute.xlu0 2
        %2272 = vperm.xlu0 %2271, %v2128
        %v2273 = vpop.permute.xlu0 %2272
        %v2275 = vmul.f32 %v2205, %v2273
        %2276 = vset.pattern.permute.xlu0 5
        %2277 = vperm.xlu0 %2276, %v2128
        %v2278 = vpop.permute.xlu0 %2277
        %v2280 = vmul.f32 %v2205, %v2278
        %2282 = vrot.lane.b32.xlu0 %v2280, 112
        %v2283 = vpop.permute.xlu0 %2282
        %v2285 = vadd.f32 %v2275, %v2283
        %2286 = vset.pattern.permute.xlu0 8
        %2287 = vperm.xlu0 %2286, %v2128
        %v2288 = vpop.permute.xlu0 %2287
        %v2290 = vmul.f32 %v2207, %v2288
        %2292 = vrot.lane.b32.xlu0 %v2290, 96
        %v2293 = vpop.permute.xlu0 %2292
        %v2295 = vadd.f32 %v2285, %v2293
        %2296 = vset.pattern.permute.xlu0 2
        %2297 = vperm.xlu0 %2296, %v2129
        %v2298 = vpop.permute.xlu0 %2297
        %v2300 = vadd.f32 %v2295, %v2298
        %v2301 = vmul.f32 %v2207, %v2212
        %v2302 = vmul.f32 %v2207, %v2217
        %2304 = vrot.lane.b32.xlu0 %v2302, 112
        %v2305 = vpop.permute.xlu0 %2304
        %v2307 = vadd.f32 %v2301, %v2305
        %v2308 = vadd.f32 %v2307, %v2232
        %v2309 = vadd.f32 %v2308, %v2238
        %v2310 = vmul.f32 %v2207, %v2243
        %v2311 = vmul.f32 %v2207, %v2248
        %2313 = vrot.lane.b32.xlu0 %v2311, 112
        %v2314 = vpop.permute.xlu0 %2313
        %v2316 = vadd.f32 %v2310, %v2314
        %v2317 = vadd.f32 %v2316, %v2263
        %v2318 = vadd.f32 %v2317, %v2268
        %v2319 = vmul.f32 %v2207, %v2273
        %v2320 = vmul.f32 %v2207, %v2278
        %2322 = vrot.lane.b32.xlu0 %v2320, 112
        %v2323 = vpop.permute.xlu0 %2322
        %v2325 = vadd.f32 %v2319, %v2323
        %v2326 = vadd.f32 %v2325, %v2293
        %v2327 = vadd.f32 %v2326, %v2298
        %v2328 = vld [vmem:[%s31] sm:$0xff]
        %v2329 = vld [vmem:[%s31 + $0x8] sm:$0xff]
        %v2330 = vld [vmem:[%s31 + $0x10] sm:$0xff]
        %v2331 = vld [vmem:[%s31 + $0x18] sm:$0xff]
        %v2332 = vld [vmem:[%s31 + $0x20] sm:$0xff]
        %v2333 = vld [vmem:[%s31 + $0x28] sm:$0xff]
        %v2334 = vld [vmem:[%s31 + $0x30] sm:$0xff]
        %v2335 = vld [vmem:[%s31 + $0x38] sm:$0xff]
        %v2336 = vld [vmem:[%s31 + $0x40] sm:$0xff]
        %v2337 = vld [vmem:[%s31 + $0x48] sm:$0xff]
        %v2338 = vld [vmem:[%s31 + $0x50] sm:$0xff]
        %v2339 = vld [vmem:[%s31 + $0x58] sm:$0xff]
        %v2340 = vld [vmem:[%s31 + $0x60] sm:$0xff]
        %v2341 = vld [vmem:[%s31 + $0x68] sm:$0xff]
        %v2342 = vld [vmem:[%s31 + $0x70] sm:$0xff]
        %v2343 = vld [vmem:[%s31 + $0x78] sm:$0xff]
        %2344 = vmatprep.subr.mxu0 0.0
        %2345 = vmatpush1.msra.mxu0 %v2328
        %2346 = vmatprep.subr.mxu0 0.0
        %2347 = vmatpush1.msra.mxu0 %v2329
        %2348 = vmatprep.subr.mxu0 0.0
        %2349 = vmatpush1.msra.mxu0 %v2330
        %2350 = vmatprep.subr.mxu0 0.0
        %2351 = vmatpush1.msra.mxu0 %v2331
        %2352 = vmatprep.subr.mxu0 0.0
        %2353 = vmatpush1.msra.mxu0 %v2332
        %2354 = vmatprep.subr.mxu0 0.0
        %2355 = vmatpush1.msra.mxu0 %v2333
        %2356 = vmatprep.subr.mxu0 0.0
        %2357 = vmatpush1.msra.mxu0 %v2334
        %2358 = vmatprep.subr.mxu0 0.0
        %2359 = vmatpush1.msra.mxu0 %v2335
        %2360 = vmatprep.subr.mxu0 0.0
        %2361 = vmatpush1.msra.mxu0 %v2336
        %2362 = vmatprep.subr.mxu0 0.0
        %2363 = vmatpush1.msra.mxu0 %v2337
        %2364 = vmatprep.subr.mxu0 0.0
        %2365 = vmatpush1.msra.mxu0 %v2338
        %2366 = vmatprep.subr.mxu0 0.0
        %2367 = vmatpush1.msra.mxu0 %v2339
        %2368 = vmatprep.subr.mxu0 0.0
        %2369 = vmatpush1.msra.mxu0 %v2340
        %2370 = vmatprep.subr.mxu0 0.0
        %2371 = vmatpush1.msra.mxu0 %v2341
        %2372 = vmatprep.subr.mxu0 0.0
        %2373 = vmatpush1.msra.mxu0 %v2342
        %2374 = vmatprep.subr.mxu0 0.0
        %2375 = vmatpush1.msra.mxu0 %v2343
        %2376 = vmatprep.subr.mxu0 0.0
        %2377 = vmatpush1.msra.mxu0 0.0
        %2378 = vmatprep.subr.mxu0 0.0
        %2379 = vmatpush1.msra.mxu0 0.0
        %2380 = vmatprep.subr.mxu0 0.0
        %2381 = vmatpush1.msra.mxu0 0.0
        %2382 = vmatprep.subr.mxu0 0.0
        %2383 = vmatpush1.msra.mxu0 0.0
        %2384 = vmatprep.subr.mxu0 0.0
        %2385 = vmatpush1.msra.mxu0 0.0
        %2386 = vmatprep.subr.mxu0 0.0
        %2387 = vmatpush1.msra.mxu0 0.0
        %2388 = vmatprep.subr.mxu0 0.0
        %2389 = vmatpush1.msra.mxu0 0.0
        %2390 = vmatprep.subr.mxu0 0.0
        %2391 = vmatpush1.msra.mxu0 0.0
        %2392 = vmatprep.subr.mxu0 0.0
        %2393 = vmatpush1.msra.mxu0 0.0
        %2394 = vmatprep.subr.mxu0 0.0
        %2395 = vmatpush1.msra.mxu0 0.0
        %2396 = vmatprep.subr.mxu0 0.0
        %2397 = vmatpush1.msra.mxu0 0.0
        %2398 = vmatprep.subr.mxu0 0.0
        %2399 = vmatpush1.msra.mxu0 0.0
        %2400 = vmatprep.subr.mxu0 0.0
        %2401 = vmatpush1.msra.mxu0 0.0
        %2402 = vmatprep.subr.mxu0 0.0
        %2403 = vmatpush1.msra.mxu0 0.0
        %2404 = vmatprep.subr.mxu0 0.0
        %2405 = vmatpush1.msra.mxu0 0.0
        %2406 = vmatprep.subr.mxu0 0.0
        %2407 = vmatpush1.msra.mxu0 0.0
        %2408 = vmatprep.mubr.f32.mxu0 0.0
        %2409 = vmatmul.mubr.f32.gmra.mrb[0].mxu0 %v1040
        %v2410 = vpop.f32.mrb[0].mxu0
        %v2411 = vadd.f32 0.0, %v2410
        %v2412 = vpop.f32.mrb[0].mxu0
        %2413 = vdwg.mxu0
        %v2414 = vld [vmem:[%s29] sm:$0x1]
        %v2415 = vld [vmem:[%s33] sm:$0x1]
        %v2416 = vld [vmem:[%s1022] sm:$0xff]
        %vm2417 = vcmp.gt.f32.partialorder %v2416, 0.5
        %v2419 = vcombine.high %v2240, %v2240
        %v2421 = vunpack.c.l.s4 1966171168
        %v2422 = vunpack.c.0.s8 %v2421
        %v2423 = vlaneseq
        %v2424 = vshrl.u32 %v2423, 7
        %v2425 = vsub.s32 %v2422, %v2424
        %v2426 = vrot.slane %v2240, %v2425
        %v2428 = vunpack.c.l.s4 1966171168
        %v2429 = vunpack.c.0.s8 %v2428
        %v2430 = vlaneseq
        %v2431 = vshrl.u32 %v2430, 7
        %v2432 = vsub.s32 %v2429, %v2431
        %v2433 = vrot.slane %v2419, %v2432
        %v2434 = vcombine.high %v2426, %v2426
        %v2435 = vcombine.high %v2433, %v2433
        %v2437 = vunpack.c.l.s4 1966171168
        %v2438 = vunpack.c.0.s8 %v2437
        %v2439 = vlaneseq
        %v2440 = vshrl.u32 %v2439, 7
        %v2441 = vsub.s32 %v2438, %v2440
        %v2442 = vrot.slane %v2426, %v2441
        %v2444 = vunpack.c.l.s4 1966171168
        %v2445 = vunpack.c.0.s8 %v2444
        %v2446 = vlaneseq
        %v2447 = vshrl.u32 %v2446, 7
        %v2448 = vsub.s32 %v2445, %v2447
        %v2449 = vrot.slane %v2433, %v2448
        %v2451 = vunpack.c.l.s4 1966171168
        %v2452 = vunpack.c.0.s8 %v2451
        %v2453 = vlaneseq
        %v2454 = vshrl.u32 %v2453, 7
        %v2455 = vsub.s32 %v2452, %v2454
        %v2456 = vrot.slane %v2434, %v2455
        %v2458 = vunpack.c.l.s4 1966171168
        %v2459 = vunpack.c.0.s8 %v2458
        %v2460 = vlaneseq
        %v2461 = vshrl.u32 %v2460, 7
        %v2462 = vsub.s32 %v2459, %v2461
        %v2463 = vrot.slane %v2435, %v2462
        %v2464 = vcombine.high %v2442, %v2442
        %v2465 = vcombine.high %v2449, %v2449
        %v2466 = vcombine.high %v2456, %v2456
        %v2467 = vcombine.high %v2463, %v2463
        %v2468 = vlaneseq
        %v2469 = vshrl.u32 %v2468, 7
        %v2470 = vsub.s32 0, %v2469
        %v2471 = vrot.slane %v2442, %v2470
        %v2472 = vlaneseq
        %v2473 = vshrl.u32 %v2472, 7
        %v2474 = vsub.s32 0, %v2473
        %v2475 = vrot.slane %v2456, %v2474
        %v2476 = vlaneseq
        %v2477 = vshrl.u32 %v2476, 7
        %v2478 = vsub.s32 0, %v2477
        %v2479 = vrot.slane %v2464, %v2478
        %v2480 = vlaneseq
        %v2481 = vshrl.u32 %v2480, 7
        %v2482 = vsub.s32 0, %v2481
        %v2483 = vrot.slane %v2466, %v2482
        %v2484 = vlaneseq
        %v2485 = vshrl.u32 %v2484, 7
        %v2486 = vsub.s32 0, %v2485
        %v2487 = vrot.slane %v2449, %v2486
        %v2488 = vlaneseq
        %v2489 = vshrl.u32 %v2488, 7
        %v2490 = vsub.s32 0, %v2489
        %v2491 = vrot.slane %v2463, %v2490
        %v2492 = vlaneseq
        %v2493 = vshrl.u32 %v2492, 7
        %v2494 = vsub.s32 0, %v2493
        %v2495 = vrot.slane %v2465, %v2494
        %v2496 = vlaneseq
        %v2497 = vshrl.u32 %v2496, 7
        %v2498 = vsub.s32 0, %v2497
        %v2499 = vrot.slane %v2467, %v2498
        %2509 = vrot.lane.b32.xlu0 %v2309, 80
        %v2510 = vpop.permute.xlu0 %2509
        %v2512 = vsub.f32 %v2471, %v2510
        %v2513 = vsub.f32 %v2475, %v2510
        %v2514 = vsub.f32 %v2479, %v2510
        %v2515 = vsub.f32 %v2483, %v2510
        %v2516 = vsub.f32 %v2487, %v2510
        %v2517 = vsub.f32 %v2491, %v2510
        %v2518 = vsub.f32 %v2495, %v2510
        %v2519 = vsub.f32 %v2499, %v2510
        %v2520 = vmul.f32 %v2512, %v2512
        %v2521 = vmul.f32 %v2513, %v2513
        %v2522 = vmul.f32 %v2514, %v2514
        %v2523 = vmul.f32 %v2515, %v2515
        %v2524 = vmul.f32 %v2516, %v2516
        %v2525 = vmul.f32 %v2517, %v2517
        %v2526 = vmul.f32 %v2518, %v2518
        %v2527 = vmul.f32 %v2519, %v2519
        %2536 = vrot.lane.b32.xlu0 %v2520, 32
        %v2537 = vpop.permute.xlu0 %2536
        %2538 = vrot.lane.b32.xlu0 %v2521, 32
        %v2539 = vpop.permute.xlu0 %2538
        %2540 = vrot.lane.b32.xlu0 %v2522, 32
        %v2541 = vpop.permute.xlu0 %2540
        %2542 = vrot.lane.b32.xlu0 %v2523, 32
        %v2543 = vpop.permute.xlu0 %2542
        %2544 = vrot.lane.b32.xlu0 %v2524, 32
        %v2545 = vpop.permute.xlu0 %2544
        %2546 = vrot.lane.b32.xlu0 %v2525, 32
        %v2547 = vpop.permute.xlu0 %2546
        %2548 = vrot.lane.b32.xlu0 %v2526, 32
        %v2549 = vpop.permute.xlu0 %2548
        %2550 = vrot.lane.b32.xlu0 %v2527, 32
        %v2551 = vpop.permute.xlu0 %2550
        %vm2560 = vcmask 31744
        %v2561 = vsel %vm2560, %v2537, 0.0
        %2562 = vadd.xlane.f32.xlu0 %v2561
        %v2563 = vpop.xlane.xlu0 %2562
        %v2564 = vsel %vm2560, %v2539, 0.0
        %2565 = vadd.xlane.f32.xlu0 %v2564
        %v2566 = vpop.xlane.xlu0 %2565
        %v2567 = vsel %vm2560, %v2541, 0.0
        %2568 = vadd.xlane.f32.xlu0 %v2567
        %v2569 = vpop.xlane.xlu0 %2568
        %v2570 = vsel %vm2560, %v2543, 0.0
        %2571 = vadd.xlane.f32.xlu0 %v2570
        %v2572 = vpop.xlane.xlu0 %2571
        %v2573 = vsel %vm2560, %v2545, 0.0
        %2574 = vadd.xlane.f32.xlu0 %v2573
        %v2575 = vpop.xlane.xlu0 %2574
        %v2576 = vsel %vm2560, %v2547, 0.0
        %2577 = vadd.xlane.f32.xlu0 %v2576
        %v2578 = vpop.xlane.xlu0 %2577
        %v2579 = vsel %vm2560, %v2549, 0.0
        %2580 = vadd.xlane.f32.xlu0 %v2579
        %v2581 = vpop.xlane.xlu0 %2580
        %v2582 = vsel %vm2560, %v2551, 0.0
        %2583 = vadd.xlane.f32.xlu0 %v2582
        %v2584 = vpop.xlane.xlu0 %2583
        %v2586 = vcombine.high %v2270, %v2270
        %v2588 = vunpack.c.l.s4 1966171168
        %v2589 = vunpack.c.0.s8 %v2588
        %v2590 = vlaneseq
        %v2591 = vshrl.u32 %v2590, 7
        %v2592 = vsub.s32 %v2589, %v2591
        %v2593 = vrot.slane %v2270, %v2592
        %v2595 = vunpack.c.l.s4 1966171168
        %v2596 = vunpack.c.0.s8 %v2595
        %v2597 = vlaneseq
        %v2598 = vshrl.u32 %v2597, 7
        %v2599 = vsub.s32 %v2596, %v2598
        %v2600 = vrot.slane %v2586, %v2599
        %v2601 = vcombine.high %v2593, %v2593
        %v2602 = vcombine.high %v2600, %v2600
        %v2604 = vunpack.c.l.s4 1966171168
        %v2605 = vunpack.c.0.s8 %v2604
        %v2606 = vlaneseq
        %v2607 = vshrl.u32 %v2606, 7
        %v2608 = vsub.s32 %v2605, %v2607
        %v2609 = vrot.slane %v2593, %v2608
        %v2611 = vunpack.c.l.s4 1966171168
        %v2612 = vunpack.c.0.s8 %v2611
        %v2613 = vlaneseq
        %v2614 = vshrl.u32 %v2613, 7
        %v2615 = vsub.s32 %v2612, %v2614
        %v2616 = vrot.slane %v2600, %v2615
        %v2618 = vunpack.c.l.s4 1966171168
        %v2619 = vunpack.c.0.s8 %v2618
        %v2620 = vlaneseq
        %v2621 = vshrl.u32 %v2620, 7
        %v2622 = vsub.s32 %v2619, %v2621
        %v2623 = vrot.slane %v2601, %v2622
        %v2625 = vunpack.c.l.s4 1966171168
        %v2626 = vunpack.c.0.s8 %v2625
        %v2627 = vlaneseq
        %v2628 = vshrl.u32 %v2627, 7
        %v2629 = vsub.s32 %v2626, %v2628
        %v2630 = vrot.slane %v2602, %v2629
        %v2631 = vcombine.high %v2609, %v2609
        %v2632 = vcombine.high %v2616, %v2616
        %v2633 = vcombine.high %v2623, %v2623
        %v2634 = vcombine.high %v2630, %v2630
        %v2635 = vlaneseq
        %v2636 = vshrl.u32 %v2635, 7
        %v2637 = vsub.s32 0, %v2636
        %v2638 = vrot.slane %v2609, %v2637
        %v2639 = vlaneseq
        %v2640 = vshrl.u32 %v2639, 7
        %v2641 = vsub.s32 0, %v2640
        %v2642 = vrot.slane %v2623, %v2641
        %v2643 = vlaneseq
        %v2644 = vshrl.u32 %v2643, 7
        %v2645 = vsub.s32 0, %v2644
        %v2646 = vrot.slane %v2631, %v2645
        %v2647 = vlaneseq
        %v2648 = vshrl.u32 %v2647, 7
        %v2649 = vsub.s32 0, %v2648
        %v2650 = vrot.slane %v2633, %v2649
        %v2651 = vlaneseq
        %v2652 = vshrl.u32 %v2651, 7
        %v2653 = vsub.s32 0, %v2652
        %v2654 = vrot.slane %v2616, %v2653
        %v2655 = vlaneseq
        %v2656 = vshrl.u32 %v2655, 7
        %v2657 = vsub.s32 0, %v2656
        %v2658 = vrot.slane %v2630, %v2657
        %v2659 = vlaneseq
        %v2660 = vshrl.u32 %v2659, 7
        %v2661 = vsub.s32 0, %v2660
        %v2662 = vrot.slane %v2632, %v2661
        %v2663 = vlaneseq
        %v2664 = vshrl.u32 %v2663, 7
        %v2665 = vsub.s32 0, %v2664
        %v2666 = vrot.slane %v2634, %v2665
        %2676 = vrot.lane.b32.xlu0 %v2318, 80
        %v2677 = vpop.permute.xlu0 %2676
        %v2679 = vsub.f32 %v2638, %v2677
        %v2680 = vsub.f32 %v2642, %v2677
        %v2681 = vsub.f32 %v2646, %v2677
        %v2682 = vsub.f32 %v2650, %v2677
        %v2683 = vsub.f32 %v2654, %v2677
        %v2684 = vsub.f32 %v2658, %v2677
        %v2685 = vsub.f32 %v2662, %v2677
        %v2686 = vsub.f32 %v2666, %v2677
        %v2687 = vmul.f32 %v2679, %v2679
        %v2688 = vmul.f32 %v2680, %v2680
        %v2689 = vmul.f32 %v2681, %v2681
        %v2690 = vmul.f32 %v2682, %v2682
        %v2691 = vmul.f32 %v2683, %v2683
        %v2692 = vmul.f32 %v2684, %v2684
        %v2693 = vmul.f32 %v2685, %v2685
        %v2694 = vmul.f32 %v2686, %v2686
        %2703 = vrot.lane.b32.xlu0 %v2687, 32
        %v2704 = vpop.permute.xlu0 %2703
        %2705 = vrot.lane.b32.xlu0 %v2688, 32
        %v2706 = vpop.permute.xlu0 %2705
        %2707 = vrot.lane.b32.xlu0 %v2689, 32
        %v2708 = vpop.permute.xlu0 %2707
        %2709 = vrot.lane.b32.xlu0 %v2690, 32
        %v2710 = vpop.permute.xlu0 %2709
        %2711 = vrot.lane.b32.xlu0 %v2691, 32
        %v2712 = vpop.permute.xlu0 %2711
        %2713 = vrot.lane.b32.xlu0 %v2692, 32
        %v2714 = vpop.permute.xlu0 %2713
        %2715 = vrot.lane.b32.xlu0 %v2693, 32
        %v2716 = vpop.permute.xlu0 %2715
        %2717 = vrot.lane.b32.xlu0 %v2694, 32
        %v2718 = vpop.permute.xlu0 %2717
        %v2727 = vsel %vm2560, %v2704, 0.0
        %2728 = vadd.xlane.f32.xlu0 %v2727
        %v2729 = vpop.xlane.xlu0 %2728
        %v2730 = vsel %vm2560, %v2706, 0.0
        %2731 = vadd.xlane.f32.xlu0 %v2730
        %v2732 = vpop.xlane.xlu0 %2731
        %v2733 = vsel %vm2560, %v2708, 0.0
        %2734 = vadd.xlane.f32.xlu0 %v2733
        %v2735 = vpop.xlane.xlu0 %2734
        %v2736 = vsel %vm2560, %v2710, 0.0
        %2737 = vadd.xlane.f32.xlu0 %v2736
        %v2738 = vpop.xlane.xlu0 %2737
        %v2739 = vsel %vm2560, %v2712, 0.0
        %2740 = vadd.xlane.f32.xlu0 %v2739
        %v2741 = vpop.xlane.xlu0 %2740
        %v2742 = vsel %vm2560, %v2714, 0.0
        %2743 = vadd.xlane.f32.xlu0 %v2742
        %v2744 = vpop.xlane.xlu0 %2743
        %v2745 = vsel %vm2560, %v2716, 0.0
        %2746 = vadd.xlane.f32.xlu0 %v2745
        %v2747 = vpop.xlane.xlu0 %2746
        %v2748 = vsel %vm2560, %v2718, 0.0
        %2749 = vadd.xlane.f32.xlu0 %v2748
        %v2750 = vpop.xlane.xlu0 %2749
        %v2751 = vadd.f32 %v2563, %v2729
        %v2752 = vadd.f32 %v2566, %v2732
        %v2753 = vadd.f32 %v2569, %v2735
        %v2754 = vadd.f32 %v2572, %v2738
        %v2755 = vadd.f32 %v2575, %v2741
        %v2756 = vadd.f32 %v2578, %v2744
        %v2757 = vadd.f32 %v2581, %v2747
        %v2758 = vadd.f32 %v2584, %v2750
        %v2760 = vcombine.high %v2300, %v2300
        %v2762 = vunpack.c.l.s4 1966171168
        %v2763 = vunpack.c.0.s8 %v2762
        %v2764 = vlaneseq
        %v2765 = vshrl.u32 %v2764, 7
        %v2766 = vsub.s32 %v2763, %v2765
        %v2767 = vrot.slane %v2300, %v2766
        %v2769 = vunpack.c.l.s4 1966171168
        %v2770 = vunpack.c.0.s8 %v2769
        %v2771 = vlaneseq
        %v2772 = vshrl.u32 %v2771, 7
        %v2773 = vsub.s32 %v2770, %v2772
        %v2774 = vrot.slane %v2760, %v2773
        %v2775 = vcombine.high %v2767, %v2767
        %v2776 = vcombine.high %v2774, %v2774
        %v2778 = vunpack.c.l.s4 1966171168
        %v2779 = vunpack.c.0.s8 %v2778
        %v2780 = vlaneseq
        %v2781 = vshrl.u32 %v2780, 7
        %v2782 = vsub.s32 %v2779, %v2781
        %v2783 = vrot.slane %v2767, %v2782
        %v2785 = vunpack.c.l.s4 1966171168
        %v2786 = vunpack.c.0.s8 %v2785
        %v2787 = vlaneseq
        %v2788 = vshrl.u32 %v2787, 7
        %v2789 = vsub.s32 %v2786, %v2788
        %v2790 = vrot.slane %v2774, %v2789
        %v2792 = vunpack.c.l.s4 1966171168
        %v2793 = vunpack.c.0.s8 %v2792
        %v2794 = vlaneseq
        %v2795 = vshrl.u32 %v2794, 7
        %v2796 = vsub.s32 %v2793, %v2795
        %v2797 = vrot.slane %v2775, %v2796
        %v2799 = vunpack.c.l.s4 1966171168
        %v2800 = vunpack.c.0.s8 %v2799
        %v2801 = vlaneseq
        %v2802 = vshrl.u32 %v2801, 7
        %v2803 = vsub.s32 %v2800, %v2802
        %v2804 = vrot.slane %v2776, %v2803
        %v2805 = vcombine.high %v2783, %v2783
        %v2806 = vcombine.high %v2790, %v2790
        %v2807 = vcombine.high %v2797, %v2797
        %v2808 = vcombine.high %v2804, %v2804
        %v2809 = vlaneseq
        %v2810 = vshrl.u32 %v2809, 7
        %v2811 = vsub.s32 0, %v2810
        %v2812 = vrot.slane %v2783, %v2811
        %v2813 = vlaneseq
        %v2814 = vshrl.u32 %v2813, 7
        %v2815 = vsub.s32 0, %v2814
        %v2816 = vrot.slane %v2797, %v2815
        %v2817 = vlaneseq
        %v2818 = vshrl.u32 %v2817, 7
        %v2819 = vsub.s32 0, %v2818
        %v2820 = vrot.slane %v2805, %v2819
        %v2821 = vlaneseq
        %v2822 = vshrl.u32 %v2821, 7
        %v2823 = vsub.s32 0, %v2822
        %v2824 = vrot.slane %v2807, %v2823
        %v2825 = vlaneseq
        %v2826 = vshrl.u32 %v2825, 7
        %v2827 = vsub.s32 0, %v2826
        %v2828 = vrot.slane %v2790, %v2827
        %v2829 = vlaneseq
        %v2830 = vshrl.u32 %v2829, 7
        %v2831 = vsub.s32 0, %v2830
        %v2832 = vrot.slane %v2804, %v2831
        %v2833 = vlaneseq
        %v2834 = vshrl.u32 %v2833, 7
        %v2835 = vsub.s32 0, %v2834
        %v2836 = vrot.slane %v2806, %v2835
        %v2837 = vlaneseq
        %v2838 = vshrl.u32 %v2837, 7
        %v2839 = vsub.s32 0, %v2838
        %v2840 = vrot.slane %v2808, %v2839
        %2850 = vrot.lane.b32.xlu0 %v2327, 80
        %v2851 = vpop.permute.xlu0 %2850
        %v2853 = vsub.f32 %v2812, %v2851
        %v2854 = vsub.f32 %v2816, %v2851
        %v2855 = vsub.f32 %v2820, %v2851
        %v2856 = vsub.f32 %v2824, %v2851
        %v2857 = vsub.f32 %v2828, %v2851
        %v2858 = vsub.f32 %v2832, %v2851
        %v2859 = vsub.f32 %v2836, %v2851
        %v2860 = vsub.f32 %v2840, %v2851
        %v2861 = vmul.f32 %v2853, %v2853
        %v2862 = vmul.f32 %v2854, %v2854
        %v2863 = vmul.f32 %v2855, %v2855
        %v2864 = vmul.f32 %v2856, %v2856
        %v2865 = vmul.f32 %v2857, %v2857
        %v2866 = vmul.f32 %v2858, %v2858
        %v2867 = vmul.f32 %v2859, %v2859
        %v2868 = vmul.f32 %v2860, %v2860
        %2877 = vrot.lane.b32.xlu0 %v2861, 32
        %v2878 = vpop.permute.xlu0 %2877
        %2879 = vrot.lane.b32.xlu0 %v2862, 32
        %v2880 = vpop.permute.xlu0 %2879
        %2881 = vrot.lane.b32.xlu0 %v2863, 32
        %v2882 = vpop.permute.xlu0 %2881
        %2883 = vrot.lane.b32.xlu0 %v2864, 32
        %v2884 = vpop.permute.xlu0 %2883
        %2885 = vrot.lane.b32.xlu0 %v2865, 32
        %v2886 = vpop.permute.xlu0 %2885
        %2887 = vrot.lane.b32.xlu0 %v2866, 32
        %v2888 = vpop.permute.xlu0 %2887
        %2889 = vrot.lane.b32.xlu0 %v2867, 32
        %v2890 = vpop.permute.xlu0 %2889
        %2891 = vrot.lane.b32.xlu0 %v2868, 32
        %v2892 = vpop.permute.xlu0 %2891
        %v2901 = vsel %vm2560, %v2878, 0.0
        %2902 = vadd.xlane.f32.xlu0 %v2901
        %v2903 = vpop.xlane.xlu0 %2902
        %v2904 = vsel %vm2560, %v2880, 0.0
        %2905 = vadd.xlane.f32.xlu0 %v2904
        %v2906 = vpop.xlane.xlu0 %2905
        %v2907 = vsel %vm2560, %v2882, 0.0
        %2908 = vadd.xlane.f32.xlu0 %v2907
        %v2909 = vpop.xlane.xlu0 %2908
        %v2910 = vsel %vm2560, %v2884, 0.0
        %2911 = vadd.xlane.f32.xlu0 %v2910
        %v2912 = vpop.xlane.xlu0 %2911
        %v2913 = vsel %vm2560, %v2886, 0.0
        %2914 = vadd.xlane.f32.xlu0 %v2913
        %v2915 = vpop.xlane.xlu0 %2914
        %v2916 = vsel %vm2560, %v2888, 0.0
        %2917 = vadd.xlane.f32.xlu0 %v2916
        %v2918 = vpop.xlane.xlu0 %2917
        %v2919 = vsel %vm2560, %v2890, 0.0
        %2920 = vadd.xlane.f32.xlu0 %v2919
        %v2921 = vpop.xlane.xlu0 %2920
        %v2922 = vsel %vm2560, %v2892, 0.0
        %2923 = vadd.xlane.f32.xlu0 %v2922
        %v2924 = vpop.xlane.xlu0 %2923
        %v2925 = vadd.f32 %v2751, %v2903
        %v2926 = vadd.f32 %v2752, %v2906
        %v2927 = vadd.f32 %v2753, %v2909
        %v2928 = vadd.f32 %v2754, %v2912
        %v2929 = vadd.f32 %v2755, %v2915
        %v2930 = vadd.f32 %v2756, %v2918
        %v2931 = vadd.f32 %v2757, %v2921
        %v2932 = vadd.f32 %v2758, %v2924
        %v2934 = vlaneseq
        %v2935 = vshrl.u32 %v2934, 7
        %v2936 = vsub.s32 0, %v2935
        %v2937 = vrot.slane %v2414, %v2936
        %2938 = vset.pattern.permute.xlu0 0
        %2939 = vperm.xlu0 %2938, %v2937
        %v2940 = vpop.permute.xlu0 %2939
        %v2942 = vmul.f32 %v2940, %v2925
        %v2943 = vmul.f32 %v2940, %v2926
        %v2944 = vmul.f32 %v2940, %v2927
        %v2945 = vmul.f32 %v2940, %v2928
        %v2946 = vmul.f32 %v2940, %v2929
        %v2947 = vmul.f32 %v2940, %v2930
        %v2948 = vmul.f32 %v2940, %v2931
        %v2949 = vmul.f32 %v2940, %v2932
        %2951 = vrot.lane.b32.xlu0 %v2205, 96
        %v2952 = vpop.permute.xlu0 %2951
        %v2961 = vlaneseq
        %v2962 = vand.u32 %v2961, 127
        %v2963 = vlaneseq
        %v2964 = vshrl.u32 %v2963, 7
        %v2965 = vsub.s32 %v2962, %v2964
        %v2966 = vrot.slane %v2942, %v2965
        %v2967 = vlaneseq
        %v2968 = vshrl.u32 %v2967, 7
        %v2969 = vsub.s32 %v2962, %v2968
        %v2970 = vrot.slane %v2943, %v2969
        %v2971 = vlaneseq
        %v2972 = vshrl.u32 %v2971, 7
        %v2973 = vsub.s32 %v2962, %v2972
        %v2974 = vrot.slane %v2944, %v2973
        %v2975 = vlaneseq
        %v2976 = vshrl.u32 %v2975, 7
        %v2977 = vsub.s32 %v2962, %v2976
        %v2978 = vrot.slane %v2945, %v2977
        %v2979 = vlaneseq
        %v2980 = vshrl.u32 %v2979, 7
        %v2981 = vsub.s32 %v2962, %v2980
        %v2982 = vrot.slane %v2946, %v2981
        %v2983 = vlaneseq
        %v2984 = vshrl.u32 %v2983, 7
        %v2985 = vsub.s32 %v2962, %v2984
        %v2986 = vrot.slane %v2947, %v2985
        %v2987 = vlaneseq
        %v2988 = vshrl.u32 %v2987, 7
        %v2989 = vsub.s32 %v2962, %v2988
        %v2990 = vrot.slane %v2948, %v2989
        %v2991 = vlaneseq
        %v2992 = vshrl.u32 %v2991, 7
        %v2993 = vsub.s32 %v2962, %v2992
        %v2994 = vrot.slane %v2949, %v2993
        %vm2995 = vcmask 1041409
        %v2996 = vsel %vm2995, %v2970, %v2966
        %vm2997 = vcmask 1042434
        %v2998 = vsel %vm2997, %v2974, %v2996
        %vm2999 = vcmask 1043459
        %v3000 = vsel %vm2999, %v2978, %v2998
        %vm3001 = vcmask 1044484
        %v3002 = vsel %vm3001, %v2982, %v3000
        %vm3003 = vcmask 1045509
        %v3004 = vsel %vm3003, %v2986, %v3002
        %vm3005 = vcmask 1046534
        %v3006 = vsel %vm3005, %v2990, %v3004
        %vm3007 = vcmask 1047559
        %v3008 = vsel %vm3007, %v2994, %v3006
        %v3010 = vsel %vm1161, %v2205, 0
        %v3012 = vsel %vm1161, %v2952, 0
        %3014 = vmatprep.subr.mxu0 0.0
        %3015 = vmatpush1.xpose.msra.mxu0 %v3012
        %3016 = vmatprep.subr.mxu0 0.0
        %3017 = vmatpush1.xpose.msra.mxu0 0.0
        %3018 = vmatprep.subr.mxu0 0.0
        %3019 = vmatpush1.xpose.msra.mxu0 0.0
        %3020 = vmatprep.subr.mxu0 0.0
        %3021 = vmatpush1.xpose.msra.mxu0 0.0
        %3022 = vmatprep.subr.mxu0 0.0
        %3023 = vmatpush1.xpose.msra.mxu0 0.0
        %3024 = vmatprep.subr.mxu0 0.0
        %3025 = vmatpush1.xpose.msra.mxu0 0.0
        %3026 = vmatprep.subr.mxu0 0.0
        %3027 = vmatpush1.xpose.msra.mxu0 0.0
        %3028 = vmatprep.subr.mxu0 0.0
        %3029 = vmatpush1.xpose.msra.mxu0 0.0
        %3030 = vmatprep.subr.mxu0 0.0
        %3031 = vmatpush1.xpose.msra.mxu0 0.0
        %3032 = vmatprep.subr.mxu0 0.0
        %3033 = vmatpush1.xpose.msra.mxu0 0.0
        %3034 = vmatprep.subr.mxu0 0.0
        %3035 = vmatpush1.xpose.msra.mxu0 0.0
        %3036 = vmatprep.subr.mxu0 0.0
        %3037 = vmatpush1.xpose.msra.mxu0 0.0
        %3038 = vmatprep.subr.mxu0 0.0
        %3039 = vmatpush1.xpose.msra.mxu0 0.0
        %3040 = vmatprep.subr.mxu0 0.0
        %3041 = vmatpush1.xpose.msra.mxu0 0.0
        %3042 = vmatprep.subr.mxu0 0.0
        %3043 = vmatpush1.xpose.msra.mxu0 0.0
        %3044 = vmatprep.subr.mxu0 0.0
        %3045 = vmatpush1.xpose.msra.mxu0 0.0
        %3046 = vmatprep.subr.mxu0 0.0
        %3047 = vmatpush1.xpose.msra.mxu0 0.0
        %3048 = vmatprep.subr.mxu0 0.0
        %3049 = vmatpush1.xpose.msra.mxu0 0.0
        %3050 = vmatprep.subr.mxu0 0.0
        %3051 = vmatpush1.xpose.msra.mxu0 0.0
        %3052 = vmatprep.subr.mxu0 0.0
        %3053 = vmatpush1.xpose.msra.mxu0 0.0
        %3054 = vmatprep.subr.mxu0 0.0
        %3055 = vmatpush1.xpose.msra.mxu0 0.0
        %3056 = vmatprep.subr.mxu0 0.0
        %3057 = vmatpush1.xpose.msra.mxu0 0.0
        %3058 = vmatprep.subr.mxu0 0.0
        %3059 = vmatpush1.xpose.msra.mxu0 0.0
        %3060 = vmatprep.subr.mxu0 0.0
        %3061 = vmatpush1.xpose.msra.mxu0 0.0
        %3062 = vmatprep.subr.mxu0 0.0
        %3063 = vmatpush1.xpose.msra.mxu0 0.0
        %3064 = vmatprep.subr.mxu0 0.0
        %3065 = vmatpush1.xpose.msra.mxu0 0.0
        %3066 = vmatprep.subr.mxu0 0.0
        %3067 = vmatpush1.xpose.msra.mxu0 0.0
        %3068 = vmatprep.subr.mxu0 0.0
        %3069 = vmatpush1.xpose.msra.mxu0 0.0
        %3070 = vmatprep.subr.mxu0 0.0
        %3071 = vmatpush1.xpose.msra.mxu0 0.0
        %3072 = vmatprep.subr.mxu0 0.0
        %3073 = vmatpush1.xpose.msra.mxu0 0.0
        %3074 = vmatprep.subr.mxu0 0.0
        %3075 = vmatpush1.xpose.msra.mxu0 0.0
        %3076 = vmatprep.subr.mxu0 0.0
        %3077 = vmatpush1.xpose.msra.mxu0 0.0
        %3078 = vmatprep.mubr.f32.mxu0 0.0
        %3079 = vmatmul.mubr.f32.gmra.mrb[0].mxu0 %v3010
        %v3080 = vpop.f32.mrb[0].mxu0
        %v3081 = vadd.f32 %v3008, %v3080
        %v3082 = vpop.f32.mrb[0].mxu0
        %3083 = vdwg.mxu0
        %v3084 = vadd.f32 %v3081, %v2411
        %v3086 = vlaneseq
        %v3087 = vshrl.u32 %v3086, 7
        %v3088 = vsub.s32 0, %v3087
        %v3089 = vrot.slane %v2415, %v3088
        %3090 = vset.pattern.permute.xlu0 0
        %3091 = vperm.xlu0 %3090, %v3089
        %v3092 = vpop.permute.xlu0 %3091
        %v3094 = vadd.f32 %v3084, %v3092
        %v3095 = vsel %vm2417, %v3094, -3.4028235e+38
        %v3096 = vsel %vm1161, %v3095, -inf
        %3097 = vmax.xlane.f32.xlu0 %v3096
        %v3098 = vpop.xlane.xlu0 %3097
        %v3099 = vsub.f32 %v3095, %v3098
        %v3100 = vmul.f32 %v3099, 1.442695
        %v3101 = vpow.pop %v3100
        %v3102 = vsel %vm1161, %v3101, 0.0
        %3103 = vadd.xlane.f32.xlu0 %v3102
        %v3104 = vpop.xlane.xlu0 %3103
        %v3105 = vrcp.pop %v3104
        %v3106 = vmul.f32 %v3101, %v3105
        %3107 = vrot.lane.b32.xlu0 %v2205, 64
        %v3108 = vpop.permute.xlu0 %3107
        %v3111 = vsel %vm1161, %v3106, 0
        %3113 = vmatprep.subr.mxu0 0.0
        %3114 = vmatpush1.msra.mxu0 %v3108
        %3115 = vmatprep.subr.mxu0 0.0
        %3116 = vmatpush1.msra.mxu0 0.0
        %3117 = vmatprep.subr.mxu0 0.0
        %3118 = vmatpush1.msra.mxu0 0.0
        %3119 = vmatprep.subr.mxu0 0.0
        %3120 = vmatpush1.msra.mxu0 0.0
        %3121 = vmatprep.subr.mxu0 0.0
        %3122 = vmatpush1.msra.mxu0 0.0
        %3123 = vmatprep.subr.mxu0 0.0
        %3124 = vmatpush1.msra.mxu0 0.0
        %3125 = vmatprep.subr.mxu0 0.0
        %3126 = vmatpush1.msra.mxu0 0.0
        %3127 = vmatprep.subr.mxu0 0.0
        %3128 = vmatpush1.msra.mxu0 0.0
        %3129 = vmatprep.subr.mxu0 0.0
        %3130 = vmatpush1.msra.mxu0 0.0
        %3131 = vmatprep.subr.mxu0 0.0
        %3132 = vmatpush1.msra.mxu0 0.0
        %3133 = vmatprep.subr.mxu0 0.0
        %3134 = vmatpush1.msra.mxu0 0.0
        %3135 = vmatprep.subr.mxu0 0.0
        %3136 = vmatpush1.msra.mxu0 0.0
        %3137 = vmatprep.subr.mxu0 0.0
        %3138 = vmatpush1.msra.mxu0 0.0
        %3139 = vmatprep.subr.mxu0 0.0
        %3140 = vmatpush1.msra.mxu0 0.0
        %3141 = vmatprep.subr.mxu0 0.0
        %3142 = vmatpush1.msra.mxu0 0.0
        %3143 = vmatprep.subr.mxu0 0.0
        %3144 = vmatpush1.msra.mxu0 0.0
        %3145 = vmatprep.subr.mxu0 0.0
        %3146 = vmatpush1.msra.mxu0 0.0
        %3147 = vmatprep.subr.mxu0 0.0
        %3148 = vmatpush1.msra.mxu0 0.0
        %3149 = vmatprep.subr.mxu0 0.0
        %3150 = vmatpush1.msra.mxu0 0.0
        %3151 = vmatprep.subr.mxu0 0.0
        %3152 = vmatpush1.msra.mxu0 0.0
        %3153 = vmatprep.subr.mxu0 0.0
        %3154 = vmatpush1.msra.mxu0 0.0
        %3155 = vmatprep.subr.mxu0 0.0
        %3156 = vmatpush1.msra.mxu0 0.0
        %3157 = vmatprep.subr.mxu0 0.0
        %3158 = vmatpush1.msra.mxu0 0.0
        %3159 = vmatprep.subr.mxu0 0.0
        %3160 = vmatpush1.msra.mxu0 0.0
        %3161 = vmatprep.subr.mxu0 0.0
        %3162 = vmatpush1.msra.mxu0 0.0
        %3163 = vmatprep.subr.mxu0 0.0
        %3164 = vmatpush1.msra.mxu0 0.0
        %3165 = vmatprep.subr.mxu0 0.0
        %3166 = vmatpush1.msra.mxu0 0.0
        %3167 = vmatprep.subr.mxu0 0.0
        %3168 = vmatpush1.msra.mxu0 0.0
        %3169 = vmatprep.subr.mxu0 0.0
        %3170 = vmatpush1.msra.mxu0 0.0
        %3171 = vmatprep.subr.mxu0 0.0
        %3172 = vmatpush1.msra.mxu0 0.0
        %3173 = vmatprep.subr.mxu0 0.0
        %3174 = vmatpush1.msra.mxu0 0.0
        %3175 = vmatprep.subr.mxu0 0.0
        %3176 = vmatpush1.msra.mxu0 0.0
        %3177 = vmatprep.mubr.f32.mxu0 0.0
        %3178 = vmatmul.mubr.f32.gmra.mrb[0].mxu0 %v3111
        %v3179 = vpop.f32.mrb[0].mxu0
        %v3180 = vadd.f32 0.0, %v3179
        %v3181 = vpop.f32.mrb[0].mxu0
        %3182 = vdwg.mxu0
        %3183 = vrot.lane.b32.xlu0 %v2309, 64
        %v3184 = vpop.permute.xlu0 %3183
        %3186 = vmatprep.subr.mxu0 0.0
        %3187 = vmatpush1.msra.mxu0 %v3184
        %3188 = vmatprep.subr.mxu0 0.0
        %3189 = vmatpush1.msra.mxu0 0.0
        %3190 = vmatprep.subr.mxu0 0.0
        %3191 = vmatpush1.msra.mxu0 0.0
        %3192 = vmatprep.subr.mxu0 0.0
        %3193 = vmatpush1.msra.mxu0 0.0
        %3194 = vmatprep.subr.mxu0 0.0
        %3195 = vmatpush1.msra.mxu0 0.0
        %3196 = vmatprep.subr.mxu0 0.0
        %3197 = vmatpush1.msra.mxu0 0.0
        %3198 = vmatprep.subr.mxu0 0.0
        %3199 = vmatpush1.msra.mxu0 0.0
        %3200 = vmatprep.subr.mxu0 0.0
        %3201 = vmatpush1.msra.mxu0 0.0
        %3202 = vmatprep.subr.mxu0 0.0
        %3203 = vmatpush1.msra.mxu0 0.0
        %3204 = vmatprep.subr.mxu0 0.0
        %3205 = vmatpush1.msra.mxu0 0.0
        %3206 = vmatprep.subr.mxu0 0.0
        %3207 = vmatpush1.msra.mxu0 0.0
        %3208 = vmatprep.subr.mxu0 0.0
        %3209 = vmatpush1.msra.mxu0 0.0
        %3210 = vmatprep.subr.mxu0 0.0
        %3211 = vmatpush1.msra.mxu0 0.0
        %3212 = vmatprep.subr.mxu0 0.0
        %3213 = vmatpush1.msra.mxu0 0.0
        %3214 = vmatprep.subr.mxu0 0.0
        %3215 = vmatpush1.msra.mxu0 0.0
        %3216 = vmatprep.subr.mxu0 0.0
        %3217 = vmatpush1.msra.mxu0 0.0
        %3218 = vmatprep.subr.mxu0 0.0
        %3219 = vmatpush1.msra.mxu0 0.0
        %3220 = vmatprep.subr.mxu0 0.0
        %3221 = vmatpush1.msra.mxu0 0.0
        %3222 = vmatprep.subr.mxu0 0.0
        %3223 = vmatpush1.msra.mxu0 0.0
        %3224 = vmatprep.subr.mxu0 0.0
        %3225 = vmatpush1.msra.mxu0 0.0
        %3226 = vmatprep.subr.mxu0 0.0
        %3227 = vmatpush1.msra.mxu0 0.0
        %3228 = vmatprep.subr.mxu0 0.0
        %3229 = vmatpush1.msra.mxu0 0.0
        %3230 = vmatprep.subr.mxu0 0.0
        %3231 = vmatpush1.msra.mxu0 0.0
        %3232 = vmatprep.subr.mxu0 0.0
        %3233 = vmatpush1.msra.mxu0 0.0
        %3234 = vmatprep.subr.mxu0 0.0
        %3235 = vmatpush1.msra.mxu0 0.0
        %3236 = vmatprep.subr.mxu0 0.0
        %3237 = vmatpush1.msra.mxu0 0.0
        %3238 = vmatprep.subr.mxu0 0.0
        %3239 = vmatpush1.msra.mxu0 0.0
        %3240 = vmatprep.subr.mxu0 0.0
        %3241 = vmatpush1.msra.mxu0 0.0
        %3242 = vmatprep.subr.mxu0 0.0
        %3243 = vmatpush1.msra.mxu0 0.0
        %3244 = vmatprep.subr.mxu0 0.0
        %3245 = vmatpush1.msra.mxu0 0.0
        %3246 = vmatprep.subr.mxu0 0.0
        %3247 = vmatpush1.msra.mxu0 0.0
        %3248 = vmatprep.subr.mxu0 0.0
        %3249 = vmatpush1.msra.mxu0 0.0
        %3250 = vmatprep.mubr.f32.mxu0 0.0
        %3251 = vmatmul.mubr.f32.gmra.mrb[0].mxu0 %v3111
        %v3252 = vpop.f32.mrb[0].mxu0
        %v3253 = vadd.f32 0.0, %v3252
        %v3254 = vpop.f32.mrb[0].mxu0
        %3255 = vdwg.mxu0
        %v3256 = vsub.f32 %v3253, %v2238
        %3257 = vrot.lane.b32.xlu0 %v2318, 64
        %v3258 = vpop.permute.xlu0 %3257
        %3260 = vmatprep.subr.mxu0 0.0
        %3261 = vmatpush1.msra.mxu0 %v3258
        %3262 = vmatprep.subr.mxu0 0.0
        %3263 = vmatpush1.msra.mxu0 0.0
        %3264 = vmatprep.subr.mxu0 0.0
        %3265 = vmatpush1.msra.mxu0 0.0
        %3266 = vmatprep.subr.mxu0 0.0
        %3267 = vmatpush1.msra.mxu0 0.0
        %3268 = vmatprep.subr.mxu0 0.0
        %3269 = vmatpush1.msra.mxu0 0.0
        %3270 = vmatprep.subr.mxu0 0.0
        %3271 = vmatpush1.msra.mxu0 0.0
        %3272 = vmatprep.subr.mxu0 0.0
        %3273 = vmatpush1.msra.mxu0 0.0
        %3274 = vmatprep.subr.mxu0 0.0
        %3275 = vmatpush1.msra.mxu0 0.0
        %3276 = vmatprep.subr.mxu0 0.0
        %3277 = vmatpush1.msra.mxu0 0.0
        %3278 = vmatprep.subr.mxu0 0.0
        %3279 = vmatpush1.msra.mxu0 0.0
        %3280 = vmatprep.subr.mxu0 0.0
        %3281 = vmatpush1.msra.mxu0 0.0
        %3282 = vmatprep.subr.mxu0 0.0
        %3283 = vmatpush1.msra.mxu0 0.0
        %3284 = vmatprep.subr.mxu0 0.0
        %3285 = vmatpush1.msra.mxu0 0.0
        %3286 = vmatprep.subr.mxu0 0.0
        %3287 = vmatpush1.msra.mxu0 0.0
        %3288 = vmatprep.subr.mxu0 0.0
        %3289 = vmatpush1.msra.mxu0 0.0
        %3290 = vmatprep.subr.mxu0 0.0
        %3291 = vmatpush1.msra.mxu0 0.0
        %3292 = vmatprep.subr.mxu0 0.0
        %3293 = vmatpush1.msra.mxu0 0.0
        %3294 = vmatprep.subr.mxu0 0.0
        %3295 = vmatpush1.msra.mxu0 0.0
        %3296 = vmatprep.subr.mxu0 0.0
        %3297 = vmatpush1.msra.mxu0 0.0
        %3298 = vmatprep.subr.mxu0 0.0
        %3299 = vmatpush1.msra.mxu0 0.0
        %3300 = vmatprep.subr.mxu0 0.0
        %3301 = vmatpush1.msra.mxu0 0.0
        %3302 = vmatprep.subr.mxu0 0.0
        %3303 = vmatpush1.msra.mxu0 0.0
        %3304 = vmatprep.subr.mxu0 0.0
        %3305 = vmatpush1.msra.mxu0 0.0
        %3306 = vmatprep.subr.mxu0 0.0
        %3307 = vmatpush1.msra.mxu0 0.0
        %3308 = vmatprep.subr.mxu0 0.0
        %3309 = vmatpush1.msra.mxu0 0.0
        %3310 = vmatprep.subr.mxu0 0.0
        %3311 = vmatpush1.msra.mxu0 0.0
        %3312 = vmatprep.subr.mxu0 0.0
        %3313 = vmatpush1.msra.mxu0 0.0
        %3314 = vmatprep.subr.mxu0 0.0
        %3315 = vmatpush1.msra.mxu0 0.0
        %3316 = vmatprep.subr.mxu0 0.0
        %3317 = vmatpush1.msra.mxu0 0.0
        %3318 = vmatprep.subr.mxu0 0.0
        %3319 = vmatpush1.msra.mxu0 0.0
        %3320 = vmatprep.subr.mxu0 0.0
        %3321 = vmatpush1.msra.mxu0 0.0
        %3322 = vmatprep.subr.mxu0 0.0
        %3323 = vmatpush1.msra.mxu0 0.0
        %3324 = vmatprep.mubr.f32.mxu0 0.0
        %3325 = vmatmul.mubr.f32.gmra.mrb[0].mxu0 %v3111
        %v3326 = vpop.f32.mrb[0].mxu0
        %v3327 = vadd.f32 0.0, %v3326
        %v3328 = vpop.f32.mrb[0].mxu0
        %3329 = vdwg.mxu0
        %v3330 = vsub.f32 %v3327, %v2268
        %3331 = vrot.lane.b32.xlu0 %v2327, 64
        %v3332 = vpop.permute.xlu0 %3331
        %3334 = vmatprep.subr.mxu0 0.0
        %3335 = vmatpush1.msra.mxu0 %v3332
        %3336 = vmatprep.subr.mxu0 0.0
        %3337 = vmatpush1.msra.mxu0 0.0
        %3338 = vmatprep.subr.mxu0 0.0
        %3339 = vmatpush1.msra.mxu0 0.0
        %3340 = vmatprep.subr.mxu0 0.0
        %3341 = vmatpush1.msra.mxu0 0.0
        %3342 = vmatprep.subr.mxu0 0.0
        %3343 = vmatpush1.msra.mxu0 0.0
        %3344 = vmatprep.subr.mxu0 0.0
        %3345 = vmatpush1.msra.mxu0 0.0
        %3346 = vmatprep.subr.mxu0 0.0
        %3347 = vmatpush1.msra.mxu0 0.0
        %3348 = vmatprep.subr.mxu0 0.0
        %3349 = vmatpush1.msra.mxu0 0.0
        %3350 = vmatprep.subr.mxu0 0.0
        %3351 = vmatpush1.msra.mxu0 0.0
        %3352 = vmatprep.subr.mxu0 0.0
        %3353 = vmatpush1.msra.mxu0 0.0
        %3354 = vmatprep.subr.mxu0 0.0
        %3355 = vmatpush1.msra.mxu0 0.0
        %3356 = vmatprep.subr.mxu0 0.0
        %3357 = vmatpush1.msra.mxu0 0.0
        %3358 = vmatprep.subr.mxu0 0.0
        %3359 = vmatpush1.msra.mxu0 0.0
        %3360 = vmatprep.subr.mxu0 0.0
        %3361 = vmatpush1.msra.mxu0 0.0
        %3362 = vmatprep.subr.mxu0 0.0
        %3363 = vmatpush1.msra.mxu0 0.0
        %3364 = vmatprep.subr.mxu0 0.0
        %3365 = vmatpush1.msra.mxu0 0.0
        %3366 = vmatprep.subr.mxu0 0.0
        %3367 = vmatpush1.msra.mxu0 0.0
        %3368 = vmatprep.subr.mxu0 0.0
        %3369 = vmatpush1.msra.mxu0 0.0
        %3370 = vmatprep.subr.mxu0 0.0
        %3371 = vmatpush1.msra.mxu0 0.0
        %3372 = vmatprep.subr.mxu0 0.0
        %3373 = vmatpush1.msra.mxu0 0.0
        %3374 = vmatprep.subr.mxu0 0.0
        %3375 = vmatpush1.msra.mxu0 0.0
        %3376 = vmatprep.subr.mxu0 0.0
        %3377 = vmatpush1.msra.mxu0 0.0
        %3378 = vmatprep.subr.mxu0 0.0
        %3379 = vmatpush1.msra.mxu0 0.0
        %3380 = vmatprep.subr.mxu0 0.0
        %3381 = vmatpush1.msra.mxu0 0.0
        %3382 = vmatprep.subr.mxu0 0.0
        %3383 = vmatpush1.msra.mxu0 0.0
        %3384 = vmatprep.subr.mxu0 0.0
        %3385 = vmatpush1.msra.mxu0 0.0
        %3386 = vmatprep.subr.mxu0 0.0
        %3387 = vmatpush1.msra.mxu0 0.0
        %3388 = vmatprep.subr.mxu0 0.0
        %3389 = vmatpush1.msra.mxu0 0.0
        %3390 = vmatprep.subr.mxu0 0.0
        %3391 = vmatpush1.msra.mxu0 0.0
        %3392 = vmatprep.subr.mxu0 0.0
        %3393 = vmatpush1.msra.mxu0 0.0
        %3394 = vmatprep.subr.mxu0 0.0
        %3395 = vmatpush1.msra.mxu0 0.0
        %3396 = vmatprep.subr.mxu0 0.0
        %3397 = vmatpush1.msra.mxu0 0.0
        %3398 = vmatprep.mubr.f32.mxu0 0.0
        %3399 = vmatmul.mubr.f32.gmra.mrb[0].mxu0 %v3111
        %v3400 = vpop.f32.mrb[0].mxu0
        %v3401 = vadd.f32 0.0, %v3400
        %v3402 = vpop.f32.mrb[0].mxu0
        %3403 = vdwg.mxu0
        %v3404 = vsub.f32 %v3401, %v2298
        %v3405 = vmul.f32 %v3256, %v2212
        %v3406 = vmul.f32 %v3330, %v2243
        %v3407 = vadd.f32 %v3405, %v3406
        %v3408 = vmul.f32 %v3404, %v2273
        %v3409 = vadd.f32 %v3407, %v3408
        %v3410 = vmul.f32 %v3256, %v2217
        %v3411 = vmul.f32 %v3330, %v2248
        %v3412 = vadd.f32 %v3410, %v3411
        %v3413 = vmul.f32 %v3404, %v2278
        %v3414 = vadd.f32 %v3412, %v3413
        %v3415 = vmul.f32 %v3256, %v2227
        %v3416 = vmul.f32 %v3330, %v2258
        %v3417 = vadd.f32 %v3415, %v3416
        %v3418 = vmul.f32 %v3404, %v2288
        %v3419 = vadd.f32 %v3417, %v3418
        %v3420 = vmul.f32 %v3409, %v3409
        %v3421 = vmul.f32 %v3414, %v3414
        %v3422 = vadd.f32 %v3420, %v3421
        %v3423 = vmul.f32 %v3419, %v3419
        %v3424 = vadd.f32 %v3422, %v3423
        %v3425 = vadd.f32 %v3424, 1e-08
        %v3426 = vrsqrt.pop %v3425
        %v3427 = vmul.f32 %v3425, %v3426
        %vm3428 = vcmp.eq.f32.partialorder %v3425, inf
        %v3429 = vsel %vm3428, %v3425, %v3427
        %vm3430 = vcmp.eq.f32.partialorder %v3425, 0.0
        %v3431 = vand.u32 %v3425, 2147483648
        %v3432 = vsel %vm3430, %v3431, %v3429
        %v3433 = vld [vmem:[%s35] sm:$0xff]
        %3434 = vmatprep.subr.mxu0 0.0
        %3435 = vmatpush1.msra.mxu0 %v3433
        %3436 = vmatprep.subr.mxu0 0.0
        %3437 = vmatpush1.msra.mxu0 0.0
        %3438 = vmatprep.subr.mxu0 0.0
        %3439 = vmatpush1.msra.mxu0 0.0
        %3440 = vmatprep.subr.mxu0 0.0
        %3441 = vmatpush1.msra.mxu0 0.0
        %3442 = vmatprep.subr.mxu0 0.0
        %3443 = vmatpush1.msra.mxu0 0.0
        %3444 = vmatprep.subr.mxu0 0.0
        %3445 = vmatpush1.msra.mxu0 0.0
        %3446 = vmatprep.subr.mxu0 0.0
        %3447 = vmatpush1.msra.mxu0 0.0
        %3448 = vmatprep.subr.mxu0 0.0
        %3449 = vmatpush1.msra.mxu0 0.0
        %3450 = vmatprep.subr.mxu0 0.0
        %3451 = vmatpush1.msra.mxu0 0.0
        %3452 = vmatprep.subr.mxu0 0.0
        %3453 = vmatpush1.msra.mxu0 0.0
        %3454 = vmatprep.subr.mxu0 0.0
        %3455 = vmatpush1.msra.mxu0 0.0
        %3456 = vmatprep.subr.mxu0 0.0
        %3457 = vmatpush1.msra.mxu0 0.0
        %3458 = vmatprep.subr.mxu0 0.0
        %3459 = vmatpush1.msra.mxu0 0.0
        %3460 = vmatprep.subr.mxu0 0.0
        %3461 = vmatpush1.msra.mxu0 0.0
        %3462 = vmatprep.subr.mxu0 0.0
        %3463 = vmatpush1.msra.mxu0 0.0
        %3464 = vmatprep.subr.mxu0 0.0
        %3465 = vmatpush1.msra.mxu0 0.0
        %3466 = vmatprep.subr.mxu0 0.0
        %3467 = vmatpush1.msra.mxu0 0.0
        %3468 = vmatprep.subr.mxu0 0.0
        %3469 = vmatpush1.msra.mxu0 0.0
        %3470 = vmatprep.subr.mxu0 0.0
        %3471 = vmatpush1.msra.mxu0 0.0
        %3472 = vmatprep.subr.mxu0 0.0
        %3473 = vmatpush1.msra.mxu0 0.0
        %3474 = vmatprep.subr.mxu0 0.0
        %3475 = vmatpush1.msra.mxu0 0.0
        %3476 = vmatprep.subr.mxu0 0.0
        %3477 = vmatpush1.msra.mxu0 0.0
        %3478 = vmatprep.subr.mxu0 0.0
        %3479 = vmatpush1.msra.mxu0 0.0
        %3480 = vmatprep.subr.mxu0 0.0
        %3481 = vmatpush1.msra.mxu0 0.0
        %3482 = vmatprep.subr.mxu0 0.0
        %3483 = vmatpush1.msra.mxu0 0.0
        %3484 = vmatprep.subr.mxu0 0.0
        %3485 = vmatpush1.msra.mxu0 0.0
        %3486 = vmatprep.subr.mxu0 0.0
        %3487 = vmatpush1.msra.mxu0 0.0
        %3488 = vmatprep.subr.mxu0 0.0
        %3489 = vmatpush1.msra.mxu0 0.0
        %3490 = vmatprep.subr.mxu0 0.0
        %3491 = vmatpush1.msra.mxu0 0.0
        %3492 = vmatprep.subr.mxu0 0.0
        %3493 = vmatpush1.msra.mxu0 0.0
        %3494 = vmatprep.subr.mxu0 0.0
        %3495 = vmatpush1.msra.mxu0 0.0
        %3496 = vmatprep.subr.mxu0 0.0
        %3497 = vmatpush1.msra.mxu0 0.0
        %3498 = vmatprep.mubr.f32.mxu0 0.0
        %3499 = vmatmul.mubr.f32.gmra.mrb[0].mxu0 %v3111
        %v3500 = vpop.f32.mrb[0].mxu0
        %v3501 = vadd.f32 0.0, %v3500
        %v3502 = vpop.f32.mrb[0].mxu0
        %3503 = vdwg.mxu0
        %v3504 = vmul.f32 %v3501, %v1040
        %v3505 = vld [vmem:[%s37] sm:$0xff]
        %v3506 = vld [vmem:[%s37 + $0x8] sm:$0xff]
        %v3507 = vld [vmem:[%s37 + $0x10] sm:$0xff]
        %v3508 = vld [vmem:[%s37 + $0x18] sm:$0xff]
        %v3509 = vld [vmem:[%s37 + $0x20] sm:$0xff]
        %v3510 = vld [vmem:[%s37 + $0x28] sm:$0xff]
        %v3511 = vld [vmem:[%s37 + $0x30] sm:$0xff]
        %v3512 = vld [vmem:[%s37 + $0x38] sm:$0xff]
        %v3513 = vld [vmem:[%s37 + $0x40] sm:$0xff]
        %v3514 = vld [vmem:[%s37 + $0x48] sm:$0xff]
        %v3515 = vld [vmem:[%s37 + $0x50] sm:$0xff]
        %v3516 = vld [vmem:[%s37 + $0x58] sm:$0xff]
        %v3517 = vld [vmem:[%s37 + $0x60] sm:$0xff]
        %v3518 = vld [vmem:[%s37 + $0x68] sm:$0xff]
        %v3519 = vld [vmem:[%s37 + $0x70] sm:$0xff]
        %v3520 = vld [vmem:[%s37 + $0x78] sm:$0xff]
        %3521 = vmatprep.subr.mxu0 0.0
        %3522 = vmatpush1.msra.mxu0 %v3505
        %3523 = vmatprep.subr.mxu0 0.0
        %3524 = vmatpush1.msra.mxu0 %v3506
        %3525 = vmatprep.subr.mxu0 0.0
        %3526 = vmatpush1.msra.mxu0 %v3507
        %3527 = vmatprep.subr.mxu0 0.0
        %3528 = vmatpush1.msra.mxu0 %v3508
        %3529 = vmatprep.subr.mxu0 0.0
        %3530 = vmatpush1.msra.mxu0 %v3509
        %3531 = vmatprep.subr.mxu0 0.0
        %3532 = vmatpush1.msra.mxu0 %v3510
        %3533 = vmatprep.subr.mxu0 0.0
        %3534 = vmatpush1.msra.mxu0 %v3511
        %3535 = vmatprep.subr.mxu0 0.0
        %3536 = vmatpush1.msra.mxu0 %v3512
        %3537 = vmatprep.subr.mxu0 0.0
        %3538 = vmatpush1.msra.mxu0 %v3513
        %3539 = vmatprep.subr.mxu0 0.0
        %3540 = vmatpush1.msra.mxu0 %v3514
        %3541 = vmatprep.subr.mxu0 0.0
        %3542 = vmatpush1.msra.mxu0 %v3515
        %3543 = vmatprep.subr.mxu0 0.0
        %3544 = vmatpush1.msra.mxu0 %v3516
        %3545 = vmatprep.subr.mxu0 0.0
        %3546 = vmatpush1.msra.mxu0 %v3517
        %3547 = vmatprep.subr.mxu0 0.0
        %3548 = vmatpush1.msra.mxu0 %v3518
        %3549 = vmatprep.subr.mxu0 0.0
        %3550 = vmatpush1.msra.mxu0 %v3519
        %3551 = vmatprep.subr.mxu0 0.0
        %3552 = vmatpush1.msra.mxu0 %v3520
        %3553 = vmatprep.subr.mxu0 0.0
        %3554 = vmatpush1.msra.mxu0 0.0
        %3555 = vmatprep.subr.mxu0 0.0
        %3556 = vmatpush1.msra.mxu0 0.0
        %3557 = vmatprep.subr.mxu0 0.0
        %3558 = vmatpush1.msra.mxu0 0.0
        %3559 = vmatprep.subr.mxu0 0.0
        %3560 = vmatpush1.msra.mxu0 0.0
        %3561 = vmatprep.subr.mxu0 0.0
        %3562 = vmatpush1.msra.mxu0 0.0
        %3563 = vmatprep.subr.mxu0 0.0
        %3564 = vmatpush1.msra.mxu0 0.0
        %3565 = vmatprep.subr.mxu0 0.0
        %3566 = vmatpush1.msra.mxu0 0.0
        %3567 = vmatprep.subr.mxu0 0.0
        %3568 = vmatpush1.msra.mxu0 0.0
        %3569 = vmatprep.subr.mxu0 0.0
        %3570 = vmatpush1.msra.mxu0 0.0
        %3571 = vmatprep.subr.mxu0 0.0
        %3572 = vmatpush1.msra.mxu0 0.0
        %3573 = vmatprep.subr.mxu0 0.0
        %3574 = vmatpush1.msra.mxu0 0.0
        %3575 = vmatprep.subr.mxu0 0.0
        %3576 = vmatpush1.msra.mxu0 0.0
        %3577 = vmatprep.subr.mxu0 0.0
        %3578 = vmatpush1.msra.mxu0 0.0
        %3579 = vmatprep.subr.mxu0 0.0
        %3580 = vmatpush1.msra.mxu0 0.0
        %3581 = vmatprep.subr.mxu0 0.0
        %3582 = vmatpush1.msra.mxu0 0.0
        %3583 = vmatprep.subr.mxu0 0.0
        %3584 = vmatpush1.msra.mxu0 0.0
        %3585 = vmatprep.mubr.f32.mxu0 0.0
        %3586 = vmatmul.mubr.f32.gmra.mrb[0].mxu0 %v3504
        %v3587 = vpop.f32.mrb[0].mxu0
        %v3588 = vadd.f32 0.0, %v3587
        %v3589 = vpop.f32.mrb[0].mxu0
        %3590 = vdwg.mxu0
        %3592 = vrot.lane.b32.xlu0 %v3409, 8
        %v3593 = vpop.permute.xlu0 %3592
        %3596 = vrot.lane.b32.xlu0 %v3414, 12
        %v3597 = vpop.permute.xlu0 %3596
        %3600 = vrot.lane.b32.xlu0 %v3419, 16
        %v3601 = vpop.permute.xlu0 %3600
        %3604 = vrot.lane.b32.xlu0 %v3432, 20
        %v3605 = vpop.permute.xlu0 %3604
        %3608 = vrot.lane.b32.xlu0 %v3588, 24
        %v3609 = vpop.permute.xlu0 %3608
        %v3611 = vsel %vm1161, %v3180, %v3593
        %vm3612 = vcmask 97280
        %v3613 = vsel %vm3612, %v3611, %v3597
        %vm3614 = vcmask 130048
        %v3615 = vsel %vm3614, %v3613, %v3601
        %vm3616 = vcmask 162816
        %v3617 = vsel %vm3616, %v3615, %v3605
        %vm3618 = vcmask 195584
        %v3619 = vsel %vm3618, %v3617, %v3609
        %v3620 = vld [vmem:[%s39] sm:$0xff]
        %v3621 = vld [vmem:[%s39 + $0x8] sm:$0xff]
        %v3622 = vld [vmem:[%s39 + $0x10] sm:$0xff]
        %v3623 = vld [vmem:[%s39 + $0x18] sm:$0xff]
        %v3624 = vld [vmem:[%s39 + $0x20] sm:$0xff]
        %3625 = vrot.lane.b32.xlu0 %v2520, 28
        %v3626 = vpop.permute.xlu0 %3625
        %3627 = vrot.lane.b32.xlu0 %v2521, 28
        %v3628 = vpop.permute.xlu0 %3627
        %3629 = vrot.lane.b32.xlu0 %v2522, 28
        %v3630 = vpop.permute.xlu0 %3629
        %3631 = vrot.lane.b32.xlu0 %v2523, 28
        %v3632 = vpop.permute.xlu0 %3631
        %3633 = vrot.lane.b32.xlu0 %v2524, 28
        %v3634 = vpop.permute.xlu0 %3633
        %3635 = vrot.lane.b32.xlu0 %v2525, 28
        %v3636 = vpop.permute.xlu0 %3635
        %3637 = vrot.lane.b32.xlu0 %v2526, 28
        %v3638 = vpop.permute.xlu0 %3637
        %3639 = vrot.lane.b32.xlu0 %v2527, 28
        %v3640 = vpop.permute.xlu0 %3639
        %v3649 = vsel %vm2560, %v3626, 0.0
        %3650 = vadd.xlane.f32.xlu0 %v3649
        %v3651 = vpop.xlane.xlu0 %3650
        %v3652 = vsel %vm2560, %v3628, 0.0
        %3653 = vadd.xlane.f32.xlu0 %v3652
        %v3654 = vpop.xlane.xlu0 %3653
        %v3655 = vsel %vm2560, %v3630, 0.0
        %3656 = vadd.xlane.f32.xlu0 %v3655
        %v3657 = vpop.xlane.xlu0 %3656
        %v3658 = vsel %vm2560, %v3632, 0.0
        %3659 = vadd.xlane.f32.xlu0 %v3658
        %v3660 = vpop.xlane.xlu0 %3659
        %v3661 = vsel %vm2560, %v3634, 0.0
        %3662 = vadd.xlane.f32.xlu0 %v3661
        %v3663 = vpop.xlane.xlu0 %3662
        %v3664 = vsel %vm2560, %v3636, 0.0
        %3665 = vadd.xlane.f32.xlu0 %v3664
        %v3666 = vpop.xlane.xlu0 %3665
        %v3667 = vsel %vm2560, %v3638, 0.0
        %3668 = vadd.xlane.f32.xlu0 %v3667
        %v3669 = vpop.xlane.xlu0 %3668
        %v3670 = vsel %vm2560, %v3640, 0.0
        %3671 = vadd.xlane.f32.xlu0 %v3670
        %v3672 = vpop.xlane.xlu0 %3671
        %3673 = vrot.lane.b32.xlu0 %v2687, 28
        %v3674 = vpop.permute.xlu0 %3673
        %3675 = vrot.lane.b32.xlu0 %v2688, 28
        %v3676 = vpop.permute.xlu0 %3675
        %3677 = vrot.lane.b32.xlu0 %v2689, 28
        %v3678 = vpop.permute.xlu0 %3677
        %3679 = vrot.lane.b32.xlu0 %v2690, 28
        %v3680 = vpop.permute.xlu0 %3679
        %3681 = vrot.lane.b32.xlu0 %v2691, 28
        %v3682 = vpop.permute.xlu0 %3681
        %3683 = vrot.lane.b32.xlu0 %v2692, 28
        %v3684 = vpop.permute.xlu0 %3683
        %3685 = vrot.lane.b32.xlu0 %v2693, 28
        %v3686 = vpop.permute.xlu0 %3685
        %3687 = vrot.lane.b32.xlu0 %v2694, 28
        %v3688 = vpop.permute.xlu0 %3687
        %v3697 = vsel %vm2560, %v3674, 0.0
        %3698 = vadd.xlane.f32.xlu0 %v3697
        %v3699 = vpop.xlane.xlu0 %3698
        %v3700 = vsel %vm2560, %v3676, 0.0
        %3701 = vadd.xlane.f32.xlu0 %v3700
        %v3702 = vpop.xlane.xlu0 %3701
        %v3703 = vsel %vm2560, %v3678, 0.0
        %3704 = vadd.xlane.f32.xlu0 %v3703
        %v3705 = vpop.xlane.xlu0 %3704
        %v3706 = vsel %vm2560, %v3680, 0.0
        %3707 = vadd.xlane.f32.xlu0 %v3706
        %v3708 = vpop.xlane.xlu0 %3707
        %v3709 = vsel %vm2560, %v3682, 0.0
        %3710 = vadd.xlane.f32.xlu0 %v3709
        %v3711 = vpop.xlane.xlu0 %3710
        %v3712 = vsel %vm2560, %v3684, 0.0
        %3713 = vadd.xlane.f32.xlu0 %v3712
        %v3714 = vpop.xlane.xlu0 %3713
        %v3715 = vsel %vm2560, %v3686, 0.0
        %3716 = vadd.xlane.f32.xlu0 %v3715
        %v3717 = vpop.xlane.xlu0 %3716
        %v3718 = vsel %vm2560, %v3688, 0.0
        %3719 = vadd.xlane.f32.xlu0 %v3718
        %v3720 = vpop.xlane.xlu0 %3719
        %v3721 = vadd.f32 %v3651, %v3699
        %v3722 = vadd.f32 %v3654, %v3702
        %v3723 = vadd.f32 %v3657, %v3705
        %v3724 = vadd.f32 %v3660, %v3708
        %v3725 = vadd.f32 %v3663, %v3711
        %v3726 = vadd.f32 %v3666, %v3714
        %v3727 = vadd.f32 %v3669, %v3717
        %v3728 = vadd.f32 %v3672, %v3720
        %3729 = vrot.lane.b32.xlu0 %v2861, 28
        %v3730 = vpop.permute.xlu0 %3729
        %3731 = vrot.lane.b32.xlu0 %v2862, 28
        %v3732 = vpop.permute.xlu0 %3731
        %3733 = vrot.lane.b32.xlu0 %v2863, 28
        %v3734 = vpop.permute.xlu0 %3733
        %3735 = vrot.lane.b32.xlu0 %v2864, 28
        %v3736 = vpop.permute.xlu0 %3735
        %3737 = vrot.lane.b32.xlu0 %v2865, 28
        %v3738 = vpop.permute.xlu0 %3737
        %3739 = vrot.lane.b32.xlu0 %v2866, 28
        %v3740 = vpop.permute.xlu0 %3739
        %3741 = vrot.lane.b32.xlu0 %v2867, 28
        %v3742 = vpop.permute.xlu0 %3741
        %3743 = vrot.lane.b32.xlu0 %v2868, 28
        %v3744 = vpop.permute.xlu0 %3743
        %v3753 = vsel %vm2560, %v3730, 0.0
        %3754 = vadd.xlane.f32.xlu0 %v3753
        %v3755 = vpop.xlane.xlu0 %3754
        %v3756 = vsel %vm2560, %v3732, 0.0
        %3757 = vadd.xlane.f32.xlu0 %v3756
        %v3758 = vpop.xlane.xlu0 %3757
        %v3759 = vsel %vm2560, %v3734, 0.0
        %3760 = vadd.xlane.f32.xlu0 %v3759
        %v3761 = vpop.xlane.xlu0 %3760
        %v3762 = vsel %vm2560, %v3736, 0.0
        %3763 = vadd.xlane.f32.xlu0 %v3762
        %v3764 = vpop.xlane.xlu0 %3763
        %v3765 = vsel %vm2560, %v3738, 0.0
        %3766 = vadd.xlane.f32.xlu0 %v3765
        %v3767 = vpop.xlane.xlu0 %3766
        %v3768 = vsel %vm2560, %v3740, 0.0
        %3769 = vadd.xlane.f32.xlu0 %v3768
        %v3770 = vpop.xlane.xlu0 %3769
        %v3771 = vsel %vm2560, %v3742, 0.0
        %3772 = vadd.xlane.f32.xlu0 %v3771
        %v3773 = vpop.xlane.xlu0 %3772
        %v3774 = vsel %vm2560, %v3744, 0.0
        %3775 = vadd.xlane.f32.xlu0 %v3774
        %v3776 = vpop.xlane.xlu0 %3775
        %v3777 = vadd.f32 %v3721, %v3755
        %v3778 = vadd.f32 %v3722, %v3758
        %v3779 = vadd.f32 %v3723, %v3761
        %v3780 = vadd.f32 %v3724, %v3764
        %v3781 = vadd.f32 %v3725, %v3767
        %v3782 = vadd.f32 %v3726, %v3770
        %v3783 = vadd.f32 %v3727, %v3773
        %v3784 = vadd.f32 %v3728, %v3776
        %3785 = vset.pattern.permute.xlu0 1
        %3786 = vperm.xlu0 %3785, %v2937
        %v3787 = vpop.permute.xlu0 %3786
        %v3789 = vmul.f32 %v3787, %v3777
        %v3790 = vmul.f32 %v3787, %v3778
        %v3791 = vmul.f32 %v3787, %v3779
        %v3792 = vmul.f32 %v3787, %v3780
        %v3793 = vmul.f32 %v3787, %v3781
        %v3794 = vmul.f32 %v3787, %v3782
        %v3795 = vmul.f32 %v3787, %v3783
        %v3796 = vmul.f32 %v3787, %v3784
        %3797 = vrot.lane.b32.xlu0 %v2205, 120
        %v3798 = vpop.permute.xlu0 %3797
        %3799 = vrot.lane.b32.xlu0 %v2205, 88
        %v3800 = vpop.permute.xlu0 %3799
        %v3809 = vlaneseq
        %v3810 = vshrl.u32 %v3809, 7
        %v3811 = vsub.s32 %v2962, %v3810
        %v3812 = vrot.slane %v3789, %v3811
        %v3813 = vlaneseq
        %v3814 = vshrl.u32 %v3813, 7
        %v3815 = vsub.s32 %v2962, %v3814
        %v3816 = vrot.slane %v3790, %v3815
        %v3817 = vlaneseq
        %v3818 = vshrl.u32 %v3817, 7
        %v3819 = vsub.s32 %v2962, %v3818
        %v3820 = vrot.slane %v3791, %v3819
        %v3821 = vlaneseq
        %v3822 = vshrl.u32 %v3821, 7
        %v3823 = vsub.s32 %v2962, %v3822
        %v3824 = vrot.slane %v3792, %v3823
        %v3825 = vlaneseq
        %v3826 = vshrl.u32 %v3825, 7
        %v3827 = vsub.s32 %v2962, %v3826
        %v3828 = vrot.slane %v3793, %v3827
        %v3829 = vlaneseq
        %v3830 = vshrl.u32 %v3829, 7
        %v3831 = vsub.s32 %v2962, %v3830
        %v3832 = vrot.slane %v3794, %v3831
        %v3833 = vlaneseq
        %v3834 = vshrl.u32 %v3833, 7
        %v3835 = vsub.s32 %v2962, %v3834
        %v3836 = vrot.slane %v3795, %v3835
        %v3837 = vlaneseq
        %v3838 = vshrl.u32 %v3837, 7
        %v3839 = vsub.s32 %v2962, %v3838
        %v3840 = vrot.slane %v3796, %v3839
        %v3841 = vsel %vm2995, %v3816, %v3812
        %v3842 = vsel %vm2997, %v3820, %v3841
        %v3843 = vsel %vm2999, %v3824, %v3842
        %v3844 = vsel %vm3001, %v3828, %v3843
        %v3845 = vsel %vm3003, %v3832, %v3844
        %v3846 = vsel %vm3005, %v3836, %v3845
        %v3847 = vsel %vm3007, %v3840, %v3846
        %v3849 = vsel %vm1161, %v3798, 0
        %v3851 = vsel %vm1161, %v3800, 0
        %3853 = vmatprep.subr.mxu0 0.0
        %3854 = vmatpush1.xpose.msra.mxu0 %v3851
        %3855 = vmatprep.subr.mxu0 0.0
        %3856 = vmatpush1.xpose.msra.mxu0 0.0
        %3857 = vmatprep.subr.mxu0 0.0
        %3858 = vmatpush1.xpose.msra.mxu0 0.0
        %3859 = vmatprep.subr.mxu0 0.0
        %3860 = vmatpush1.xpose.msra.mxu0 0.0
        %3861 = vmatprep.subr.mxu0 0.0
        %3862 = vmatpush1.xpose.msra.mxu0 0.0
        %3863 = vmatprep.subr.mxu0 0.0
        %3864 = vmatpush1.xpose.msra.mxu0 0.0
        %3865 = vmatprep.subr.mxu0 0.0
        %3866 = vmatpush1.xpose.msra.mxu0 0.0
        %3867 = vmatprep.subr.mxu0 0.0
        %3868 = vmatpush1.xpose.msra.mxu0 0.0
        %3869 = vmatprep.subr.mxu0 0.0
        %3870 = vmatpush1.xpose.msra.mxu0 0.0
        %3871 = vmatprep.subr.mxu0 0.0
        %3872 = vmatpush1.xpose.msra.mxu0 0.0
        %3873 = vmatprep.subr.mxu0 0.0
        %3874 = vmatpush1.xpose.msra.mxu0 0.0
        %3875 = vmatprep.subr.mxu0 0.0
        %3876 = vmatpush1.xpose.msra.mxu0 0.0
        %3877 = vmatprep.subr.mxu0 0.0
        %3878 = vmatpush1.xpose.msra.mxu0 0.0
        %3879 = vmatprep.subr.mxu0 0.0
        %3880 = vmatpush1.xpose.msra.mxu0 0.0
        %3881 = vmatprep.subr.mxu0 0.0
        %3882 = vmatpush1.xpose.msra.mxu0 0.0
        %3883 = vmatprep.subr.mxu0 0.0
        %3884 = vmatpush1.xpose.msra.mxu0 0.0
        %3885 = vmatprep.subr.mxu0 0.0
        %3886 = vmatpush1.xpose.msra.mxu0 0.0
        %3887 = vmatprep.subr.mxu0 0.0
        %3888 = vmatpush1.xpose.msra.mxu0 0.0
        %3889 = vmatprep.subr.mxu0 0.0
        %3890 = vmatpush1.xpose.msra.mxu0 0.0
        %3891 = vmatprep.subr.mxu0 0.0
        %3892 = vmatpush1.xpose.msra.mxu0 0.0
        %3893 = vmatprep.subr.mxu0 0.0
        %3894 = vmatpush1.xpose.msra.mxu0 0.0
        %3895 = vmatprep.subr.mxu0 0.0
        %3896 = vmatpush1.xpose.msra.mxu0 0.0
        %3897 = vmatprep.subr.mxu0 0.0
        %3898 = vmatpush1.xpose.msra.mxu0 0.0
        %3899 = vmatprep.subr.mxu0 0.0
        %3900 = vmatpush1.xpose.msra.mxu0 0.0
        %3901 = vmatprep.subr.mxu0 0.0
        %3902 = vmatpush1.xpose.msra.mxu0 0.0
        %3903 = vmatprep.subr.mxu0 0.0
        %3904 = vmatpush1.xpose.msra.mxu0 0.0
        %3905 = vmatprep.subr.mxu0 0.0
        %3906 = vmatpush1.xpose.msra.mxu0 0.0
        %3907 = vmatprep.subr.mxu0 0.0
        %3908 = vmatpush1.xpose.msra.mxu0 0.0
        %3909 = vmatprep.subr.mxu0 0.0
        %3910 = vmatpush1.xpose.msra.mxu0 0.0
        %3911 = vmatprep.subr.mxu0 0.0
        %3912 = vmatpush1.xpose.msra.mxu0 0.0
        %3913 = vmatprep.subr.mxu0 0.0
        %3914 = vmatpush1.xpose.msra.mxu0 0.0
        %3915 = vmatprep.subr.mxu0 0.0
        %3916 = vmatpush1.xpose.msra.mxu0 0.0
        %3917 = vmatprep.mubr.f32.mxu0 0.0
        %3918 = vmatmul.mubr.f32.gmra.mrb[0].mxu0 %v3849
        %v3919 = vpop.f32.mrb[0].mxu0
        %v3920 = vadd.f32 %v3847, %v3919
        %v3921 = vpop.f32.mrb[0].mxu0
        %3922 = vdwg.mxu0
        %3924 = vrot.lane.b32.xlu0 %v2411, 120
        %v3925 = vpop.permute.xlu0 %3924
        %v3927 = vadd.f32 %v3920, %v3925
        %3928 = vset.pattern.permute.xlu0 1
        %3929 = vperm.xlu0 %3928, %v3089
        %v3930 = vpop.permute.xlu0 %3929
        %v3932 = vadd.f32 %v3927, %v3930
        %v3933 = vsel %vm2417, %v3932, -3.4028235e+38
        %v3934 = vsel %vm1161, %v3933, -inf
        %3935 = vmax.xlane.f32.xlu0 %v3934
        %v3936 = vpop.xlane.xlu0 %3935
        %v3937 = vsub.f32 %v3933, %v3936
        %v3938 = vmul.f32 %v3937, 1.442695
        %v3939 = vpow.pop %v3938
        %v3940 = vsel %vm1161, %v3939, 0.0
        %3941 = vadd.xlane.f32.xlu0 %v3940
        %v3942 = vpop.xlane.xlu0 %3941
        %v3943 = vrcp.pop %v3942
        %v3944 = vmul.f32 %v3939, %v3943
        %3945 = vrot.lane.b32.xlu0 %v2205, 56
        %v3946 = vpop.permute.xlu0 %3945
        %v3949 = vsel %vm1161, %v3944, 0
        %3951 = vmatprep.subr.mxu0 0.0
        %3952 = vmatpush1.msra.mxu0 %v3946
        %3953 = vmatprep.subr.mxu0 0.0
        %3954 = vmatpush1.msra.mxu0 0.0
        %3955 = vmatprep.subr.mxu0 0.0
        %3956 = vmatpush1.msra.mxu0 0.0
        %3957 = vmatprep.subr.mxu0 0.0
        %3958 = vmatpush1.msra.mxu0 0.0
        %3959 = vmatprep.subr.mxu0 0.0
        %3960 = vmatpush1.msra.mxu0 0.0
        %3961 = vmatprep.subr.mxu0 0.0
        %3962 = vmatpush1.msra.mxu0 0.0
        %3963 = vmatprep.subr.mxu0 0.0
        %3964 = vmatpush1.msra.mxu0 0.0
        %3965 = vmatprep.subr.mxu0 0.0
        %3966 = vmatpush1.msra.mxu0 0.0
        %3967 = vmatprep.subr.mxu0 0.0
        %3968 = vmatpush1.msra.mxu0 0.0
        %3969 = vmatprep.subr.mxu0 0.0
        %3970 = vmatpush1.msra.mxu0 0.0
        %3971 = vmatprep.subr.mxu0 0.0
        %3972 = vmatpush1.msra.mxu0 0.0
        %3973 = vmatprep.subr.mxu0 0.0
        %3974 = vmatpush1.msra.mxu0 0.0
        %3975 = vmatprep.subr.mxu0 0.0
        %3976 = vmatpush1.msra.mxu0 0.0
        %3977 = vmatprep.subr.mxu0 0.0
        %3978 = vmatpush1.msra.mxu0 0.0
        %3979 = vmatprep.subr.mxu0 0.0
        %3980 = vmatpush1.msra.mxu0 0.0
        %3981 = vmatprep.subr.mxu0 0.0
        %3982 = vmatpush1.msra.mxu0 0.0
        %3983 = vmatprep.subr.mxu0 0.0
        %3984 = vmatpush1.msra.mxu0 0.0
        %3985 = vmatprep.subr.mxu0 0.0
        %3986 = vmatpush1.msra.mxu0 0.0
        %3987 = vmatprep.subr.mxu0 0.0
        %3988 = vmatpush1.msra.mxu0 0.0
        %3989 = vmatprep.subr.mxu0 0.0
        %3990 = vmatpush1.msra.mxu0 0.0
        %3991 = vmatprep.subr.mxu0 0.0
        %3992 = vmatpush1.msra.mxu0 0.0
        %3993 = vmatprep.subr.mxu0 0.0
        %3994 = vmatpush1.msra.mxu0 0.0
        %3995 = vmatprep.subr.mxu0 0.0
        %3996 = vmatpush1.msra.mxu0 0.0
        %3997 = vmatprep.subr.mxu0 0.0
        %3998 = vmatpush1.msra.mxu0 0.0
        %3999 = vmatprep.subr.mxu0 0.0
        %4000 = vmatpush1.msra.mxu0 0.0
        %4001 = vmatprep.subr.mxu0 0.0
        %4002 = vmatpush1.msra.mxu0 0.0
        %4003 = vmatprep.subr.mxu0 0.0
        %4004 = vmatpush1.msra.mxu0 0.0
        %4005 = vmatprep.subr.mxu0 0.0
        %4006 = vmatpush1.msra.mxu0 0.0
        %4007 = vmatprep.subr.mxu0 0.0
        %4008 = vmatpush1.msra.mxu0 0.0
        %4009 = vmatprep.subr.mxu0 0.0
        %4010 = vmatpush1.msra.mxu0 0.0
        %4011 = vmatprep.subr.mxu0 0.0
        %4012 = vmatpush1.msra.mxu0 0.0
        %4013 = vmatprep.subr.mxu0 0.0
        %4014 = vmatpush1.msra.mxu0 0.0
        %4015 = vmatprep.mubr.f32.mxu0 0.0
        %4016 = vmatmul.mubr.f32.gmra.mrb[0].mxu0 %v3949
        %v4017 = vpop.f32.mrb[0].mxu0
        %v4018 = vadd.f32 0.0, %v4017
        %v4019 = vpop.f32.mrb[0].mxu0
        %4020 = vdwg.mxu0
        %4021 = vrot.lane.b32.xlu0 %v2309, 60
        %v4022 = vpop.permute.xlu0 %4021
        %4024 = vmatprep.subr.mxu0 0.0
        %4025 = vmatpush1.msra.mxu0 %v4022
        %4026 = vmatprep.subr.mxu0 0.0
        %4027 = vmatpush1.msra.mxu0 0.0
        %4028 = vmatprep.subr.mxu0 0.0
        %4029 = vmatpush1.msra.mxu0 0.0
        %4030 = vmatprep.subr.mxu0 0.0
        %4031 = vmatpush1.msra.mxu0 0.0
        %4032 = vmatprep.subr.mxu0 0.0
        %4033 = vmatpush1.msra.mxu0 0.0
        %4034 = vmatprep.subr.mxu0 0.0
        %4035 = vmatpush1.msra.mxu0 0.0
        %4036 = vmatprep.subr.mxu0 0.0
        %4037 = vmatpush1.msra.mxu0 0.0
        %4038 = vmatprep.subr.mxu0 0.0
        %4039 = vmatpush1.msra.mxu0 0.0
        %4040 = vmatprep.subr.mxu0 0.0
        %4041 = vmatpush1.msra.mxu0 0.0
        %4042 = vmatprep.subr.mxu0 0.0
        %4043 = vmatpush1.msra.mxu0 0.0
        %4044 = vmatprep.subr.mxu0 0.0
        %4045 = vmatpush1.msra.mxu0 0.0
        %4046 = vmatprep.subr.mxu0 0.0
        %4047 = vmatpush1.msra.mxu0 0.0
        %4048 = vmatprep.subr.mxu0 0.0
        %4049 = vmatpush1.msra.mxu0 0.0
        %4050 = vmatprep.subr.mxu0 0.0
        %4051 = vmatpush1.msra.mxu0 0.0
        %4052 = vmatprep.subr.mxu0 0.0
        %4053 = vmatpush1.msra.mxu0 0.0
        %4054 = vmatprep.subr.mxu0 0.0
        %4055 = vmatpush1.msra.mxu0 0.0
        %4056 = vmatprep.subr.mxu0 0.0
        %4057 = vmatpush1.msra.mxu0 0.0
        %4058 = vmatprep.subr.mxu0 0.0
        %4059 = vmatpush1.msra.mxu0 0.0
        %4060 = vmatprep.subr.mxu0 0.0
        %4061 = vmatpush1.msra.mxu0 0.0
        %4062 = vmatprep.subr.mxu0 0.0
        %4063 = vmatpush1.msra.mxu0 0.0
        %4064 = vmatprep.subr.mxu0 0.0
        %4065 = vmatpush1.msra.mxu0 0.0
        %4066 = vmatprep.subr.mxu0 0.0
        %4067 = vmatpush1.msra.mxu0 0.0
        %4068 = vmatprep.subr.mxu0 0.0
        %4069 = vmatpush1.msra.mxu0 0.0
        %4070 = vmatprep.subr.mxu0 0.0
        %4071 = vmatpush1.msra.mxu0 0.0
        %4072 = vmatprep.subr.mxu0 0.0
        %4073 = vmatpush1.msra.mxu0 0.0
        %4074 = vmatprep.subr.mxu0 0.0
        %4075 = vmatpush1.msra.mxu0 0.0
        %4076 = vmatprep.subr.mxu0 0.0
        %4077 = vmatpush1.msra.mxu0 0.0
        %4078 = vmatprep.subr.mxu0 0.0
        %4079 = vmatpush1.msra.mxu0 0.0
        %4080 = vmatprep.subr.mxu0 0.0
        %4081 = vmatpush1.msra.mxu0 0.0
        %4082 = vmatprep.subr.mxu0 0.0
        %4083 = vmatpush1.msra.mxu0 0.0
        %4084 = vmatprep.subr.mxu0 0.0
        %4085 = vmatpush1.msra.mxu0 0.0
        %4086 = vmatprep.subr.mxu0 0.0
        %4087 = vmatpush1.msra.mxu0 0.0
        %4088 = vmatprep.mubr.f32.mxu0 0.0
        %4089 = vmatmul.mubr.f32.gmra.mrb[0].mxu0 %v3949
        %v4090 = vpop.f32.mrb[0].mxu0
        %v4091 = vadd.f32 0.0, %v4090
        %v4092 = vpop.f32.mrb[0].mxu0
        %4093 = vdwg.mxu0
        %v4094 = vsub.f32 %v4091, %v2238
        %4095 = vrot.lane.b32.xlu0 %v2318, 60
        %v4096 = vpop.permute.xlu0 %4095
        %4098 = vmatprep.subr.mxu0 0.0
        %4099 = vmatpush1.msra.mxu0 %v4096
        %4100 = vmatprep.subr.mxu0 0.0
        %4101 = vmatpush1.msra.mxu0 0.0
        %4102 = vmatprep.subr.mxu0 0.0
        %4103 = vmatpush1.msra.mxu0 0.0
        %4104 = vmatprep.subr.mxu0 0.0
        %4105 = vmatpush1.msra.mxu0 0.0
        %4106 = vmatprep.subr.mxu0 0.0
        %4107 = vmatpush1.msra.mxu0 0.0
        %4108 = vmatprep.subr.mxu0 0.0
        %4109 = vmatpush1.msra.mxu0 0.0
        %4110 = vmatprep.subr.mxu0 0.0
        %4111 = vmatpush1.msra.mxu0 0.0
        %4112 = vmatprep.subr.mxu0 0.0
        %4113 = vmatpush1.msra.mxu0 0.0
        %4114 = vmatprep.subr.mxu0 0.0
        %4115 = vmatpush1.msra.mxu0 0.0
        %4116 = vmatprep.subr.mxu0 0.0
        %4117 = vmatpush1.msra.mxu0 0.0
        %4118 = vmatprep.subr.mxu0 0.0
        %4119 = vmatpush1.msra.mxu0 0.0
        %4120 = vmatprep.subr.mxu0 0.0
        %4121 = vmatpush1.msra.mxu0 0.0
        %4122 = vmatprep.subr.mxu0 0.0
        %4123 = vmatpush1.msra.mxu0 0.0
        %4124 = vmatprep.subr.mxu0 0.0
        %4125 = vmatpush1.msra.mxu0 0.0
        %4126 = vmatprep.subr.mxu0 0.0
        %4127 = vmatpush1.msra.mxu0 0.0
        %4128 = vmatprep.subr.mxu0 0.0
        %4129 = vmatpush1.msra.mxu0 0.0
        %4130 = vmatprep.subr.mxu0 0.0
        %4131 = vmatpush1.msra.mxu0 0.0
        %4132 = vmatprep.subr.mxu0 0.0
        %4133 = vmatpush1.msra.mxu0 0.0
        %4134 = vmatprep.subr.mxu0 0.0
        %4135 = vmatpush1.msra.mxu0 0.0
        %4136 = vmatprep.subr.mxu0 0.0
        %4137 = vmatpush1.msra.mxu0 0.0
        %4138 = vmatprep.subr.mxu0 0.0
        %4139 = vmatpush1.msra.mxu0 0.0
        %4140 = vmatprep.subr.mxu0 0.0
        %4141 = vmatpush1.msra.mxu0 0.0
        %4142 = vmatprep.subr.mxu0 0.0
        %4143 = vmatpush1.msra.mxu0 0.0
        %4144 = vmatprep.subr.mxu0 0.0
        %4145 = vmatpush1.msra.mxu0 0.0
        %4146 = vmatprep.subr.mxu0 0.0
        %4147 = vmatpush1.msra.mxu0 0.0
        %4148 = vmatprep.subr.mxu0 0.0
        %4149 = vmatpush1.msra.mxu0 0.0
        %4150 = vmatprep.subr.mxu0 0.0
        %4151 = vmatpush1.msra.mxu0 0.0
        %4152 = vmatprep.subr.mxu0 0.0
        %4153 = vmatpush1.msra.mxu0 0.0
        %4154 = vmatprep.subr.mxu0 0.0
        %4155 = vmatpush1.msra.mxu0 0.0
        %4156 = vmatprep.subr.mxu0 0.0
        %4157 = vmatpush1.msra.mxu0 0.0
        %4158 = vmatprep.subr.mxu0 0.0
        %4159 = vmatpush1.msra.mxu0 0.0
        %4160 = vmatprep.subr.mxu0 0.0
        %4161 = vmatpush1.msra.mxu0 0.0
        %4162 = vmatprep.mubr.f32.mxu0 0.0
        %4163 = vmatmul.mubr.f32.gmra.mrb[0].mxu0 %v3949
        %v4164 = vpop.f32.mrb[0].mxu0
        %v4165 = vadd.f32 0.0, %v4164
        %v4166 = vpop.f32.mrb[0].mxu0
        %4167 = vdwg.mxu0
        %v4168 = vsub.f32 %v4165, %v2268
        %4169 = vrot.lane.b32.xlu0 %v2327, 60
        %v4170 = vpop.permute.xlu0 %4169
        %4172 = vmatprep.subr.mxu0 0.0
        %4173 = vmatpush1.msra.mxu0 %v4170
        %4174 = vmatprep.subr.mxu0 0.0
        %4175 = vmatpush1.msra.mxu0 0.0
        %4176 = vmatprep.subr.mxu0 0.0
        %4177 = vmatpush1.msra.mxu0 0.0
        %4178 = vmatprep.subr.mxu0 0.0
        %4179 = vmatpush1.msra.mxu0 0.0
        %4180 = vmatprep.subr.mxu0 0.0
        %4181 = vmatpush1.msra.mxu0 0.0
        %4182 = vmatprep.subr.mxu0 0.0
        %4183 = vmatpush1.msra.mxu0 0.0
        %4184 = vmatprep.subr.mxu0 0.0
        %4185 = vmatpush1.msra.mxu0 0.0
        %4186 = vmatprep.subr.mxu0 0.0
        %4187 = vmatpush1.msra.mxu0 0.0
        %4188 = vmatprep.subr.mxu0 0.0
        %4189 = vmatpush1.msra.mxu0 0.0
        %4190 = vmatprep.subr.mxu0 0.0
        %4191 = vmatpush1.msra.mxu0 0.0
        %4192 = vmatprep.subr.mxu0 0.0
        %4193 = vmatpush1.msra.mxu0 0.0
        %4194 = vmatprep.subr.mxu0 0.0
        %4195 = vmatpush1.msra.mxu0 0.0
        %4196 = vmatprep.subr.mxu0 0.0
        %4197 = vmatpush1.msra.mxu0 0.0
        %4198 = vmatprep.subr.mxu0 0.0
        %4199 = vmatpush1.msra.mxu0 0.0
        %4200 = vmatprep.subr.mxu0 0.0
        %4201 = vmatpush1.msra.mxu0 0.0
        %4202 = vmatprep.subr.mxu0 0.0
        %4203 = vmatpush1.msra.mxu0 0.0
        %4204 = vmatprep.subr.mxu0 0.0
        %4205 = vmatpush1.msra.mxu0 0.0
        %4206 = vmatprep.subr.mxu0 0.0
        %4207 = vmatpush1.msra.mxu0 0.0
        %4208 = vmatprep.subr.mxu0 0.0
        %4209 = vmatpush1.msra.mxu0 0.0
        %4210 = vmatprep.subr.mxu0 0.0
        %4211 = vmatpush1.msra.mxu0 0.0
        %4212 = vmatprep.subr.mxu0 0.0
        %4213 = vmatpush1.msra.mxu0 0.0
        %4214 = vmatprep.subr.mxu0 0.0
        %4215 = vmatpush1.msra.mxu0 0.0
        %4216 = vmatprep.subr.mxu0 0.0
        %4217 = vmatpush1.msra.mxu0 0.0
        %4218 = vmatprep.subr.mxu0 0.0
        %4219 = vmatpush1.msra.mxu0 0.0
        %4220 = vmatprep.subr.mxu0 0.0
        %4221 = vmatpush1.msra.mxu0 0.0
        %4222 = vmatprep.subr.mxu0 0.0
        %4223 = vmatpush1.msra.mxu0 0.0
        %4224 = vmatprep.subr.mxu0 0.0
        %4225 = vmatpush1.msra.mxu0 0.0
        %4226 = vmatprep.subr.mxu0 0.0
        %4227 = vmatpush1.msra.mxu0 0.0
        %4228 = vmatprep.subr.mxu0 0.0
        %4229 = vmatpush1.msra.mxu0 0.0
        %4230 = vmatprep.subr.mxu0 0.0
        %4231 = vmatpush1.msra.mxu0 0.0
        %4232 = vmatprep.subr.mxu0 0.0
        %4233 = vmatpush1.msra.mxu0 0.0
        %4234 = vmatprep.subr.mxu0 0.0
        %4235 = vmatpush1.msra.mxu0 0.0
        %4236 = vmatprep.mubr.f32.mxu0 0.0
        %4237 = vmatmul.mubr.f32.gmra.mrb[0].mxu0 %v3949
        %v4238 = vpop.f32.mrb[0].mxu0
        %v4239 = vadd.f32 0.0, %v4238
        %v4240 = vpop.f32.mrb[0].mxu0
        %4241 = vdwg.mxu0
        %v4242 = vsub.f32 %v4239, %v2298
        %v4243 = vmul.f32 %v4094, %v2212
        %v4244 = vmul.f32 %v4168, %v2243
        %v4245 = vadd.f32 %v4243, %v4244
        %v4246 = vmul.f32 %v4242, %v2273
        %v4247 = vadd.f32 %v4245, %v4246
        %v4248 = vmul.f32 %v4094, %v2217
        %v4249 = vmul.f32 %v4168, %v2248
        %v4250 = vadd.f32 %v4248, %v4249
        %v4251 = vmul.f32 %v4242, %v2278
        %v4252 = vadd.f32 %v4250, %v4251
        %v4253 = vmul.f32 %v4094, %v2227
        %v4254 = vmul.f32 %v4168, %v2258
        %v4255 = vadd.f32 %v4253, %v4254
        %v4256 = vmul.f32 %v4242, %v2288
        %v4257 = vadd.f32 %v4255, %v4256
        %v4258 = vmul.f32 %v4247, %v4247
        %v4259 = vmul.f32 %v4252, %v4252
        %v4260 = vadd.f32 %v4258, %v4259
        %v4261 = vmul.f32 %v4257, %v4257
        %v4262 = vadd.f32 %v4260, %v4261
        %v4263 = vadd.f32 %v4262, 1e-08
        %v4264 = vrsqrt.pop %v4263
        %v4265 = vmul.f32 %v4263, %v4264
        %vm4266 = vcmp.eq.f32.partialorder %v4263, inf
        %v4267 = vsel %vm4266, %v4263, %v4265
        %vm4268 = vcmp.eq.f32.partialorder %v4263, 0.0
        %v4269 = vand.u32 %v4263, 2147483648
        %v4270 = vsel %vm4268, %v4269, %v4267
        %4271 = vmatprep.subr.mxu0 0.0
        %4272 = vmatpush1.msra.mxu0 %v3433
        %4273 = vmatprep.subr.mxu0 0.0
        %4274 = vmatpush1.msra.mxu0 0.0
        %4275 = vmatprep.subr.mxu0 0.0
        %4276 = vmatpush1.msra.mxu0 0.0
        %4277 = vmatprep.subr.mxu0 0.0
        %4278 = vmatpush1.msra.mxu0 0.0
        %4279 = vmatprep.subr.mxu0 0.0
        %4280 = vmatpush1.msra.mxu0 0.0
        %4281 = vmatprep.subr.mxu0 0.0
        %4282 = vmatpush1.msra.mxu0 0.0
        %4283 = vmatprep.subr.mxu0 0.0
        %4284 = vmatpush1.msra.mxu0 0.0
        %4285 = vmatprep.subr.mxu0 0.0
        %4286 = vmatpush1.msra.mxu0 0.0
        %4287 = vmatprep.subr.mxu0 0.0
        %4288 = vmatpush1.msra.mxu0 0.0
        %4289 = vmatprep.subr.mxu0 0.0
        %4290 = vmatpush1.msra.mxu0 0.0
        %4291 = vmatprep.subr.mxu0 0.0
        %4292 = vmatpush1.msra.mxu0 0.0
        %4293 = vmatprep.subr.mxu0 0.0
        %4294 = vmatpush1.msra.mxu0 0.0
        %4295 = vmatprep.subr.mxu0 0.0
        %4296 = vmatpush1.msra.mxu0 0.0
        %4297 = vmatprep.subr.mxu0 0.0
        %4298 = vmatpush1.msra.mxu0 0.0
        %4299 = vmatprep.subr.mxu0 0.0
        %4300 = vmatpush1.msra.mxu0 0.0
        %4301 = vmatprep.subr.mxu0 0.0
        %4302 = vmatpush1.msra.mxu0 0.0
        %4303 = vmatprep.subr.mxu0 0.0
        %4304 = vmatpush1.msra.mxu0 0.0
        %4305 = vmatprep.subr.mxu0 0.0
        %4306 = vmatpush1.msra.mxu0 0.0
        %4307 = vmatprep.subr.mxu0 0.0
        %4308 = vmatpush1.msra.mxu0 0.0
        %4309 = vmatprep.subr.mxu0 0.0
        %4310 = vmatpush1.msra.mxu0 0.0
        %4311 = vmatprep.subr.mxu0 0.0
        %4312 = vmatpush1.msra.mxu0 0.0
        %4313 = vmatprep.subr.mxu0 0.0
        %4314 = vmatpush1.msra.mxu0 0.0
        %4315 = vmatprep.subr.mxu0 0.0
        %4316 = vmatpush1.msra.mxu0 0.0
        %4317 = vmatprep.subr.mxu0 0.0
        %4318 = vmatpush1.msra.mxu0 0.0
        %4319 = vmatprep.subr.mxu0 0.0
        %4320 = vmatpush1.msra.mxu0 0.0
        %4321 = vmatprep.subr.mxu0 0.0
        %4322 = vmatpush1.msra.mxu0 0.0
        %4323 = vmatprep.subr.mxu0 0.0
        %4324 = vmatpush1.msra.mxu0 0.0
        %4325 = vmatprep.subr.mxu0 0.0
        %4326 = vmatpush1.msra.mxu0 0.0
        %4327 = vmatprep.subr.mxu0 0.0
        %4328 = vmatpush1.msra.mxu0 0.0
        %4329 = vmatprep.subr.mxu0 0.0
        %4330 = vmatpush1.msra.mxu0 0.0
        %4331 = vmatprep.subr.mxu0 0.0
        %4332 = vmatpush1.msra.mxu0 0.0
        %4333 = vmatprep.subr.mxu0 0.0
        %4334 = vmatpush1.msra.mxu0 0.0
        %4335 = vmatprep.mubr.f32.mxu0 0.0
        %4336 = vmatmul.mubr.f32.gmra.mrb[0].mxu0 %v3949
        %v4337 = vpop.f32.mrb[0].mxu0
        %v4338 = vadd.f32 0.0, %v4337
        %v4339 = vpop.f32.mrb[0].mxu0
        %4340 = vdwg.mxu0
        %v4341 = vmul.f32 %v4338, %v1040
        %4342 = vmatprep.subr.mxu0 0.0
        %4343 = vmatpush1.msra.mxu0 %v3505
        %4344 = vmatprep.subr.mxu0 0.0
        %4345 = vmatpush1.msra.mxu0 %v3506
        %4346 = vmatprep.subr.mxu0 0.0
        %4347 = vmatpush1.msra.mxu0 %v3507
        %4348 = vmatprep.subr.mxu0 0.0
        %4349 = vmatpush1.msra.mxu0 %v3508
        %4350 = vmatprep.subr.mxu0 0.0
        %4351 = vmatpush1.msra.mxu0 %v3509
        %4352 = vmatprep.subr.mxu0 0.0
        %4353 = vmatpush1.msra.mxu0 %v3510
        %4354 = vmatprep.subr.mxu0 0.0
        %4355 = vmatpush1.msra.mxu0 %v3511
        %4356 = vmatprep.subr.mxu0 0.0
        %4357 = vmatpush1.msra.mxu0 %v3512
        %4358 = vmatprep.subr.mxu0 0.0
        %4359 = vmatpush1.msra.mxu0 %v3513
        %4360 = vmatprep.subr.mxu0 0.0
        %4361 = vmatpush1.msra.mxu0 %v3514
        %4362 = vmatprep.subr.mxu0 0.0
        %4363 = vmatpush1.msra.mxu0 %v3515
        %4364 = vmatprep.subr.mxu0 0.0
        %4365 = vmatpush1.msra.mxu0 %v3516
        %4366 = vmatprep.subr.mxu0 0.0
        %4367 = vmatpush1.msra.mxu0 %v3517
        %4368 = vmatprep.subr.mxu0 0.0
        %4369 = vmatpush1.msra.mxu0 %v3518
        %4370 = vmatprep.subr.mxu0 0.0
        %4371 = vmatpush1.msra.mxu0 %v3519
        %4372 = vmatprep.subr.mxu0 0.0
        %4373 = vmatpush1.msra.mxu0 %v3520
        %4374 = vmatprep.subr.mxu0 0.0
        %4375 = vmatpush1.msra.mxu0 0.0
        %4376 = vmatprep.subr.mxu0 0.0
        %4377 = vmatpush1.msra.mxu0 0.0
        %4378 = vmatprep.subr.mxu0 0.0
        %4379 = vmatpush1.msra.mxu0 0.0
        %4380 = vmatprep.subr.mxu0 0.0
        %4381 = vmatpush1.msra.mxu0 0.0
        %4382 = vmatprep.subr.mxu0 0.0
        %4383 = vmatpush1.msra.mxu0 0.0
        %4384 = vmatprep.subr.mxu0 0.0
        %4385 = vmatpush1.msra.mxu0 0.0
        %4386 = vmatprep.subr.mxu0 0.0
        %4387 = vmatpush1.msra.mxu0 0.0
        %4388 = vmatprep.subr.mxu0 0.0
        %4389 = vmatpush1.msra.mxu0 0.0
        %4390 = vmatprep.subr.mxu0 0.0
        %4391 = vmatpush1.msra.mxu0 0.0
        %4392 = vmatprep.subr.mxu0 0.0
        %4393 = vmatpush1.msra.mxu0 0.0
        %4394 = vmatprep.subr.mxu0 0.0
        %4395 = vmatpush1.msra.mxu0 0.0
        %4396 = vmatprep.subr.mxu0 0.0
        %4397 = vmatpush1.msra.mxu0 0.0
        %4398 = vmatprep.subr.mxu0 0.0
        %4399 = vmatpush1.msra.mxu0 0.0
        %4400 = vmatprep.subr.mxu0 0.0
        %4401 = vmatpush1.msra.mxu0 0.0
        %4402 = vmatprep.subr.mxu0 0.0
        %4403 = vmatpush1.msra.mxu0 0.0
        %4404 = vmatprep.subr.mxu0 0.0
        %4405 = vmatpush1.msra.mxu0 0.0
        %4406 = vmatprep.mubr.f32.mxu0 0.0
        %4407 = vmatmul.mubr.f32.gmra.mrb[0].mxu0 %v4341
        %v4408 = vpop.f32.mrb[0].mxu0
        %v4409 = vadd.f32 0.0, %v4408
        %v4410 = vpop.f32.mrb[0].mxu0
        %4411 = vdwg.mxu0
        %4413 = vrot.lane.b32.xlu0 %v4247, 8
        %v4414 = vpop.permute.xlu0 %4413
        %4417 = vrot.lane.b32.xlu0 %v4252, 12
        %v4418 = vpop.permute.xlu0 %4417
        %4421 = vrot.lane.b32.xlu0 %v4257, 16
        %v4422 = vpop.permute.xlu0 %4421
        %4425 = vrot.lane.b32.xlu0 %v4270, 20
        %v4426 = vpop.permute.xlu0 %4425
        %4429 = vrot.lane.b32.xlu0 %v4409, 24
        %v4430 = vpop.permute.xlu0 %4429
        %v4432 = vsel %vm1161, %v4018, %v4414
        %v4433 = vsel %vm3612, %v4432, %v4418
        %v4434 = vsel %vm3614, %v4433, %v4422
        %v4435 = vsel %vm3616, %v4434, %v4426
        %v4436 = vsel %vm3618, %v4435, %v4430
        %v4437 = vld [vmem:[%s39 + $0x28] sm:$0xff]
        %v4438 = vld [vmem:[%s39 + $0x30] sm:$0xff]
        %v4439 = vld [vmem:[%s39 + $0x38] sm:$0xff]
        %v4440 = vld [vmem:[%s39 + $0x40] sm:$0xff]
        %v4441 = vld [vmem:[%s39 + $0x48] sm:$0xff]
        %vm4442 = vcmask 326656
        %v4444 = vsel %vm4442, %v4436, 0
        %4446 = vmatprep.subr.mxu0 0.0
        %4447 = vmatpush1.msra.mxu0 %v4437
        %4448 = vmatprep.subr.mxu0 0.0
        %4449 = vmatpush1.msra.mxu0 %v4438
        %4450 = vmatprep.subr.mxu0 0.0
        %4451 = vmatpush1.msra.mxu0 %v4439
        %4452 = vmatprep.subr.mxu0 0.0
        %4453 = vmatpush1.msra.mxu0 %v4440
        %4454 = vmatprep.subr.mxu0 0.0
        %4455 = vmatpush1.msra.mxu0 %v4441
        %4456 = vmatprep.subr.mxu0 0.0
        %4457 = vmatpush1.msra.mxu0 0.0
        %4458 = vmatprep.subr.mxu0 0.0
        %4459 = vmatpush1.msra.mxu0 0.0
        %4460 = vmatprep.subr.mxu0 0.0
        %4461 = vmatpush1.msra.mxu0 0.0
        %4462 = vmatprep.subr.mxu0 0.0
        %4463 = vmatpush1.msra.mxu0 0.0
        %4464 = vmatprep.subr.mxu0 0.0
        %4465 = vmatpush1.msra.mxu0 0.0
        %4466 = vmatprep.subr.mxu0 0.0
        %4467 = vmatpush1.msra.mxu0 0.0
        %4468 = vmatprep.subr.mxu0 0.0
        %4469 = vmatpush1.msra.mxu0 0.0
        %4470 = vmatprep.subr.mxu0 0.0
        %4471 = vmatpush1.msra.mxu0 0.0
        %4472 = vmatprep.subr.mxu0 0.0
        %4473 = vmatpush1.msra.mxu0 0.0
        %4474 = vmatprep.subr.mxu0 0.0
        %4475 = vmatpush1.msra.mxu0 0.0
        %4476 = vmatprep.subr.mxu0 0.0
        %4477 = vmatpush1.msra.mxu0 0.0
        %4478 = vmatprep.subr.mxu0 0.0
        %4479 = vmatpush1.msra.mxu0 0.0
        %4480 = vmatprep.subr.mxu0 0.0
        %4481 = vmatpush1.msra.mxu0 0.0
        %4482 = vmatprep.subr.mxu0 0.0
        %4483 = vmatpush1.msra.mxu0 0.0
        %4484 = vmatprep.subr.mxu0 0.0
        %4485 = vmatpush1.msra.mxu0 0.0
        %4486 = vmatprep.subr.mxu0 0.0
        %4487 = vmatpush1.msra.mxu0 0.0
        %4488 = vmatprep.subr.mxu0 0.0
        %4489 = vmatpush1.msra.mxu0 0.0
        %4490 = vmatprep.subr.mxu0 0.0
        %4491 = vmatpush1.msra.mxu0 0.0
        %4492 = vmatprep.subr.mxu0 0.0
        %4493 = vmatpush1.msra.mxu0 0.0
        %4494 = vmatprep.subr.mxu0 0.0
        %4495 = vmatpush1.msra.mxu0 0.0
        %4496 = vmatprep.subr.mxu0 0.0
        %4497 = vmatpush1.msra.mxu0 0.0
        %4498 = vmatprep.subr.mxu0 0.0
        %4499 = vmatpush1.msra.mxu0 0.0
        %4500 = vmatprep.subr.mxu0 0.0
        %4501 = vmatpush1.msra.mxu0 0.0
        %4502 = vmatprep.subr.mxu0 0.0
        %4503 = vmatpush1.msra.mxu0 0.0
        %4504 = vmatprep.subr.mxu0 0.0
        %4505 = vmatpush1.msra.mxu0 0.0
        %4506 = vmatprep.subr.mxu0 0.0
        %4507 = vmatpush1.msra.mxu0 0.0
        %4508 = vmatprep.subr.mxu0 0.0
        %4509 = vmatpush1.msra.mxu0 0.0
        %4510 = vmatprep.mubr.f32.mxu0 0.0
        %4511 = vmatmul.mubr.f32.gmra.mrb[0].mxu0 %v4444
        %v4512 = vpop.f32.mrb[0].mxu0
        %v4513 = vadd.f32 0.0, %v4512
        %v4514 = vpop.f32.mrb[0].mxu0
        %4515 = vdwg.mxu0
        %v4517 = vsel %vm4442, %v3619, 0
        %4519 = vmatprep.subr.mxu0 0.0
        %4520 = vmatpush1.msra.mxu0 %v3620
        %4521 = vmatprep.subr.mxu0 0.0
        %4522 = vmatpush1.msra.mxu0 %v3621
        %4523 = vmatprep.subr.mxu0 0.0
        %4524 = vmatpush1.msra.mxu0 %v3622
        %4525 = vmatprep.subr.mxu0 0.0
        %4526 = vmatpush1.msra.mxu0 %v3623
        %4527 = vmatprep.subr.mxu0 0.0
        %4528 = vmatpush1.msra.mxu0 %v3624
        %4529 = vmatprep.subr.mxu0 0.0
        %4530 = vmatpush1.msra.mxu0 0.0
        %4531 = vmatprep.subr.mxu0 0.0
        %4532 = vmatpush1.msra.mxu0 0.0
        %4533 = vmatprep.subr.mxu0 0.0
        %4534 = vmatpush1.msra.mxu0 0.0
        %4535 = vmatprep.subr.mxu0 0.0
        %4536 = vmatpush1.msra.mxu0 0.0
        %4537 = vmatprep.subr.mxu0 0.0
        %4538 = vmatpush1.msra.mxu0 0.0
        %4539 = vmatprep.subr.mxu0 0.0
        %4540 = vmatpush1.msra.mxu0 0.0
        %4541 = vmatprep.subr.mxu0 0.0
        %4542 = vmatpush1.msra.mxu0 0.0
        %4543 = vmatprep.subr.mxu0 0.0
        %4544 = vmatpush1.msra.mxu0 0.0
        %4545 = vmatprep.subr.mxu0 0.0
        %4546 = vmatpush1.msra.mxu0 0.0
        %4547 = vmatprep.subr.mxu0 0.0
        %4548 = vmatpush1.msra.mxu0 0.0
        %4549 = vmatprep.subr.mxu0 0.0
        %4550 = vmatpush1.msra.mxu0 0.0
        %4551 = vmatprep.subr.mxu0 0.0
        %4552 = vmatpush1.msra.mxu0 0.0
        %4553 = vmatprep.subr.mxu0 0.0
        %4554 = vmatpush1.msra.mxu0 0.0
        %4555 = vmatprep.subr.mxu0 0.0
        %4556 = vmatpush1.msra.mxu0 0.0
        %4557 = vmatprep.subr.mxu0 0.0
        %4558 = vmatpush1.msra.mxu0 0.0
        %4559 = vmatprep.subr.mxu0 0.0
        %4560 = vmatpush1.msra.mxu0 0.0
        %4561 = vmatprep.subr.mxu0 0.0
        %4562 = vmatpush1.msra.mxu0 0.0
        %4563 = vmatprep.subr.mxu0 0.0
        %4564 = vmatpush1.msra.mxu0 0.0
        %4565 = vmatprep.subr.mxu0 0.0
        %4566 = vmatpush1.msra.mxu0 0.0
        %4567 = vmatprep.subr.mxu0 0.0
        %4568 = vmatpush1.msra.mxu0 0.0
        %4569 = vmatprep.subr.mxu0 0.0
        %4570 = vmatpush1.msra.mxu0 0.0
        %4571 = vmatprep.subr.mxu0 0.0
        %4572 = vmatpush1.msra.mxu0 0.0
        %4573 = vmatprep.subr.mxu0 0.0
        %4574 = vmatpush1.msra.mxu0 0.0
        %4575 = vmatprep.subr.mxu0 0.0
        %4576 = vmatpush1.msra.mxu0 0.0
        %4577 = vmatprep.subr.mxu0 0.0
        %4578 = vmatpush1.msra.mxu0 0.0
        %4579 = vmatprep.subr.mxu0 0.0
        %4580 = vmatpush1.msra.mxu0 0.0
        %4581 = vmatprep.subr.mxu0 0.0
        %4582 = vmatpush1.msra.mxu0 0.0
        %4583 = vmatprep.mubr.f32.mxu0 0.0
        %4584 = vmatmul.mubr.f32.gmra.mrb[0].mxu0 %v4517
        %v4585 = vpop.f32.mrb[0].mxu0
        %v4586 = vadd.f32 %v4513, %v4585
        %v4587 = vpop.f32.mrb[0].mxu0
        %4588 = vdwg.mxu0
        %4589 = vrot.lane.b32.xlu0 %v2520, 24
        %v4590 = vpop.permute.xlu0 %4589
        %4591 = vrot.lane.b32.xlu0 %v2521, 24
        %v4592 = vpop.permute.xlu0 %4591
        %4593 = vrot.lane.b32.xlu0 %v2522, 24
        %v4594 = vpop.permute.xlu0 %4593
        %4595 = vrot.lane.b32.xlu0 %v2523, 24
        %v4596 = vpop.permute.xlu0 %4595
        %4597 = vrot.lane.b32.xlu0 %v2524, 24
        %v4598 = vpop.permute.xlu0 %4597
        %4599 = vrot.lane.b32.xlu0 %v2525, 24
        %v4600 = vpop.permute.xlu0 %4599
        %4601 = vrot.lane.b32.xlu0 %v2526, 24
        %v4602 = vpop.permute.xlu0 %4601
        %4603 = vrot.lane.b32.xlu0 %v2527, 24
        %v4604 = vpop.permute.xlu0 %4603
        %v4613 = vsel %vm2560, %v4590, 0.0
        %4614 = vadd.xlane.f32.xlu0 %v4613
        %v4615 = vpop.xlane.xlu0 %4614
        %v4616 = vsel %vm2560, %v4592, 0.0
        %4617 = vadd.xlane.f32.xlu0 %v4616
        %v4618 = vpop.xlane.xlu0 %4617
        %v4619 = vsel %vm2560, %v4594, 0.0
        %4620 = vadd.xlane.f32.xlu0 %v4619
        %v4621 = vpop.xlane.xlu0 %4620
        %v4622 = vsel %vm2560, %v4596, 0.0
        %4623 = vadd.xlane.f32.xlu0 %v4622
        %v4624 = vpop.xlane.xlu0 %4623
        %v4625 = vsel %vm2560, %v4598, 0.0
        %4626 = vadd.xlane.f32.xlu0 %v4625
        %v4627 = vpop.xlane.xlu0 %4626
        %v4628 = vsel %vm2560, %v4600, 0.0
        %4629 = vadd.xlane.f32.xlu0 %v4628
        %v4630 = vpop.xlane.xlu0 %4629
        %v4631 = vsel %vm2560, %v4602, 0.0
        %4632 = vadd.xlane.f32.xlu0 %v4631
        %v4633 = vpop.xlane.xlu0 %4632
        %v4634 = vsel %vm2560, %v4604, 0.0
        %4635 = vadd.xlane.f32.xlu0 %v4634
        %v4636 = vpop.xlane.xlu0 %4635
        %4637 = vrot.lane.b32.xlu0 %v2687, 24
        %v4638 = vpop.permute.xlu0 %4637
        %4639 = vrot.lane.b32.xlu0 %v2688, 24
        %v4640 = vpop.permute.xlu0 %4639
        %4641 = vrot.lane.b32.xlu0 %v2689, 24
        %v4642 = vpop.permute.xlu0 %4641
        %4643 = vrot.lane.b32.xlu0 %v2690, 24
        %v4644 = vpop.permute.xlu0 %4643
        %4645 = vrot.lane.b32.xlu0 %v2691, 24
        %v4646 = vpop.permute.xlu0 %4645
        %4647 = vrot.lane.b32.xlu0 %v2692, 24
        %v4648 = vpop.permute.xlu0 %4647
        %4649 = vrot.lane.b32.xlu0 %v2693, 24
        %v4650 = vpop.permute.xlu0 %4649
        %4651 = vrot.lane.b32.xlu0 %v2694, 24
        %v4652 = vpop.permute.xlu0 %4651
        %v4661 = vsel %vm2560, %v4638, 0.0
        %4662 = vadd.xlane.f32.xlu0 %v4661
        %v4663 = vpop.xlane.xlu0 %4662
        %v4664 = vsel %vm2560, %v4640, 0.0
        %4665 = vadd.xlane.f32.xlu0 %v4664
        %v4666 = vpop.xlane.xlu0 %4665
        %v4667 = vsel %vm2560, %v4642, 0.0
        %4668 = vadd.xlane.f32.xlu0 %v4667
        %v4669 = vpop.xlane.xlu0 %4668
        %v4670 = vsel %vm2560, %v4644, 0.0
        %4671 = vadd.xlane.f32.xlu0 %v4670
        %v4672 = vpop.xlane.xlu0 %4671
        %v4673 = vsel %vm2560, %v4646, 0.0
        %4674 = vadd.xlane.f32.xlu0 %v4673
        %v4675 = vpop.xlane.xlu0 %4674
        %v4676 = vsel %vm2560, %v4648, 0.0
        %4677 = vadd.xlane.f32.xlu0 %v4676
        %v4678 = vpop.xlane.xlu0 %4677
        %v4679 = vsel %vm2560, %v4650, 0.0
        %4680 = vadd.xlane.f32.xlu0 %v4679
        %v4681 = vpop.xlane.xlu0 %4680
        %v4682 = vsel %vm2560, %v4652, 0.0
        %4683 = vadd.xlane.f32.xlu0 %v4682
        %v4684 = vpop.xlane.xlu0 %4683
        %v4685 = vadd.f32 %v4615, %v4663
        %v4686 = vadd.f32 %v4618, %v4666
        %v4687 = vadd.f32 %v4621, %v4669
        %v4688 = vadd.f32 %v4624, %v4672
        %v4689 = vadd.f32 %v4627, %v4675
        %v4690 = vadd.f32 %v4630, %v4678
        %v4691 = vadd.f32 %v4633, %v4681
        %v4692 = vadd.f32 %v4636, %v4684
        %4693 = vrot.lane.b32.xlu0 %v2861, 24
        %v4694 = vpop.permute.xlu0 %4693
        %4695 = vrot.lane.b32.xlu0 %v2862, 24
        %v4696 = vpop.permute.xlu0 %4695
        %4697 = vrot.lane.b32.xlu0 %v2863, 24
        %v4698 = vpop.permute.xlu0 %4697
        %4699 = vrot.lane.b32.xlu0 %v2864, 24
        %v4700 = vpop.permute.xlu0 %4699
        %4701 = vrot.lane.b32.xlu0 %v2865, 24
        %v4702 = vpop.permute.xlu0 %4701
        %4703 = vrot.lane.b32.xlu0 %v2866, 24
        %v4704 = vpop.permute.xlu0 %4703
        %4705 = vrot.lane.b32.xlu0 %v2867, 24
        %v4706 = vpop.permute.xlu0 %4705
        %4707 = vrot.lane.b32.xlu0 %v2868, 24
        %v4708 = vpop.permute.xlu0 %4707
        %v4717 = vsel %vm2560, %v4694, 0.0
        %4718 = vadd.xlane.f32.xlu0 %v4717
        %v4719 = vpop.xlane.xlu0 %4718
        %v4720 = vsel %vm2560, %v4696, 0.0
        %4721 = vadd.xlane.f32.xlu0 %v4720
        %v4722 = vpop.xlane.xlu0 %4721
        %v4723 = vsel %vm2560, %v4698, 0.0
        %4724 = vadd.xlane.f32.xlu0 %v4723
        %v4725 = vpop.xlane.xlu0 %4724
        %v4726 = vsel %vm2560, %v4700, 0.0
        %4727 = vadd.xlane.f32.xlu0 %v4726
        %v4728 = vpop.xlane.xlu0 %4727
        %v4729 = vsel %vm2560, %v4702, 0.0
        %4730 = vadd.xlane.f32.xlu0 %v4729
        %v4731 = vpop.xlane.xlu0 %4730
        %v4732 = vsel %vm2560, %v4704, 0.0
        %4733 = vadd.xlane.f32.xlu0 %v4732
        %v4734 = vpop.xlane.xlu0 %4733
        %v4735 = vsel %vm2560, %v4706, 0.0
        %4736 = vadd.xlane.f32.xlu0 %v4735
        %v4737 = vpop.xlane.xlu0 %4736
        %v4738 = vsel %vm2560, %v4708, 0.0
        %4739 = vadd.xlane.f32.xlu0 %v4738
        %v4740 = vpop.xlane.xlu0 %4739
        %v4741 = vadd.f32 %v4685, %v4719
        %v4742 = vadd.f32 %v4686, %v4722
        %v4743 = vadd.f32 %v4687, %v4725
        %v4744 = vadd.f32 %v4688, %v4728
        %v4745 = vadd.f32 %v4689, %v4731
        %v4746 = vadd.f32 %v4690, %v4734
        %v4747 = vadd.f32 %v4691, %v4737
        %v4748 = vadd.f32 %v4692, %v4740
        %4749 = vset.pattern.permute.xlu0 2
        %4750 = vperm.xlu0 %4749, %v2937
        %v4751 = vpop.permute.xlu0 %4750
        %v4753 = vmul.f32 %v4751, %v4741
        %v4754 = vmul.f32 %v4751, %v4742
        %v4755 = vmul.f32 %v4751, %v4743
        %v4756 = vmul.f32 %v4751, %v4744
        %v4757 = vmul.f32 %v4751, %v4745
        %v4758 = vmul.f32 %v4751, %v4746
        %v4759 = vmul.f32 %v4751, %v4747
        %v4760 = vmul.f32 %v4751, %v4748
        %4761 = vrot.lane.b32.xlu0 %v2205, 112
        %v4762 = vpop.permute.xlu0 %4761
        %4763 = vrot.lane.b32.xlu0 %v2205, 80
        %v4764 = vpop.permute.xlu0 %4763
        %v4773 = vlaneseq
        %v4774 = vshrl.u32 %v4773, 7
        %v4775 = vsub.s32 %v2962, %v4774
        %v4776 = vrot.slane %v4753, %v4775
        %v4777 = vlaneseq
        %v4778 = vshrl.u32 %v4777, 7
        %v4779 = vsub.s32 %v2962, %v4778
        %v4780 = vrot.slane %v4754, %v4779
        %v4781 = vlaneseq
        %v4782 = vshrl.u32 %v4781, 7
        %v4783 = vsub.s32 %v2962, %v4782
        %v4784 = vrot.slane %v4755, %v4783
        %v4785 = vlaneseq
        %v4786 = vshrl.u32 %v4785, 7
        %v4787 = vsub.s32 %v2962, %v4786
        %v4788 = vrot.slane %v4756, %v4787
        %v4789 = vlaneseq
        %v4790 = vshrl.u32 %v4789, 7
        %v4791 = vsub.s32 %v2962, %v4790
        %v4792 = vrot.slane %v4757, %v4791
        %v4793 = vlaneseq
        %v4794 = vshrl.u32 %v4793, 7
        %v4795 = vsub.s32 %v2962, %v4794
        %v4796 = vrot.slane %v4758, %v4795
        %v4797 = vlaneseq
        %v4798 = vshrl.u32 %v4797, 7
        %v4799 = vsub.s32 %v2962, %v4798
        %v4800 = vrot.slane %v4759, %v4799
        %v4801 = vlaneseq
        %v4802 = vshrl.u32 %v4801, 7
        %v4803 = vsub.s32 %v2962, %v4802
        %v4804 = vrot.slane %v4760, %v4803
        %v4805 = vsel %vm2995, %v4780, %v4776
        %v4806 = vsel %vm2997, %v4784, %v4805
        %v4807 = vsel %vm2999, %v4788, %v4806
        %v4808 = vsel %vm3001, %v4792, %v4807
        %v4809 = vsel %vm3003, %v4796, %v4808
        %v4810 = vsel %vm3005, %v4800, %v4809
        %v4811 = vsel %vm3007, %v4804, %v4810
        %v4813 = vsel %vm1161, %v4762, 0
        %v4815 = vsel %vm1161, %v4764, 0
        %4817 = vmatprep.subr.mxu0 0.0
        %4818 = vmatpush1.xpose.msra.mxu0 %v4815
        %4819 = vmatprep.subr.mxu0 0.0
        %4820 = vmatpush1.xpose.msra.mxu0 0.0
        %4821 = vmatprep.subr.mxu0 0.0
        %4822 = vmatpush1.xpose.msra.mxu0 0.0
        %4823 = vmatprep.subr.mxu0 0.0
        %4824 = vmatpush1.xpose.msra.mxu0 0.0
        %4825 = vmatprep.subr.mxu0 0.0
        %4826 = vmatpush1.xpose.msra.mxu0 0.0
        %4827 = vmatprep.subr.mxu0 0.0
        %4828 = vmatpush1.xpose.msra.mxu0 0.0
        %4829 = vmatprep.subr.mxu0 0.0
        %4830 = vmatpush1.xpose.msra.mxu0 0.0
        %4831 = vmatprep.subr.mxu0 0.0
        %4832 = vmatpush1.xpose.msra.mxu0 0.0
        %4833 = vmatprep.subr.mxu0 0.0
        %4834 = vmatpush1.xpose.msra.mxu0 0.0
        %4835 = vmatprep.subr.mxu0 0.0
        %4836 = vmatpush1.xpose.msra.mxu0 0.0
        %4837 = vmatprep.subr.mxu0 0.0
        %4838 = vmatpush1.xpose.msra.mxu0 0.0
        %4839 = vmatprep.subr.mxu0 0.0
        %4840 = vmatpush1.xpose.msra.mxu0 0.0
        %4841 = vmatprep.subr.mxu0 0.0
        %4842 = vmatpush1.xpose.msra.mxu0 0.0
        %4843 = vmatprep.subr.mxu0 0.0
        %4844 = vmatpush1.xpose.msra.mxu0 0.0
        %4845 = vmatprep.subr.mxu0 0.0
        %4846 = vmatpush1.xpose.msra.mxu0 0.0
        %4847 = vmatprep.subr.mxu0 0.0
        %4848 = vmatpush1.xpose.msra.mxu0 0.0
        %4849 = vmatprep.subr.mxu0 0.0
        %4850 = vmatpush1.xpose.msra.mxu0 0.0
        %4851 = vmatprep.subr.mxu0 0.0
        %4852 = vmatpush1.xpose.msra.mxu0 0.0
        %4853 = vmatprep.subr.mxu0 0.0
        %4854 = vmatpush1.xpose.msra.mxu0 0.0
        %4855 = vmatprep.subr.mxu0 0.0
        %4856 = vmatpush1.xpose.msra.mxu0 0.0
        %4857 = vmatprep.subr.mxu0 0.0
        %4858 = vmatpush1.xpose.msra.mxu0 0.0
        %4859 = vmatprep.subr.mxu0 0.0
        %4860 = vmatpush1.xpose.msra.mxu0 0.0
        %4861 = vmatprep.subr.mxu0 0.0
        %4862 = vmatpush1.xpose.msra.mxu0 0.0
        %4863 = vmatprep.subr.mxu0 0.0
        %4864 = vmatpush1.xpose.msra.mxu0 0.0
        %4865 = vmatprep.subr.mxu0 0.0
        %4866 = vmatpush1.xpose.msra.mxu0 0.0
        %4867 = vmatprep.subr.mxu0 0.0
        %4868 = vmatpush1.xpose.msra.mxu0 0.0
        %4869 = vmatprep.subr.mxu0 0.0
        %4870 = vmatpush1.xpose.msra.mxu0 0.0
        %4871 = vmatprep.subr.mxu0 0.0
        %4872 = vmatpush1.xpose.msra.mxu0 0.0
        %4873 = vmatprep.subr.mxu0 0.0
        %4874 = vmatpush1.xpose.msra.mxu0 0.0
        %4875 = vmatprep.subr.mxu0 0.0
        %4876 = vmatpush1.xpose.msra.mxu0 0.0
        %4877 = vmatprep.subr.mxu0 0.0
        %4878 = vmatpush1.xpose.msra.mxu0 0.0
        %4879 = vmatprep.subr.mxu0 0.0
        %4880 = vmatpush1.xpose.msra.mxu0 0.0
        %4881 = vmatprep.mubr.f32.mxu0 0.0
        %4882 = vmatmul.mubr.f32.gmra.mrb[0].mxu0 %v4813
        %v4883 = vpop.f32.mrb[0].mxu0
        %v4884 = vadd.f32 %v4811, %v4883
        %v4885 = vpop.f32.mrb[0].mxu0
        %4886 = vdwg.mxu0
        %4887 = vrot.lane.b32.xlu0 %v2411, 112
        %v4888 = vpop.permute.xlu0 %4887
        %v4890 = vadd.f32 %v4884, %v4888
        %4891 = vset.pattern.permute.xlu0 2
        %4892 = vperm.xlu0 %4891, %v3089
        %v4893 = vpop.permute.xlu0 %4892
        %v4895 = vadd.f32 %v4890, %v4893
        %v4896 = vsel %vm2417, %v4895, -3.4028235e+38
        %v4897 = vsel %vm1161, %v4896, -inf
        %4898 = vmax.xlane.f32.xlu0 %v4897
        %v4899 = vpop.xlane.xlu0 %4898
        %v4900 = vsub.f32 %v4896, %v4899
        %v4901 = vmul.f32 %v4900, 1.442695
        %v4902 = vpow.pop %v4901
        %v4903 = vsel %vm1161, %v4902, 0.0
        %4904 = vadd.xlane.f32.xlu0 %v4903
        %v4905 = vpop.xlane.xlu0 %4904
        %v4906 = vrcp.pop %v4905
        %v4907 = vmul.f32 %v4902, %v4906
        %4908 = vrot.lane.b32.xlu0 %v2205, 48
        %v4909 = vpop.permute.xlu0 %4908
        %v4912 = vsel %vm1161, %v4907, 0
        %4914 = vmatprep.subr.mxu0 0.0
        %4915 = vmatpush1.msra.mxu0 %v4909
        %4916 = vmatprep.subr.mxu0 0.0
        %4917 = vmatpush1.msra.mxu0 0.0
        %4918 = vmatprep.subr.mxu0 0.0
        %4919 = vmatpush1.msra.mxu0 0.0
        %4920 = vmatprep.subr.mxu0 0.0
        %4921 = vmatpush1.msra.mxu0 0.0
        %4922 = vmatprep.subr.mxu0 0.0
        %4923 = vmatpush1.msra.mxu0 0.0
        %4924 = vmatprep.subr.mxu0 0.0
        %4925 = vmatpush1.msra.mxu0 0.0
        %4926 = vmatprep.subr.mxu0 0.0
        %4927 = vmatpush1.msra.mxu0 0.0
        %4928 = vmatprep.subr.mxu0 0.0
        %4929 = vmatpush1.msra.mxu0 0.0
        %4930 = vmatprep.subr.mxu0 0.0
        %4931 = vmatpush1.msra.mxu0 0.0
        %4932 = vmatprep.subr.mxu0 0.0
        %4933 = vmatpush1.msra.mxu0 0.0
        %4934 = vmatprep.subr.mxu0 0.0
        %4935 = vmatpush1.msra.mxu0 0.0
        %4936 = vmatprep.subr.mxu0 0.0
        %4937 = vmatpush1.msra.mxu0 0.0
        %4938 = vmatprep.subr.mxu0 0.0
        %4939 = vmatpush1.msra.mxu0 0.0
        %4940 = vmatprep.subr.mxu0 0.0
        %4941 = vmatpush1.msra.mxu0 0.0
        %4942 = vmatprep.subr.mxu0 0.0
        %4943 = vmatpush1.msra.mxu0 0.0
        %4944 = vmatprep.subr.mxu0 0.0
        %4945 = vmatpush1.msra.mxu0 0.0
        %4946 = vmatprep.subr.mxu0 0.0
        %4947 = vmatpush1.msra.mxu0 0.0
        %4948 = vmatprep.subr.mxu0 0.0
        %4949 = vmatpush1.msra.mxu0 0.0
        %4950 = vmatprep.subr.mxu0 0.0
        %4951 = vmatpush1.msra.mxu0 0.0
        %4952 = vmatprep.subr.mxu0 0.0
        %4953 = vmatpush1.msra.mxu0 0.0
        %4954 = vmatprep.subr.mxu0 0.0
        %4955 = vmatpush1.msra.mxu0 0.0
        %4956 = vmatprep.subr.mxu0 0.0
        %4957 = vmatpush1.msra.mxu0 0.0
        %4958 = vmatprep.subr.mxu0 0.0
        %4959 = vmatpush1.msra.mxu0 0.0
        %4960 = vmatprep.subr.mxu0 0.0
        %4961 = vmatpush1.msra.mxu0 0.0
        %4962 = vmatprep.subr.mxu0 0.0
        %4963 = vmatpush1.msra.mxu0 0.0
        %4964 = vmatprep.subr.mxu0 0.0
        %4965 = vmatpush1.msra.mxu0 0.0
        %4966 = vmatprep.subr.mxu0 0.0
        %4967 = vmatpush1.msra.mxu0 0.0
        %4968 = vmatprep.subr.mxu0 0.0
        %4969 = vmatpush1.msra.mxu0 0.0
        %4970 = vmatprep.subr.mxu0 0.0
        %4971 = vmatpush1.msra.mxu0 0.0
        %4972 = vmatprep.subr.mxu0 0.0
        %4973 = vmatpush1.msra.mxu0 0.0
        %4974 = vmatprep.subr.mxu0 0.0
        %4975 = vmatpush1.msra.mxu0 0.0
        %4976 = vmatprep.subr.mxu0 0.0
        %4977 = vmatpush1.msra.mxu0 0.0
        %4978 = vmatprep.mubr.f32.mxu0 0.0
        %4979 = vmatmul.mubr.f32.gmra.mrb[0].mxu0 %v4912
        %v4980 = vpop.f32.mrb[0].mxu0
        %v4981 = vadd.f32 0.0, %v4980
        %v4982 = vpop.f32.mrb[0].mxu0
        %4983 = vdwg.mxu0
        %4984 = vrot.lane.b32.xlu0 %v2309, 56
        %v4985 = vpop.permute.xlu0 %4984
        %4987 = vmatprep.subr.mxu0 0.0
        %4988 = vmatpush1.msra.mxu0 %v4985
        %4989 = vmatprep.subr.mxu0 0.0
        %4990 = vmatpush1.msra.mxu0 0.0
        %4991 = vmatprep.subr.mxu0 0.0
        %4992 = vmatpush1.msra.mxu0 0.0
        %4993 = vmatprep.subr.mxu0 0.0
        %4994 = vmatpush1.msra.mxu0 0.0
        %4995 = vmatprep.subr.mxu0 0.0
        %4996 = vmatpush1.msra.mxu0 0.0
        %4997 = vmatprep.subr.mxu0 0.0
        %4998 = vmatpush1.msra.mxu0 0.0
        %4999 = vmatprep.subr.mxu0 0.0
        %5000 = vmatpush1.msra.mxu0 0.0
        %5001 = vmatprep.subr.mxu0 0.0
        %5002 = vmatpush1.msra.mxu0 0.0
        %5003 = vmatprep.subr.mxu0 0.0
        %5004 = vmatpush1.msra.mxu0 0.0
        %5005 = vmatprep.subr.mxu0 0.0
        %5006 = vmatpush1.msra.mxu0 0.0
        %5007 = vmatprep.subr.mxu0 0.0
        %5008 = vmatpush1.msra.mxu0 0.0
        %5009 = vmatprep.subr.mxu0 0.0
        %5010 = vmatpush1.msra.mxu0 0.0
        %5011 = vmatprep.subr.mxu0 0.0
        %5012 = vmatpush1.msra.mxu0 0.0
        %5013 = vmatprep.subr.mxu0 0.0
        %5014 = vmatpush1.msra.mxu0 0.0
        %5015 = vmatprep.subr.mxu0 0.0
        %5016 = vmatpush1.msra.mxu0 0.0
        %5017 = vmatprep.subr.mxu0 0.0
        %5018 = vmatpush1.msra.mxu0 0.0
        %5019 = vmatprep.subr.mxu0 0.0
        %5020 = vmatpush1.msra.mxu0 0.0
        %5021 = vmatprep.subr.mxu0 0.0
        %5022 = vmatpush1.msra.mxu0 0.0
        %5023 = vmatprep.subr.mxu0 0.0
        %5024 = vmatpush1.msra.mxu0 0.0
        %5025 = vmatprep.subr.mxu0 0.0
        %5026 = vmatpush1.msra.mxu0 0.0
        %5027 = vmatprep.subr.mxu0 0.0
        %5028 = vmatpush1.msra.mxu0 0.0
        %5029 = vmatprep.subr.mxu0 0.0
        %5030 = vmatpush1.msra.mxu0 0.0
        %5031 = vmatprep.subr.mxu0 0.0
        %5032 = vmatpush1.msra.mxu0 0.0
        %5033 = vmatprep.subr.mxu0 0.0
        %5034 = vmatpush1.msra.mxu0 0.0
        %5035 = vmatprep.subr.mxu0 0.0
        %5036 = vmatpush1.msra.mxu0 0.0
        %5037 = vmatprep.subr.mxu0 0.0
        %5038 = vmatpush1.msra.mxu0 0.0
        %5039 = vmatprep.subr.mxu0 0.0
        %5040 = vmatpush1.msra.mxu0 0.0
        %5041 = vmatprep.subr.mxu0 0.0
        %5042 = vmatpush1.msra.mxu0 0.0
        %5043 = vmatprep.subr.mxu0 0.0
        %5044 = vmatpush1.msra.mxu0 0.0
        %5045 = vmatprep.subr.mxu0 0.0
        %5046 = vmatpush1.msra.mxu0 0.0
        %5047 = vmatprep.subr.mxu0 0.0
        %5048 = vmatpush1.msra.mxu0 0.0
        %5049 = vmatprep.subr.mxu0 0.0
        %5050 = vmatpush1.msra.mxu0 0.0
        %5051 = vmatprep.mubr.f32.mxu0 0.0
        %5052 = vmatmul.mubr.f32.gmra.mrb[0].mxu0 %v4912
        %v5053 = vpop.f32.mrb[0].mxu0
        %v5054 = vadd.f32 0.0, %v5053
        %v5055 = vpop.f32.mrb[0].mxu0
        %5056 = vdwg.mxu0
        %v5057 = vsub.f32 %v5054, %v2238
        %5058 = vrot.lane.b32.xlu0 %v2318, 56
        %v5059 = vpop.permute.xlu0 %5058
        %5061 = vmatprep.subr.mxu0 0.0
        %5062 = vmatpush1.msra.mxu0 %v5059
        %5063 = vmatprep.subr.mxu0 0.0
        %5064 = vmatpush1.msra.mxu0 0.0
        %5065 = vmatprep.subr.mxu0 0.0
        %5066 = vmatpush1.msra.mxu0 0.0
        %5067 = vmatprep.subr.mxu0 0.0
        %5068 = vmatpush1.msra.mxu0 0.0
        %5069 = vmatprep.subr.mxu0 0.0
        %5070 = vmatpush1.msra.mxu0 0.0
        %5071 = vmatprep.subr.mxu0 0.0
        %5072 = vmatpush1.msra.mxu0 0.0
        %5073 = vmatprep.subr.mxu0 0.0
        %5074 = vmatpush1.msra.mxu0 0.0
        %5075 = vmatprep.subr.mxu0 0.0
        %5076 = vmatpush1.msra.mxu0 0.0
        %5077 = vmatprep.subr.mxu0 0.0
        %5078 = vmatpush1.msra.mxu0 0.0
        %5079 = vmatprep.subr.mxu0 0.0
        %5080 = vmatpush1.msra.mxu0 0.0
        %5081 = vmatprep.subr.mxu0 0.0
        %5082 = vmatpush1.msra.mxu0 0.0
        %5083 = vmatprep.subr.mxu0 0.0
        %5084 = vmatpush1.msra.mxu0 0.0
        %5085 = vmatprep.subr.mxu0 0.0
        %5086 = vmatpush1.msra.mxu0 0.0
        %5087 = vmatprep.subr.mxu0 0.0
        %5088 = vmatpush1.msra.mxu0 0.0
        %5089 = vmatprep.subr.mxu0 0.0
        %5090 = vmatpush1.msra.mxu0 0.0
        %5091 = vmatprep.subr.mxu0 0.0
        %5092 = vmatpush1.msra.mxu0 0.0
        %5093 = vmatprep.subr.mxu0 0.0
        %5094 = vmatpush1.msra.mxu0 0.0
        %5095 = vmatprep.subr.mxu0 0.0
        %5096 = vmatpush1.msra.mxu0 0.0
        %5097 = vmatprep.subr.mxu0 0.0
        %5098 = vmatpush1.msra.mxu0 0.0
        %5099 = vmatprep.subr.mxu0 0.0
        %5100 = vmatpush1.msra.mxu0 0.0
        %5101 = vmatprep.subr.mxu0 0.0
        %5102 = vmatpush1.msra.mxu0 0.0
        %5103 = vmatprep.subr.mxu0 0.0
        %5104 = vmatpush1.msra.mxu0 0.0
        %5105 = vmatprep.subr.mxu0 0.0
        %5106 = vmatpush1.msra.mxu0 0.0
        %5107 = vmatprep.subr.mxu0 0.0
        %5108 = vmatpush1.msra.mxu0 0.0
        %5109 = vmatprep.subr.mxu0 0.0
        %5110 = vmatpush1.msra.mxu0 0.0
        %5111 = vmatprep.subr.mxu0 0.0
        %5112 = vmatpush1.msra.mxu0 0.0
        %5113 = vmatprep.subr.mxu0 0.0
        %5114 = vmatpush1.msra.mxu0 0.0
        %5115 = vmatprep.subr.mxu0 0.0
        %5116 = vmatpush1.msra.mxu0 0.0
        %5117 = vmatprep.subr.mxu0 0.0
        %5118 = vmatpush1.msra.mxu0 0.0
        %5119 = vmatprep.subr.mxu0 0.0
        %5120 = vmatpush1.msra.mxu0 0.0
        %5121 = vmatprep.subr.mxu0 0.0
        %5122 = vmatpush1.msra.mxu0 0.0
        %5123 = vmatprep.subr.mxu0 0.0
        %5124 = vmatpush1.msra.mxu0 0.0
        %5125 = vmatprep.mubr.f32.mxu0 0.0
        %5126 = vmatmul.mubr.f32.gmra.mrb[0].mxu0 %v4912
        %v5127 = vpop.f32.mrb[0].mxu0
        %v5128 = vadd.f32 0.0, %v5127
        %v5129 = vpop.f32.mrb[0].mxu0
        %5130 = vdwg.mxu0
        %v5131 = vsub.f32 %v5128, %v2268
        %5132 = vrot.lane.b32.xlu0 %v2327, 56
        %v5133 = vpop.permute.xlu0 %5132
        %5135 = vmatprep.subr.mxu0 0.0
        %5136 = vmatpush1.msra.mxu0 %v5133
        %5137 = vmatprep.subr.mxu0 0.0
        %5138 = vmatpush1.msra.mxu0 0.0
        %5139 = vmatprep.subr.mxu0 0.0
        %5140 = vmatpush1.msra.mxu0 0.0
        %5141 = vmatprep.subr.mxu0 0.0
        %5142 = vmatpush1.msra.mxu0 0.0
        %5143 = vmatprep.subr.mxu0 0.0
        %5144 = vmatpush1.msra.mxu0 0.0
        %5145 = vmatprep.subr.mxu0 0.0
        %5146 = vmatpush1.msra.mxu0 0.0
        %5147 = vmatprep.subr.mxu0 0.0
        %5148 = vmatpush1.msra.mxu0 0.0
        %5149 = vmatprep.subr.mxu0 0.0
        %5150 = vmatpush1.msra.mxu0 0.0
        %5151 = vmatprep.subr.mxu0 0.0
        %5152 = vmatpush1.msra.mxu0 0.0
        %5153 = vmatprep.subr.mxu0 0.0
        %5154 = vmatpush1.msra.mxu0 0.0
        %5155 = vmatprep.subr.mxu0 0.0
        %5156 = vmatpush1.msra.mxu0 0.0
        %5157 = vmatprep.subr.mxu0 0.0
        %5158 = vmatpush1.msra.mxu0 0.0
        %5159 = vmatprep.subr.mxu0 0.0
        %5160 = vmatpush1.msra.mxu0 0.0
        %5161 = vmatprep.subr.mxu0 0.0
        %5162 = vmatpush1.msra.mxu0 0.0
        %5163 = vmatprep.subr.mxu0 0.0
        %5164 = vmatpush1.msra.mxu0 0.0
        %5165 = vmatprep.subr.mxu0 0.0
        %5166 = vmatpush1.msra.mxu0 0.0
        %5167 = vmatprep.subr.mxu0 0.0
        %5168 = vmatpush1.msra.mxu0 0.0
        %5169 = vmatprep.subr.mxu0 0.0
        %5170 = vmatpush1.msra.mxu0 0.0
        %5171 = vmatprep.subr.mxu0 0.0
        %5172 = vmatpush1.msra.mxu0 0.0
        %5173 = vmatprep.subr.mxu0 0.0
        %5174 = vmatpush1.msra.mxu0 0.0
        %5175 = vmatprep.subr.mxu0 0.0
        %5176 = vmatpush1.msra.mxu0 0.0
        %5177 = vmatprep.subr.mxu0 0.0
        %5178 = vmatpush1.msra.mxu0 0.0
        %5179 = vmatprep.subr.mxu0 0.0
        %5180 = vmatpush1.msra.mxu0 0.0
        %5181 = vmatprep.subr.mxu0 0.0
        %5182 = vmatpush1.msra.mxu0 0.0
        %5183 = vmatprep.subr.mxu0 0.0
        %5184 = vmatpush1.msra.mxu0 0.0
        %5185 = vmatprep.subr.mxu0 0.0
        %5186 = vmatpush1.msra.mxu0 0.0
        %5187 = vmatprep.subr.mxu0 0.0
        %5188 = vmatpush1.msra.mxu0 0.0
        %5189 = vmatprep.subr.mxu0 0.0
        %5190 = vmatpush1.msra.mxu0 0.0
        %5191 = vmatprep.subr.mxu0 0.0
        %5192 = vmatpush1.msra.mxu0 0.0
        %5193 = vmatprep.subr.mxu0 0.0
        %5194 = vmatpush1.msra.mxu0 0.0
        %5195 = vmatprep.subr.mxu0 0.0
        %5196 = vmatpush1.msra.mxu0 0.0
        %5197 = vmatprep.subr.mxu0 0.0
        %5198 = vmatpush1.msra.mxu0 0.0
        %5199 = vmatprep.mubr.f32.mxu0 0.0
        %5200 = vmatmul.mubr.f32.gmra.mrb[0].mxu0 %v4912
        %v5201 = vpop.f32.mrb[0].mxu0
        %v5202 = vadd.f32 0.0, %v5201
        %v5203 = vpop.f32.mrb[0].mxu0
        %5204 = vdwg.mxu0
        %v5205 = vsub.f32 %v5202, %v2298
        %v5206 = vmul.f32 %v5057, %v2212
        %v5207 = vmul.f32 %v5131, %v2243
        %v5208 = vadd.f32 %v5206, %v5207
        %v5209 = vmul.f32 %v5205, %v2273
        %v5210 = vadd.f32 %v5208, %v5209
        %v5211 = vmul.f32 %v5057, %v2217
        %v5212 = vmul.f32 %v5131, %v2248
        %v5213 = vadd.f32 %v5211, %v5212
        %v5214 = vmul.f32 %v5205, %v2278
        %v5215 = vadd.f32 %v5213, %v5214
        %v5216 = vmul.f32 %v5057, %v2227
        %v5217 = vmul.f32 %v5131, %v2258
        %v5218 = vadd.f32 %v5216, %v5217
        %v5219 = vmul.f32 %v5205, %v2288
        %v5220 = vadd.f32 %v5218, %v5219
        %v5221 = vmul.f32 %v5210, %v5210
        %v5222 = vmul.f32 %v5215, %v5215
        %v5223 = vadd.f32 %v5221, %v5222
        %v5224 = vmul.f32 %v5220, %v5220
        %v5225 = vadd.f32 %v5223, %v5224
        %v5226 = vadd.f32 %v5225, 1e-08
        %v5227 = vrsqrt.pop %v5226
        %v5228 = vmul.f32 %v5226, %v5227
        %vm5229 = vcmp.eq.f32.partialorder %v5226, inf
        %v5230 = vsel %vm5229, %v5226, %v5228
        %vm5231 = vcmp.eq.f32.partialorder %v5226, 0.0
        %v5232 = vand.u32 %v5226, 2147483648
        %v5233 = vsel %vm5231, %v5232, %v5230
        %5234 = vmatprep.subr.mxu0 0.0
        %5235 = vmatpush1.msra.mxu0 %v3433
        %5236 = vmatprep.subr.mxu0 0.0
        %5237 = vmatpush1.msra.mxu0 0.0
        %5238 = vmatprep.subr.mxu0 0.0
        %5239 = vmatpush1.msra.mxu0 0.0
        %5240 = vmatprep.subr.mxu0 0.0
        %5241 = vmatpush1.msra.mxu0 0.0
        %5242 = vmatprep.subr.mxu0 0.0
        %5243 = vmatpush1.msra.mxu0 0.0
        %5244 = vmatprep.subr.mxu0 0.0
        %5245 = vmatpush1.msra.mxu0 0.0
        %5246 = vmatprep.subr.mxu0 0.0
        %5247 = vmatpush1.msra.mxu0 0.0
        %5248 = vmatprep.subr.mxu0 0.0
        %5249 = vmatpush1.msra.mxu0 0.0
        %5250 = vmatprep.subr.mxu0 0.0
        %5251 = vmatpush1.msra.mxu0 0.0
        %5252 = vmatprep.subr.mxu0 0.0
        %5253 = vmatpush1.msra.mxu0 0.0
        %5254 = vmatprep.subr.mxu0 0.0
        %5255 = vmatpush1.msra.mxu0 0.0
        %5256 = vmatprep.subr.mxu0 0.0
        %5257 = vmatpush1.msra.mxu0 0.0
        %5258 = vmatprep.subr.mxu0 0.0
        %5259 = vmatpush1.msra.mxu0 0.0
        %5260 = vmatprep.subr.mxu0 0.0
        %5261 = vmatpush1.msra.mxu0 0.0
        %5262 = vmatprep.subr.mxu0 0.0
        %5263 = vmatpush1.msra.mxu0 0.0
        %5264 = vmatprep.subr.mxu0 0.0
        %5265 = vmatpush1.msra.mxu0 0.0
        %5266 = vmatprep.subr.mxu0 0.0
        %5267 = vmatpush1.msra.mxu0 0.0
        %5268 = vmatprep.subr.mxu0 0.0
        %5269 = vmatpush1.msra.mxu0 0.0
        %5270 = vmatprep.subr.mxu0 0.0
        %5271 = vmatpush1.msra.mxu0 0.0
        %5272 = vmatprep.subr.mxu0 0.0
        %5273 = vmatpush1.msra.mxu0 0.0
        %5274 = vmatprep.subr.mxu0 0.0
        %5275 = vmatpush1.msra.mxu0 0.0
        %5276 = vmatprep.subr.mxu0 0.0
        %5277 = vmatpush1.msra.mxu0 0.0
        %5278 = vmatprep.subr.mxu0 0.0
        %5279 = vmatpush1.msra.mxu0 0.0
        %5280 = vmatprep.subr.mxu0 0.0
        %5281 = vmatpush1.msra.mxu0 0.0
        %5282 = vmatprep.subr.mxu0 0.0
        %5283 = vmatpush1.msra.mxu0 0.0
        %5284 = vmatprep.subr.mxu0 0.0
        %5285 = vmatpush1.msra.mxu0 0.0
        %5286 = vmatprep.subr.mxu0 0.0
        %5287 = vmatpush1.msra.mxu0 0.0
        %5288 = vmatprep.subr.mxu0 0.0
        %5289 = vmatpush1.msra.mxu0 0.0
        %5290 = vmatprep.subr.mxu0 0.0
        %5291 = vmatpush1.msra.mxu0 0.0
        %5292 = vmatprep.subr.mxu0 0.0
        %5293 = vmatpush1.msra.mxu0 0.0
        %5294 = vmatprep.subr.mxu0 0.0
        %5295 = vmatpush1.msra.mxu0 0.0
        %5296 = vmatprep.subr.mxu0 0.0
        %5297 = vmatpush1.msra.mxu0 0.0
        %5298 = vmatprep.mubr.f32.mxu0 0.0
        %5299 = vmatmul.mubr.f32.gmra.mrb[0].mxu0 %v4912
        %v5300 = vpop.f32.mrb[0].mxu0
        %v5301 = vadd.f32 0.0, %v5300
        %v5302 = vpop.f32.mrb[0].mxu0
        %5303 = vdwg.mxu0
        %v5304 = vmul.f32 %v5301, %v1040
        %5305 = vmatprep.subr.mxu0 0.0
        %5306 = vmatpush1.msra.mxu0 %v3505
        %5307 = vmatprep.subr.mxu0 0.0
        %5308 = vmatpush1.msra.mxu0 %v3506
        %5309 = vmatprep.subr.mxu0 0.0
        %5310 = vmatpush1.msra.mxu0 %v3507
        %5311 = vmatprep.subr.mxu0 0.0
        %5312 = vmatpush1.msra.mxu0 %v3508
        %5313 = vmatprep.subr.mxu0 0.0
        %5314 = vmatpush1.msra.mxu0 %v3509
        %5315 = vmatprep.subr.mxu0 0.0
        %5316 = vmatpush1.msra.mxu0 %v3510
        %5317 = vmatprep.subr.mxu0 0.0
        %5318 = vmatpush1.msra.mxu0 %v3511
        %5319 = vmatprep.subr.mxu0 0.0
        %5320 = vmatpush1.msra.mxu0 %v3512
        %5321 = vmatprep.subr.mxu0 0.0
        %5322 = vmatpush1.msra.mxu0 %v3513
        %5323 = vmatprep.subr.mxu0 0.0
        %5324 = vmatpush1.msra.mxu0 %v3514
        %5325 = vmatprep.subr.mxu0 0.0
        %5326 = vmatpush1.msra.mxu0 %v3515
        %5327 = vmatprep.subr.mxu0 0.0
        %5328 = vmatpush1.msra.mxu0 %v3516
        %5329 = vmatprep.subr.mxu0 0.0
        %5330 = vmatpush1.msra.mxu0 %v3517
        %5331 = vmatprep.subr.mxu0 0.0
        %5332 = vmatpush1.msra.mxu0 %v3518
        %5333 = vmatprep.subr.mxu0 0.0
        %5334 = vmatpush1.msra.mxu0 %v3519
        %5335 = vmatprep.subr.mxu0 0.0
        %5336 = vmatpush1.msra.mxu0 %v3520
        %5337 = vmatprep.subr.mxu0 0.0
        %5338 = vmatpush1.msra.mxu0 0.0
        %5339 = vmatprep.subr.mxu0 0.0
        %5340 = vmatpush1.msra.mxu0 0.0
        %5341 = vmatprep.subr.mxu0 0.0
        %5342 = vmatpush1.msra.mxu0 0.0
        %5343 = vmatprep.subr.mxu0 0.0
        %5344 = vmatpush1.msra.mxu0 0.0
        %5345 = vmatprep.subr.mxu0 0.0
        %5346 = vmatpush1.msra.mxu0 0.0
        %5347 = vmatprep.subr.mxu0 0.0
        %5348 = vmatpush1.msra.mxu0 0.0
        %5349 = vmatprep.subr.mxu0 0.0
        %5350 = vmatpush1.msra.mxu0 0.0
        %5351 = vmatprep.subr.mxu0 0.0
        %5352 = vmatpush1.msra.mxu0 0.0
        %5353 = vmatprep.subr.mxu0 0.0
        %5354 = vmatpush1.msra.mxu0 0.0
        %5355 = vmatprep.subr.mxu0 0.0
        %5356 = vmatpush1.msra.mxu0 0.0
        %5357 = vmatprep.subr.mxu0 0.0
        %5358 = vmatpush1.msra.mxu0 0.0
        %5359 = vmatprep.subr.mxu0 0.0
        %5360 = vmatpush1.msra.mxu0 0.0
        %5361 = vmatprep.subr.mxu0 0.0
        %5362 = vmatpush1.msra.mxu0 0.0
        %5363 = vmatprep.subr.mxu0 0.0
        %5364 = vmatpush1.msra.mxu0 0.0
        %5365 = vmatprep.subr.mxu0 0.0
        %5366 = vmatpush1.msra.mxu0 0.0
        %5367 = vmatprep.subr.mxu0 0.0
        %5368 = vmatpush1.msra.mxu0 0.0
        %5369 = vmatprep.mubr.f32.mxu0 0.0
        %5370 = vmatmul.mubr.f32.gmra.mrb[0].mxu0 %v5304
        %v5371 = vpop.f32.mrb[0].mxu0
        %v5372 = vadd.f32 0.0, %v5371
        %v5373 = vpop.f32.mrb[0].mxu0
        %5374 = vdwg.mxu0
        %5376 = vrot.lane.b32.xlu0 %v5210, 8
        %v5377 = vpop.permute.xlu0 %5376
        %5380 = vrot.lane.b32.xlu0 %v5215, 12
        %v5381 = vpop.permute.xlu0 %5380
        %5384 = vrot.lane.b32.xlu0 %v5220, 16
        %v5385 = vpop.permute.xlu0 %5384
        %5388 = vrot.lane.b32.xlu0 %v5233, 20
        %v5389 = vpop.permute.xlu0 %5388
        %5392 = vrot.lane.b32.xlu0 %v5372, 24
        %v5393 = vpop.permute.xlu0 %5392
        %v5395 = vsel %vm1161, %v4981, %v5377
        %v5396 = vsel %vm3612, %v5395, %v5381
        %v5397 = vsel %vm3614, %v5396, %v5385
        %v5398 = vsel %vm3616, %v5397, %v5389
        %v5399 = vsel %vm3618, %v5398, %v5393
        %v5400 = vld [vmem:[%s39 + $0x50] sm:$0xff]
        %v5401 = vld [vmem:[%s39 + $0x58] sm:$0xff]
        %v5402 = vld [vmem:[%s39 + $0x60] sm:$0xff]
        %v5403 = vld [vmem:[%s39 + $0x68] sm:$0xff]
        %v5404 = vld [vmem:[%s39 + $0x70] sm:$0xff]
        %v5406 = vsel %vm4442, %v5399, 0
        %5408 = vmatprep.subr.mxu0 0.0
        %5409 = vmatpush1.msra.mxu0 %v5400
        %5410 = vmatprep.subr.mxu0 0.0
        %5411 = vmatpush1.msra.mxu0 %v5401
        %5412 = vmatprep.subr.mxu0 0.0
        %5413 = vmatpush1.msra.mxu0 %v5402
        %5414 = vmatprep.subr.mxu0 0.0
        %5415 = vmatpush1.msra.mxu0 %v5403
        %5416 = vmatprep.subr.mxu0 0.0
        %5417 = vmatpush1.msra.mxu0 %v5404
        %5418 = vmatprep.subr.mxu0 0.0
        %5419 = vmatpush1.msra.mxu0 0.0
        %5420 = vmatprep.subr.mxu0 0.0
        %5421 = vmatpush1.msra.mxu0 0.0
        %5422 = vmatprep.subr.mxu0 0.0
        %5423 = vmatpush1.msra.mxu0 0.0
        %5424 = vmatprep.subr.mxu0 0.0
        %5425 = vmatpush1.msra.mxu0 0.0
        %5426 = vmatprep.subr.mxu0 0.0
        %5427 = vmatpush1.msra.mxu0 0.0
        %5428 = vmatprep.subr.mxu0 0.0
        %5429 = vmatpush1.msra.mxu0 0.0
        %5430 = vmatprep.subr.mxu0 0.0
        %5431 = vmatpush1.msra.mxu0 0.0
        %5432 = vmatprep.subr.mxu0 0.0
        %5433 = vmatpush1.msra.mxu0 0.0
        %5434 = vmatprep.subr.mxu0 0.0
        %5435 = vmatpush1.msra.mxu0 0.0
        %5436 = vmatprep.subr.mxu0 0.0
        %5437 = vmatpush1.msra.mxu0 0.0
        %5438 = vmatprep.subr.mxu0 0.0
        %5439 = vmatpush1.msra.mxu0 0.0
        %5440 = vmatprep.subr.mxu0 0.0
        %5441 = vmatpush1.msra.mxu0 0.0
        %5442 = vmatprep.subr.mxu0 0.0
        %5443 = vmatpush1.msra.mxu0 0.0
        %5444 = vmatprep.subr.mxu0 0.0
        %5445 = vmatpush1.msra.mxu0 0.0
        %5446 = vmatprep.subr.mxu0 0.0
        %5447 = vmatpush1.msra.mxu0 0.0
        %5448 = vmatprep.subr.mxu0 0.0
        %5449 = vmatpush1.msra.mxu0 0.0
        %5450 = vmatprep.subr.mxu0 0.0
        %5451 = vmatpush1.msra.mxu0 0.0
        %5452 = vmatprep.subr.mxu0 0.0
        %5453 = vmatpush1.msra.mxu0 0.0
        %5454 = vmatprep.subr.mxu0 0.0
        %5455 = vmatpush1.msra.mxu0 0.0
        %5456 = vmatprep.subr.mxu0 0.0
        %5457 = vmatpush1.msra.mxu0 0.0
        %5458 = vmatprep.subr.mxu0 0.0
        %5459 = vmatpush1.msra.mxu0 0.0
        %5460 = vmatprep.subr.mxu0 0.0
        %5461 = vmatpush1.msra.mxu0 0.0
        %5462 = vmatprep.subr.mxu0 0.0
        %5463 = vmatpush1.msra.mxu0 0.0
        %5464 = vmatprep.subr.mxu0 0.0
        %5465 = vmatpush1.msra.mxu0 0.0
        %5466 = vmatprep.subr.mxu0 0.0
        %5467 = vmatpush1.msra.mxu0 0.0
        %5468 = vmatprep.subr.mxu0 0.0
        %5469 = vmatpush1.msra.mxu0 0.0
        %5470 = vmatprep.subr.mxu0 0.0
        %5471 = vmatpush1.msra.mxu0 0.0
        %5472 = vmatprep.mubr.f32.mxu0 0.0
        %5473 = vmatmul.mubr.f32.gmra.mrb[0].mxu0 %v5406
        %v5474 = vpop.f32.mrb[0].mxu0
        %v5475 = vadd.f32 0.0, %v5474
        %v5476 = vpop.f32.mrb[0].mxu0
        %5477 = vdwg.mxu0
        %v5478 = vadd.f32 %v4586, %v5475
        %5479 = vrot.lane.b32.xlu0 %v2520, 20
        %v5480 = vpop.permute.xlu0 %5479
        %5481 = vrot.lane.b32.xlu0 %v2521, 20
        %v5482 = vpop.permute.xlu0 %5481
        %5483 = vrot.lane.b32.xlu0 %v2522, 20
        %v5484 = vpop.permute.xlu0 %5483
        %5485 = vrot.lane.b32.xlu0 %v2523, 20
        %v5486 = vpop.permute.xlu0 %5485
        %5487 = vrot.lane.b32.xlu0 %v2524, 20
        %v5488 = vpop.permute.xlu0 %5487
        %5489 = vrot.lane.b32.xlu0 %v2525, 20
        %v5490 = vpop.permute.xlu0 %5489
        %5491 = vrot.lane.b32.xlu0 %v2526, 20
        %v5492 = vpop.permute.xlu0 %5491
        %5493 = vrot.lane.b32.xlu0 %v2527, 20
        %v5494 = vpop.permute.xlu0 %5493
        %v5503 = vsel %vm2560, %v5480, 0.0
        %5504 = vadd.xlane.f32.xlu0 %v5503
        %v5505 = vpop.xlane.xlu0 %5504
        %v5506 = vsel %vm2560, %v5482, 0.0
        %5507 = vadd.xlane.f32.xlu0 %v5506
        %v5508 = vpop.xlane.xlu0 %5507
        %v5509 = vsel %vm2560, %v5484, 0.0
        %5510 = vadd.xlane.f32.xlu0 %v5509
        %v5511 = vpop.xlane.xlu0 %5510
        %v5512 = vsel %vm2560, %v5486, 0.0
        %5513 = vadd.xlane.f32.xlu0 %v5512
        %v5514 = vpop.xlane.xlu0 %5513
        %v5515 = vsel %vm2560, %v5488, 0.0
        %5516 = vadd.xlane.f32.xlu0 %v5515
        %v5517 = vpop.xlane.xlu0 %5516
        %v5518 = vsel %vm2560, %v5490, 0.0
        %5519 = vadd.xlane.f32.xlu0 %v5518
        %v5520 = vpop.xlane.xlu0 %5519
        %v5521 = vsel %vm2560, %v5492, 0.0
        %5522 = vadd.xlane.f32.xlu0 %v5521
        %v5523 = vpop.xlane.xlu0 %5522
        %v5524 = vsel %vm2560, %v5494, 0.0
        %5525 = vadd.xlane.f32.xlu0 %v5524
        %v5526 = vpop.xlane.xlu0 %5525
        %5527 = vrot.lane.b32.xlu0 %v2687, 20
        %v5528 = vpop.permute.xlu0 %5527
        %5529 = vrot.lane.b32.xlu0 %v2688, 20
        %v5530 = vpop.permute.xlu0 %5529
        %5531 = vrot.lane.b32.xlu0 %v2689, 20
        %v5532 = vpop.permute.xlu0 %5531
        %5533 = vrot.lane.b32.xlu0 %v2690, 20
        %v5534 = vpop.permute.xlu0 %5533
        %5535 = vrot.lane.b32.xlu0 %v2691, 20
        %v5536 = vpop.permute.xlu0 %5535
        %5537 = vrot.lane.b32.xlu0 %v2692, 20
        %v5538 = vpop.permute.xlu0 %5537
        %5539 = vrot.lane.b32.xlu0 %v2693, 20
        %v5540 = vpop.permute.xlu0 %5539
        %5541 = vrot.lane.b32.xlu0 %v2694, 20
        %v5542 = vpop.permute.xlu0 %5541
        %v5551 = vsel %vm2560, %v5528, 0.0
        %5552 = vadd.xlane.f32.xlu0 %v5551
        %v5553 = vpop.xlane.xlu0 %5552
        %v5554 = vsel %vm2560, %v5530, 0.0
        %5555 = vadd.xlane.f32.xlu0 %v5554
        %v5556 = vpop.xlane.xlu0 %5555
        %v5557 = vsel %vm2560, %v5532, 0.0
        %5558 = vadd.xlane.f32.xlu0 %v5557
        %v5559 = vpop.xlane.xlu0 %5558
        %v5560 = vsel %vm2560, %v5534, 0.0
        %5561 = vadd.xlane.f32.xlu0 %v5560
        %v5562 = vpop.xlane.xlu0 %5561
        %v5563 = vsel %vm2560, %v5536, 0.0
        %5564 = vadd.xlane.f32.xlu0 %v5563
        %v5565 = vpop.xlane.xlu0 %5564
        %v5566 = vsel %vm2560, %v5538, 0.0
        %5567 = vadd.xlane.f32.xlu0 %v5566
        %v5568 = vpop.xlane.xlu0 %5567
        %v5569 = vsel %vm2560, %v5540, 0.0
        %5570 = vadd.xlane.f32.xlu0 %v5569
        %v5571 = vpop.xlane.xlu0 %5570
        %v5572 = vsel %vm2560, %v5542, 0.0
        %5573 = vadd.xlane.f32.xlu0 %v5572
        %v5574 = vpop.xlane.xlu0 %5573
        %v5575 = vadd.f32 %v5505, %v5553
        %v5576 = vadd.f32 %v5508, %v5556
        %v5577 = vadd.f32 %v5511, %v5559
        %v5578 = vadd.f32 %v5514, %v5562
        %v5579 = vadd.f32 %v5517, %v5565
        %v5580 = vadd.f32 %v5520, %v5568
        %v5581 = vadd.f32 %v5523, %v5571
        %v5582 = vadd.f32 %v5526, %v5574
        %5583 = vrot.lane.b32.xlu0 %v2861, 20
        %v5584 = vpop.permute.xlu0 %5583
        %5585 = vrot.lane.b32.xlu0 %v2862, 20
        %v5586 = vpop.permute.xlu0 %5585
        %5587 = vrot.lane.b32.xlu0 %v2863, 20
        %v5588 = vpop.permute.xlu0 %5587
        %5589 = vrot.lane.b32.xlu0 %v2864, 20
        %v5590 = vpop.permute.xlu0 %5589
        %5591 = vrot.lane.b32.xlu0 %v2865, 20
        %v5592 = vpop.permute.xlu0 %5591
        %5593 = vrot.lane.b32.xlu0 %v2866, 20
        %v5594 = vpop.permute.xlu0 %5593
        %5595 = vrot.lane.b32.xlu0 %v2867, 20
        %v5596 = vpop.permute.xlu0 %5595
        %5597 = vrot.lane.b32.xlu0 %v2868, 20
        %v5598 = vpop.permute.xlu0 %5597
        %v5607 = vsel %vm2560, %v5584, 0.0
        %5608 = vadd.xlane.f32.xlu0 %v5607
        %v5609 = vpop.xlane.xlu0 %5608
        %v5610 = vsel %vm2560, %v5586, 0.0
        %5611 = vadd.xlane.f32.xlu0 %v5610
        %v5612 = vpop.xlane.xlu0 %5611
        %v5613 = vsel %vm2560, %v5588, 0.0
        %5614 = vadd.xlane.f32.xlu0 %v5613
        %v5615 = vpop.xlane.xlu0 %5614
        %v5616 = vsel %vm2560, %v5590, 0.0
        %5617 = vadd.xlane.f32.xlu0 %v5616
        %v5618 = vpop.xlane.xlu0 %5617
        %v5619 = vsel %vm2560, %v5592, 0.0
        %5620 = vadd.xlane.f32.xlu0 %v5619
        %v5621 = vpop.xlane.xlu0 %5620
        %v5622 = vsel %vm2560, %v5594, 0.0
        %5623 = vadd.xlane.f32.xlu0 %v5622
        %v5624 = vpop.xlane.xlu0 %5623
        %v5625 = vsel %vm2560, %v5596, 0.0
        %5626 = vadd.xlane.f32.xlu0 %v5625
        %v5627 = vpop.xlane.xlu0 %5626
        %v5628 = vsel %vm2560, %v5598, 0.0
        %5629 = vadd.xlane.f32.xlu0 %v5628
        %v5630 = vpop.xlane.xlu0 %5629
        %v5631 = vadd.f32 %v5575, %v5609
        %v5632 = vadd.f32 %v5576, %v5612
        %v5633 = vadd.f32 %v5577, %v5615
        %v5634 = vadd.f32 %v5578, %v5618
        %v5635 = vadd.f32 %v5579, %v5621
        %v5636 = vadd.f32 %v5580, %v5624
        %v5637 = vadd.f32 %v5581, %v5627
        %v5638 = vadd.f32 %v5582, %v5630
        %5639 = vset.pattern.permute.xlu0 3
        %5640 = vperm.xlu0 %5639, %v2937
        %v5641 = vpop.permute.xlu0 %5640
        %v5643 = vmul.f32 %v5641, %v5631
        %v5644 = vmul.f32 %v5641, %v5632
        %v5645 = vmul.f32 %v5641, %v5633
        %v5646 = vmul.f32 %v5641, %v5634
        %v5647 = vmul.f32 %v5641, %v5635
        %v5648 = vmul.f32 %v5641, %v5636
        %v5649 = vmul.f32 %v5641, %v5637
        %v5650 = vmul.f32 %v5641, %v5638
        %5651 = vrot.lane.b32.xlu0 %v2205, 104
        %v5652 = vpop.permute.xlu0 %5651
        %5653 = vrot.lane.b32.xlu0 %v2205, 72
        %v5654 = vpop.permute.xlu0 %5653
        %v5663 = vlaneseq
        %v5664 = vshrl.u32 %v5663, 7
        %v5665 = vsub.s32 %v2962, %v5664
        %v5666 = vrot.slane %v5643, %v5665
        %v5667 = vlaneseq
        %v5668 = vshrl.u32 %v5667, 7
        %v5669 = vsub.s32 %v2962, %v5668
        %v5670 = vrot.slane %v5644, %v5669
        %v5671 = vlaneseq
        %v5672 = vshrl.u32 %v5671, 7
        %v5673 = vsub.s32 %v2962, %v5672
        %v5674 = vrot.slane %v5645, %v5673
        %v5675 = vlaneseq
        %v5676 = vshrl.u32 %v5675, 7
        %v5677 = vsub.s32 %v2962, %v5676
        %v5678 = vrot.slane %v5646, %v5677
        %v5679 = vlaneseq
        %v5680 = vshrl.u32 %v5679, 7
        %v5681 = vsub.s32 %v2962, %v5680
        %v5682 = vrot.slane %v5647, %v5681
        %v5683 = vlaneseq
        %v5684 = vshrl.u32 %v5683, 7
        %v5685 = vsub.s32 %v2962, %v5684
        %v5686 = vrot.slane %v5648, %v5685
        %v5687 = vlaneseq
        %v5688 = vshrl.u32 %v5687, 7
        %v5689 = vsub.s32 %v2962, %v5688
        %v5690 = vrot.slane %v5649, %v5689
        %v5691 = vlaneseq
        %v5692 = vshrl.u32 %v5691, 7
        %v5693 = vsub.s32 %v2962, %v5692
        %v5694 = vrot.slane %v5650, %v5693
        %v5695 = vsel %vm2995, %v5670, %v5666
        %v5696 = vsel %vm2997, %v5674, %v5695
        %v5697 = vsel %vm2999, %v5678, %v5696
        %v5698 = vsel %vm3001, %v5682, %v5697
        %v5699 = vsel %vm3003, %v5686, %v5698
        %v5700 = vsel %vm3005, %v5690, %v5699
        %v5701 = vsel %vm3007, %v5694, %v5700
        %v5703 = vsel %vm1161, %v5652, 0
        %v5705 = vsel %vm1161, %v5654, 0
        %5707 = vmatprep.subr.mxu0 0.0
        %5708 = vmatpush1.xpose.msra.mxu0 %v5705
        %5709 = vmatprep.subr.mxu0 0.0
        %5710 = vmatpush1.xpose.msra.mxu0 0.0
        %5711 = vmatprep.subr.mxu0 0.0
        %5712 = vmatpush1.xpose.msra.mxu0 0.0
        %5713 = vmatprep.subr.mxu0 0.0
        %5714 = vmatpush1.xpose.msra.mxu0 0.0
        %5715 = vmatprep.subr.mxu0 0.0
        %5716 = vmatpush1.xpose.msra.mxu0 0.0
        %5717 = vmatprep.subr.mxu0 0.0
        %5718 = vmatpush1.xpose.msra.mxu0 0.0
        %5719 = vmatprep.subr.mxu0 0.0
        %5720 = vmatpush1.xpose.msra.mxu0 0.0
        %5721 = vmatprep.subr.mxu0 0.0
        %5722 = vmatpush1.xpose.msra.mxu0 0.0
        %5723 = vmatprep.subr.mxu0 0.0
        %5724 = vmatpush1.xpose.msra.mxu0 0.0
        %5725 = vmatprep.subr.mxu0 0.0
        %5726 = vmatpush1.xpose.msra.mxu0 0.0
        %5727 = vmatprep.subr.mxu0 0.0
        %5728 = vmatpush1.xpose.msra.mxu0 0.0
        %5729 = vmatprep.subr.mxu0 0.0
        %5730 = vmatpush1.xpose.msra.mxu0 0.0
        %5731 = vmatprep.subr.mxu0 0.0
        %5732 = vmatpush1.xpose.msra.mxu0 0.0
        %5733 = vmatprep.subr.mxu0 0.0
        %5734 = vmatpush1.xpose.msra.mxu0 0.0
        %5735 = vmatprep.subr.mxu0 0.0
        %5736 = vmatpush1.xpose.msra.mxu0 0.0
        %5737 = vmatprep.subr.mxu0 0.0
        %5738 = vmatpush1.xpose.msra.mxu0 0.0
        %5739 = vmatprep.subr.mxu0 0.0
        %5740 = vmatpush1.xpose.msra.mxu0 0.0
        %5741 = vmatprep.subr.mxu0 0.0
        %5742 = vmatpush1.xpose.msra.mxu0 0.0
        %5743 = vmatprep.subr.mxu0 0.0
        %5744 = vmatpush1.xpose.msra.mxu0 0.0
        %5745 = vmatprep.subr.mxu0 0.0
        %5746 = vmatpush1.xpose.msra.mxu0 0.0
        %5747 = vmatprep.subr.mxu0 0.0
        %5748 = vmatpush1.xpose.msra.mxu0 0.0
        %5749 = vmatprep.subr.mxu0 0.0
        %5750 = vmatpush1.xpose.msra.mxu0 0.0
        %5751 = vmatprep.subr.mxu0 0.0
        %5752 = vmatpush1.xpose.msra.mxu0 0.0
        %5753 = vmatprep.subr.mxu0 0.0
        %5754 = vmatpush1.xpose.msra.mxu0 0.0
        %5755 = vmatprep.subr.mxu0 0.0
        %5756 = vmatpush1.xpose.msra.mxu0 0.0
        %5757 = vmatprep.subr.mxu0 0.0
        %5758 = vmatpush1.xpose.msra.mxu0 0.0
        %5759 = vmatprep.subr.mxu0 0.0
        %5760 = vmatpush1.xpose.msra.mxu0 0.0
        %5761 = vmatprep.subr.mxu0 0.0
        %5762 = vmatpush1.xpose.msra.mxu0 0.0
        %5763 = vmatprep.subr.mxu0 0.0
        %5764 = vmatpush1.xpose.msra.mxu0 0.0
        %5765 = vmatprep.subr.mxu0 0.0
        %5766 = vmatpush1.xpose.msra.mxu0 0.0
        %5767 = vmatprep.subr.mxu0 0.0
        %5768 = vmatpush1.xpose.msra.mxu0 0.0
        %5769 = vmatprep.subr.mxu0 0.0
        %5770 = vmatpush1.xpose.msra.mxu0 0.0
        %5771 = vmatprep.mubr.f32.mxu0 0.0
        %5772 = vmatmul.mubr.f32.gmra.mrb[0].mxu0 %v5703
        %v5773 = vpop.f32.mrb[0].mxu0
        %v5774 = vadd.f32 %v5701, %v5773
        %v5775 = vpop.f32.mrb[0].mxu0
        %5776 = vdwg.mxu0
        %5777 = vrot.lane.b32.xlu0 %v2411, 104
        %v5778 = vpop.permute.xlu0 %5777
        %v5780 = vadd.f32 %v5774, %v5778
        %5781 = vset.pattern.permute.xlu0 3
        %5782 = vperm.xlu0 %5781, %v3089
        %v5783 = vpop.permute.xlu0 %5782
        %v5785 = vadd.f32 %v5780, %v5783
        %v5786 = vsel %vm2417, %v5785, -3.4028235e+38
        %v5787 = vsel %vm1161, %v5786, -inf
        %5788 = vmax.xlane.f32.xlu0 %v5787
        %v5789 = vpop.xlane.xlu0 %5788
        %v5790 = vsub.f32 %v5786, %v5789
        %v5791 = vmul.f32 %v5790, 1.442695
        %v5792 = vpow.pop %v5791
        %v5793 = vsel %vm1161, %v5792, 0.0
        %5794 = vadd.xlane.f32.xlu0 %v5793
        %v5795 = vpop.xlane.xlu0 %5794
        %v5796 = vrcp.pop %v5795
        %v5797 = vmul.f32 %v5792, %v5796
        %5798 = vrot.lane.b32.xlu0 %v2205, 40
        %v5799 = vpop.permute.xlu0 %5798
        %v5802 = vsel %vm1161, %v5797, 0
        %5804 = vmatprep.subr.mxu0 0.0
        %5805 = vmatpush1.msra.mxu0 %v5799
        %5806 = vmatprep.subr.mxu0 0.0
        %5807 = vmatpush1.msra.mxu0 0.0
        %5808 = vmatprep.subr.mxu0 0.0
        %5809 = vmatpush1.msra.mxu0 0.0
        %5810 = vmatprep.subr.mxu0 0.0
        %5811 = vmatpush1.msra.mxu0 0.0
        %5812 = vmatprep.subr.mxu0 0.0
        %5813 = vmatpush1.msra.mxu0 0.0
        %5814 = vmatprep.subr.mxu0 0.0
        %5815 = vmatpush1.msra.mxu0 0.0
        %5816 = vmatprep.subr.mxu0 0.0
        %5817 = vmatpush1.msra.mxu0 0.0
        %5818 = vmatprep.subr.mxu0 0.0
        %5819 = vmatpush1.msra.mxu0 0.0
        %5820 = vmatprep.subr.mxu0 0.0
        %5821 = vmatpush1.msra.mxu0 0.0
        %5822 = vmatprep.subr.mxu0 0.0
        %5823 = vmatpush1.msra.mxu0 0.0
        %5824 = vmatprep.subr.mxu0 0.0
        %5825 = vmatpush1.msra.mxu0 0.0
        %5826 = vmatprep.subr.mxu0 0.0
        %5827 = vmatpush1.msra.mxu0 0.0
        %5828 = vmatprep.subr.mxu0 0.0
        %5829 = vmatpush1.msra.mxu0 0.0
        %5830 = vmatprep.subr.mxu0 0.0
        %5831 = vmatpush1.msra.mxu0 0.0
        %5832 = vmatprep.subr.mxu0 0.0
        %5833 = vmatpush1.msra.mxu0 0.0
        %5834 = vmatprep.subr.mxu0 0.0
        %5835 = vmatpush1.msra.mxu0 0.0
        %5836 = vmatprep.subr.mxu0 0.0
        %5837 = vmatpush1.msra.mxu0 0.0
        %5838 = vmatprep.subr.mxu0 0.0
        %5839 = vmatpush1.msra.mxu0 0.0
        %5840 = vmatprep.subr.mxu0 0.0
        %5841 = vmatpush1.msra.mxu0 0.0
        %5842 = vmatprep.subr.mxu0 0.0
        %5843 = vmatpush1.msra.mxu0 0.0
        %5844 = vmatprep.subr.mxu0 0.0
        %5845 = vmatpush1.msra.mxu0 0.0
        %5846 = vmatprep.subr.mxu0 0.0
        %5847 = vmatpush1.msra.mxu0 0.0
        %5848 = vmatprep.subr.mxu0 0.0
        %5849 = vmatpush1.msra.mxu0 0.0
        %5850 = vmatprep.subr.mxu0 0.0
        %5851 = vmatpush1.msra.mxu0 0.0
        %5852 = vmatprep.subr.mxu0 0.0
        %5853 = vmatpush1.msra.mxu0 0.0
        %5854 = vmatprep.subr.mxu0 0.0
        %5855 = vmatpush1.msra.mxu0 0.0
        %5856 = vmatprep.subr.mxu0 0.0
        %5857 = vmatpush1.msra.mxu0 0.0
        %5858 = vmatprep.subr.mxu0 0.0
        %5859 = vmatpush1.msra.mxu0 0.0
        %5860 = vmatprep.subr.mxu0 0.0
        %5861 = vmatpush1.msra.mxu0 0.0
        %5862 = vmatprep.subr.mxu0 0.0
        %5863 = vmatpush1.msra.mxu0 0.0
        %5864 = vmatprep.subr.mxu0 0.0
        %5865 = vmatpush1.msra.mxu0 0.0
        %5866 = vmatprep.subr.mxu0 0.0
        %5867 = vmatpush1.msra.mxu0 0.0
        %5868 = vmatprep.mubr.f32.mxu0 0.0
        %5869 = vmatmul.mubr.f32.gmra.mrb[0].mxu0 %v5802
        %v5870 = vpop.f32.mrb[0].mxu0
        %v5871 = vadd.f32 0.0, %v5870
        %v5872 = vpop.f32.mrb[0].mxu0
        %5873 = vdwg.mxu0
        %5874 = vrot.lane.b32.xlu0 %v2309, 52
        %v5875 = vpop.permute.xlu0 %5874
        %5877 = vmatprep.subr.mxu0 0.0
        %5878 = vmatpush1.msra.mxu0 %v5875
        %5879 = vmatprep.subr.mxu0 0.0
        %5880 = vmatpush1.msra.mxu0 0.0
        %5881 = vmatprep.subr.mxu0 0.0
        %5882 = vmatpush1.msra.mxu0 0.0
        %5883 = vmatprep.subr.mxu0 0.0
        %5884 = vmatpush1.msra.mxu0 0.0
        %5885 = vmatprep.subr.mxu0 0.0
        %5886 = vmatpush1.msra.mxu0 0.0
        %5887 = vmatprep.subr.mxu0 0.0
        %5888 = vmatpush1.msra.mxu0 0.0
        %5889 = vmatprep.subr.mxu0 0.0
        %5890 = vmatpush1.msra.mxu0 0.0
        %5891 = vmatprep.subr.mxu0 0.0
        %5892 = vmatpush1.msra.mxu0 0.0
        %5893 = vmatprep.subr.mxu0 0.0
        %5894 = vmatpush1.msra.mxu0 0.0
        %5895 = vmatprep.subr.mxu0 0.0
        %5896 = vmatpush1.msra.mxu0 0.0
        %5897 = vmatprep.subr.mxu0 0.0
        %5898 = vmatpush1.msra.mxu0 0.0
        %5899 = vmatprep.subr.mxu0 0.0
        %5900 = vmatpush1.msra.mxu0 0.0
        %5901 = vmatprep.subr.mxu0 0.0
        %5902 = vmatpush1.msra.mxu0 0.0
        %5903 = vmatprep.subr.mxu0 0.0
        %5904 = vmatpush1.msra.mxu0 0.0
        %5905 = vmatprep.subr.mxu0 0.0
        %5906 = vmatpush1.msra.mxu0 0.0
        %5907 = vmatprep.subr.mxu0 0.0
        %5908 = vmatpush1.msra.mxu0 0.0
        %5909 = vmatprep.subr.mxu0 0.0
        %5910 = vmatpush1.msra.mxu0 0.0
        %5911 = vmatprep.subr.mxu0 0.0
        %5912 = vmatpush1.msra.mxu0 0.0
        %5913 = vmatprep.subr.mxu0 0.0
        %5914 = vmatpush1.msra.mxu0 0.0
        %5915 = vmatprep.subr.mxu0 0.0
        %5916 = vmatpush1.msra.mxu0 0.0
        %5917 = vmatprep.subr.mxu0 0.0
        %5918 = vmatpush1.msra.mxu0 0.0
        %5919 = vmatprep.subr.mxu0 0.0
        %5920 = vmatpush1.msra.mxu0 0.0
        %5921 = vmatprep.subr.mxu0 0.0
        %5922 = vmatpush1.msra.mxu0 0.0
        %5923 = vmatprep.subr.mxu0 0.0
        %5924 = vmatpush1.msra.mxu0 0.0
        %5925 = vmatprep.subr.mxu0 0.0
        %5926 = vmatpush1.msra.mxu0 0.0
        %5927 = vmatprep.subr.mxu0 0.0
        %5928 = vmatpush1.msra.mxu0 0.0
        %5929 = vmatprep.subr.mxu0 0.0
        %5930 = vmatpush1.msra.mxu0 0.0
        %5931 = vmatprep.subr.mxu0 0.0
        %5932 = vmatpush1.msra.mxu0 0.0
        %5933 = vmatprep.subr.mxu0 0.0
        %5934 = vmatpush1.msra.mxu0 0.0
        %5935 = vmatprep.subr.mxu0 0.0
        %5936 = vmatpush1.msra.mxu0 0.0
        %5937 = vmatprep.subr.mxu0 0.0
        %5938 = vmatpush1.msra.mxu0 0.0
        %5939 = vmatprep.subr.mxu0 0.0
        %5940 = vmatpush1.msra.mxu0 0.0
        %5941 = vmatprep.mubr.f32.mxu0 0.0
        %5942 = vmatmul.mubr.f32.gmra.mrb[0].mxu0 %v5802
        %v5943 = vpop.f32.mrb[0].mxu0
        %v5944 = vadd.f32 0.0, %v5943
        %v5945 = vpop.f32.mrb[0].mxu0
        %5946 = vdwg.mxu0
        %v5947 = vsub.f32 %v5944, %v2238
        %5948 = vrot.lane.b32.xlu0 %v2318, 52
        %v5949 = vpop.permute.xlu0 %5948
        %5951 = vmatprep.subr.mxu0 0.0
        %5952 = vmatpush1.msra.mxu0 %v5949
        %5953 = vmatprep.subr.mxu0 0.0
        %5954 = vmatpush1.msra.mxu0 0.0
        %5955 = vmatprep.subr.mxu0 0.0
        %5956 = vmatpush1.msra.mxu0 0.0
        %5957 = vmatprep.subr.mxu0 0.0
        %5958 = vmatpush1.msra.mxu0 0.0
        %5959 = vmatprep.subr.mxu0 0.0
        %5960 = vmatpush1.msra.mxu0 0.0
        %5961 = vmatprep.subr.mxu0 0.0
        %5962 = vmatpush1.msra.mxu0 0.0
        %5963 = vmatprep.subr.mxu0 0.0
        %5964 = vmatpush1.msra.mxu0 0.0
        %5965 = vmatprep.subr.mxu0 0.0
        %5966 = vmatpush1.msra.mxu0 0.0
        %5967 = vmatprep.subr.mxu0 0.0
        %5968 = vmatpush1.msra.mxu0 0.0
        %5969 = vmatprep.subr.mxu0 0.0
        %5970 = vmatpush1.msra.mxu0 0.0
        %5971 = vmatprep.subr.mxu0 0.0
        %5972 = vmatpush1.msra.mxu0 0.0
        %5973 = vmatprep.subr.mxu0 0.0
        %5974 = vmatpush1.msra.mxu0 0.0
        %5975 = vmatprep.subr.mxu0 0.0
        %5976 = vmatpush1.msra.mxu0 0.0
        %5977 = vmatprep.subr.mxu0 0.0
        %5978 = vmatpush1.msra.mxu0 0.0
        %5979 = vmatprep.subr.mxu0 0.0
        %5980 = vmatpush1.msra.mxu0 0.0
        %5981 = vmatprep.subr.mxu0 0.0
        %5982 = vmatpush1.msra.mxu0 0.0
        %5983 = vmatprep.subr.mxu0 0.0
        %5984 = vmatpush1.msra.mxu0 0.0
        %5985 = vmatprep.subr.mxu0 0.0
        %5986 = vmatpush1.msra.mxu0 0.0
        %5987 = vmatprep.subr.mxu0 0.0
        %5988 = vmatpush1.msra.mxu0 0.0
        %5989 = vmatprep.subr.mxu0 0.0
        %5990 = vmatpush1.msra.mxu0 0.0
        %5991 = vmatprep.subr.mxu0 0.0
        %5992 = vmatpush1.msra.mxu0 0.0
        %5993 = vmatprep.subr.mxu0 0.0
        %5994 = vmatpush1.msra.mxu0 0.0
        %5995 = vmatprep.subr.mxu0 0.0
        %5996 = vmatpush1.msra.mxu0 0.0
        %5997 = vmatprep.subr.mxu0 0.0
        %5998 = vmatpush1.msra.mxu0 0.0
        %5999 = vmatprep.subr.mxu0 0.0
        %6000 = vmatpush1.msra.mxu0 0.0
        %6001 = vmatprep.subr.mxu0 0.0
        %6002 = vmatpush1.msra.mxu0 0.0
        %6003 = vmatprep.subr.mxu0 0.0
        %6004 = vmatpush1.msra.mxu0 0.0
        %6005 = vmatprep.subr.mxu0 0.0
        %6006 = vmatpush1.msra.mxu0 0.0
        %6007 = vmatprep.subr.mxu0 0.0
        %6008 = vmatpush1.msra.mxu0 0.0
        %6009 = vmatprep.subr.mxu0 0.0
        %6010 = vmatpush1.msra.mxu0 0.0
        %6011 = vmatprep.subr.mxu0 0.0
        %6012 = vmatpush1.msra.mxu0 0.0
        %6013 = vmatprep.subr.mxu0 0.0
        %6014 = vmatpush1.msra.mxu0 0.0
        %6015 = vmatprep.mubr.f32.mxu0 0.0
        %6016 = vmatmul.mubr.f32.gmra.mrb[0].mxu0 %v5802
        %v6017 = vpop.f32.mrb[0].mxu0
        %v6018 = vadd.f32 0.0, %v6017
        %v6019 = vpop.f32.mrb[0].mxu0
        %6020 = vdwg.mxu0
        %v6021 = vsub.f32 %v6018, %v2268
        %6022 = vrot.lane.b32.xlu0 %v2327, 52
        %v6023 = vpop.permute.xlu0 %6022
        %6025 = vmatprep.subr.mxu0 0.0
        %6026 = vmatpush1.msra.mxu0 %v6023
        %6027 = vmatprep.subr.mxu0 0.0
        %6028 = vmatpush1.msra.mxu0 0.0
        %6029 = vmatprep.subr.mxu0 0.0
        %6030 = vmatpush1.msra.mxu0 0.0
        %6031 = vmatprep.subr.mxu0 0.0
        %6032 = vmatpush1.msra.mxu0 0.0
        %6033 = vmatprep.subr.mxu0 0.0
        %6034 = vmatpush1.msra.mxu0 0.0
        %6035 = vmatprep.subr.mxu0 0.0
        %6036 = vmatpush1.msra.mxu0 0.0
        %6037 = vmatprep.subr.mxu0 0.0
        %6038 = vmatpush1.msra.mxu0 0.0
        %6039 = vmatprep.subr.mxu0 0.0
        %6040 = vmatpush1.msra.mxu0 0.0
        %6041 = vmatprep.subr.mxu0 0.0
        %6042 = vmatpush1.msra.mxu0 0.0
        %6043 = vmatprep.subr.mxu0 0.0
        %6044 = vmatpush1.msra.mxu0 0.0
        %6045 = vmatprep.subr.mxu0 0.0
        %6046 = vmatpush1.msra.mxu0 0.0
        %6047 = vmatprep.subr.mxu0 0.0
        %6048 = vmatpush1.msra.mxu0 0.0
        %6049 = vmatprep.subr.mxu0 0.0
        %6050 = vmatpush1.msra.mxu0 0.0
        %6051 = vmatprep.subr.mxu0 0.0
        %6052 = vmatpush1.msra.mxu0 0.0
        %6053 = vmatprep.subr.mxu0 0.0
        %6054 = vmatpush1.msra.mxu0 0.0
        %6055 = vmatprep.subr.mxu0 0.0
        %6056 = vmatpush1.msra.mxu0 0.0
        %6057 = vmatprep.subr.mxu0 0.0
        %6058 = vmatpush1.msra.mxu0 0.0
        %6059 = vmatprep.subr.mxu0 0.0
        %6060 = vmatpush1.msra.mxu0 0.0
        %6061 = vmatprep.subr.mxu0 0.0
        %6062 = vmatpush1.msra.mxu0 0.0
        %6063 = vmatprep.subr.mxu0 0.0
        %6064 = vmatpush1.msra.mxu0 0.0
        %6065 = vmatprep.subr.mxu0 0.0
        %6066 = vmatpush1.msra.mxu0 0.0
        %6067 = vmatprep.subr.mxu0 0.0
        %6068 = vmatpush1.msra.mxu0 0.0
        %6069 = vmatprep.subr.mxu0 0.0
        %6070 = vmatpush1.msra.mxu0 0.0
        %6071 = vmatprep.subr.mxu0 0.0
        %6072 = vmatpush1.msra.mxu0 0.0
        %6073 = vmatprep.subr.mxu0 0.0
        %6074 = vmatpush1.msra.mxu0 0.0
        %6075 = vmatprep.subr.mxu0 0.0
        %6076 = vmatpush1.msra.mxu0 0.0
        %6077 = vmatprep.subr.mxu0 0.0
        %6078 = vmatpush1.msra.mxu0 0.0
        %6079 = vmatprep.subr.mxu0 0.0
        %6080 = vmatpush1.msra.mxu0 0.0
        %6081 = vmatprep.subr.mxu0 0.0
        %6082 = vmatpush1.msra.mxu0 0.0
        %6083 = vmatprep.subr.mxu0 0.0
        %6084 = vmatpush1.msra.mxu0 0.0
        %6085 = vmatprep.subr.mxu0 0.0
        %6086 = vmatpush1.msra.mxu0 0.0
        %6087 = vmatprep.subr.mxu0 0.0
        %6088 = vmatpush1.msra.mxu0 0.0
        %6089 = vmatprep.mubr.f32.mxu0 0.0
        %6090 = vmatmul.mubr.f32.gmra.mrb[0].mxu0 %v5802
        %v6091 = vpop.f32.mrb[0].mxu0
        %v6092 = vadd.f32 0.0, %v6091
        %v6093 = vpop.f32.mrb[0].mxu0
        %6094 = vdwg.mxu0
        %v6095 = vsub.f32 %v6092, %v2298
        %v6096 = vmul.f32 %v5947, %v2212
        %v6097 = vmul.f32 %v6021, %v2243
        %v6098 = vadd.f32 %v6096, %v6097
        %v6099 = vmul.f32 %v6095, %v2273
        %v6100 = vadd.f32 %v6098, %v6099
        %v6101 = vmul.f32 %v5947, %v2217
        %v6102 = vmul.f32 %v6021, %v2248
        %v6103 = vadd.f32 %v6101, %v6102
        %v6104 = vmul.f32 %v6095, %v2278
        %v6105 = vadd.f32 %v6103, %v6104
        %v6106 = vmul.f32 %v5947, %v2227
        %v6107 = vmul.f32 %v6021, %v2258
        %v6108 = vadd.f32 %v6106, %v6107
        %v6109 = vmul.f32 %v6095, %v2288
        %v6110 = vadd.f32 %v6108, %v6109
        %v6111 = vmul.f32 %v6100, %v6100
        %v6112 = vmul.f32 %v6105, %v6105
        %v6113 = vadd.f32 %v6111, %v6112
        %v6114 = vmul.f32 %v6110, %v6110
        %v6115 = vadd.f32 %v6113, %v6114
        %v6116 = vadd.f32 %v6115, 1e-08
        %v6117 = vrsqrt.pop %v6116
        %v6118 = vmul.f32 %v6116, %v6117
        %vm6119 = vcmp.eq.f32.partialorder %v6116, inf
        %v6120 = vsel %vm6119, %v6116, %v6118
        %vm6121 = vcmp.eq.f32.partialorder %v6116, 0.0
        %v6122 = vand.u32 %v6116, 2147483648
        %v6123 = vsel %vm6121, %v6122, %v6120
        %6124 = vmatprep.subr.mxu0 0.0
        %6125 = vmatpush1.msra.mxu0 %v3433
        %6126 = vmatprep.subr.mxu0 0.0
        %6127 = vmatpush1.msra.mxu0 0.0
        %6128 = vmatprep.subr.mxu0 0.0
        %6129 = vmatpush1.msra.mxu0 0.0
        %6130 = vmatprep.subr.mxu0 0.0
        %6131 = vmatpush1.msra.mxu0 0.0
        %6132 = vmatprep.subr.mxu0 0.0
        %6133 = vmatpush1.msra.mxu0 0.0
        %6134 = vmatprep.subr.mxu0 0.0
        %6135 = vmatpush1.msra.mxu0 0.0
        %6136 = vmatprep.subr.mxu0 0.0
        %6137 = vmatpush1.msra.mxu0 0.0
        %6138 = vmatprep.subr.mxu0 0.0
        %6139 = vmatpush1.msra.mxu0 0.0
        %6140 = vmatprep.subr.mxu0 0.0
        %6141 = vmatpush1.msra.mxu0 0.0
        %6142 = vmatprep.subr.mxu0 0.0
        %6143 = vmatpush1.msra.mxu0 0.0
        %6144 = vmatprep.subr.mxu0 0.0
        %6145 = vmatpush1.msra.mxu0 0.0
        %6146 = vmatprep.subr.mxu0 0.0
        %6147 = vmatpush1.msra.mxu0 0.0
        %6148 = vmatprep.subr.mxu0 0.0
        %6149 = vmatpush1.msra.mxu0 0.0
        %6150 = vmatprep.subr.mxu0 0.0
        %6151 = vmatpush1.msra.mxu0 0.0
        %6152 = vmatprep.subr.mxu0 0.0
        %6153 = vmatpush1.msra.mxu0 0.0
        %6154 = vmatprep.subr.mxu0 0.0
        %6155 = vmatpush1.msra.mxu0 0.0
        %6156 = vmatprep.subr.mxu0 0.0
        %6157 = vmatpush1.msra.mxu0 0.0
        %6158 = vmatprep.subr.mxu0 0.0
        %6159 = vmatpush1.msra.mxu0 0.0
        %6160 = vmatprep.subr.mxu0 0.0
        %6161 = vmatpush1.msra.mxu0 0.0
        %6162 = vmatprep.subr.mxu0 0.0
        %6163 = vmatpush1.msra.mxu0 0.0
        %6164 = vmatprep.subr.mxu0 0.0
        %6165 = vmatpush1.msra.mxu0 0.0
        %6166 = vmatprep.subr.mxu0 0.0
        %6167 = vmatpush1.msra.mxu0 0.0
        %6168 = vmatprep.subr.mxu0 0.0
        %6169 = vmatpush1.msra.mxu0 0.0
        %6170 = vmatprep.subr.mxu0 0.0
        %6171 = vmatpush1.msra.mxu0 0.0
        %6172 = vmatprep.subr.mxu0 0.0
        %6173 = vmatpush1.msra.mxu0 0.0
        %6174 = vmatprep.subr.mxu0 0.0
        %6175 = vmatpush1.msra.mxu0 0.0
        %6176 = vmatprep.subr.mxu0 0.0
        %6177 = vmatpush1.msra.mxu0 0.0
        %6178 = vmatprep.subr.mxu0 0.0
        %6179 = vmatpush1.msra.mxu0 0.0
        %6180 = vmatprep.subr.mxu0 0.0
        %6181 = vmatpush1.msra.mxu0 0.0
        %6182 = vmatprep.subr.mxu0 0.0
        %6183 = vmatpush1.msra.mxu0 0.0
        %6184 = vmatprep.subr.mxu0 0.0
        %6185 = vmatpush1.msra.mxu0 0.0
        %6186 = vmatprep.subr.mxu0 0.0
        %6187 = vmatpush1.msra.mxu0 0.0
        %6188 = vmatprep.mubr.f32.mxu0 0.0
        %6189 = vmatmul.mubr.f32.gmra.mrb[0].mxu0 %v5802
        %v6190 = vpop.f32.mrb[0].mxu0
        %v6191 = vadd.f32 0.0, %v6190
        %v6192 = vpop.f32.mrb[0].mxu0
        %6193 = vdwg.mxu0
        %v6194 = vmul.f32 %v6191, %v1040
        %6195 = vmatprep.subr.mxu0 0.0
        %6196 = vmatpush1.msra.mxu0 %v3505
        %6197 = vmatprep.subr.mxu0 0.0
        %6198 = vmatpush1.msra.mxu0 %v3506
        %6199 = vmatprep.subr.mxu0 0.0
        %6200 = vmatpush1.msra.mxu0 %v3507
        %6201 = vmatprep.subr.mxu0 0.0
        %6202 = vmatpush1.msra.mxu0 %v3508
        %6203 = vmatprep.subr.mxu0 0.0
        %6204 = vmatpush1.msra.mxu0 %v3509
        %6205 = vmatprep.subr.mxu0 0.0
        %6206 = vmatpush1.msra.mxu0 %v3510
        %6207 = vmatprep.subr.mxu0 0.0
        %6208 = vmatpush1.msra.mxu0 %v3511
        %6209 = vmatprep.subr.mxu0 0.0
        %6210 = vmatpush1.msra.mxu0 %v3512
        %6211 = vmatprep.subr.mxu0 0.0
        %6212 = vmatpush1.msra.mxu0 %v3513
        %6213 = vmatprep.subr.mxu0 0.0
        %6214 = vmatpush1.msra.mxu0 %v3514
        %6215 = vmatprep.subr.mxu0 0.0
        %6216 = vmatpush1.msra.mxu0 %v3515
        %6217 = vmatprep.subr.mxu0 0.0
        %6218 = vmatpush1.msra.mxu0 %v3516
        %6219 = vmatprep.subr.mxu0 0.0
        %6220 = vmatpush1.msra.mxu0 %v3517
        %6221 = vmatprep.subr.mxu0 0.0
        %6222 = vmatpush1.msra.mxu0 %v3518
        %6223 = vmatprep.subr.mxu0 0.0
        %6224 = vmatpush1.msra.mxu0 %v3519
        %6225 = vmatprep.subr.mxu0 0.0
        %6226 = vmatpush1.msra.mxu0 %v3520
        %6227 = vmatprep.subr.mxu0 0.0
        %6228 = vmatpush1.msra.mxu0 0.0
        %6229 = vmatprep.subr.mxu0 0.0
        %6230 = vmatpush1.msra.mxu0 0.0
        %6231 = vmatprep.subr.mxu0 0.0
        %6232 = vmatpush1.msra.mxu0 0.0
        %6233 = vmatprep.subr.mxu0 0.0
        %6234 = vmatpush1.msra.mxu0 0.0
        %6235 = vmatprep.subr.mxu0 0.0
        %6236 = vmatpush1.msra.mxu0 0.0
        %6237 = vmatprep.subr.mxu0 0.0
        %6238 = vmatpush1.msra.mxu0 0.0
        %6239 = vmatprep.subr.mxu0 0.0
        %6240 = vmatpush1.msra.mxu0 0.0
        %6241 = vmatprep.subr.mxu0 0.0
        %6242 = vmatpush1.msra.mxu0 0.0
        %6243 = vmatprep.subr.mxu0 0.0
        %6244 = vmatpush1.msra.mxu0 0.0
        %6245 = vmatprep.subr.mxu0 0.0
        %6246 = vmatpush1.msra.mxu0 0.0
        %6247 = vmatprep.subr.mxu0 0.0
        %6248 = vmatpush1.msra.mxu0 0.0
        %6249 = vmatprep.subr.mxu0 0.0
        %6250 = vmatpush1.msra.mxu0 0.0
        %6251 = vmatprep.subr.mxu0 0.0
        %6252 = vmatpush1.msra.mxu0 0.0
        %6253 = vmatprep.subr.mxu0 0.0
        %6254 = vmatpush1.msra.mxu0 0.0
        %6255 = vmatprep.subr.mxu0 0.0
        %6256 = vmatpush1.msra.mxu0 0.0
        %6257 = vmatprep.subr.mxu0 0.0
        %6258 = vmatpush1.msra.mxu0 0.0
        %6259 = vmatprep.mubr.f32.mxu0 0.0
        %6260 = vmatmul.mubr.f32.gmra.mrb[0].mxu0 %v6194
        %v6261 = vpop.f32.mrb[0].mxu0
        %v6262 = vadd.f32 0.0, %v6261
        %v6263 = vpop.f32.mrb[0].mxu0
        %6264 = vdwg.mxu0
        %6266 = vrot.lane.b32.xlu0 %v6100, 8
        %v6267 = vpop.permute.xlu0 %6266
        %6270 = vrot.lane.b32.xlu0 %v6105, 12
        %v6271 = vpop.permute.xlu0 %6270
        %6274 = vrot.lane.b32.xlu0 %v6110, 16
        %v6275 = vpop.permute.xlu0 %6274
        %6278 = vrot.lane.b32.xlu0 %v6123, 20
        %v6279 = vpop.permute.xlu0 %6278
        %6282 = vrot.lane.b32.xlu0 %v6262, 24
        %v6283 = vpop.permute.xlu0 %6282
        %v6285 = vsel %vm1161, %v5871, %v6267
        %v6286 = vsel %vm3612, %v6285, %v6271
        %v6287 = vsel %vm3614, %v6286, %v6275
        %v6288 = vsel %vm3616, %v6287, %v6279
        %v6289 = vsel %vm3618, %v6288, %v6283
        %v6290 = vld [vmem:[%s39 + $0x78] sm:$0xff]
        %v6291 = vld [vmem:[%s39 + $0x80] sm:$0xff]
        %v6292 = vld [vmem:[%s39 + $0x88] sm:$0xff]
        %v6293 = vld [vmem:[%s39 + $0x90] sm:$0xff]
        %v6294 = vld [vmem:[%s39 + $0x98] sm:$0xff]
        %v6296 = vsel %vm4442, %v6289, 0
        %6298 = vmatprep.subr.mxu0 0.0
        %6299 = vmatpush1.msra.mxu0 %v6290
        %6300 = vmatprep.subr.mxu0 0.0
        %6301 = vmatpush1.msra.mxu0 %v6291
        %6302 = vmatprep.subr.mxu0 0.0
        %6303 = vmatpush1.msra.mxu0 %v6292
        %6304 = vmatprep.subr.mxu0 0.0
        %6305 = vmatpush1.msra.mxu0 %v6293
        %6306 = vmatprep.subr.mxu0 0.0
        %6307 = vmatpush1.msra.mxu0 %v6294
        %6308 = vmatprep.subr.mxu0 0.0
        %6309 = vmatpush1.msra.mxu0 0.0
        %6310 = vmatprep.subr.mxu0 0.0
        %6311 = vmatpush1.msra.mxu0 0.0
        %6312 = vmatprep.subr.mxu0 0.0
        %6313 = vmatpush1.msra.mxu0 0.0
        %6314 = vmatprep.subr.mxu0 0.0
        %6315 = vmatpush1.msra.mxu0 0.0
        %6316 = vmatprep.subr.mxu0 0.0
        %6317 = vmatpush1.msra.mxu0 0.0
        %6318 = vmatprep.subr.mxu0 0.0
        %6319 = vmatpush1.msra.mxu0 0.0
        %6320 = vmatprep.subr.mxu0 0.0
        %6321 = vmatpush1.msra.mxu0 0.0
        %6322 = vmatprep.subr.mxu0 0.0
        %6323 = vmatpush1.msra.mxu0 0.0
        %6324 = vmatprep.subr.mxu0 0.0
        %6325 = vmatpush1.msra.mxu0 0.0
        %6326 = vmatprep.subr.mxu0 0.0
        %6327 = vmatpush1.msra.mxu0 0.0
        %6328 = vmatprep.subr.mxu0 0.0
        %6329 = vmatpush1.msra.mxu0 0.0
        %6330 = vmatprep.subr.mxu0 0.0
        %6331 = vmatpush1.msra.mxu0 0.0
        %6332 = vmatprep.subr.mxu0 0.0
        %6333 = vmatpush1.msra.mxu0 0.0
        %6334 = vmatprep.subr.mxu0 0.0
        %6335 = vmatpush1.msra.mxu0 0.0
        %6336 = vmatprep.subr.mxu0 0.0
        %6337 = vmatpush1.msra.mxu0 0.0
        %6338 = vmatprep.subr.mxu0 0.0
        %6339 = vmatpush1.msra.mxu0 0.0
        %6340 = vmatprep.subr.mxu0 0.0
        %6341 = vmatpush1.msra.mxu0 0.0
        %6342 = vmatprep.subr.mxu0 0.0
        %6343 = vmatpush1.msra.mxu0 0.0
        %6344 = vmatprep.subr.mxu0 0.0
        %6345 = vmatpush1.msra.mxu0 0.0
        %6346 = vmatprep.subr.mxu0 0.0
        %6347 = vmatpush1.msra.mxu0 0.0
        %6348 = vmatprep.subr.mxu0 0.0
        %6349 = vmatpush1.msra.mxu0 0.0
        %6350 = vmatprep.subr.mxu0 0.0
        %6351 = vmatpush1.msra.mxu0 0.0
        %6352 = vmatprep.subr.mxu0 0.0
        %6353 = vmatpush1.msra.mxu0 0.0
        %6354 = vmatprep.subr.mxu0 0.0
        %6355 = vmatpush1.msra.mxu0 0.0
        %6356 = vmatprep.subr.mxu0 0.0
        %6357 = vmatpush1.msra.mxu0 0.0
        %6358 = vmatprep.subr.mxu0 0.0
        %6359 = vmatpush1.msra.mxu0 0.0
        %6360 = vmatprep.subr.mxu0 0.0
        %6361 = vmatpush1.msra.mxu0 0.0
        %6362 = vmatprep.mubr.f32.mxu0 0.0
        %6363 = vmatmul.mubr.f32.gmra.mrb[0].mxu0 %v6296
        %v6364 = vpop.f32.mrb[0].mxu0
        %v6365 = vadd.f32 0.0, %v6364
        %v6366 = vpop.f32.mrb[0].mxu0
        %6367 = vdwg.mxu0
        %v6368 = vadd.f32 %v5478, %v6365
        %v6369 = vld [vmem:[%s41] sm:$0x1]
        %v6371 = vlaneseq
        %v6372 = vshrl.u32 %v6371, 7
        %v6373 = vsub.s32 0, %v6372
        %v6374 = vrot.slane %v6369, %v6373
        %v6376 = vadd.f32 %v6368, %v6374
        %v6377 = vadd.f32 %v1039, %v6376
        %v6378 = vadd.f32 %v6377, %v2127
        %v6379 = vld [vmem:[%s43] sm:$0x1]
        %v6380 = vld [vmem:[%s45] sm:$0x1]
        %v6381 = vsel %vm1043, %v6378, 0.0
        %6382 = vadd.xlane.f32.xlu0 %v6381
        %v6383 = vpop.xlane.xlu0 %6382
        %v6384 = vmul.f32 %v6383, %v1047
        %v6385 = vsub.f32 %v6378, %v6384
        %v6386 = vmul.f32 %v6385, %v6385
        %v6387 = vsel %vm1043, %v6386, 0.0
        %6388 = vadd.xlane.f32.xlu0 %v6387
        %v6389 = vpop.xlane.xlu0 %6388
        %v6390 = vmul.f32 %v6389, %v1047
        %v6391 = vadd.f32 %v6390, 1e-05
        %v6392 = vrsqrt.pop %v6391
        %v6393 = vmul.f32 %v6385, %v6392
        %v6395 = vlaneseq
        %v6396 = vshrl.u32 %v6395, 7
        %v6397 = vsub.s32 0, %v6396
        %v6398 = vrot.slane %v6379, %v6397
        %v6400 = vmul.f32 %v6393, %v6398
        %v6402 = vlaneseq
        %v6403 = vshrl.u32 %v6402, 7
        %v6404 = vsub.s32 0, %v6403
        %v6405 = vrot.slane %v6380, %v6404
        %v6407 = vadd.f32 %v6400, %v6405
        %v6408 = vld [vmem:[%s47] sm:$0xff]
        %v6409 = vld [vmem:[%s47 + $0x8] sm:$0xff]
        %v6410 = vld [vmem:[%s47 + $0x10] sm:$0xff]
        %v6411 = vld [vmem:[%s47 + $0x18] sm:$0xff]
        %v6412 = vld [vmem:[%s49] sm:$0x1]
        %v6414 = vlaneseq
        %v6415 = vshrl.u32 %v6414, 7
        %v6416 = vsub.s32 0, %v6415
        %v6417 = vrot.slane %v6412, %v6416
        %v6420 = vsel %vm1043, %v6407, 0
        %6422 = vmatprep.subr.mxu0 0.0
        %6423 = vmatpush1.msra.mxu0 %v6408
        %6424 = vmatprep.subr.mxu0 0.0
        %6425 = vmatpush1.msra.mxu0 %v6409
        %6426 = vmatprep.subr.mxu0 0.0
        %6427 = vmatpush1.msra.mxu0 %v6410
        %6428 = vmatprep.subr.mxu0 0.0
        %6429 = vmatpush1.msra.mxu0 %v6411
        %6430 = vmatprep.subr.mxu0 0.0
        %6431 = vmatpush1.msra.mxu0 0.0
        %6432 = vmatprep.subr.mxu0 0.0
        %6433 = vmatpush1.msra.mxu0 0.0
        %6434 = vmatprep.subr.mxu0 0.0
        %6435 = vmatpush1.msra.mxu0 0.0
        %6436 = vmatprep.subr.mxu0 0.0
        %6437 = vmatpush1.msra.mxu0 0.0
        %6438 = vmatprep.subr.mxu0 0.0
        %6439 = vmatpush1.msra.mxu0 0.0
        %6440 = vmatprep.subr.mxu0 0.0
        %6441 = vmatpush1.msra.mxu0 0.0
        %6442 = vmatprep.subr.mxu0 0.0
        %6443 = vmatpush1.msra.mxu0 0.0
        %6444 = vmatprep.subr.mxu0 0.0
        %6445 = vmatpush1.msra.mxu0 0.0
        %6446 = vmatprep.subr.mxu0 0.0
        %6447 = vmatpush1.msra.mxu0 0.0
        %6448 = vmatprep.subr.mxu0 0.0
        %6449 = vmatpush1.msra.mxu0 0.0
        %6450 = vmatprep.subr.mxu0 0.0
        %6451 = vmatpush1.msra.mxu0 0.0
        %6452 = vmatprep.subr.mxu0 0.0
        %6453 = vmatpush1.msra.mxu0 0.0
        %6454 = vmatprep.subr.mxu0 0.0
        %6455 = vmatpush1.msra.mxu0 0.0
        %6456 = vmatprep.subr.mxu0 0.0
        %6457 = vmatpush1.msra.mxu0 0.0
        %6458 = vmatprep.subr.mxu0 0.0
        %6459 = vmatpush1.msra.mxu0 0.0
        %6460 = vmatprep.subr.mxu0 0.0
        %6461 = vmatpush1.msra.mxu0 0.0
        %6462 = vmatprep.subr.mxu0 0.0
        %6463 = vmatpush1.msra.mxu0 0.0
        %6464 = vmatprep.subr.mxu0 0.0
        %6465 = vmatpush1.msra.mxu0 0.0
        %6466 = vmatprep.subr.mxu0 0.0
        %6467 = vmatpush1.msra.mxu0 0.0
        %6468 = vmatprep.subr.mxu0 0.0
        %6469 = vmatpush1.msra.mxu0 0.0
        %6470 = vmatprep.subr.mxu0 0.0
        %6471 = vmatpush1.msra.mxu0 0.0
        %6472 = vmatprep.subr.mxu0 0.0
        %6473 = vmatpush1.msra.mxu0 0.0
        %6474 = vmatprep.subr.mxu0 0.0
        %6475 = vmatpush1.msra.mxu0 0.0
        %6476 = vmatprep.subr.mxu0 0.0
        %6477 = vmatpush1.msra.mxu0 0.0
        %6478 = vmatprep.subr.mxu0 0.0
        %6479 = vmatpush1.msra.mxu0 0.0
        %6480 = vmatprep.subr.mxu0 0.0
        %6481 = vmatpush1.msra.mxu0 0.0
        %6482 = vmatprep.subr.mxu0 0.0
        %6483 = vmatpush1.msra.mxu0 0.0
        %6484 = vmatprep.subr.mxu0 0.0
        %6485 = vmatpush1.msra.mxu0 0.0
        %6486 = vmatprep.mubr.f32.mxu0 0.0
        %6487 = vmatmul.mubr.f32.gmra.mrb[0].mxu0 %v6420
        %v6488 = vpop.f32.mrb[0].mxu0
        %v6489 = vadd.f32 %v6417, %v6488
        %v6490 = vpop.f32.mrb[0].mxu0
        %6491 = vdwg.mxu0
        %v6492 = vadd.f32 %v6489, %v6407
        %6493 = vst.msk [vmem:[%s1000] sm:$0xff] %vm1043, %v6492
        %v6494 = vld [vmem:[%s51] sm:$0xff]
        %v6495 = vld [vmem:[%s51 + $0x8] sm:$0xff]
        %v6496 = vld [vmem:[%s51 + $0x10] sm:$0xff]
        %v6497 = vld [vmem:[%s51 + $0x18] sm:$0xff]
        %v6499 = vsel %vm1043, %v6492, 0
        %6501 = vmatprep.subr.mxu0 0.0
        %6502 = vmatpush1.msra.mxu0 %v6494
        %6503 = vmatprep.subr.mxu0 0.0
        %6504 = vmatpush1.msra.mxu0 %v6495
        %6505 = vmatprep.subr.mxu0 0.0
        %6506 = vmatpush1.msra.mxu0 %v6496
        %6507 = vmatprep.subr.mxu0 0.0
        %6508 = vmatpush1.msra.mxu0 %v6497
        %6509 = vmatprep.subr.mxu0 0.0
        %6510 = vmatpush1.msra.mxu0 0.0
        %6511 = vmatprep.subr.mxu0 0.0
        %6512 = vmatpush1.msra.mxu0 0.0
        %6513 = vmatprep.subr.mxu0 0.0
        %6514 = vmatpush1.msra.mxu0 0.0
        %6515 = vmatprep.subr.mxu0 0.0
        %6516 = vmatpush1.msra.mxu0 0.0
        %6517 = vmatprep.subr.mxu0 0.0
        %6518 = vmatpush1.msra.mxu0 0.0
        %6519 = vmatprep.subr.mxu0 0.0
        %6520 = vmatpush1.msra.mxu0 0.0
        %6521 = vmatprep.subr.mxu0 0.0
        %6522 = vmatpush1.msra.mxu0 0.0
        %6523 = vmatprep.subr.mxu0 0.0
        %6524 = vmatpush1.msra.mxu0 0.0
        %6525 = vmatprep.subr.mxu0 0.0
        %6526 = vmatpush1.msra.mxu0 0.0
        %6527 = vmatprep.subr.mxu0 0.0
        %6528 = vmatpush1.msra.mxu0 0.0
        %6529 = vmatprep.subr.mxu0 0.0
        %6530 = vmatpush1.msra.mxu0 0.0
        %6531 = vmatprep.subr.mxu0 0.0
        %6532 = vmatpush1.msra.mxu0 0.0
        %6533 = vmatprep.subr.mxu0 0.0
        %6534 = vmatpush1.msra.mxu0 0.0
        %6535 = vmatprep.subr.mxu0 0.0
        %6536 = vmatpush1.msra.mxu0 0.0
        %6537 = vmatprep.subr.mxu0 0.0
        %6538 = vmatpush1.msra.mxu0 0.0
        %6539 = vmatprep.subr.mxu0 0.0
        %6540 = vmatpush1.msra.mxu0 0.0
        %6541 = vmatprep.subr.mxu0 0.0
        %6542 = vmatpush1.msra.mxu0 0.0
        %6543 = vmatprep.subr.mxu0 0.0
        %6544 = vmatpush1.msra.mxu0 0.0
        %6545 = vmatprep.subr.mxu0 0.0
        %6546 = vmatpush1.msra.mxu0 0.0
        %6547 = vmatprep.subr.mxu0 0.0
        %6548 = vmatpush1.msra.mxu0 0.0
        %6549 = vmatprep.subr.mxu0 0.0
        %6550 = vmatpush1.msra.mxu0 0.0
        %6551 = vmatprep.subr.mxu0 0.0
        %6552 = vmatpush1.msra.mxu0 0.0
        %6553 = vmatprep.subr.mxu0 0.0
        %6554 = vmatpush1.msra.mxu0 0.0
        %6555 = vmatprep.subr.mxu0 0.0
        %6556 = vmatpush1.msra.mxu0 0.0
        %6557 = vmatprep.subr.mxu0 0.0
        %6558 = vmatpush1.msra.mxu0 0.0
        %6559 = vmatprep.subr.mxu0 0.0
        %6560 = vmatpush1.msra.mxu0 0.0
        %6561 = vmatprep.subr.mxu0 0.0
        %6562 = vmatpush1.msra.mxu0 0.0
        %6563 = vmatprep.subr.mxu0 0.0
        %6564 = vmatpush1.msra.mxu0 0.0
        %6565 = vmatprep.mubr.f32.mxu0 0.0
        %6566 = vmatmul.mubr.f32.gmra.mrb[0].mxu0 %v6499
        %v6567 = vpop.f32.mrb[0].mxu0
        %v6568 = vadd.f32 0.0, %v6567
        %v6569 = vpop.f32.mrb[0].mxu0
        %6570 = vdwg.mxu0
        %v6572 = vrot.slane %v6568, 1
        %6573 = vrot.lane.b32.xlu0 %v6572, 32
        %v6574 = vpop.permute.xlu0 %6573
        %v6576 = vrot.slane %v6568, 2
        %6577 = vrot.lane.b32.xlu0 %v6576, 64
        %v6578 = vpop.permute.xlu0 %6577
        %v6580 = vrot.slane %v6568, 3
        %6581 = vrot.lane.b32.xlu0 %v6580, 96
        %v6582 = vpop.permute.xlu0 %6581
        %v6584 = vrot.slane %v6568, 4
        %v6586 = vrot.slane %v6568, 5
        %6587 = vrot.lane.b32.xlu0 %v6586, 32
        %v6588 = vpop.permute.xlu0 %6587
        %v6590 = vrot.slane %v6568, 6
        %6591 = vrot.lane.b32.xlu0 %v6590, 64
        %v6592 = vpop.permute.xlu0 %6591
        %v6594 = vrot.slane %v6568, 7
        %6595 = vrot.lane.b32.xlu0 %v6594, 96
        %v6596 = vpop.permute.xlu0 %6595
        %v6598 = vsel %vm1043, %v6568, %v6574
        %vm6599 = vcmask 523264
        %v6600 = vsel %vm6599, %v6598, %v6578
        %vm6601 = vcmask 785408
        %v6602 = vsel %vm6601, %v6600, %v6582
        %v6603 = vsel %vm1043, %v6584, %v6588
        %v6604 = vsel %vm6599, %v6603, %v6592
        %v6605 = vsel %vm6601, %v6604, %v6596
        %6606 = vrot.lane.b32.xlu0 %v6568, 32
        %v6607 = vpop.permute.xlu0 %6606
        %6609 = vrot.lane.b32.xlu0 %v6568, 64
        %v6610 = vpop.permute.xlu0 %6609
        %6612 = vrot.lane.b32.xlu0 %v6568, 96
        %v6613 = vpop.permute.xlu0 %6612
        %v6615 = vsel %vm1043, %v6568, %v6607
        %v6616 = vsel %vm6599, %v6615, %v6610
        %v6617 = vsel %vm6601, %v6616, %v6613
        %v6618 = vlaneseq
        %v6619 = vshrl.u32 %v6618, 7
        %v6620 = vsub.s32 0, %v6619
        %v6621 = vrot.slane %v6602, %v6620
        %v6622 = vlaneseq
        %v6623 = vshrl.u32 %v6622, 7
        %v6624 = vsub.s32 0, %v6623
        %v6625 = vrot.slane %v6605, %v6624
        %v6626 = vsub.f32 %v6621, %v6617
        %v6627 = vsub.f32 %v6625, %v6617
        %v6628 = vld [vmem:[%s53] sm:$0x3]
        %v6630 = vlaneseq
        %v6631 = vshrl.u32 %v6630, 7
        %v6632 = vsub.s32 0, %v6631
        %v6633 = vrot.slane %v6628, %v6632
        %v6634 = vlaneseq
        %v6635 = vshrl.u32 %v6634, 7
        %v6636 = vsub.s32 1, %v6635
        %v6637 = vrot.slane %v6628, %v6636
        %v6640 = vadd.f32 %v6626, %v6633
        %v6641 = vadd.f32 %v6627, %v6637
        %vm6642 = vcmp.gt.f32.partialorder %v6640, 0.0
        %vm6643 = vcmp.gt.f32.partialorder %v6641, 0.0
        %v6644 = vmul.f32 %v6640, 0.01
        %v6645 = vmul.f32 %v6641, 0.01
        %v6646 = vsel %vm6642, %v6640, %v6644
        %v6647 = vsel %vm6643, %v6641, %v6645
        %v6648 = vld [vmem:[%s55] sm:$0xff]
        %v6649 = vld [vmem:[%s55 + $0x8] sm:$0xff]
        %v6650 = vld [vmem:[%s55 + $0x10] sm:$0xff]
        %v6651 = vld [vmem:[%s55 + $0x18] sm:$0xff]
        %v6652 = vld [vmem:[%s55 + $0x20] sm:$0xff]
        %v6653 = vld [vmem:[%s55 + $0x28] sm:$0xff]
        %v6654 = vld [vmem:[%s55 + $0x30] sm:$0xff]
        %v6655 = vld [vmem:[%s55 + $0x38] sm:$0xff]
        %v6656 = vld [vmem:[%s55 + $0x40] sm:$0xff]
        %v6657 = vld [vmem:[%s55 + $0x48] sm:$0xff]
        %v6658 = vld [vmem:[%s55 + $0x50] sm:$0xff]
        %v6659 = vld [vmem:[%s55 + $0x58] sm:$0xff]
        %v6660 = vld [vmem:[%s55 + $0x60] sm:$0xff]
        %v6661 = vld [vmem:[%s55 + $0x68] sm:$0xff]
        %v6662 = vld [vmem:[%s55 + $0x70] sm:$0xff]
        %v6663 = vld [vmem:[%s55 + $0x78] sm:$0xff]
        %v6664 = vld [vmem:[%s55 + $0x80] sm:$0xff]
        %v6665 = vld [vmem:[%s55 + $0x88] sm:$0xff]
        %v6666 = vld [vmem:[%s55 + $0x90] sm:$0xff]
        %v6667 = vld [vmem:[%s55 + $0x98] sm:$0xff]
        %v6668 = vld [vmem:[%s55 + $0xa0] sm:$0xff]
        %v6669 = vld [vmem:[%s55 + $0xa8] sm:$0xff]
        %v6670 = vld [vmem:[%s55 + $0xb0] sm:$0xff]
        %v6671 = vld [vmem:[%s55 + $0xb8] sm:$0xff]
        %v6672 = vld [vmem:[%s55 + $0xc0] sm:$0xff]
        %v6673 = vld [vmem:[%s55 + $0xc8] sm:$0xff]
        %v6674 = vld [vmem:[%s55 + $0xd0] sm:$0xff]
        %v6675 = vld [vmem:[%s55 + $0xd8] sm:$0xff]
        %v6676 = vld [vmem:[%s55 + $0xe0] sm:$0xff]
        %v6677 = vld [vmem:[%s55 + $0xe8] sm:$0xff]
        %v6678 = vld [vmem:[%s55 + $0xf0] sm:$0xff]
        %v6679 = vld [vmem:[%s55 + $0xf8] sm:$0xff]
        %v6680 = vld [vmem:[%s57] sm:$0x1]
        %v6682 = vlaneseq
        %v6683 = vshrl.u32 %v6682, 7
        %v6684 = vsub.s32 0, %v6683
        %v6685 = vrot.slane %v6680, %v6684
        %6687 = vmatprep.subr.mxu0 0.0
        %6688 = vmatpush1.msra.mxu0 %v6648
        %6689 = vmatprep.subr.mxu0 0.0
        %6690 = vmatpush1.msra.mxu0 %v6649
        %6691 = vmatprep.subr.mxu0 0.0
        %6692 = vmatpush1.msra.mxu0 %v6650
        %6693 = vmatprep.subr.mxu0 0.0
        %6694 = vmatpush1.msra.mxu0 %v6651
        %6695 = vmatprep.subr.mxu0 0.0
        %6696 = vmatpush1.msra.mxu0 %v6652
        %6697 = vmatprep.subr.mxu0 0.0
        %6698 = vmatpush1.msra.mxu0 %v6653
        %6699 = vmatprep.subr.mxu0 0.0
        %6700 = vmatpush1.msra.mxu0 %v6654
        %6701 = vmatprep.subr.mxu0 0.0
        %6702 = vmatpush1.msra.mxu0 %v6655
        %6703 = vmatprep.subr.mxu0 0.0
        %6704 = vmatpush1.msra.mxu0 %v6656
        %6705 = vmatprep.subr.mxu0 0.0
        %6706 = vmatpush1.msra.mxu0 %v6657
        %6707 = vmatprep.subr.mxu0 0.0
        %6708 = vmatpush1.msra.mxu0 %v6658
        %6709 = vmatprep.subr.mxu0 0.0
        %6710 = vmatpush1.msra.mxu0 %v6659
        %6711 = vmatprep.subr.mxu0 0.0
        %6712 = vmatpush1.msra.mxu0 %v6660
        %6713 = vmatprep.subr.mxu0 0.0
        %6714 = vmatpush1.msra.mxu0 %v6661
        %6715 = vmatprep.subr.mxu0 0.0
        %6716 = vmatpush1.msra.mxu0 %v6662
        %6717 = vmatprep.subr.mxu0 0.0
        %6718 = vmatpush1.msra.mxu0 %v6663
        %6719 = vmatprep.subr.mxu0 0.0
        %6720 = vmatpush1.msra.mxu0 %v6664
        %6721 = vmatprep.subr.mxu0 0.0
        %6722 = vmatpush1.msra.mxu0 %v6665
        %6723 = vmatprep.subr.mxu0 0.0
        %6724 = vmatpush1.msra.mxu0 %v6666
        %6725 = vmatprep.subr.mxu0 0.0
        %6726 = vmatpush1.msra.mxu0 %v6667
        %6727 = vmatprep.subr.mxu0 0.0
        %6728 = vmatpush1.msra.mxu0 %v6668
        %6729 = vmatprep.subr.mxu0 0.0
        %6730 = vmatpush1.msra.mxu0 %v6669
        %6731 = vmatprep.subr.mxu0 0.0
        %6732 = vmatpush1.msra.mxu0 %v6670
        %6733 = vmatprep.subr.mxu0 0.0
        %6734 = vmatpush1.msra.mxu0 %v6671
        %6735 = vmatprep.subr.mxu0 0.0
        %6736 = vmatpush1.msra.mxu0 %v6672
        %6737 = vmatprep.subr.mxu0 0.0
        %6738 = vmatpush1.msra.mxu0 %v6673
        %6739 = vmatprep.subr.mxu0 0.0
        %6740 = vmatpush1.msra.mxu0 %v6674
        %6741 = vmatprep.subr.mxu0 0.0
        %6742 = vmatpush1.msra.mxu0 %v6675
        %6743 = vmatprep.subr.mxu0 0.0
        %6744 = vmatpush1.msra.mxu0 %v6676
        %6745 = vmatprep.subr.mxu0 0.0
        %6746 = vmatpush1.msra.mxu0 %v6677
        %6747 = vmatprep.subr.mxu0 0.0
        %6748 = vmatpush1.msra.mxu0 %v6678
        %6749 = vmatprep.subr.mxu0 0.0
        %6750 = vmatpush1.msra.mxu0 %v6679
        %6751 = vmatprep.mubr.f32.mxu0 %v6647
        %6752 = vmatmul.mubr.f32.gmra.mrb[0].mxu0 %v6646
        %v6753 = vpop.f32.mrb[0].mxu0
        %v6754 = vadd.f32 %v6685, %v6753
        %v6755 = vpop.f32.mrb[0].mxu0
        %6756 = vdwg.mxu0
        %v6757 = vld [vmem:[%s1026] sm:$0xff]
        %v6758 = vmul.f32 %v6757, 2.0
        %v6759 = vmul.f32 %v6758, %v6754
        %v6760 = vadd.f32 %v1040, %v6759
        %6761 = vst [vmem:[%s1038] sm:$0xff] %v6760
        %s6762 = sand.u32 %s728, 1
        %s6763 = scalar_lea.sflag [#allocation3], %s6762
        %s6764 = sand.u32 %s728, 1
        %s6765 = smul.addr %s6764, 8
        %s6766 = scalar_lea.vmem [#allocation2], %s6765
        %p6767 = scmp.lt.s32.totalorder %s76, 1
        %s6768 = scalar_select %p6767, %s76, 1
        %s6769 = smul.addr %s6768, 8
        %s6770 = scalar_lea.vmem %s61, %s6769
        // Predicated region
        $region137: #{cross_encoder_block.1} parent=135 // pred_check
          %p6771 = pneg %p738
        $region138: #{cross_encoder_block.1} parent=135 // pred_check_branch
          %6773 = sbr.rel (%p6771) target = $region140
        $region139: #{cross_encoder_block.1} parent=135 // pred_region
          %s6775 = ssub.s32 128, 128
          %6776 = vsyncadd %s6763, %s6775
          %s6777 = smul.addr %s76, 128
          %s6778 = scalar_lea.hbm %s59, %s6777
          %s6780 = sshll.u32 %s6766, 4
          %s6781 = int_to_ptr.vmem [resolvable:$true] %s6780
          %6783 = dma.vmem_to_hbm [thread:$0]  %s6781, 128, %s6778, %s6763
        $region140: #{cross_encoder_block.1} parent=135 // pred_fallthru
          _
        // Predicated region
        $region141: #{cross_encoder_block.1} parent=135 // pred_check
          %p6784 = pneg %p764
        $region142: #{cross_encoder_block.1} parent=135 // pred_check_branch
          %6786 = sbr.rel (%p6784) target = $region144
        $region143: #{cross_encoder_block.1} parent=135 // pred_region
          _
        $region144: #{cross_encoder_block.1} parent=135 // pred_fallthru
          _
      $region136: #{cross_encoder_block.1} parent=5 // pred_fallthru
        _
      %p6787 = scmp.le.s32.totalorder 2, %s71
      // Predicated region
      $region145: #{cross_encoder_block.1} parent=5 // pred_check
        %p6788 = pneg %p6787
      $region146: #{cross_encoder_block.1} parent=5 // pred_check_branch
        %6790 = sbr.rel (%p6788) target = $region148
      $region147: #{cross_encoder_block.1} parent=5 // pred_region
        %s6791 = ssub.s32 %s71, 2
        // Predicated region
        $region149: #{cross_encoder_block.1} parent=147 // pred_check
          %p6792 = pneg %p744
        $region150: #{cross_encoder_block.1} parent=147 // pred_check_branch
          %6794 = sbr.rel (%p6792) target = $region152
        $region151: #{cross_encoder_block.1} parent=147 // pred_region
          %s6795 = sand.u32 %s729, 1
          %s6796 = scalar_lea.sflag [#allocation3], %s6795
          %s6797 = sand.u32 %s729, 1
          %s6798 = smul.addr %s6797, 8
          %s6799 = scalar_lea.vmem [#allocation2], %s6798
          %6800 = dma.done %s6796, 128
        $region152: #{cross_encoder_block.1} parent=147 // pred_fallthru
          _
        // Predicated region
        $region153: #{cross_encoder_block.1} parent=147 // pred_check
          %p6801 = pneg %p770
        $region154: #{cross_encoder_block.1} parent=147 // pred_check_branch
          %6803 = sbr.rel (%p6801) target = $region156
        $region155: #{cross_encoder_block.1} parent=147 // pred_region
          %p6804 = scmp.lt.s32.totalorder %s77, 1
          %s6805 = scalar_select %p6804, %s77, 1
          %s6806 = smul.addr %s6805, 8
          %s6807 = scalar_lea.vmem %s61, %s6806
        $region156: #{cross_encoder_block.1} parent=147 // pred_fallthru
          _
      $region148: #{cross_encoder_block.1} parent=5 // pred_fallthru
        _
    $region6: #{cross_encoder_block.1} parent=1 // loop_footer
      %s75 = sadd.s32 1, %s71
    $region7: #{cross_encoder_block.1} parent=1 // loop_footer_branch
      %70 = sbr.rel target = $region3
    $region8: #{cross_encoder_block.1} parent=1 // loop_exit
      _
    %6808 = vsyncpa [#allocation3], 1
    %s6809 = scalar_lea.sflag [#allocation3], 1
    %6810 = vsyncpa %s6809, 1

</llo_original>
